<compile_context>
chip_gen: v7x
topology: tpu7x:2x2x1
jax: 0.10.0
libtpu: 0.0.40
codegen_flags: <defaults>
</compile_context>

<pallas_src>
import math

import jax
import jax.numpy as jnp
from jax.experimental import pallas as pl
from jax.experimental.pallas import tpu as pltpu

LR = 16                        # low-res graph size (input is [LR, LR])
HR = 32                        # high-res feature size
UP1_HEADS = 4
UP1_HEAD_DIM = 200 // UP1_HEADS        # 50 (logical head width of upsampler.conv1)
UP1_HEAD_PAD = 64                      # padded head width (zero columns, inert)
UP1_HC_PAD = UP1_HEADS * UP1_HEAD_PAD  # 256 padded feature width


def _round_up(x, m):
    return (x + m - 1) // m * m


# ---------------------------------------------------------------------------
# Static slab layouts (pure-Python ints -> static slices inside the kernel)
# ---------------------------------------------------------------------------
def _build_vec_layout():
    segs = [
        ('b1', 4 * HR), ('b2', 4 * 2 * HR), ('b3', 4 * UP1_HC_PAD), ('b4', 4 * HR),
        ('we1', HR), ('we2', 2 * HR),
        ('gn1w', HR), ('gn1b', HR), ('gn1m', HR),
        ('gn2w', 2 * HR), ('gn2b', 2 * HR), ('gn2m', 2 * HR),
        ('gn3w', UP1_HC_PAD), ('gn3b', UP1_HC_PAD), ('gn3m', UP1_HC_PAD),
        ('gn4w', HR), ('gn4b', HR), ('gn4m', HR),
    ]
    layout, off = {}, 0
    for name, width in segs:
        layout[name] = (off, width)          # every offset is a multiple of 128
        off += _round_up(width, 128)
    return layout, off


_VLAYOUT, _VTOTAL = _build_vec_layout()      # _VTOTAL == 3712

# weight slab A: row-concatenation (sublane offsets are multiples of 8)
_WA_ROWS = {
    'fl1': (0, LR, 4 * HR),                   # rows   0:16 , cols 0:128
    'fl2': (LR, HR, 4 * 2 * HR),              # rows  16:48 , cols 0:256
    'up2': (LR + HR, UP1_HC_PAD, 4 * HR),     # rows 48:304 , cols 0:128
}
_WA_SHAPE = (LR + HR + UP1_HC_PAD, 4 * 2 * HR)   # (304, 256)


# ---------------------------------------------------------------------------
# In-kernel building blocks (traced inside the single fused kernel)
# ---------------------------------------------------------------------------
def _heads_from(mat, base, heads, head_dim):
    """[n, >=base+heads*head_dim] -> [heads, n, head_dim] via static slices."""
    return jnp.stack(
        [mat[:, base + h * head_dim: base + (h + 1) * head_dim]
         for h in range(heads)], axis=0)


def _merge_heads(x3):
    """[heads, n, head_dim] -> [n, heads*head_dim] (PyG concat order)."""
    return jnp.concatenate([x3[h] for h in range(x3.shape[0])], axis=1)


def _tconv(x, w_all, b_all, heads, head_dim, we=None, e_t=None):
    """Dense multi-head TransformerConv on a complete graph with self loops.

    w_all packs [Wq*scale | Wk | Wv | Wskip] column-wise (scale = 1/sqrt(C)
    folded into the q columns/bias at pack time) -> one projection matmul.
    e_t[dst, src] is the scalar edge attribute of edge src->dst.

      logits[h,i,j] = <q_i^h, k_j^h + e_{j->i} * we^h>
      out_i^h       = sum_j softmax_j(logits)[h,i,j] * (v_j^h + e_{j->i} * we^h)
      out           = concat_h(out^h) + x @ W_skip + b_skip
    """
    hc = heads * head_dim
    proj = jnp.dot(x, w_all, preferred_element_type=jnp.float32) + b_all  # [n, 4*hc]
    skip = proj[:, 3 * hc:4 * hc]

    q = _heads_from(proj, 0 * hc, heads, head_dim)     # [heads, n, hd] (pre-scaled)
    k = _heads_from(proj, 1 * hc, heads, head_dim)
    v = _heads_from(proj, 2 * hc, heads, head_dim)

    # One batched matmul pair over heads; contraction on the last dims so the
    # MXU consumes the transposed RHS natively (no k transposes materialized).
    logits = jnp.einsum('hnd,hmd->hnm', q, k,
                        preferred_element_type=jnp.float32)     # [heads, n, n]
    if e_t is not None:
        we_h = _heads_from(we, 0, heads, head_dim)              # [heads, 1, hd]
        qe = jnp.sum(q * we_h, axis=2, keepdims=True)           # q_i . we (scaled)
        logits = logits + qe * e_t[None, :, :]

    logits = logits - jnp.max(logits, axis=2, keepdims=True)
    p = jnp.exp(logits)
    inv_den = pl.reciprocal(jnp.sum(p, axis=2, keepdims=True), approx=False)
    alpha = p * inv_den                                         # softmax over j

    out = jnp.einsum('hnm,hmd->hnd', alpha, v,
                     preferred_element_type=jnp.float32)        # [heads, n, hd]
    if e_t is not None:
        s = jnp.sum(alpha * e_t[None, :, :], axis=2, keepdims=True)
        out = out + s * we_h

    return _merge_heads(out) + skip


def _graph_norm(x, w, b, ms, eps=1e-5):
    """PyG GraphNorm over a single graph: per-feature mean/var across nodes."""
    inv_n = 1.0 / x.shape[0]
    mean = jnp.sum(x, axis=0, keepdims=True) * inv_n
    cen = x - mean * ms
    var = jnp.sum(cen * cen, axis=0, keepdims=True) * inv_n
    return w * cen * jax.lax.rsqrt(var + eps) + b


def _row_l2_normalize(x):
    # eps clamp so an (unlikely) zero row cannot produce NaN/Inf; otherwise
    # matches x / ||x||_2.
    ss = jnp.sum(x * x, axis=1, keepdims=True)
    return x * jax.lax.rsqrt(ss + 1e-24)


def _gram_relu(x):
    # relu(x @ x.T) without materializing the transpose.
    g = jax.lax.dot_general(x, x, (((1,), (1,)), ((), ())),
                            preferred_element_type=jnp.float32)
    return jnp.maximum(g, 0.0)


# ---------------------------------------------------------------------------
# Single fused kernel: the whole PerfectFeatureModel forward
# ---------------------------------------------------------------------------
def _fused_forward_kernel(x_ref, wa_ref, wb_ref, v_ref, hr_ref, lr_gram_ref):
    def vec(name):                       # [1, width] slice at a 128-aligned offset
        off, width = _VLAYOUT[name]
        return v_ref[:, off:off + width]

    def wa(name):                        # weight block from the row-concat slab
        r0, nr, nc = _WA_ROWS[name]
        return wa_ref[r0:r0 + nr, 0:nc]

    x = x_ref[...]                       # [LR, LR] connectivity matrix
    e_t = x.T                            # e_t[dst, src] = attr of edge src->dst

    # ---- feature_learner (LrFeatureUpScaler) ----
    h = _tconv(x, wa('fl1'), vec('b1'), heads=4, head_dim=HR // 4,
               we=vec('we1'), e_t=e_t)
    h = _graph_norm(h, vec('gn1w'), vec('gn1b'), vec('gn1m'))
    h = _tconv(h, wa('fl2'), vec('b2'), heads=8, head_dim=(2 * HR) // 8,
               we=vec('we2'), e_t=e_t)
    h = _graph_norm(h, vec('gn2w'), vec('gn2b'), vec('gn2m'))
    lr_x = _row_l2_normalize(h)                           # [LR, 2*HR]
    lr_gram_ref[...] = _gram_relu(lr_x)                   # relu(lr_x @ lr_x.T)

    # ---- upsampler (LrUpsampling) ----
    u = _tconv(lr_x.T, wb_ref[...], vec('b3'),
               heads=UP1_HEADS, head_dim=UP1_HEAD_PAD)    # [2*HR, 256] (padded)
    u = _graph_norm(u, vec('gn3w'), vec('gn3b'), vec('gn3m'))
    u = _tconv(u, wa('up2'), vec('b4'), heads=4, head_dim=HR // 4)
    u = _graph_norm(u, vec('gn4w'), vec('gn4b'), vec('gn4m')).T
    u = _row_l2_normalize(u)                              # [HR, 2*HR]
    hr_ref[...] = _gram_relu(u)                           # relu(u @ u.T)


@jax.jit
def perfect_feature_model(x, packed):
    vmem = pl.BlockSpec(memory_space=pltpu.MemorySpace.VMEM)  # whole array in VMEM
    hr_mat, lr_gram = pl.pallas_call(
        _fused_forward_kernel,
        out_shape=(jax.ShapeDtypeStruct((HR, HR), jnp.float32),
                   jax.ShapeDtypeStruct((LR, LR), jnp.float32)),
        in_specs=[vmem, vmem, vmem, vmem],
        out_specs=(vmem, vmem),
    )(x, packed['wa'], packed['wb'], packed['vec'])
    return hr_mat, lr_gram


# ---------------------------------------------------------------------------
# Deterministic synthetic parameter init, packed into the three DMA slabs
# ---------------------------------------------------------------------------
def _linear(key, fan_in, fan_out, bias=True):
    kw, kb = jax.random.split(key)
    bound = 1.0 / math.sqrt(fan_in)
    w = jax.random.uniform(kw, (fan_in, fan_out), jnp.float32, -bound, bound)
    b = jax.random.uniform(kb, (1, fan_out), jnp.float32, -bound, bound) if bias else None
    return w, b


def init_tconv_packed(key, fin, heads, head_dim, *, edge_dim=None,
                      pad_head_dim=None, fin_blocks=None):
    """TransformerConv params packed as [Wq*scale | Wk | Wv | Wskip].

    pad_head_dim : zero-pad each head's output block (numerically inert).
    fin_blocks   : (n_blocks, blk, blk_pad) zero-pad the input dim block-wise
                   to match a head-padded producer layer.
    """
    hc = heads * head_dim
    ks = jax.random.split(key, 5)
    wq, bq = _linear(ks[0], fin, hc)
    wk, bk = _linear(ks[1], fin, hc)
    wv, bv = _linear(ks[2], fin, hc)
    wsk, bsk = _linear(ks[3], fin, hc)
    we = _linear(ks[4], edge_dim, hc, bias=False)[0] if edge_dim is not None else None

    scale = 1.0 / math.sqrt(head_dim)   # PyG divides logits by sqrt(out_channels)
    wq = wq * scale
    bq = bq * scale

    hd_p = head_dim if pad_head_dim is None else pad_head_dim

    def pad_cols(m):                    # [r, heads*head_dim] -> [r, heads*hd_p]
        if hd_p == head_dim:
            return m
        m3 = m.reshape(m.shape[0], heads, head_dim)
        m3 = jnp.pad(m3, ((0, 0), (0, 0), (0, hd_p - head_dim)))
        return m3.reshape(m.shape[0], heads * hd_p)

    def pad_rows(m):                    # block-wise zero rows on the input dim
        if fin_blocks is None:
            return m
        nb, blk, blk_p = fin_blocks
        m3 = m.reshape(nb, blk, m.shape[1])
        m3 = jnp.pad(m3, ((0, 0), (0, blk_p - blk), (0, 0)))
        return m3.reshape(nb * blk_p, m.shape[1])

    wq, wk, wv, wsk = tuple(pad_rows(pad_cols(w)) for w in (wq, wk, wv, wsk))
    bq, bk, bv, bsk = tuple(pad_cols(b) for b in (bq, bk, bv, bsk))

    p = {'w_all': jnp.concatenate([wq, wk, wv, wsk], axis=1),
         'b_all': jnp.concatenate([bq, bk, bv, bsk], axis=1)}
    if we is not None:
        p['we'] = pad_cols(we)
    return p


def init_gnorm(dim):
    return {'w': jnp.ones((1, dim), jnp.float32),
            'b': jnp.zeros((1, dim), jnp.float32),
            'ms': jnp.ones((1, dim), jnp.float32)}


def init_params(key):
    k = jax.random.split(key, 4)
    fl1 = init_tconv_packed(k[0], LR, 4, HR // 4, edge_dim=1)
    fl2 = init_tconv_packed(k[1], HR, 8, (2 * HR) // 8, edge_dim=1)
    # upsampler conv1: head_dim 50 padded to 64 (200 -> 256)
    up1 = init_tconv_packed(k[2], LR, UP1_HEADS, UP1_HEAD_DIM,
                            pad_head_dim=UP1_HEAD_PAD)
    up2 = init_tconv_packed(k[3], UP1_HEADS * UP1_HEAD_DIM, 4, HR // 4,
                            fin_blocks=(UP1_HEADS, UP1_HEAD_DIM, UP1_HEAD_PAD))
    gn1, gn2 = init_gnorm(HR), init_gnorm(2 * HR)
    gn3, gn4 = init_gnorm(UP1_HC_PAD), init_gnorm(HR)   # identity on padded lanes

    # --- weight slab A (row-concat) and B (up_conv1) ---
    wa = jnp.zeros(_WA_SHAPE, jnp.float32)
    for name, w in (('fl1', fl1['w_all']), ('fl2', fl2['w_all']),
                    ('up2', up2['w_all'])):
        r0, nr, nc = _WA_ROWS[name]
        wa = wa.at[r0:r0 + nr, 0:nc].set(w)
    wb = up1['w_all']                                    # [16, 1024]

    # --- vector slab: all [1, dim] params lane-concatenated, 128-aligned ---
    vs = jnp.zeros((1, _VTOTAL), jnp.float32)

    def put(buf, name, arr):
        off, width = _VLAYOUT[name]
        return buf.at[:, off:off + width].set(arr.reshape(1, width))

    vs = put(vs, 'b1', fl1['b_all'])
    vs = put(vs, 'b2', fl2['b_all'])
    vs = put(vs, 'b3', up1['b_all'])
    vs = put(vs, 'b4', up2['b_all'])
    vs = put(vs, 'we1', fl1['we'])
    vs = put(vs, 'we2', fl2['we'])
    for tag, gn in (('gn1', gn1), ('gn2', gn2), ('gn3', gn3), ('gn4', gn4)):
        vs = put(vs, tag + 'w', gn['w'])
        vs = put(vs, tag + 'b', gn['b'])
        vs = put(vs, tag + 'm', gn['ms'])

    return {'wa': wa, 'wb': wb, 'vec': vs}


if __name__ == "__main__":
    key = jax.random.PRNGKey(0)
    kx, kp = jax.random.split(key)
    x = jax.random.normal(kx, (LR, LR), jnp.float32)   # [lr, lr] connectivity matrix
    packed = init_params(kp)

    hr_mat, lr_gram = perfect_feature_model(x, packed)
    jax.block_until_ready((hr_mat, lr_gram))

    assert hr_mat.shape == (HR, HR) and lr_gram.shape == (LR, LR)
    assert bool(jnp.all(jnp.isfinite(hr_mat))) and bool(jnp.all(jnp.isfinite(lr_gram)))
    print("KERNEL_OK")
</pallas_src>

<mosaic_0001>
module attributes {stable_mosaic.version = 11 : i64} {
  func.func @_fused_forward_kernel(%arg0: memref<16x16xf32, #tpu.memory_space<vmem>>, %arg1: memref<304x256xf32, #tpu.memory_space<vmem>>, %arg2: memref<16x1024xf32, #tpu.memory_space<vmem>>, %arg3: memref<1x3712xf32, #tpu.memory_space<vmem>>, %arg4: memref<32x32xf32, #tpu.memory_space<vmem>>, %arg5: memref<16x16xf32, #tpu.memory_space<vmem>>) attributes {dimension_semantics = [], scalar_prefetch = 0 : i64, scratch_operands = 0 : i64, tpu.core_type = #tpu.core_type<tc>} {
    %c0 = arith.constant 0 : index
    %c0_0 = arith.constant 0 : index
    %0 = vector.load %arg0[%c0, %c0_0] : memref<16x16xf32, #tpu.memory_space<vmem>>, vector<16x16xf32>
    %1 = tpu.transpose %0, [1, 0] : vector<16x16xf32> -> vector<16x16xf32>
    %c0_1 = arith.constant 0 : index
    %c0_2 = arith.constant 0 : index
    %2 = vector.load %arg1[%c0_1, %c0_2] : memref<304x256xf32, #tpu.memory_space<vmem>>, vector<16x128xf32>
    %c0_3 = arith.constant 0 : index
    %c0_4 = arith.constant 0 : index
    %3 = vector.load %arg3[%c0_3, %c0_4] : memref<1x3712xf32, #tpu.memory_space<vmem>>, vector<1x128xf32>
    %c0_5 = arith.constant 0 : index
    %c1536 = arith.constant 1536 : index
    %4 = vector.load %arg3[%c0_5, %c1536] : memref<1x3712xf32, #tpu.memory_space<vmem>>, vector<1x32xf32>
    %cst = arith.constant dense<0.000000e+00> : vector<16x128xf32>
    %5 = tpu.matmul %0, %2, %cst {dimension_numbers = #tpu.dot_dimension_numbers<[1], [0], [0], [1], [0, 0, 1, 1], [], []>} : vector<16x16xf32>, vector<16x128xf32>, vector<16x128xf32> -> vector<16x128xf32>
    %6 = vector.broadcast %3 : vector<1x128xf32> to vector<16x128xf32>
    %7 = arith.addf %5, %6 : vector<16x128xf32>
    %8 = vector.extract_strided_slice %7 {offsets = [0, 96], sizes = [16, 32], strides = [1, 1]} : vector<16x128xf32> to vector<16x32xf32>
    %9 = vector.extract_strided_slice %7 {offsets = [0, 0], sizes = [16, 8], strides = [1, 1]} : vector<16x128xf32> to vector<16x8xf32>
    %10 = vector.extract_strided_slice %7 {offsets = [0, 8], sizes = [16, 8], strides = [1, 1]} : vector<16x128xf32> to vector<16x8xf32>
    %11 = vector.extract_strided_slice %7 {offsets = [0, 16], sizes = [16, 8], strides = [1, 1]} : vector<16x128xf32> to vector<16x8xf32>
    %12 = vector.extract_strided_slice %7 {offsets = [0, 24], sizes = [16, 8], strides = [1, 1]} : vector<16x128xf32> to vector<16x8xf32>
    %13 = vector.shape_cast %9 : vector<16x8xf32> to vector<1x16x8xf32>
    %14 = vector.shape_cast %10 : vector<16x8xf32> to vector<1x16x8xf32>
    %15 = vector.shape_cast %11 : vector<16x8xf32> to vector<1x16x8xf32>
    %16 = vector.shape_cast %12 : vector<16x8xf32> to vector<1x16x8xf32>
    %17 = tpu.concatenate %13, %14, %15, %16 in 0 : vector<1x16x8xf32>, vector<1x16x8xf32>, vector<1x16x8xf32>, vector<1x16x8xf32> -> vector<4x16x8xf32>
    %18 = vector.extract_strided_slice %7 {offsets = [0, 32], sizes = [16, 8], strides = [1, 1]} : vector<16x128xf32> to vector<16x8xf32>
    %19 = vector.extract_strided_slice %7 {offsets = [0, 40], sizes = [16, 8], strides = [1, 1]} : vector<16x128xf32> to vector<16x8xf32>
    %20 = vector.extract_strided_slice %7 {offsets = [0, 48], sizes = [16, 8], strides = [1, 1]} : vector<16x128xf32> to vector<16x8xf32>
    %21 = vector.extract_strided_slice %7 {offsets = [0, 56], sizes = [16, 8], strides = [1, 1]} : vector<16x128xf32> to vector<16x8xf32>
    %22 = vector.shape_cast %18 : vector<16x8xf32> to vector<1x16x8xf32>
    %23 = vector.shape_cast %19 : vector<16x8xf32> to vector<1x16x8xf32>
    %24 = vector.shape_cast %20 : vector<16x8xf32> to vector<1x16x8xf32>
    %25 = vector.shape_cast %21 : vector<16x8xf32> to vector<1x16x8xf32>
    %26 = tpu.concatenate %22, %23, %24, %25 in 0 : vector<1x16x8xf32>, vector<1x16x8xf32>, vector<1x16x8xf32>, vector<1x16x8xf32> -> vector<4x16x8xf32>
    %27 = vector.extract_strided_slice %7 {offsets = [0, 64], sizes = [16, 8], strides = [1, 1]} : vector<16x128xf32> to vector<16x8xf32>
    %28 = vector.extract_strided_slice %7 {offsets = [0, 72], sizes = [16, 8], strides = [1, 1]} : vector<16x128xf32> to vector<16x8xf32>
    %29 = vector.extract_strided_slice %7 {offsets = [0, 80], sizes = [16, 8], strides = [1, 1]} : vector<16x128xf32> to vector<16x8xf32>
    %30 = vector.extract_strided_slice %7 {offsets = [0, 88], sizes = [16, 8], strides = [1, 1]} : vector<16x128xf32> to vector<16x8xf32>
    %31 = vector.shape_cast %27 : vector<16x8xf32> to vector<1x16x8xf32>
    %32 = vector.shape_cast %28 : vector<16x8xf32> to vector<1x16x8xf32>
    %33 = vector.shape_cast %29 : vector<16x8xf32> to vector<1x16x8xf32>
    %34 = vector.shape_cast %30 : vector<16x8xf32> to vector<1x16x8xf32>
    %35 = tpu.concatenate %31, %32, %33, %34 in 0 : vector<1x16x8xf32>, vector<1x16x8xf32>, vector<1x16x8xf32>, vector<1x16x8xf32> -> vector<4x16x8xf32>
    "tpu.trace_start"() <{level = 10 : i32, message = "hnd,hmd->hnm"}> : () -> ()
    %cst_6 = arith.constant dense<0.000000e+00> : vector<4x16x16xf32>
    %36 = tpu.matmul %17, %26, %cst_6 {dimension_numbers = #tpu.dot_dimension_numbers<[2], [2], [1], [1], [0, 0, 0, 1, 1, 1], [0], [0]>} : vector<4x16x8xf32>, vector<4x16x8xf32>, vector<4x16x16xf32> -> vector<4x16x16xf32>
    "tpu.trace_stop"() : () -> ()
    %37 = vector.extract_strided_slice %4 {offsets = [0, 0], sizes = [1, 8], strides = [1, 1]} : vector<1x32xf32> to vector<1x8xf32>
    %38 = vector.extract_strided_slice %4 {offsets = [0, 8], sizes = [1, 8], strides = [1, 1]} : vector<1x32xf32> to vector<1x8xf32>
    %39 = vector.extract_strided_slice %4 {offsets = [0, 16], sizes = [1, 8], strides = [1, 1]} : vector<1x32xf32> to vector<1x8xf32>
    %40 = vector.extract_strided_slice %4 {offsets = [0, 24], sizes = [1, 8], strides = [1, 1]} : vector<1x32xf32> to vector<1x8xf32>
    %41 = vector.shape_cast %37 : vector<1x8xf32> to vector<1x1x8xf32>
    %42 = vector.shape_cast %38 : vector<1x8xf32> to vector<1x1x8xf32>
    %43 = vector.shape_cast %39 : vector<1x8xf32> to vector<1x1x8xf32>
    %44 = vector.shape_cast %40 : vector<1x8xf32> to vector<1x1x8xf32>
    %45 = tpu.concatenate %41, %42, %43, %44 in 0 : vector<1x1x8xf32>, vector<1x1x8xf32>, vector<1x1x8xf32>, vector<1x1x8xf32> -> vector<4x1x8xf32>
    %46 = vector.broadcast %45 : vector<4x1x8xf32> to vector<4x16x8xf32>
    %47 = arith.mulf %17, %46 : vector<4x16x8xf32>
    %cst_7 = arith.constant dense<0.000000e+00> : vector<4x16xf32>
    %48 = vector.multi_reduction <add>, %47, %cst_7 [2] : vector<4x16x8xf32> to vector<4x16xf32>
    %49 = vector.shape_cast %48 : vector<4x16xf32> to vector<4x16x1xf32>
    %50 = vector.shape_cast %1 : vector<16x16xf32> to vector<1x16x16xf32>
    %51 = vector.broadcast %49 : vector<4x16x1xf32> to vector<4x16x16xf32>
    %52 = vector.broadcast %50 : vector<1x16x16xf32> to vector<4x16x16xf32>
    %53 = arith.mulf %51, %52 : vector<4x16x16xf32>
    %54 = arith.addf %36, %53 : vector<4x16x16xf32>
    %cst_8 = arith.constant dense<0xFF800000> : vector<4x16xf32>
    %55 = vector.multi_reduction <maximumf>, %54, %cst_8 [2] : vector<4x16x16xf32> to vector<4x16xf32>
    %56 = vector.shape_cast %55 : vector<4x16xf32> to vector<4x16x1xf32>
    %57 = vector.broadcast %56 : vector<4x16x1xf32> to vector<4x16x16xf32>
    %58 = arith.subf %54, %57 : vector<4x16x16xf32>
    %59 = math.exp %58 : vector<4x16x16xf32>
    %cst_9 = arith.constant dense<0.000000e+00> : vector<4x16xf32>
    %60 = vector.multi_reduction <add>, %59, %cst_9 [2] : vector<4x16x16xf32> to vector<4x16xf32>
    %61 = vector.shape_cast %60 : vector<4x16xf32> to vector<4x16x1xf32>
    %62 = tpu.reciprocal %61 : vector<4x16x1xf32> -> vector<4x16x1xf32>
    %63 = vector.broadcast %62 : vector<4x16x1xf32> to vector<4x16x16xf32>
    %64 = arith.mulf %59, %63 : vector<4x16x16xf32>
    "tpu.trace_start"() <{level = 10 : i32, message = "hnm,hmd->hnd"}> : () -> ()
    %cst_10 = arith.constant dense<0.000000e+00> : vector<4x16x8xf32>
    %65 = tpu.matmul %64, %35, %cst_10 {dimension_numbers = #tpu.dot_dimension_numbers<[2], [1], [1], [2], [0, 0, 0, 1, 1, 2], [0], [0]>} : vector<4x16x16xf32>, vector<4x16x8xf32>, vector<4x16x8xf32> -> vector<4x16x8xf32>
    "tpu.trace_stop"() : () -> ()
    %66 = vector.shape_cast %1 : vector<16x16xf32> to vector<1x16x16xf32>
    %67 = vector.broadcast %66 : vector<1x16x16xf32> to vector<4x16x16xf32>
    %68 = arith.mulf %64, %67 : vector<4x16x16xf32>
    %cst_11 = arith.constant dense<0.000000e+00> : vector<4x16xf32>
    %69 = vector.multi_reduction <add>, %68, %cst_11 [2] : vector<4x16x16xf32> to vector<4x16xf32>
    %70 = vector.shape_cast %69 : vector<4x16xf32> to vector<4x16x1xf32>
    %71 = vector.broadcast %70 : vector<4x16x1xf32> to vector<4x16x8xf32>
    %72 = vector.broadcast %45 : vector<4x1x8xf32> to vector<4x16x8xf32>
    %73 = arith.mulf %71, %72 : vector<4x16x8xf32>
    %74 = arith.addf %65, %73 : vector<4x16x8xf32>
    %75 = vector.extract_strided_slice %74 {offsets = [0, 0, 0], sizes = [1, 16, 8], strides = [1, 1, 1]} : vector<4x16x8xf32> to vector<1x16x8xf32>
    %76 = vector.shape_cast %75 : vector<1x16x8xf32> to vector<16x8xf32>
    %77 = vector.extract_strided_slice %74 {offsets = [1, 0, 0], sizes = [1, 16, 8], strides = [1, 1, 1]} : vector<4x16x8xf32> to vector<1x16x8xf32>
    %78 = vector.shape_cast %77 : vector<1x16x8xf32> to vector<16x8xf32>
    %79 = vector.extract_strided_slice %74 {offsets = [2, 0, 0], sizes = [1, 16, 8], strides = [1, 1, 1]} : vector<4x16x8xf32> to vector<1x16x8xf32>
    %80 = vector.shape_cast %79 : vector<1x16x8xf32> to vector<16x8xf32>
    %81 = vector.extract_strided_slice %74 {offsets = [3, 0, 0], sizes = [1, 16, 8], strides = [1, 1, 1]} : vector<4x16x8xf32> to vector<1x16x8xf32>
    %82 = vector.shape_cast %81 : vector<1x16x8xf32> to vector<16x8xf32>
    %83 = tpu.concatenate %76, %78, %80, %82 in 1 : vector<16x8xf32>, vector<16x8xf32>, vector<16x8xf32>, vector<16x8xf32> -> vector<16x32xf32>
    %84 = arith.addf %83, %8 : vector<16x32xf32>
    %c0_12 = arith.constant 0 : index
    %c1792 = arith.constant 1792 : index
    %85 = vector.load %arg3[%c0_12, %c1792] : memref<1x3712xf32, #tpu.memory_space<vmem>>, vector<1x32xf32>
    %c0_13 = arith.constant 0 : index
    %c1920 = arith.constant 1920 : index
    %86 = vector.load %arg3[%c0_13, %c1920] : memref<1x3712xf32, #tpu.memory_space<vmem>>, vector<1x32xf32>
    %c0_14 = arith.constant 0 : index
    %c2048 = arith.constant 2048 : index
    %87 = vector.load %arg3[%c0_14, %c2048] : memref<1x3712xf32, #tpu.memory_space<vmem>>, vector<1x32xf32>
    %cst_15 = arith.constant dense<0.000000e+00> : vector<32xf32>
    %88 = vector.multi_reduction <add>, %84, %cst_15 [0] : vector<16x32xf32> to vector<32xf32>
    %89 = vector.shape_cast %88 : vector<32xf32> to vector<1x32xf32>
    %cst_16 = arith.constant 6.250000e-02 : f32
    %90 = vector.broadcast %cst_16 : f32 to vector<1x32xf32>
    %91 = arith.mulf %89, %90 : vector<1x32xf32>
    %92 = arith.mulf %91, %87 : vector<1x32xf32>
    %93 = vector.broadcast %92 : vector<1x32xf32> to vector<16x32xf32>
    %94 = arith.subf %84, %93 : vector<16x32xf32>
    %95 = arith.mulf %94, %94 : vector<16x32xf32>
    %cst_17 = arith.constant dense<0.000000e+00> : vector<32xf32>
    %96 = vector.multi_reduction <add>, %95, %cst_17 [0] : vector<16x32xf32> to vector<32xf32>
    %97 = vector.shape_cast %96 : vector<32xf32> to vector<1x32xf32>
    %cst_18 = arith.constant 6.250000e-02 : f32
    %98 = vector.broadcast %cst_18 : f32 to vector<1x32xf32>
    %99 = arith.mulf %97, %98 : vector<1x32xf32>
    %100 = vector.broadcast %85 : vector<1x32xf32> to vector<16x32xf32>
    %101 = arith.mulf %100, %94 : vector<16x32xf32>
    %cst_19 = arith.constant 9.99999974E-6 : f32
    %102 = vector.broadcast %cst_19 : f32 to vector<1x32xf32>
    %103 = arith.addf %99, %102 : vector<1x32xf32>
    %104 = math.rsqrt %103 : vector<1x32xf32>
    %105 = vector.broadcast %104 : vector<1x32xf32> to vector<16x32xf32>
    %106 = arith.mulf %101, %105 : vector<16x32xf32>
    %107 = vector.broadcast %86 : vector<1x32xf32> to vector<16x32xf32>
    %108 = arith.addf %106, %107 : vector<16x32xf32>
    %c16 = arith.constant 16 : index
    %c0_20 = arith.constant 0 : index
    %109 = vector.load %arg1[%c16, %c0_20] : memref<304x256xf32, #tpu.memory_space<vmem>>, vector<32x256xf32>
    %c0_21 = arith.constant 0 : index
    %c128 = arith.constant 128 : index
    %110 = vector.load %arg3[%c0_21, %c128] : memref<1x3712xf32, #tpu.memory_space<vmem>>, vector<1x256xf32>
    %c0_22 = arith.constant 0 : index
    %c1664 = arith.constant 1664 : index
    %111 = vector.load %arg3[%c0_22, %c1664] : memref<1x3712xf32, #tpu.memory_space<vmem>>, vector<1x64xf32>
    %cst_23 = arith.constant dense<0.000000e+00> : vector<16x256xf32>
    %112 = tpu.matmul %108, %109, %cst_23 {dimension_numbers = #tpu.dot_dimension_numbers<[1], [0], [0], [1], [0, 0, 1, 1], [], []>} : vector<16x32xf32>, vector<32x256xf32>, vector<16x256xf32> -> vector<16x256xf32>
    %113 = vector.broadcast %110 : vector<1x256xf32> to vector<16x256xf32>
    %114 = arith.addf %112, %113 : vector<16x256xf32>
    %115 = vector.extract_strided_slice %114 {offsets = [0, 192], sizes = [16, 64], strides = [1, 1]} : vector<16x256xf32> to vector<16x64xf32>
    %116 = vector.extract_strided_slice %114 {offsets = [0, 0], sizes = [16, 8], strides = [1, 1]} : vector<16x256xf32> to vector<16x8xf32>
    %117 = vector.extract_strided_slice %114 {offsets = [0, 8], sizes = [16, 8], strides = [1, 1]} : vector<16x256xf32> to vector<16x8xf32>
    %118 = vector.extract_strided_slice %114 {offsets = [0, 16], sizes = [16, 8], strides = [1, 1]} : vector<16x256xf32> to vector<16x8xf32>
    %119 = vector.extract_strided_slice %114 {offsets = [0, 24], sizes = [16, 8], strides = [1, 1]} : vector<16x256xf32> to vector<16x8xf32>
    %120 = vector.extract_strided_slice %114 {offsets = [0, 32], sizes = [16, 8], strides = [1, 1]} : vector<16x256xf32> to vector<16x8xf32>
    %121 = vector.extract_strided_slice %114 {offsets = [0, 40], sizes = [16, 8], strides = [1, 1]} : vector<16x256xf32> to vector<16x8xf32>
    %122 = vector.extract_strided_slice %114 {offsets = [0, 48], sizes = [16, 8], strides = [1, 1]} : vector<16x256xf32> to vector<16x8xf32>
    %123 = vector.extract_strided_slice %114 {offsets = [0, 56], sizes = [16, 8], strides = [1, 1]} : vector<16x256xf32> to vector<16x8xf32>
    %124 = vector.shape_cast %116 : vector<16x8xf32> to vector<1x16x8xf32>
    %125 = vector.shape_cast %117 : vector<16x8xf32> to vector<1x16x8xf32>
    %126 = vector.shape_cast %118 : vector<16x8xf32> to vector<1x16x8xf32>
    %127 = vector.shape_cast %119 : vector<16x8xf32> to vector<1x16x8xf32>
    %128 = vector.shape_cast %120 : vector<16x8xf32> to vector<1x16x8xf32>
    %129 = vector.shape_cast %121 : vector<16x8xf32> to vector<1x16x8xf32>
    %130 = vector.shape_cast %122 : vector<16x8xf32> to vector<1x16x8xf32>
    %131 = vector.shape_cast %123 : vector<16x8xf32> to vector<1x16x8xf32>
    %132 = tpu.concatenate %124, %125, %126, %127, %128, %129, %130, %131 in 0 : vector<1x16x8xf32>, vector<1x16x8xf32>, vector<1x16x8xf32>, vector<1x16x8xf32>, vector<1x16x8xf32>, vector<1x16x8xf32>, vector<1x16x8xf32>, vector<1x16x8xf32> -> vector<8x16x8xf32>
    %133 = vector.extract_strided_slice %114 {offsets = [0, 64], sizes = [16, 8], strides = [1, 1]} : vector<16x256xf32> to vector<16x8xf32>
    %134 = vector.extract_strided_slice %114 {offsets = [0, 72], sizes = [16, 8], strides = [1, 1]} : vector<16x256xf32> to vector<16x8xf32>
    %135 = vector.extract_strided_slice %114 {offsets = [0, 80], sizes = [16, 8], strides = [1, 1]} : vector<16x256xf32> to vector<16x8xf32>
    %136 = vector.extract_strided_slice %114 {offsets = [0, 88], sizes = [16, 8], strides = [1, 1]} : vector<16x256xf32> to vector<16x8xf32>
    %137 = vector.extract_strided_slice %114 {offsets = [0, 96], sizes = [16, 8], strides = [1, 1]} : vector<16x256xf32> to vector<16x8xf32>
    %138 = vector.extract_strided_slice %114 {offsets = [0, 104], sizes = [16, 8], strides = [1, 1]} : vector<16x256xf32> to vector<16x8xf32>
    %139 = vector.extract_strided_slice %114 {offsets = [0, 112], sizes = [16, 8], strides = [1, 1]} : vector<16x256xf32> to vector<16x8xf32>
    %140 = vector.extract_strided_slice %114 {offsets = [0, 120], sizes = [16, 8], strides = [1, 1]} : vector<16x256xf32> to vector<16x8xf32>
    %141 = vector.shape_cast %133 : vector<16x8xf32> to vector<1x16x8xf32>
    %142 = vector.shape_cast %134 : vector<16x8xf32> to vector<1x16x8xf32>
    %143 = vector.shape_cast %135 : vector<16x8xf32> to vector<1x16x8xf32>
    %144 = vector.shape_cast %136 : vector<16x8xf32> to vector<1x16x8xf32>
    %145 = vector.shape_cast %137 : vector<16x8xf32> to vector<1x16x8xf32>
    %146 = vector.shape_cast %138 : vector<16x8xf32> to vector<1x16x8xf32>
    %147 = vector.shape_cast %139 : vector<16x8xf32> to vector<1x16x8xf32>
    %148 = vector.shape_cast %140 : vector<16x8xf32> to vector<1x16x8xf32>
    %149 = tpu.concatenate %141, %142, %143, %144, %145, %146, %147, %148 in 0 : vector<1x16x8xf32>, vector<1x16x8xf32>, vector<1x16x8xf32>, vector<1x16x8xf32>, vector<1x16x8xf32>, vector<1x16x8xf32>, vector<1x16x8xf32>, vector<1x16x8xf32> -> vector<8x16x8xf32>
    %150 = vector.extract_strided_slice %114 {offsets = [0, 128], sizes = [16, 8], strides = [1, 1]} : vector<16x256xf32> to vector<16x8xf32>
    %151 = vector.extract_strided_slice %114 {offsets = [0, 136], sizes = [16, 8], strides = [1, 1]} : vector<16x256xf32> to vector<16x8xf32>
    %152 = vector.extract_strided_slice %114 {offsets = [0, 144], sizes = [16, 8], strides = [1, 1]} : vector<16x256xf32> to vector<16x8xf32>
    %153 = vector.extract_strided_slice %114 {offsets = [0, 152], sizes = [16, 8], strides = [1, 1]} : vector<16x256xf32> to vector<16x8xf32>
    %154 = vector.extract_strided_slice %114 {offsets = [0, 160], sizes = [16, 8], strides = [1, 1]} : vector<16x256xf32> to vector<16x8xf32>
    %155 = vector.extract_strided_slice %114 {offsets = [0, 168], sizes = [16, 8], strides = [1, 1]} : vector<16x256xf32> to vector<16x8xf32>
    %156 = vector.extract_strided_slice %114 {offsets = [0, 176], sizes = [16, 8], strides = [1, 1]} : vector<16x256xf32> to vector<16x8xf32>
    %157 = vector.extract_strided_slice %114 {offsets = [0, 184], sizes = [16, 8], strides = [1, 1]} : vector<16x256xf32> to vector<16x8xf32>
    %158 = vector.shape_cast %150 : vector<16x8xf32> to vector<1x16x8xf32>
    %159 = vector.shape_cast %151 : vector<16x8xf32> to vector<1x16x8xf32>
    %160 = vector.shape_cast %152 : vector<16x8xf32> to vector<1x16x8xf32>
    %161 = vector.shape_cast %153 : vector<16x8xf32> to vector<1x16x8xf32>
    %162 = vector.shape_cast %154 : vector<16x8xf32> to vector<1x16x8xf32>
    %163 = vector.shape_cast %155 : vector<16x8xf32> to vector<1x16x8xf32>
    %164 = vector.shape_cast %156 : vector<16x8xf32> to vector<1x16x8xf32>
    %165 = vector.shape_cast %157 : vector<16x8xf32> to vector<1x16x8xf32>
    %166 = tpu.concatenate %158, %159, %160, %161, %162, %163, %164, %165 in 0 : vector<1x16x8xf32>, vector<1x16x8xf32>, vector<1x16x8xf32>, vector<1x16x8xf32>, vector<1x16x8xf32>, vector<1x16x8xf32>, vector<1x16x8xf32>, vector<1x16x8xf32> -> vector<8x16x8xf32>
    "tpu.trace_start"() <{level = 10 : i32, message = "hnd,hmd->hnm"}> : () -> ()
    %cst_24 = arith.constant dense<0.000000e+00> : vector<8x16x16xf32>
    %167 = tpu.matmul %132, %149, %cst_24 {dimension_numbers = #tpu.dot_dimension_numbers<[2], [2], [1], [1], [0, 0, 0, 1, 1, 1], [0], [0]>} : vector<8x16x8xf32>, vector<8x16x8xf32>, vector<8x16x16xf32> -> vector<8x16x16xf32>
    "tpu.trace_stop"() : () -> ()
    %168 = vector.extract_strided_slice %111 {offsets = [0, 0], sizes = [1, 8], strides = [1, 1]} : vector<1x64xf32> to vector<1x8xf32>
    %169 = vector.extract_strided_slice %111 {offsets = [0, 8], sizes = [1, 8], strides = [1, 1]} : vector<1x64xf32> to vector<1x8xf32>
    %170 = vector.extract_strided_slice %111 {offsets = [0, 16], sizes = [1, 8], strides = [1, 1]} : vector<1x64xf32> to vector<1x8xf32>
    %171 = vector.extract_strided_slice %111 {offsets = [0, 24], sizes = [1, 8], strides = [1, 1]} : vector<1x64xf32> to vector<1x8xf32>
    %172 = vector.extract_strided_slice %111 {offsets = [0, 32], sizes = [1, 8], strides = [1, 1]} : vector<1x64xf32> to vector<1x8xf32>
    %173 = vector.extract_strided_slice %111 {offsets = [0, 40], sizes = [1, 8], strides = [1, 1]} : vector<1x64xf32> to vector<1x8xf32>
    %174 = vector.extract_strided_slice %111 {offsets = [0, 48], sizes = [1, 8], strides = [1, 1]} : vector<1x64xf32> to vector<1x8xf32>
    %175 = vector.extract_strided_slice %111 {offsets = [0, 56], sizes = [1, 8], strides = [1, 1]} : vector<1x64xf32> to vector<1x8xf32>
    %176 = vector.shape_cast %168 : vector<1x8xf32> to vector<1x1x8xf32>
    %177 = vector.shape_cast %169 : vector<1x8xf32> to vector<1x1x8xf32>
    %178 = vector.shape_cast %170 : vector<1x8xf32> to vector<1x1x8xf32>
    %179 = vector.shape_cast %171 : vector<1x8xf32> to vector<1x1x8xf32>
    %180 = vector.shape_cast %172 : vector<1x8xf32> to vector<1x1x8xf32>
    %181 = vector.shape_cast %173 : vector<1x8xf32> to vector<1x1x8xf32>
    %182 = vector.shape_cast %174 : vector<1x8xf32> to vector<1x1x8xf32>
    %183 = vector.shape_cast %175 : vector<1x8xf32> to vector<1x1x8xf32>
    %184 = tpu.concatenate %176, %177, %178, %179, %180, %181, %182, %183 in 0 : vector<1x1x8xf32>, vector<1x1x8xf32>, vector<1x1x8xf32>, vector<1x1x8xf32>, vector<1x1x8xf32>, vector<1x1x8xf32>, vector<1x1x8xf32>, vector<1x1x8xf32> -> vector<8x1x8xf32>
    %185 = vector.broadcast %184 : vector<8x1x8xf32> to vector<8x16x8xf32>
    %186 = arith.mulf %132, %185 : vector<8x16x8xf32>
    %cst_25 = arith.constant dense<0.000000e+00> : vector<8x16xf32>
    %187 = vector.multi_reduction <add>, %186, %cst_25 [2] : vector<8x16x8xf32> to vector<8x16xf32>
    %188 = vector.shape_cast %187 : vector<8x16xf32> to vector<8x16x1xf32>
    %189 = vector.shape_cast %1 : vector<16x16xf32> to vector<1x16x16xf32>
    %190 = vector.broadcast %188 : vector<8x16x1xf32> to vector<8x16x16xf32>
    %191 = vector.broadcast %189 : vector<1x16x16xf32> to vector<8x16x16xf32>
    %192 = arith.mulf %190, %191 : vector<8x16x16xf32>
    %193 = arith.addf %167, %192 : vector<8x16x16xf32>
    %cst_26 = arith.constant dense<0xFF800000> : vector<8x16xf32>
    %194 = vector.multi_reduction <maximumf>, %193, %cst_26 [2] : vector<8x16x16xf32> to vector<8x16xf32>
    %195 = vector.shape_cast %194 : vector<8x16xf32> to vector<8x16x1xf32>
    %196 = vector.broadcast %195 : vector<8x16x1xf32> to vector<8x16x16xf32>
    %197 = arith.subf %193, %196 : vector<8x16x16xf32>
    %198 = math.exp %197 : vector<8x16x16xf32>
    %cst_27 = arith.constant dense<0.000000e+00> : vector<8x16xf32>
    %199 = vector.multi_reduction <add>, %198, %cst_27 [2] : vector<8x16x16xf32> to vector<8x16xf32>
    %200 = vector.shape_cast %199 : vector<8x16xf32> to vector<8x16x1xf32>
    %201 = tpu.reciprocal %200 : vector<8x16x1xf32> -> vector<8x16x1xf32>
    %202 = vector.broadcast %201 : vector<8x16x1xf32> to vector<8x16x16xf32>
    %203 = arith.mulf %198, %202 : vector<8x16x16xf32>
    "tpu.trace_start"() <{level = 10 : i32, message = "hnm,hmd->hnd"}> : () -> ()
    %cst_28 = arith.constant dense<0.000000e+00> : vector<8x16x8xf32>
    %204 = tpu.matmul %203, %166, %cst_28 {dimension_numbers = #tpu.dot_dimension_numbers<[2], [1], [1], [2], [0, 0, 0, 1, 1, 2], [0], [0]>} : vector<8x16x16xf32>, vector<8x16x8xf32>, vector<8x16x8xf32> -> vector<8x16x8xf32>
    "tpu.trace_stop"() : () -> ()
    %205 = vector.shape_cast %1 : vector<16x16xf32> to vector<1x16x16xf32>
    %206 = vector.broadcast %205 : vector<1x16x16xf32> to vector<8x16x16xf32>
    %207 = arith.mulf %203, %206 : vector<8x16x16xf32>
    %cst_29 = arith.constant dense<0.000000e+00> : vector<8x16xf32>
    %208 = vector.multi_reduction <add>, %207, %cst_29 [2] : vector<8x16x16xf32> to vector<8x16xf32>
    %209 = vector.shape_cast %208 : vector<8x16xf32> to vector<8x16x1xf32>
    %210 = vector.broadcast %209 : vector<8x16x1xf32> to vector<8x16x8xf32>
    %211 = vector.broadcast %184 : vector<8x1x8xf32> to vector<8x16x8xf32>
    %212 = arith.mulf %210, %211 : vector<8x16x8xf32>
    %213 = arith.addf %204, %212 : vector<8x16x8xf32>
    %214 = vector.extract_strided_slice %213 {offsets = [0, 0, 0], sizes = [1, 16, 8], strides = [1, 1, 1]} : vector<8x16x8xf32> to vector<1x16x8xf32>
    %215 = vector.shape_cast %214 : vector<1x16x8xf32> to vector<16x8xf32>
    %216 = vector.extract_strided_slice %213 {offsets = [1, 0, 0], sizes = [1, 16, 8], strides = [1, 1, 1]} : vector<8x16x8xf32> to vector<1x16x8xf32>
    %217 = vector.shape_cast %216 : vector<1x16x8xf32> to vector<16x8xf32>
    %218 = vector.extract_strided_slice %213 {offsets = [2, 0, 0], sizes = [1, 16, 8], strides = [1, 1, 1]} : vector<8x16x8xf32> to vector<1x16x8xf32>
    %219 = vector.shape_cast %218 : vector<1x16x8xf32> to vector<16x8xf32>
    %220 = vector.extract_strided_slice %213 {offsets = [3, 0, 0], sizes = [1, 16, 8], strides = [1, 1, 1]} : vector<8x16x8xf32> to vector<1x16x8xf32>
    %221 = vector.shape_cast %220 : vector<1x16x8xf32> to vector<16x8xf32>
    %222 = vector.extract_strided_slice %213 {offsets = [4, 0, 0], sizes = [1, 16, 8], strides = [1, 1, 1]} : vector<8x16x8xf32> to vector<1x16x8xf32>
    %223 = vector.shape_cast %222 : vector<1x16x8xf32> to vector<16x8xf32>
    %224 = vector.extract_strided_slice %213 {offsets = [5, 0, 0], sizes = [1, 16, 8], strides = [1, 1, 1]} : vector<8x16x8xf32> to vector<1x16x8xf32>
    %225 = vector.shape_cast %224 : vector<1x16x8xf32> to vector<16x8xf32>
    %226 = vector.extract_strided_slice %213 {offsets = [6, 0, 0], sizes = [1, 16, 8], strides = [1, 1, 1]} : vector<8x16x8xf32> to vector<1x16x8xf32>
    %227 = vector.shape_cast %226 : vector<1x16x8xf32> to vector<16x8xf32>
    %228 = vector.extract_strided_slice %213 {offsets = [7, 0, 0], sizes = [1, 16, 8], strides = [1, 1, 1]} : vector<8x16x8xf32> to vector<1x16x8xf32>
    %229 = vector.shape_cast %228 : vector<1x16x8xf32> to vector<16x8xf32>
    %230 = tpu.concatenate %215, %217, %219, %221, %223, %225, %227, %229 in 1 : vector<16x8xf32>, vector<16x8xf32>, vector<16x8xf32>, vector<16x8xf32>, vector<16x8xf32>, vector<16x8xf32>, vector<16x8xf32>, vector<16x8xf32> -> vector<16x64xf32>
    %231 = arith.addf %230, %115 : vector<16x64xf32>
    %c0_30 = arith.constant 0 : index
    %c2176 = arith.constant 2176 : index
    %232 = vector.load %arg3[%c0_30, %c2176] : memref<1x3712xf32, #tpu.memory_space<vmem>>, vector<1x64xf32>
    %c0_31 = arith.constant 0 : index
    %c2304 = arith.constant 2304 : index
    %233 = vector.load %arg3[%c0_31, %c2304] : memref<1x3712xf32, #tpu.memory_space<vmem>>, vector<1x64xf32>
    %c0_32 = arith.constant 0 : index
    %c2432 = arith.constant 2432 : index
    %234 = vector.load %arg3[%c0_32, %c2432] : memref<1x3712xf32, #tpu.memory_space<vmem>>, vector<1x64xf32>
    %cst_33 = arith.constant dense<0.000000e+00> : vector<64xf32>
    %235 = vector.multi_reduction <add>, %231, %cst_33 [0] : vector<16x64xf32> to vector<64xf32>
    %236 = vector.shape_cast %235 : vector<64xf32> to vector<1x64xf32>
    %cst_34 = arith.constant 6.250000e-02 : f32
    %237 = vector.broadcast %cst_34 : f32 to vector<1x64xf32>
    %238 = arith.mulf %236, %237 : vector<1x64xf32>
    %239 = arith.mulf %238, %234 : vector<1x64xf32>
    %240 = vector.broadcast %239 : vector<1x64xf32> to vector<16x64xf32>
    %241 = arith.subf %231, %240 : vector<16x64xf32>
    %242 = arith.mulf %241, %241 : vector<16x64xf32>
    %cst_35 = arith.constant dense<0.000000e+00> : vector<64xf32>
    %243 = vector.multi_reduction <add>, %242, %cst_35 [0] : vector<16x64xf32> to vector<64xf32>
    %244 = vector.shape_cast %243 : vector<64xf32> to vector<1x64xf32>
    %cst_36 = arith.constant 6.250000e-02 : f32
    %245 = vector.broadcast %cst_36 : f32 to vector<1x64xf32>
    %246 = arith.mulf %244, %245 : vector<1x64xf32>
    %247 = vector.broadcast %232 : vector<1x64xf32> to vector<16x64xf32>
    %248 = arith.mulf %247, %241 : vector<16x64xf32>
    %cst_37 = arith.constant 9.99999974E-6 : f32
    %249 = vector.broadcast %cst_37 : f32 to vector<1x64xf32>
    %250 = arith.addf %246, %249 : vector<1x64xf32>
    %251 = math.rsqrt %250 : vector<1x64xf32>
    %252 = vector.broadcast %251 : vector<1x64xf32> to vector<16x64xf32>
    %253 = arith.mulf %248, %252 : vector<16x64xf32>
    %254 = vector.broadcast %233 : vector<1x64xf32> to vector<16x64xf32>
    %255 = arith.addf %253, %254 : vector<16x64xf32>
    %256 = arith.mulf %255, %255 : vector<16x64xf32>
    %cst_38 = arith.constant dense<0.000000e+00> : vector<16xf32>
    %257 = vector.multi_reduction <add>, %256, %cst_38 [1] : vector<16x64xf32> to vector<16xf32>
    %258 = vector.shape_cast %257 : vector<16xf32> to vector<16x1xf32>
    %cst_39 = arith.constant 1.000000e-24 : f32
    %259 = vector.broadcast %cst_39 : f32 to vector<16x1xf32>
    %260 = arith.addf %258, %259 : vector<16x1xf32>
    %261 = math.rsqrt %260 : vector<16x1xf32>
    %262 = vector.broadcast %261 : vector<16x1xf32> to vector<16x64xf32>
    %263 = arith.mulf %255, %262 : vector<16x64xf32>
    %cst_40 = arith.constant dense<0.000000e+00> : vector<16x16xf32>
    %264 = tpu.matmul %263, %263, %cst_40 {dimension_numbers = #tpu.dot_dimension_numbers<[1], [1], [0], [0], [0, 0, 1, 0], [], []>} : vector<16x64xf32>, vector<16x64xf32>, vector<16x16xf32> -> vector<16x16xf32>
    %cst_41 = arith.constant 0.000000e+00 : f32
    %265 = vector.broadcast %cst_41 : f32 to vector<16x16xf32>
    %266 = arith.maximumf %264, %265 : vector<16x16xf32>
    %c0_42 = arith.constant 0 : index
    %c0_43 = arith.constant 0 : index
    %267 = vector.load %arg5[%c0_42, %c0_43] : memref<16x16xf32, #tpu.memory_space<vmem>>, vector<16x16xf32>
    tpu.vector_store %arg5[%c0_42, %c0_43], %266 {strides = array<i32>} : memref<16x16xf32, #tpu.memory_space<vmem>>, vector<16x16xf32>,
    %268 = tpu.transpose %263, [1, 0] : vector<16x64xf32> -> vector<64x16xf32>
    %c0_44 = arith.constant 0 : index
    %c0_45 = arith.constant 0 : index
    %269 = vector.load %arg2[%c0_44, %c0_45] : memref<16x1024xf32, #tpu.memory_space<vmem>>, vector<16x1024xf32>
    %c0_46 = arith.constant 0 : index
    %c384 = arith.constant 384 : index
    %270 = vector.load %arg3[%c0_46, %c384] : memref<1x3712xf32, #tpu.memory_space<vmem>>, vector<1x1024xf32>
    %cst_47 = arith.constant dense<0.000000e+00> : vector<64x1024xf32>
    %271 = tpu.matmul %268, %269, %cst_47 {dimension_numbers = #tpu.dot_dimension_numbers<[1], [0], [0], [1], [0, 0, 1, 1], [], []>} : vector<64x16xf32>, vector<16x1024xf32>, vector<64x1024xf32> -> vector<64x1024xf32>
    %272 = vector.broadcast %270 : vector<1x1024xf32> to vector<64x1024xf32>
    %273 = arith.addf %271, %272 : vector<64x1024xf32>
    %274 = vector.extract_strided_slice %273 {offsets = [0, 768], sizes = [64, 256], strides = [1, 1]} : vector<64x1024xf32> to vector<64x256xf32>
    %275 = vector.extract_strided_slice %273 {offsets = [0, 0], sizes = [64, 64], strides = [1, 1]} : vector<64x1024xf32> to vector<64x64xf32>
    %276 = vector.extract_strided_slice %273 {offsets = [0, 64], sizes = [64, 64], strides = [1, 1]} : vector<64x1024xf32> to vector<64x64xf32>
    %277 = vector.extract_strided_slice %273 {offsets = [0, 128], sizes = [64, 64], strides = [1, 1]} : vector<64x1024xf32> to vector<64x64xf32>
    %278 = vector.extract_strided_slice %273 {offsets = [0, 192], sizes = [64, 64], strides = [1, 1]} : vector<64x1024xf32> to vector<64x64xf32>
    %279 = vector.shape_cast %275 : vector<64x64xf32> to vector<1x64x64xf32>
    %280 = vector.shape_cast %276 : vector<64x64xf32> to vector<1x64x64xf32>
    %281 = vector.shape_cast %277 : vector<64x64xf32> to vector<1x64x64xf32>
    %282 = vector.shape_cast %278 : vector<64x64xf32> to vector<1x64x64xf32>
    %283 = tpu.concatenate %279, %280, %281, %282 in 0 : vector<1x64x64xf32>, vector<1x64x64xf32>, vector<1x64x64xf32>, vector<1x64x64xf32> -> vector<4x64x64xf32>
    %284 = vector.extract_strided_slice %273 {offsets = [0, 256], sizes = [64, 64], strides = [1, 1]} : vector<64x1024xf32> to vector<64x64xf32>
    %285 = vector.extract_strided_slice %273 {offsets = [0, 320], sizes = [64, 64], strides = [1, 1]} : vector<64x1024xf32> to vector<64x64xf32>
    %286 = vector.extract_strided_slice %273 {offsets = [0, 384], sizes = [64, 64], strides = [1, 1]} : vector<64x1024xf32> to vector<64x64xf32>
    %287 = vector.extract_strided_slice %273 {offsets = [0, 448], sizes = [64, 64], strides = [1, 1]} : vector<64x1024xf32> to vector<64x64xf32>
    %288 = vector.shape_cast %284 : vector<64x64xf32> to vector<1x64x64xf32>
    %289 = vector.shape_cast %285 : vector<64x64xf32> to vector<1x64x64xf32>
    %290 = vector.shape_cast %286 : vector<64x64xf32> to vector<1x64x64xf32>
    %291 = vector.shape_cast %287 : vector<64x64xf32> to vector<1x64x64xf32>
    %292 = tpu.concatenate %288, %289, %290, %291 in 0 : vector<1x64x64xf32>, vector<1x64x64xf32>, vector<1x64x64xf32>, vector<1x64x64xf32> -> vector<4x64x64xf32>
    %293 = vector.extract_strided_slice %273 {offsets = [0, 512], sizes = [64, 64], strides = [1, 1]} : vector<64x1024xf32> to vector<64x64xf32>
    %294 = vector.extract_strided_slice %273 {offsets = [0, 576], sizes = [64, 64], strides = [1, 1]} : vector<64x1024xf32> to vector<64x64xf32>
    %295 = vector.extract_strided_slice %273 {offsets = [0, 640], sizes = [64, 64], strides = [1, 1]} : vector<64x1024xf32> to vector<64x64xf32>
    %296 = vector.extract_strided_slice %273 {offsets = [0, 704], sizes = [64, 64], strides = [1, 1]} : vector<64x1024xf32> to vector<64x64xf32>
    %297 = vector.shape_cast %293 : vector<64x64xf32> to vector<1x64x64xf32>
    %298 = vector.shape_cast %294 : vector<64x64xf32> to vector<1x64x64xf32>
    %299 = vector.shape_cast %295 : vector<64x64xf32> to vector<1x64x64xf32>
    %300 = vector.shape_cast %296 : vector<64x64xf32> to vector<1x64x64xf32>
    %301 = tpu.concatenate %297, %298, %299, %300 in 0 : vector<1x64x64xf32>, vector<1x64x64xf32>, vector<1x64x64xf32>, vector<1x64x64xf32> -> vector<4x64x64xf32>
    "tpu.trace_start"() <{level = 10 : i32, message = "hnd,hmd->hnm"}> : () -> ()
    %cst_48 = arith.constant dense<0.000000e+00> : vector<4x64x64xf32>
    %302 = tpu.matmul %283, %292, %cst_48 {dimension_numbers = #tpu.dot_dimension_numbers<[2], [2], [1], [1], [0, 0, 0, 1, 1, 1], [0], [0]>} : vector<4x64x64xf32>, vector<4x64x64xf32>, vector<4x64x64xf32> -> vector<4x64x64xf32>
    "tpu.trace_stop"() : () -> ()
    %cst_49 = arith.constant dense<0xFF800000> : vector<4x64xf32>
    %303 = vector.multi_reduction <maximumf>, %302, %cst_49 [2] : vector<4x64x64xf32> to vector<4x64xf32>
    %304 = vector.shape_cast %303 : vector<4x64xf32> to vector<4x64x1xf32>
    %305 = vector.broadcast %304 : vector<4x64x1xf32> to vector<4x64x64xf32>
    %306 = arith.subf %302, %305 : vector<4x64x64xf32>
    %307 = math.exp %306 : vector<4x64x64xf32>
    %cst_50 = arith.constant dense<0.000000e+00> : vector<4x64xf32>
    %308 = vector.multi_reduction <add>, %307, %cst_50 [2] : vector<4x64x64xf32> to vector<4x64xf32>
    %309 = vector.shape_cast %308 : vector<4x64xf32> to vector<4x64x1xf32>
    %310 = tpu.reciprocal %309 : vector<4x64x1xf32> -> vector<4x64x1xf32>
    %311 = vector.broadcast %310 : vector<4x64x1xf32> to vector<4x64x64xf32>
    %312 = arith.mulf %307, %311 : vector<4x64x64xf32>
    "tpu.trace_start"() <{level = 10 : i32, message = "hnm,hmd->hnd"}> : () -> ()
    %cst_51 = arith.constant dense<0.000000e+00> : vector<4x64x64xf32>
    %313 = tpu.matmul %312, %301, %cst_51 {dimension_numbers = #tpu.dot_dimension_numbers<[2], [1], [1], [2], [0, 0, 0, 1, 1, 2], [0], [0]>} : vector<4x64x64xf32>, vector<4x64x64xf32>, vector<4x64x64xf32> -> vector<4x64x64xf32>
    "tpu.trace_stop"() : () -> ()
    %314 = vector.extract_strided_slice %313 {offsets = [0, 0, 0], sizes = [1, 64, 64], strides = [1, 1, 1]} : vector<4x64x64xf32> to vector<1x64x64xf32>
    %315 = vector.shape_cast %314 : vector<1x64x64xf32> to vector<64x64xf32>
    %316 = vector.extract_strided_slice %313 {offsets = [1, 0, 0], sizes = [1, 64, 64], strides = [1, 1, 1]} : vector<4x64x64xf32> to vector<1x64x64xf32>
    %317 = vector.shape_cast %316 : vector<1x64x64xf32> to vector<64x64xf32>
    %318 = vector.extract_strided_slice %313 {offsets = [2, 0, 0], sizes = [1, 64, 64], strides = [1, 1, 1]} : vector<4x64x64xf32> to vector<1x64x64xf32>
    %319 = vector.shape_cast %318 : vector<1x64x64xf32> to vector<64x64xf32>
    %320 = vector.extract_strided_slice %313 {offsets = [3, 0, 0], sizes = [1, 64, 64], strides = [1, 1, 1]} : vector<4x64x64xf32> to vector<1x64x64xf32>
    %321 = vector.shape_cast %320 : vector<1x64x64xf32> to vector<64x64xf32>
    %322 = tpu.concatenate %315, %317, %319, %321 in 1 : vector<64x64xf32>, vector<64x64xf32>, vector<64x64xf32>, vector<64x64xf32> -> vector<64x256xf32>
    %323 = arith.addf %322, %274 : vector<64x256xf32>
    %c0_52 = arith.constant 0 : index
    %c2560 = arith.constant 2560 : index
    %324 = vector.load %arg3[%c0_52, %c2560] : memref<1x3712xf32, #tpu.memory_space<vmem>>, vector<1x256xf32>
    %c0_53 = arith.constant 0 : index
    %c2816 = arith.constant 2816 : index
    %325 = vector.load %arg3[%c0_53, %c2816] : memref<1x3712xf32, #tpu.memory_space<vmem>>, vector<1x256xf32>
    %c0_54 = arith.constant 0 : index
    %c3072 = arith.constant 3072 : index
    %326 = vector.load %arg3[%c0_54, %c3072] : memref<1x3712xf32, #tpu.memory_space<vmem>>, vector<1x256xf32>
    %cst_55 = arith.constant dense<0.000000e+00> : vector<256xf32>
    %327 = vector.multi_reduction <add>, %323, %cst_55 [0] : vector<64x256xf32> to vector<256xf32>
    %328 = vector.shape_cast %327 : vector<256xf32> to vector<1x256xf32>
    %cst_56 = arith.constant 1.562500e-02 : f32
    %329 = vector.broadcast %cst_56 : f32 to vector<1x256xf32>
    %330 = arith.mulf %328, %329 : vector<1x256xf32>
    %331 = arith.mulf %330, %326 : vector<1x256xf32>
    %332 = vector.broadcast %331 : vector<1x256xf32> to vector<64x256xf32>
    %333 = arith.subf %323, %332 : vector<64x256xf32>
    %334 = arith.mulf %333, %333 : vector<64x256xf32>
    %cst_57 = arith.constant dense<0.000000e+00> : vector<256xf32>
    %335 = vector.multi_reduction <add>, %334, %cst_57 [0] : vector<64x256xf32> to vector<256xf32>
    %336 = vector.shape_cast %335 : vector<256xf32> to vector<1x256xf32>
    %cst_58 = arith.constant 1.562500e-02 : f32
    %337 = vector.broadcast %cst_58 : f32 to vector<1x256xf32>
    %338 = arith.mulf %336, %337 : vector<1x256xf32>
    %339 = vector.broadcast %324 : vector<1x256xf32> to vector<64x256xf32>
    %340 = arith.mulf %339, %333 : vector<64x256xf32>
    %cst_59 = arith.constant 9.99999974E-6 : f32
    %341 = vector.broadcast %cst_59 : f32 to vector<1x256xf32>
    %342 = arith.addf %338, %341 : vector<1x256xf32>
    %343 = math.rsqrt %342 : vector<1x256xf32>
    %344 = vector.broadcast %343 : vector<1x256xf32> to vector<64x256xf32>
    %345 = arith.mulf %340, %344 : vector<64x256xf32>
    %346 = vector.broadcast %325 : vector<1x256xf32> to vector<64x256xf32>
    %347 = arith.addf %345, %346 : vector<64x256xf32>
    %c48 = arith.constant 48 : index
    %c0_60 = arith.constant 0 : index
    %348 = vector.load %arg1[%c48, %c0_60] : memref<304x256xf32, #tpu.memory_space<vmem>>, vector<256x128xf32>
    %c0_61 = arith.constant 0 : index
    %c1408 = arith.constant 1408 : index
    %349 = vector.load %arg3[%c0_61, %c1408] : memref<1x3712xf32, #tpu.memory_space<vmem>>, vector<1x128xf32>
    %cst_62 = arith.constant dense<0.000000e+00> : vector<64x128xf32>
    %350 = tpu.matmul %347, %348, %cst_62 {dimension_numbers = #tpu.dot_dimension_numbers<[1], [0], [0], [1], [0, 0, 1, 1], [], []>} : vector<64x256xf32>, vector<256x128xf32>, vector<64x128xf32> -> vector<64x128xf32>
    %351 = vector.broadcast %349 : vector<1x128xf32> to vector<64x128xf32>
    %352 = arith.addf %350, %351 : vector<64x128xf32>
    %353 = vector.extract_strided_slice %352 {offsets = [0, 96], sizes = [64, 32], strides = [1, 1]} : vector<64x128xf32> to vector<64x32xf32>
    %354 = vector.extract_strided_slice %352 {offsets = [0, 0], sizes = [64, 8], strides = [1, 1]} : vector<64x128xf32> to vector<64x8xf32>
    %355 = vector.extract_strided_slice %352 {offsets = [0, 8], sizes = [64, 8], strides = [1, 1]} : vector<64x128xf32> to vector<64x8xf32>
    %356 = vector.extract_strided_slice %352 {offsets = [0, 16], sizes = [64, 8], strides = [1, 1]} : vector<64x128xf32> to vector<64x8xf32>
    %357 = vector.extract_strided_slice %352 {offsets = [0, 24], sizes = [64, 8], strides = [1, 1]} : vector<64x128xf32> to vector<64x8xf32>
    %358 = vector.shape_cast %354 : vector<64x8xf32> to vector<1x64x8xf32>
    %359 = vector.shape_cast %355 : vector<64x8xf32> to vector<1x64x8xf32>
    %360 = vector.shape_cast %356 : vector<64x8xf32> to vector<1x64x8xf32>
    %361 = vector.shape_cast %357 : vector<64x8xf32> to vector<1x64x8xf32>
    %362 = tpu.concatenate %358, %359, %360, %361 in 0 : vector<1x64x8xf32>, vector<1x64x8xf32>, vector<1x64x8xf32>, vector<1x64x8xf32> -> vector<4x64x8xf32>
    %363 = vector.extract_strided_slice %352 {offsets = [0, 32], sizes = [64, 8], strides = [1, 1]} : vector<64x128xf32> to vector<64x8xf32>
    %364 = vector.extract_strided_slice %352 {offsets = [0, 40], sizes = [64, 8], strides = [1, 1]} : vector<64x128xf32> to vector<64x8xf32>
    %365 = vector.extract_strided_slice %352 {offsets = [0, 48], sizes = [64, 8], strides = [1, 1]} : vector<64x128xf32> to vector<64x8xf32>
    %366 = vector.extract_strided_slice %352 {offsets = [0, 56], sizes = [64, 8], strides = [1, 1]} : vector<64x128xf32> to vector<64x8xf32>
    %367 = vector.shape_cast %363 : vector<64x8xf32> to vector<1x64x8xf32>
    %368 = vector.shape_cast %364 : vector<64x8xf32> to vector<1x64x8xf32>
    %369 = vector.shape_cast %365 : vector<64x8xf32> to vector<1x64x8xf32>
    %370 = vector.shape_cast %366 : vector<64x8xf32> to vector<1x64x8xf32>
    %371 = tpu.concatenate %367, %368, %369, %370 in 0 : vector<1x64x8xf32>, vector<1x64x8xf32>, vector<1x64x8xf32>, vector<1x64x8xf32> -> vector<4x64x8xf32>
    %372 = vector.extract_strided_slice %352 {offsets = [0, 64], sizes = [64, 8], strides = [1, 1]} : vector<64x128xf32> to vector<64x8xf32>
    %373 = vector.extract_strided_slice %352 {offsets = [0, 72], sizes = [64, 8], strides = [1, 1]} : vector<64x128xf32> to vector<64x8xf32>
    %374 = vector.extract_strided_slice %352 {offsets = [0, 80], sizes = [64, 8], strides = [1, 1]} : vector<64x128xf32> to vector<64x8xf32>
    %375 = vector.extract_strided_slice %352 {offsets = [0, 88], sizes = [64, 8], strides = [1, 1]} : vector<64x128xf32> to vector<64x8xf32>
    %376 = vector.shape_cast %372 : vector<64x8xf32> to vector<1x64x8xf32>
    %377 = vector.shape_cast %373 : vector<64x8xf32> to vector<1x64x8xf32>
    %378 = vector.shape_cast %374 : vector<64x8xf32> to vector<1x64x8xf32>
    %379 = vector.shape_cast %375 : vector<64x8xf32> to vector<1x64x8xf32>
    %380 = tpu.concatenate %376, %377, %378, %379 in 0 : vector<1x64x8xf32>, vector<1x64x8xf32>, vector<1x64x8xf32>, vector<1x64x8xf32> -> vector<4x64x8xf32>
    "tpu.trace_start"() <{level = 10 : i32, message = "hnd,hmd->hnm"}> : () -> ()
    %cst_63 = arith.constant dense<0.000000e+00> : vector<4x64x64xf32>
    %381 = tpu.matmul %362, %371, %cst_63 {dimension_numbers = #tpu.dot_dimension_numbers<[2], [2], [1], [1], [0, 0, 0, 1, 1, 1], [0], [0]>} : vector<4x64x8xf32>, vector<4x64x8xf32>, vector<4x64x64xf32> -> vector<4x64x64xf32>
    "tpu.trace_stop"() : () -> ()
    %cst_64 = arith.constant dense<0xFF800000> : vector<4x64xf32>
    %382 = vector.multi_reduction <maximumf>, %381, %cst_64 [2] : vector<4x64x64xf32> to vector<4x64xf32>
    %383 = vector.shape_cast %382 : vector<4x64xf32> to vector<4x64x1xf32>
    %384 = vector.broadcast %383 : vector<4x64x1xf32> to vector<4x64x64xf32>
    %385 = arith.subf %381, %384 : vector<4x64x64xf32>
    %386 = math.exp %385 : vector<4x64x64xf32>
    %cst_65 = arith.constant dense<0.000000e+00> : vector<4x64xf32>
    %387 = vector.multi_reduction <add>, %386, %cst_65 [2] : vector<4x64x64xf32> to vector<4x64xf32>
    %388 = vector.shape_cast %387 : vector<4x64xf32> to vector<4x64x1xf32>
    %389 = tpu.reciprocal %388 : vector<4x64x1xf32> -> vector<4x64x1xf32>
    %390 = vector.broadcast %389 : vector<4x64x1xf32> to vector<4x64x64xf32>
    %391 = arith.mulf %386, %390 : vector<4x64x64xf32>
    "tpu.trace_start"() <{level = 10 : i32, message = "hnm,hmd->hnd"}> : () -> ()
    %cst_66 = arith.constant dense<0.000000e+00> : vector<4x64x8xf32>
    %392 = tpu.matmul %391, %380, %cst_66 {dimension_numbers = #tpu.dot_dimension_numbers<[2], [1], [1], [2], [0, 0, 0, 1, 1, 2], [0], [0]>} : vector<4x64x64xf32>, vector<4x64x8xf32>, vector<4x64x8xf32> -> vector<4x64x8xf32>
    "tpu.trace_stop"() : () -> ()
    %393 = vector.extract_strided_slice %392 {offsets = [0, 0, 0], sizes = [1, 64, 8], strides = [1, 1, 1]} : vector<4x64x8xf32> to vector<1x64x8xf32>
    %394 = vector.shape_cast %393 : vector<1x64x8xf32> to vector<64x8xf32>
    %395 = vector.extract_strided_slice %392 {offsets = [1, 0, 0], sizes = [1, 64, 8], strides = [1, 1, 1]} : vector<4x64x8xf32> to vector<1x64x8xf32>
    %396 = vector.shape_cast %395 : vector<1x64x8xf32> to vector<64x8xf32>
    %397 = vector.extract_strided_slice %392 {offsets = [2, 0, 0], sizes = [1, 64, 8], strides = [1, 1, 1]} : vector<4x64x8xf32> to vector<1x64x8xf32>
    %398 = vector.shape_cast %397 : vector<1x64x8xf32> to vector<64x8xf32>
    %399 = vector.extract_strided_slice %392 {offsets = [3, 0, 0], sizes = [1, 64, 8], strides = [1, 1, 1]} : vector<4x64x8xf32> to vector<1x64x8xf32>
    %400 = vector.shape_cast %399 : vector<1x64x8xf32> to vector<64x8xf32>
    %401 = tpu.concatenate %394, %396, %398, %400 in 1 : vector<64x8xf32>, vector<64x8xf32>, vector<64x8xf32>, vector<64x8xf32> -> vector<64x32xf32>
    %402 = arith.addf %401, %353 : vector<64x32xf32>
    %c0_67 = arith.constant 0 : index
    %c3328 = arith.constant 3328 : index
    %403 = vector.load %arg3[%c0_67, %c3328] : memref<1x3712xf32, #tpu.memory_space<vmem>>, vector<1x32xf32>
    %c0_68 = arith.constant 0 : index
    %c3456 = arith.constant 3456 : index
    %404 = vector.load %arg3[%c0_68, %c3456] : memref<1x3712xf32, #tpu.memory_space<vmem>>, vector<1x32xf32>
    %c0_69 = arith.constant 0 : index
    %c3584 = arith.constant 3584 : index
    %405 = vector.load %arg3[%c0_69, %c3584] : memref<1x3712xf32, #tpu.memory_space<vmem>>, vector<1x32xf32>
    %cst_70 = arith.constant dense<0.000000e+00> : vector<32xf32>
    %406 = vector.multi_reduction <add>, %402, %cst_70 [0] : vector<64x32xf32> to vector<32xf32>
    %407 = vector.shape_cast %406 : vector<32xf32> to vector<1x32xf32>
    %cst_71 = arith.constant 1.562500e-02 : f32
    %408 = vector.broadcast %cst_71 : f32 to vector<1x32xf32>
    %409 = arith.mulf %407, %408 : vector<1x32xf32>
    %410 = arith.mulf %409, %405 : vector<1x32xf32>
    %411 = vector.broadcast %410 : vector<1x32xf32> to vector<64x32xf32>
    %412 = arith.subf %402, %411 : vector<64x32xf32>
    %413 = arith.mulf %412, %412 : vector<64x32xf32>
    %cst_72 = arith.constant dense<0.000000e+00> : vector<32xf32>
    %414 = vector.multi_reduction <add>, %413, %cst_72 [0] : vector<64x32xf32> to vector<32xf32>
    %415 = vector.shape_cast %414 : vector<32xf32> to vector<1x32xf32>
    %cst_73 = arith.constant 1.562500e-02 : f32
    %416 = vector.broadcast %cst_73 : f32 to vector<1x32xf32>
    %417 = arith.mulf %415, %416 : vector<1x32xf32>
    %418 = vector.broadcast %403 : vector<1x32xf32> to vector<64x32xf32>
    %419 = arith.mulf %418, %412 : vector<64x32xf32>
    %cst_74 = arith.constant 9.99999974E-6 : f32
    %420 = vector.broadcast %cst_74 : f32 to vector<1x32xf32>
    %421 = arith.addf %417, %420 : vector<1x32xf32>
    %422 = math.rsqrt %421 : vector<1x32xf32>
    %423 = vector.broadcast %422 : vector<1x32xf32> to vector<64x32xf32>
    %424 = arith.mulf %419, %423 : vector<64x32xf32>
    %425 = vector.broadcast %404 : vector<1x32xf32> to vector<64x32xf32>
    %426 = arith.addf %424, %425 : vector<64x32xf32>
    %427 = tpu.transpose %426, [1, 0] : vector<64x32xf32> -> vector<32x64xf32>
    %428 = arith.mulf %427, %427 : vector<32x64xf32>
    %cst_75 = arith.constant dense<0.000000e+00> : vector<32xf32>
    %429 = vector.multi_reduction <add>, %428, %cst_75 [1] : vector<32x64xf32> to vector<32xf32>
    %430 = vector.shape_cast %429 : vector<32xf32> to vector<32x1xf32>
    %cst_76 = arith.constant 1.000000e-24 : f32
    %431 = vector.broadcast %cst_76 : f32 to vector<32x1xf32>
    %432 = arith.addf %430, %431 : vector<32x1xf32>
    %433 = math.rsqrt %432 : vector<32x1xf32>
    %434 = vector.broadcast %433 : vector<32x1xf32> to vector<32x64xf32>
    %435 = arith.mulf %427, %434 : vector<32x64xf32>
    %cst_77 = arith.constant dense<0.000000e+00> : vector<32x32xf32>
    %436 = tpu.matmul %435, %435, %cst_77 {dimension_numbers = #tpu.dot_dimension_numbers<[1], [1], [0], [0], [0, 0, 1, 0], [], []>} : vector<32x64xf32>, vector<32x64xf32>, vector<32x32xf32> -> vector<32x32xf32>
    %cst_78 = arith.constant 0.000000e+00 : f32
    %437 = vector.broadcast %cst_78 : f32 to vector<32x32xf32>
    %438 = arith.maximumf %436, %437 : vector<32x32xf32>
    %c0_79 = arith.constant 0 : index
    %c0_80 = arith.constant 0 : index
    %439 = vector.load %arg4[%c0_79, %c0_80] : memref<32x32xf32, #tpu.memory_space<vmem>>, vector<32x32xf32>
    tpu.vector_store %arg4[%c0_79, %c0_80], %438 {strides = array<i32>} : memref<32x32xf32, #tpu.memory_space<vmem>>, vector<32x32xf32>,
    return
  }
}

</mosaic_0001>

<llo_original>
// kernel: perfect_feature_model.1
$region0: #{perfect_feature_model.1}
  #allocation0 [shape = 'u32[]', space=smem, size = 0x4, offset = 0x4, fixed_abs, tag = 'smem constant byte address 0x4 - core index']
  #allocation1 [shape = 'u32[144,128]{1,0:T(1,128)}', space=vmem, size = 0x12000, scoped, tag = 'internal scratch']
  %s0 = inlined_call_operand.hbm [shape: f32[16,16], index: 0, kind: input, shape index: {}]
  %s1 = inlined_call_operand.hbm [shape: f32[304,256], index: 1, kind: input, shape index: {}]
  %s2 = inlined_call_operand.hbm [shape: f32[16,1024], index: 2, kind: input, shape index: {}]
  %s3 = inlined_call_operand.hbm [shape: f32[1,3712], index: 3, kind: input, shape index: {}]
  %s4 = inlined_call_operand.hbm [shape: f32[32,32], index: 4, kind: output, shape index: {0}]
  %s5 = inlined_call_operand.hbm [shape: f32[16,16], index: 5, kind: output, shape index: {1}]
  %6 = xla_tuple %s4, %s5
  %s7 = sld [smem:[#allocation0]]
  $region50: #{perfect_feature_model.1} parent=0
    _
  %s9 = ssub.s32 1, %s7
  %s10 = scalar_select 0, %s9, %s7
  $region1: #{perfect_feature_model.1} parent=0
    #allocation2 [shape = 'u8[8192]{0}', space=vmem, size = 0x2000, scoped, tag = 'input window, operand 0, single buffered']
    #allocation3 [shape = 's32[1]{0}', space=sflag, size = 0x4, scoped, tag = 'scoped memory for perfect_feature_model.1']
    #allocation4 [shape = 's32[1]{0}', space=sflag, size = 0x4, scoped, tag = 'scoped memory for perfect_feature_model.1']
    #allocation5 [shape = 'u8[311296]{0}', space=vmem, size = 0x4c000, scoped, tag = 'input window, operand 1, single buffered']
    #allocation6 [shape = 's32[1]{0}', space=sflag, size = 0x4, scoped, tag = 'scoped memory for perfect_feature_model.1']
    #allocation7 [shape = 'u8[65536]{0}', space=vmem, size = 0x10000, scoped, tag = 'input window, operand 2, single buffered']
    #allocation8 [shape = 'u8[14848]{0}', space=vmem, size = 0x3c00, scoped, tag = 'input window, operand 3, single buffered']
    #allocation9 [shape = 's32[1]{0}', space=sflag, size = 0x4, scoped, tag = 'scoped memory for perfect_feature_model.1']
    #allocation10 [shape = 'u8[16384]{0}', space=vmem, size = 0x4000, scoped, tag = 'output window, operand 0, single buffered']
    #allocation11 [shape = 'u8[8192]{0}', space=vmem, size = 0x2000, scoped, tag = 'output window, operand 1, single buffered']
    #allocation12 [shape = 's32[1]{0}', space=sflag, size = 0x4, scoped, tag = 'scoped memory for perfect_feature_model.1']
    %11 = vsyncpa [#allocation3], 0
    %12 = vsyncpa [#allocation6], 0
    %13 = vsyncpa [#allocation9], 0
    %14 = vsyncpa [#allocation4], 0
    %15 = vsyncpa [#allocation12], 0
    // Predicated region
    $region2: #{perfect_feature_model.1} parent=1 // pred_check
      _
    $region3: #{perfect_feature_model.1} parent=1 // pred_check_branch
      %17 = sbr.rel (0) target = $region5
    $region4: #{perfect_feature_model.1} parent=1 // pred_region
      %s19 = ssub.s32 256, 256
      %20 = vsyncadd [#allocation3], %s19
      %s21 = sshll.u32 [#allocation2], 4
      %s22 = int_to_ptr.vmem [resolvable:$true] %s21
      %27 = dma.hbm_to_vmem [thread:$0]  %s0, 256, %s22, [#allocation3], 128, 128, 8
    $region5: #{perfect_feature_model.1} parent=1 // pred_fallthru
      _
    // Predicated region
    $region6: #{perfect_feature_model.1} parent=1 // pred_check
      _
    $region7: #{perfect_feature_model.1} parent=1 // pred_check_branch
      %29 = sbr.rel (0) target = $region9
    $region8: #{perfect_feature_model.1} parent=1 // pred_region
      %s31 = ssub.s32 9728, 9728
      %32 = vsyncadd [#allocation6], %s31
      %s33 = sshll.u32 [#allocation5], 4
      %s34 = int_to_ptr.vmem [resolvable:$true] %s33
      %39 = dma.hbm_to_vmem [thread:$0]  %s1, 9728, %s34, [#allocation6], 256, 256, 16
    $region9: #{perfect_feature_model.1} parent=1 // pred_fallthru
      _
    // Predicated region
    $region10: #{perfect_feature_model.1} parent=1 // pred_check
      _
    $region11: #{perfect_feature_model.1} parent=1 // pred_check_branch
      %41 = sbr.rel (0) target = $region13
    $region12: #{perfect_feature_model.1} parent=1 // pred_region
      %s43 = ssub.s32 2048, 2048
      %44 = vsyncadd [#allocation6], %s43
      %s45 = sshll.u32 [#allocation7], 4
      %s46 = int_to_ptr.vmem [resolvable:$true] %s45
      %51 = dma.hbm_to_vmem [thread:$0]  %s2, 2048, %s46, [#allocation6], 1024, 1024, 64
    $region13: #{perfect_feature_model.1} parent=1 // pred_fallthru
      _
    // Predicated region
    $region14: #{perfect_feature_model.1} parent=1 // pred_check
      _
    $region15: #{perfect_feature_model.1} parent=1 // pred_check_branch
      %53 = sbr.rel (0) target = $region17
    $region16: #{perfect_feature_model.1} parent=1 // pred_region
      %s55 = ssub.s32 464, 464
      %56 = vsyncadd [#allocation9], %s55
      %s58 = sshll.u32 [#allocation8], 4
      %s59 = int_to_ptr.vmem [resolvable:$true] %s58
      %61 = dma.hbm_to_vmem [thread:$0]  %s3, 464, %s59, [#allocation9]
    $region17: #{perfect_feature_model.1} parent=1 // pred_fallthru
      _
    // Predicated region
    $region18: #{perfect_feature_model.1} parent=1 // pred_check
      _
    $region19: #{perfect_feature_model.1} parent=1 // pred_check_branch
      %63 = sbr.rel (0) target = $region21
    $region20: #{perfect_feature_model.1} parent=1 // pred_region
      %64 = dma.done [#allocation3], 256
    $region21: #{perfect_feature_model.1} parent=1 // pred_fallthru
      _
    // Predicated region
    $region22: #{perfect_feature_model.1} parent=1 // pred_check
      _
    $region23: #{perfect_feature_model.1} parent=1 // pred_check_branch
      %66 = sbr.rel (0) target = $region25
    $region24: #{perfect_feature_model.1} parent=1 // pred_region
      %67 = dma.done [#allocation6], 9728
    $region25: #{perfect_feature_model.1} parent=1 // pred_fallthru
      _
    // Predicated region
    $region26: #{perfect_feature_model.1} parent=1 // pred_check
      _
    $region27: #{perfect_feature_model.1} parent=1 // pred_check_branch
      %69 = sbr.rel (0) target = $region29
    $region28: #{perfect_feature_model.1} parent=1 // pred_region
      %70 = dma.done [#allocation6], 2048
    $region29: #{perfect_feature_model.1} parent=1 // pred_fallthru
      _
    // Predicated region
    $region30: #{perfect_feature_model.1} parent=1 // pred_check
      _
    $region31: #{perfect_feature_model.1} parent=1 // pred_check_branch
      %72 = sbr.rel (0) target = $region33
    $region32: #{perfect_feature_model.1} parent=1 // pred_region
      %73 = dma.done [#allocation9], 464
    $region33: #{perfect_feature_model.1} parent=1 // pred_fallthru
      _
    %v74 = vld [vmem:[#allocation2] sm:$0xff]
    %v75 = vld [vmem:[#allocation2 + $0x8] sm:$0xff]
    %76 = vxpose.xlu0.b32.start [1/16] %v74, 128
    %77 = vxpose.xlu0.b32.cont [2/16] %v75, 128
    %78 = vxpose.xlu0.b32.cont [3/16] 0.0, 128
    %79 = vxpose.xlu0.b32.cont [4/16] 0.0, 128
    %80 = vxpose.xlu0.b32.cont [5/16] 0.0, 128
    %81 = vxpose.xlu0.b32.cont [6/16] 0.0, 128
    %82 = vxpose.xlu0.b32.cont [7/16] 0.0, 128
    %83 = vxpose.xlu0.b32.cont [8/16] 0.0, 128
    %84 = vxpose.xlu0.b32.cont [9/16] 0.0, 128
    %85 = vxpose.xlu0.b32.cont [10/16] 0.0, 128
    %86 = vxpose.xlu0.b32.cont [11/16] 0.0, 128
    %87 = vxpose.xlu0.b32.cont [12/16] 0.0, 128
    %88 = vxpose.xlu0.b32.cont [13/16] 0.0, 128
    %89 = vxpose.xlu0.b32.cont [14/16] 0.0, 128
    %90 = vxpose.xlu0.b32.cont [15/16] 0.0, 128
    %91 = vxpose.xlu0.b32.end [16/16] 0.0, 128
    %v92 = vpop.trf.xlu0
    %v93 = vpop.trf.xlu0
    %v94 = vpop.trf.xlu0
    %v95 = vpop.trf.xlu0
    %v96 = vpop.trf.xlu0
    %v97 = vpop.trf.xlu0
    %v98 = vpop.trf.xlu0
    %v99 = vpop.trf.xlu0
    %v100 = vpop.trf.xlu0
    %v101 = vpop.trf.xlu0
    %v102 = vpop.trf.xlu0
    %v103 = vpop.trf.xlu0
    %v104 = vpop.trf.xlu0
    %v105 = vpop.trf.xlu0
    %v106 = vpop.trf.xlu0
    %v107 = vpop.trf.xlu0
    %v108 = vld [vmem:[#allocation5] sm:$0xff]
    %v109 = vld [vmem:[#allocation5 + $0x10] sm:$0xff]
    %v110 = vld [vmem:[#allocation8] sm:$0x1]
    %v111 = vld [vmem:[#allocation8 + $0xc] sm:$0x1]
    %v113 = vlaneseq
    %v114 = vshrl.u32 %v113, 7
    %v115 = vsub.s32 0, %v114
    %v116 = vrot.slane %v110, %v115
    %vm118 = vcmask 130048
    %v120 = vsel %vm118, %v74, 0
    %v123 = vsel %vm118, %v75, 0
    %125 = vmatprep.subr.mxu0 0.0
    %126 = vmatpush1.msra.mxu0 %v108
    %127 = vmatprep.subr.mxu0 0.0
    %128 = vmatpush1.msra.mxu0 %v109
    %129 = vmatprep.subr.mxu0 0.0
    %130 = vmatpush1.msra.mxu0 0.0
    %131 = vmatprep.subr.mxu0 0.0
    %132 = vmatpush1.msra.mxu0 0.0
    %133 = vmatprep.subr.mxu0 0.0
    %134 = vmatpush1.msra.mxu0 0.0
    %135 = vmatprep.subr.mxu0 0.0
    %136 = vmatpush1.msra.mxu0 0.0
    %137 = vmatprep.subr.mxu0 0.0
    %138 = vmatpush1.msra.mxu0 0.0
    %139 = vmatprep.subr.mxu0 0.0
    %140 = vmatpush1.msra.mxu0 0.0
    %141 = vmatprep.subr.mxu0 0.0
    %142 = vmatpush1.msra.mxu0 0.0
    %143 = vmatprep.subr.mxu0 0.0
    %144 = vmatpush1.msra.mxu0 0.0
    %145 = vmatprep.subr.mxu0 0.0
    %146 = vmatpush1.msra.mxu0 0.0
    %147 = vmatprep.subr.mxu0 0.0
    %148 = vmatpush1.msra.mxu0 0.0
    %149 = vmatprep.subr.mxu0 0.0
    %150 = vmatpush1.msra.mxu0 0.0
    %151 = vmatprep.subr.mxu0 0.0
    %152 = vmatpush1.msra.mxu0 0.0
    %153 = vmatprep.subr.mxu0 0.0
    %154 = vmatpush1.msra.mxu0 0.0
    %155 = vmatprep.subr.mxu0 0.0
    %156 = vmatpush1.msra.mxu0 0.0
    %157 = vmatprep.subr.mxu0 0.0
    %158 = vmatpush1.msra.mxu0 0.0
    %159 = vmatprep.subr.mxu0 0.0
    %160 = vmatpush1.msra.mxu0 0.0
    %161 = vmatprep.subr.mxu0 0.0
    %162 = vmatpush1.msra.mxu0 0.0
    %163 = vmatprep.subr.mxu0 0.0
    %164 = vmatpush1.msra.mxu0 0.0
    %165 = vmatprep.subr.mxu0 0.0
    %166 = vmatpush1.msra.mxu0 0.0
    %167 = vmatprep.subr.mxu0 0.0
    %168 = vmatpush1.msra.mxu0 0.0
    %169 = vmatprep.subr.mxu0 0.0
    %170 = vmatpush1.msra.mxu0 0.0
    %171 = vmatprep.subr.mxu0 0.0
    %172 = vmatpush1.msra.mxu0 0.0
    %173 = vmatprep.subr.mxu0 0.0
    %174 = vmatpush1.msra.mxu0 0.0
    %175 = vmatprep.subr.mxu0 0.0
    %176 = vmatpush1.msra.mxu0 0.0
    %177 = vmatprep.subr.mxu0 0.0
    %178 = vmatpush1.msra.mxu0 0.0
    %179 = vmatprep.subr.mxu0 0.0
    %180 = vmatpush1.msra.mxu0 0.0
    %181 = vmatprep.subr.mxu0 0.0
    %182 = vmatpush1.msra.mxu0 0.0
    %183 = vmatprep.subr.mxu0 0.0
    %184 = vmatpush1.msra.mxu0 0.0
    %185 = vmatprep.subr.mxu0 0.0
    %186 = vmatpush1.msra.mxu0 0.0
    %187 = vmatprep.subr.mxu0 0.0
    %188 = vmatpush1.msra.mxu0 0.0
    %189 = vmatprep.mubr.f32.mxu0 0.0
    %190 = vmatmul.mubr.f32.gmra.mrb[0].mxu0 %v120
    %v191 = vpop.f32.mrb[0].mxu0
    %v192 = vadd.f32 %v116, %v191
    %v193 = vpop.f32.mrb[0].mxu0
    %194 = vmatprep.mubr.f32.mxu0 0.0
    %195 = vmatmul.mubr.f32.gmra.mrb[0].mxu0 %v123
    %v196 = vpop.f32.mrb[0].mxu0
    %v197 = vadd.f32 %v116, %v196
    %v198 = vpop.f32.mrb[0].mxu0
    %199 = vdwg.mxu0
    %202 = vrot.lane.b32.xlu0 %v192, 120
    %v203 = vpop.permute.xlu0 %202
    %204 = vrot.lane.b32.xlu0 %v197, 120
    %v205 = vpop.permute.xlu0 %204
    %208 = vrot.lane.b32.xlu0 %v192, 112
    %v209 = vpop.permute.xlu0 %208
    %210 = vrot.lane.b32.xlu0 %v197, 112
    %v211 = vpop.permute.xlu0 %210
    %214 = vrot.lane.b32.xlu0 %v192, 104
    %v215 = vpop.permute.xlu0 %214
    %216 = vrot.lane.b32.xlu0 %v197, 104
    %v217 = vpop.permute.xlu0 %216
    %221 = vrot.lane.b32.xlu0 %v111, 120
    %v222 = vpop.permute.xlu0 %221
    %223 = vrot.lane.b32.xlu0 %v111, 112
    %v224 = vpop.permute.xlu0 %223
    %225 = vrot.lane.b32.xlu0 %v111, 104
    %v226 = vpop.permute.xlu0 %225
    %v227 = vlaneseq
    %v228 = vshrl.u32 %v227, 7
    %v229 = vsub.s32 0, %v228
    %v230 = vrot.slane %v111, %v229
    %v231 = vlaneseq
    %v232 = vshrl.u32 %v231, 7
    %v233 = vsub.s32 0, %v232
    %v234 = vrot.slane %v222, %v233
    %v235 = vlaneseq
    %v236 = vshrl.u32 %v235, 7
    %v237 = vsub.s32 0, %v236
    %v238 = vrot.slane %v224, %v237
    %v239 = vlaneseq
    %v240 = vshrl.u32 %v239, 7
    %v241 = vsub.s32 0, %v240
    %v242 = vrot.slane %v226, %v241
    %v247 = vmul.f32 %v192, %v230
    %v248 = vmul.f32 %v197, %v230
    %v249 = vmul.f32 %v203, %v234
    %v250 = vmul.f32 %v205, %v234
    %v251 = vmul.f32 %v209, %v238
    %v252 = vmul.f32 %v211, %v238
    %v253 = vmul.f32 %v215, %v242
    %v254 = vmul.f32 %v217, %v242
    %vm255 = vcmask 64512
    %v256 = vsel %vm255, %v247, 0.0
    %257 = vadd.xlane.f32.xlu0 %v256
    %v258 = vpop.xlane.xlu0 %257
    %v259 = vsel %vm255, %v248, 0.0
    %260 = vadd.xlane.f32.xlu0 %v259
    %v261 = vpop.xlane.xlu0 %260
    %v262 = vsel %vm255, %v249, 0.0
    %263 = vadd.xlane.f32.xlu0 %v262
    %v264 = vpop.xlane.xlu0 %263
    %v265 = vsel %vm255, %v250, 0.0
    %266 = vadd.xlane.f32.xlu0 %v265
    %v267 = vpop.xlane.xlu0 %266
    %v268 = vsel %vm255, %v251, 0.0
    %269 = vadd.xlane.f32.xlu0 %v268
    %v270 = vpop.xlane.xlu0 %269
    %v271 = vsel %vm255, %v252, 0.0
    %272 = vadd.xlane.f32.xlu0 %v271
    %v273 = vpop.xlane.xlu0 %272
    %v274 = vsel %vm255, %v253, 0.0
    %275 = vadd.xlane.f32.xlu0 %v274
    %v276 = vpop.xlane.xlu0 %275
    %v277 = vsel %vm255, %v254, 0.0
    %278 = vadd.xlane.f32.xlu0 %v277
    %v279 = vpop.xlane.xlu0 %278
    %v280 = vmul.f32 %v258, %v92
    %v281 = vmul.f32 %v261, %v93
    %v282 = vmul.f32 %v264, %v92
    %v283 = vmul.f32 %v267, %v93
    %v284 = vmul.f32 %v270, %v92
    %v285 = vmul.f32 %v273, %v93
    %v286 = vmul.f32 %v276, %v92
    %v287 = vmul.f32 %v279, %v93
    %288 = vrot.lane.b32.xlu0 %v192, 96
    %v289 = vpop.permute.xlu0 %288
    %290 = vrot.lane.b32.xlu0 %v197, 96
    %v291 = vpop.permute.xlu0 %290
    %v292 = vsel %vm255, %v192, 0
    %v294 = vsel %vm255, %v197, 0
    %v296 = vsel %vm255, %v289, 0
    %v298 = vsel %vm255, %v291, 0
    %300 = vmatprep.subr.mxu0 0.0
    %301 = vmatpush1.xpose.msra.mxu0 %v296
    %302 = vmatprep.subr.mxu0 0.0
    %303 = vmatpush1.xpose.msra.mxu0 %v298
    %304 = vmatprep.subr.mxu0 0.0
    %305 = vmatpush1.xpose.msra.mxu0 0.0
    %306 = vmatprep.subr.mxu0 0.0
    %307 = vmatpush1.xpose.msra.mxu0 0.0
    %308 = vmatprep.subr.mxu0 0.0
    %309 = vmatpush1.xpose.msra.mxu0 0.0
    %310 = vmatprep.subr.mxu0 0.0
    %311 = vmatpush1.xpose.msra.mxu0 0.0
    %312 = vmatprep.subr.mxu0 0.0
    %313 = vmatpush1.xpose.msra.mxu0 0.0
    %314 = vmatprep.subr.mxu0 0.0
    %315 = vmatpush1.xpose.msra.mxu0 0.0
    %316 = vmatprep.subr.mxu0 0.0
    %317 = vmatpush1.xpose.msra.mxu0 0.0
    %318 = vmatprep.subr.mxu0 0.0
    %319 = vmatpush1.xpose.msra.mxu0 0.0
    %320 = vmatprep.subr.mxu0 0.0
    %321 = vmatpush1.xpose.msra.mxu0 0.0
    %322 = vmatprep.subr.mxu0 0.0
    %323 = vmatpush1.xpose.msra.mxu0 0.0
    %324 = vmatprep.subr.mxu0 0.0
    %325 = vmatpush1.xpose.msra.mxu0 0.0
    %326 = vmatprep.subr.mxu0 0.0
    %327 = vmatpush1.xpose.msra.mxu0 0.0
    %328 = vmatprep.subr.mxu0 0.0
    %329 = vmatpush1.xpose.msra.mxu0 0.0
    %330 = vmatprep.subr.mxu0 0.0
    %331 = vmatpush1.xpose.msra.mxu0 0.0
    %332 = vmatprep.subr.mxu0 0.0
    %333 = vmatpush1.xpose.msra.mxu0 0.0
    %334 = vmatprep.subr.mxu0 0.0
    %335 = vmatpush1.xpose.msra.mxu0 0.0
    %336 = vmatprep.subr.mxu0 0.0
    %337 = vmatpush1.xpose.msra.mxu0 0.0
    %338 = vmatprep.subr.mxu0 0.0
    %339 = vmatpush1.xpose.msra.mxu0 0.0
    %340 = vmatprep.subr.mxu0 0.0
    %341 = vmatpush1.xpose.msra.mxu0 0.0
    %342 = vmatprep.subr.mxu0 0.0
    %343 = vmatpush1.xpose.msra.mxu0 0.0
    %344 = vmatprep.subr.mxu0 0.0
    %345 = vmatpush1.xpose.msra.mxu0 0.0
    %346 = vmatprep.subr.mxu0 0.0
    %347 = vmatpush1.xpose.msra.mxu0 0.0
    %348 = vmatprep.subr.mxu0 0.0
    %349 = vmatpush1.xpose.msra.mxu0 0.0
    %350 = vmatprep.subr.mxu0 0.0
    %351 = vmatpush1.xpose.msra.mxu0 0.0
    %352 = vmatprep.subr.mxu0 0.0
    %353 = vmatpush1.xpose.msra.mxu0 0.0
    %354 = vmatprep.subr.mxu0 0.0
    %355 = vmatpush1.xpose.msra.mxu0 0.0
    %356 = vmatprep.subr.mxu0 0.0
    %357 = vmatpush1.xpose.msra.mxu0 0.0
    %358 = vmatprep.subr.mxu0 0.0
    %359 = vmatpush1.xpose.msra.mxu0 0.0
    %360 = vmatprep.subr.mxu0 0.0
    %361 = vmatpush1.xpose.msra.mxu0 0.0
    %362 = vmatprep.subr.mxu0 0.0
    %363 = vmatpush1.xpose.msra.mxu0 0.0
    %364 = vmatprep.mubr.f32.mxu0 0.0
    %365 = vmatmul.mubr.f32.gmra.mrb[0].mxu0 %v292
    %v366 = vpop.f32.mrb[0].mxu0
    %v367 = vadd.f32 %v280, %v366
    %v368 = vpop.f32.mrb[0].mxu0
    %369 = vmatprep.mubr.f32.mxu0 0.0
    %370 = vmatmul.mubr.f32.gmra.mrb[0].mxu0 %v294
    %v371 = vpop.f32.mrb[0].mxu0
    %v372 = vadd.f32 %v281, %v371
    %v373 = vpop.f32.mrb[0].mxu0
    %374 = vdwg.mxu0
    %375 = vrot.lane.b32.xlu0 %v203, 96
    %v376 = vpop.permute.xlu0 %375
    %377 = vrot.lane.b32.xlu0 %v205, 96
    %v378 = vpop.permute.xlu0 %377
    %v379 = vsel %vm255, %v203, 0
    %v381 = vsel %vm255, %v205, 0
    %v383 = vsel %vm255, %v376, 0
    %v385 = vsel %vm255, %v378, 0
    %387 = vmatprep.subr.mxu0 0.0
    %388 = vmatpush1.xpose.msra.mxu0 %v383
    %389 = vmatprep.subr.mxu0 0.0
    %390 = vmatpush1.xpose.msra.mxu0 %v385
    %391 = vmatprep.subr.mxu0 0.0
    %392 = vmatpush1.xpose.msra.mxu0 0.0
    %393 = vmatprep.subr.mxu0 0.0
    %394 = vmatpush1.xpose.msra.mxu0 0.0
    %395 = vmatprep.subr.mxu0 0.0
    %396 = vmatpush1.xpose.msra.mxu0 0.0
    %397 = vmatprep.subr.mxu0 0.0
    %398 = vmatpush1.xpose.msra.mxu0 0.0
    %399 = vmatprep.subr.mxu0 0.0
    %400 = vmatpush1.xpose.msra.mxu0 0.0
    %401 = vmatprep.subr.mxu0 0.0
    %402 = vmatpush1.xpose.msra.mxu0 0.0
    %403 = vmatprep.subr.mxu0 0.0
    %404 = vmatpush1.xpose.msra.mxu0 0.0
    %405 = vmatprep.subr.mxu0 0.0
    %406 = vmatpush1.xpose.msra.mxu0 0.0
    %407 = vmatprep.subr.mxu0 0.0
    %408 = vmatpush1.xpose.msra.mxu0 0.0
    %409 = vmatprep.subr.mxu0 0.0
    %410 = vmatpush1.xpose.msra.mxu0 0.0
    %411 = vmatprep.subr.mxu0 0.0
    %412 = vmatpush1.xpose.msra.mxu0 0.0
    %413 = vmatprep.subr.mxu0 0.0
    %414 = vmatpush1.xpose.msra.mxu0 0.0
    %415 = vmatprep.subr.mxu0 0.0
    %416 = vmatpush1.xpose.msra.mxu0 0.0
    %417 = vmatprep.subr.mxu0 0.0
    %418 = vmatpush1.xpose.msra.mxu0 0.0
    %419 = vmatprep.subr.mxu0 0.0
    %420 = vmatpush1.xpose.msra.mxu0 0.0
    %421 = vmatprep.subr.mxu0 0.0
    %422 = vmatpush1.xpose.msra.mxu0 0.0
    %423 = vmatprep.subr.mxu0 0.0
    %424 = vmatpush1.xpose.msra.mxu0 0.0
    %425 = vmatprep.subr.mxu0 0.0
    %426 = vmatpush1.xpose.msra.mxu0 0.0
    %427 = vmatprep.subr.mxu0 0.0
    %428 = vmatpush1.xpose.msra.mxu0 0.0
    %429 = vmatprep.subr.mxu0 0.0
    %430 = vmatpush1.xpose.msra.mxu0 0.0
    %431 = vmatprep.subr.mxu0 0.0
    %432 = vmatpush1.xpose.msra.mxu0 0.0
    %433 = vmatprep.subr.mxu0 0.0
    %434 = vmatpush1.xpose.msra.mxu0 0.0
    %435 = vmatprep.subr.mxu0 0.0
    %436 = vmatpush1.xpose.msra.mxu0 0.0
    %437 = vmatprep.subr.mxu0 0.0
    %438 = vmatpush1.xpose.msra.mxu0 0.0
    %439 = vmatprep.subr.mxu0 0.0
    %440 = vmatpush1.xpose.msra.mxu0 0.0
    %441 = vmatprep.subr.mxu0 0.0
    %442 = vmatpush1.xpose.msra.mxu0 0.0
    %443 = vmatprep.subr.mxu0 0.0
    %444 = vmatpush1.xpose.msra.mxu0 0.0
    %445 = vmatprep.subr.mxu0 0.0
    %446 = vmatpush1.xpose.msra.mxu0 0.0
    %447 = vmatprep.subr.mxu0 0.0
    %448 = vmatpush1.xpose.msra.mxu0 0.0
    %449 = vmatprep.subr.mxu0 0.0
    %450 = vmatpush1.xpose.msra.mxu0 0.0
    %451 = vmatprep.mubr.f32.mxu0 0.0
    %452 = vmatmul.mubr.f32.gmra.mrb[0].mxu0 %v379
    %v453 = vpop.f32.mrb[0].mxu0
    %v454 = vadd.f32 %v282, %v453
    %v455 = vpop.f32.mrb[0].mxu0
    %456 = vmatprep.mubr.f32.mxu0 0.0
    %457 = vmatmul.mubr.f32.gmra.mrb[0].mxu0 %v381
    %v458 = vpop.f32.mrb[0].mxu0
    %v459 = vadd.f32 %v283, %v458
    %v460 = vpop.f32.mrb[0].mxu0
    %461 = vdwg.mxu0
    %462 = vrot.lane.b32.xlu0 %v209, 96
    %v463 = vpop.permute.xlu0 %462
    %464 = vrot.lane.b32.xlu0 %v211, 96
    %v465 = vpop.permute.xlu0 %464
    %v466 = vsel %vm255, %v209, 0
    %v468 = vsel %vm255, %v211, 0
    %v470 = vsel %vm255, %v463, 0
    %v472 = vsel %vm255, %v465, 0
    %474 = vmatprep.subr.mxu0 0.0
    %475 = vmatpush1.xpose.msra.mxu0 %v470
    %476 = vmatprep.subr.mxu0 0.0
    %477 = vmatpush1.xpose.msra.mxu0 %v472
    %478 = vmatprep.subr.mxu0 0.0
    %479 = vmatpush1.xpose.msra.mxu0 0.0
    %480 = vmatprep.subr.mxu0 0.0
    %481 = vmatpush1.xpose.msra.mxu0 0.0
    %482 = vmatprep.subr.mxu0 0.0
    %483 = vmatpush1.xpose.msra.mxu0 0.0
    %484 = vmatprep.subr.mxu0 0.0
    %485 = vmatpush1.xpose.msra.mxu0 0.0
    %486 = vmatprep.subr.mxu0 0.0
    %487 = vmatpush1.xpose.msra.mxu0 0.0
    %488 = vmatprep.subr.mxu0 0.0
    %489 = vmatpush1.xpose.msra.mxu0 0.0
    %490 = vmatprep.subr.mxu0 0.0
    %491 = vmatpush1.xpose.msra.mxu0 0.0
    %492 = vmatprep.subr.mxu0 0.0
    %493 = vmatpush1.xpose.msra.mxu0 0.0
    %494 = vmatprep.subr.mxu0 0.0
    %495 = vmatpush1.xpose.msra.mxu0 0.0
    %496 = vmatprep.subr.mxu0 0.0
    %497 = vmatpush1.xpose.msra.mxu0 0.0
    %498 = vmatprep.subr.mxu0 0.0
    %499 = vmatpush1.xpose.msra.mxu0 0.0
    %500 = vmatprep.subr.mxu0 0.0
    %501 = vmatpush1.xpose.msra.mxu0 0.0
    %502 = vmatprep.subr.mxu0 0.0
    %503 = vmatpush1.xpose.msra.mxu0 0.0
    %504 = vmatprep.subr.mxu0 0.0
    %505 = vmatpush1.xpose.msra.mxu0 0.0
    %506 = vmatprep.subr.mxu0 0.0
    %507 = vmatpush1.xpose.msra.mxu0 0.0
    %508 = vmatprep.subr.mxu0 0.0
    %509 = vmatpush1.xpose.msra.mxu0 0.0
    %510 = vmatprep.subr.mxu0 0.0
    %511 = vmatpush1.xpose.msra.mxu0 0.0
    %512 = vmatprep.subr.mxu0 0.0
    %513 = vmatpush1.xpose.msra.mxu0 0.0
    %514 = vmatprep.subr.mxu0 0.0
    %515 = vmatpush1.xpose.msra.mxu0 0.0
    %516 = vmatprep.subr.mxu0 0.0
    %517 = vmatpush1.xpose.msra.mxu0 0.0
    %518 = vmatprep.subr.mxu0 0.0
    %519 = vmatpush1.xpose.msra.mxu0 0.0
    %520 = vmatprep.subr.mxu0 0.0
    %521 = vmatpush1.xpose.msra.mxu0 0.0
    %522 = vmatprep.subr.mxu0 0.0
    %523 = vmatpush1.xpose.msra.mxu0 0.0
    %524 = vmatprep.subr.mxu0 0.0
    %525 = vmatpush1.xpose.msra.mxu0 0.0
    %526 = vmatprep.subr.mxu0 0.0
    %527 = vmatpush1.xpose.msra.mxu0 0.0
    %528 = vmatprep.subr.mxu0 0.0
    %529 = vmatpush1.xpose.msra.mxu0 0.0
    %530 = vmatprep.subr.mxu0 0.0
    %531 = vmatpush1.xpose.msra.mxu0 0.0
    %532 = vmatprep.subr.mxu0 0.0
    %533 = vmatpush1.xpose.msra.mxu0 0.0
    %534 = vmatprep.subr.mxu0 0.0
    %535 = vmatpush1.xpose.msra.mxu0 0.0
    %536 = vmatprep.subr.mxu0 0.0
    %537 = vmatpush1.xpose.msra.mxu0 0.0
    %538 = vmatprep.mubr.f32.mxu0 0.0
    %539 = vmatmul.mubr.f32.gmra.mrb[0].mxu0 %v466
    %v540 = vpop.f32.mrb[0].mxu0
    %v541 = vadd.f32 %v284, %v540
    %v542 = vpop.f32.mrb[0].mxu0
    %543 = vmatprep.mubr.f32.mxu0 0.0
    %544 = vmatmul.mubr.f32.gmra.mrb[0].mxu0 %v468
    %v545 = vpop.f32.mrb[0].mxu0
    %v546 = vadd.f32 %v285, %v545
    %v547 = vpop.f32.mrb[0].mxu0
    %548 = vdwg.mxu0
    %549 = vrot.lane.b32.xlu0 %v215, 96
    %v550 = vpop.permute.xlu0 %549
    %551 = vrot.lane.b32.xlu0 %v217, 96
    %v552 = vpop.permute.xlu0 %551
    %v553 = vsel %vm255, %v215, 0
    %v555 = vsel %vm255, %v217, 0
    %v557 = vsel %vm255, %v550, 0
    %v559 = vsel %vm255, %v552, 0
    %561 = vmatprep.subr.mxu0 0.0
    %562 = vmatpush1.xpose.msra.mxu0 %v557
    %563 = vmatprep.subr.mxu0 0.0
    %564 = vmatpush1.xpose.msra.mxu0 %v559
    %565 = vmatprep.subr.mxu0 0.0
    %566 = vmatpush1.xpose.msra.mxu0 0.0
    %567 = vmatprep.subr.mxu0 0.0
    %568 = vmatpush1.xpose.msra.mxu0 0.0
    %569 = vmatprep.subr.mxu0 0.0
    %570 = vmatpush1.xpose.msra.mxu0 0.0
    %571 = vmatprep.subr.mxu0 0.0
    %572 = vmatpush1.xpose.msra.mxu0 0.0
    %573 = vmatprep.subr.mxu0 0.0
    %574 = vmatpush1.xpose.msra.mxu0 0.0
    %575 = vmatprep.subr.mxu0 0.0
    %576 = vmatpush1.xpose.msra.mxu0 0.0
    %577 = vmatprep.subr.mxu0 0.0
    %578 = vmatpush1.xpose.msra.mxu0 0.0
    %579 = vmatprep.subr.mxu0 0.0
    %580 = vmatpush1.xpose.msra.mxu0 0.0
    %581 = vmatprep.subr.mxu0 0.0
    %582 = vmatpush1.xpose.msra.mxu0 0.0
    %583 = vmatprep.subr.mxu0 0.0
    %584 = vmatpush1.xpose.msra.mxu0 0.0
    %585 = vmatprep.subr.mxu0 0.0
    %586 = vmatpush1.xpose.msra.mxu0 0.0
    %587 = vmatprep.subr.mxu0 0.0
    %588 = vmatpush1.xpose.msra.mxu0 0.0
    %589 = vmatprep.subr.mxu0 0.0
    %590 = vmatpush1.xpose.msra.mxu0 0.0
    %591 = vmatprep.subr.mxu0 0.0
    %592 = vmatpush1.xpose.msra.mxu0 0.0
    %593 = vmatprep.subr.mxu0 0.0
    %594 = vmatpush1.xpose.msra.mxu0 0.0
    %595 = vmatprep.subr.mxu0 0.0
    %596 = vmatpush1.xpose.msra.mxu0 0.0
    %597 = vmatprep.subr.mxu0 0.0
    %598 = vmatpush1.xpose.msra.mxu0 0.0
    %599 = vmatprep.subr.mxu0 0.0
    %600 = vmatpush1.xpose.msra.mxu0 0.0
    %601 = vmatprep.subr.mxu0 0.0
    %602 = vmatpush1.xpose.msra.mxu0 0.0
    %603 = vmatprep.subr.mxu0 0.0
    %604 = vmatpush1.xpose.msra.mxu0 0.0
    %605 = vmatprep.subr.mxu0 0.0
    %606 = vmatpush1.xpose.msra.mxu0 0.0
    %607 = vmatprep.subr.mxu0 0.0
    %608 = vmatpush1.xpose.msra.mxu0 0.0
    %609 = vmatprep.subr.mxu0 0.0
    %610 = vmatpush1.xpose.msra.mxu0 0.0
    %611 = vmatprep.subr.mxu0 0.0
    %612 = vmatpush1.xpose.msra.mxu0 0.0
    %613 = vmatprep.subr.mxu0 0.0
    %614 = vmatpush1.xpose.msra.mxu0 0.0
    %615 = vmatprep.subr.mxu0 0.0
    %616 = vmatpush1.xpose.msra.mxu0 0.0
    %617 = vmatprep.subr.mxu0 0.0
    %618 = vmatpush1.xpose.msra.mxu0 0.0
    %619 = vmatprep.subr.mxu0 0.0
    %620 = vmatpush1.xpose.msra.mxu0 0.0
    %621 = vmatprep.subr.mxu0 0.0
    %622 = vmatpush1.xpose.msra.mxu0 0.0
    %623 = vmatprep.subr.mxu0 0.0
    %624 = vmatpush1.xpose.msra.mxu0 0.0
    %625 = vmatprep.mubr.f32.mxu0 0.0
    %626 = vmatmul.mubr.f32.gmra.mrb[0].mxu0 %v553
    %v627 = vpop.f32.mrb[0].mxu0
    %v628 = vadd.f32 %v286, %v627
    %v629 = vpop.f32.mrb[0].mxu0
    %630 = vmatprep.mubr.f32.mxu0 0.0
    %631 = vmatmul.mubr.f32.gmra.mrb[0].mxu0 %v555
    %v632 = vpop.f32.mrb[0].mxu0
    %v633 = vadd.f32 %v287, %v632
    %v634 = vpop.f32.mrb[0].mxu0
    %635 = vdwg.mxu0
    %v636 = vsel %vm118, %v367, -inf
    %637 = vmax.xlane.f32.xlu0 %v636
    %v638 = vpop.xlane.xlu0 %637
    %v639 = vsel %vm118, %v372, -inf
    %640 = vmax.xlane.f32.xlu0 %v639
    %v641 = vpop.xlane.xlu0 %640
    %v642 = vsel %vm118, %v454, -inf
    %643 = vmax.xlane.f32.xlu0 %v642
    %v644 = vpop.xlane.xlu0 %643
    %v645 = vsel %vm118, %v459, -inf
    %646 = vmax.xlane.f32.xlu0 %v645
    %v647 = vpop.xlane.xlu0 %646
    %v648 = vsel %vm118, %v541, -inf
    %649 = vmax.xlane.f32.xlu0 %v648
    %v650 = vpop.xlane.xlu0 %649
    %v651 = vsel %vm118, %v546, -inf
    %652 = vmax.xlane.f32.xlu0 %v651
    %v653 = vpop.xlane.xlu0 %652
    %v654 = vsel %vm118, %v628, -inf
    %655 = vmax.xlane.f32.xlu0 %v654
    %v656 = vpop.xlane.xlu0 %655
    %v657 = vsel %vm118, %v633, -inf
    %658 = vmax.xlane.f32.xlu0 %v657
    %v659 = vpop.xlane.xlu0 %658
    %v660 = vsub.f32 %v367, %v638
    %v661 = vsub.f32 %v372, %v641
    %v662 = vsub.f32 %v454, %v644
    %v663 = vsub.f32 %v459, %v647
    %v664 = vsub.f32 %v541, %v650
    %v665 = vsub.f32 %v546, %v653
    %v666 = vsub.f32 %v628, %v656
    %v667 = vsub.f32 %v633, %v659
    %v668 = vmul.f32 %v660, 1.442695
    %v669 = vpow.pop %v668
    %v670 = vmul.f32 %v661, 1.442695
    %v671 = vpow.pop %v670
    %v672 = vmul.f32 %v662, 1.442695
    %v673 = vpow.pop %v672
    %v674 = vmul.f32 %v663, 1.442695
    %v675 = vpow.pop %v674
    %v676 = vmul.f32 %v664, 1.442695
    %v677 = vpow.pop %v676
    %v678 = vmul.f32 %v665, 1.442695
    %v679 = vpow.pop %v678
    %v680 = vmul.f32 %v666, 1.442695
    %v681 = vpow.pop %v680
    %v682 = vmul.f32 %v667, 1.442695
    %v683 = vpow.pop %v682
    %v684 = vsel %vm118, %v669, 0.0
    %685 = vadd.xlane.f32.xlu0 %v684
    %v686 = vpop.xlane.xlu0 %685
    %v687 = vsel %vm118, %v671, 0.0
    %688 = vadd.xlane.f32.xlu0 %v687
    %v689 = vpop.xlane.xlu0 %688
    %v690 = vsel %vm118, %v673, 0.0
    %691 = vadd.xlane.f32.xlu0 %v690
    %v692 = vpop.xlane.xlu0 %691
    %v693 = vsel %vm118, %v675, 0.0
    %694 = vadd.xlane.f32.xlu0 %v693
    %v695 = vpop.xlane.xlu0 %694
    %v696 = vsel %vm118, %v677, 0.0
    %697 = vadd.xlane.f32.xlu0 %v696
    %v698 = vpop.xlane.xlu0 %697
    %v699 = vsel %vm118, %v679, 0.0
    %700 = vadd.xlane.f32.xlu0 %v699
    %v701 = vpop.xlane.xlu0 %700
    %v702 = vsel %vm118, %v681, 0.0
    %703 = vadd.xlane.f32.xlu0 %v702
    %v704 = vpop.xlane.xlu0 %703
    %v705 = vsel %vm118, %v683, 0.0
    %706 = vadd.xlane.f32.xlu0 %v705
    %v707 = vpop.xlane.xlu0 %706
    %v708 = vrcp.pop %v686
    %v709 = vrcp.pop %v689
    %v710 = vrcp.pop %v692
    %v711 = vrcp.pop %v695
    %v712 = vrcp.pop %v698
    %v713 = vrcp.pop %v701
    %v714 = vrcp.pop %v704
    %v715 = vrcp.pop %v707
    %v716 = vmul.f32 %v669, %v708
    %v717 = vmul.f32 %v671, %v709
    %v718 = vmul.f32 %v673, %v710
    %v719 = vmul.f32 %v675, %v711
    %v720 = vmul.f32 %v677, %v712
    %v721 = vmul.f32 %v679, %v713
    %v722 = vmul.f32 %v681, %v714
    %v723 = vmul.f32 %v683, %v715
    %v724 = vmul.f32 %v716, %v92
    %v725 = vmul.f32 %v717, %v93
    %v726 = vmul.f32 %v718, %v92
    %v727 = vmul.f32 %v719, %v93
    %v728 = vmul.f32 %v720, %v92
    %v729 = vmul.f32 %v721, %v93
    %v730 = vmul.f32 %v722, %v92
    %v731 = vmul.f32 %v723, %v93
    %v732 = vsel %vm118, %v724, 0.0
    %733 = vadd.xlane.f32.xlu0 %v732
    %v734 = vpop.xlane.xlu0 %733
    %v735 = vsel %vm118, %v725, 0.0
    %736 = vadd.xlane.f32.xlu0 %v735
    %v737 = vpop.xlane.xlu0 %736
    %v738 = vsel %vm118, %v726, 0.0
    %739 = vadd.xlane.f32.xlu0 %v738
    %v740 = vpop.xlane.xlu0 %739
    %v741 = vsel %vm118, %v727, 0.0
    %742 = vadd.xlane.f32.xlu0 %v741
    %v743 = vpop.xlane.xlu0 %742
    %v744 = vsel %vm118, %v728, 0.0
    %745 = vadd.xlane.f32.xlu0 %v744
    %v746 = vpop.xlane.xlu0 %745
    %v747 = vsel %vm118, %v729, 0.0
    %748 = vadd.xlane.f32.xlu0 %v747
    %v749 = vpop.xlane.xlu0 %748
    %v750 = vsel %vm118, %v730, 0.0
    %751 = vadd.xlane.f32.xlu0 %v750
    %v752 = vpop.xlane.xlu0 %751
    %v753 = vsel %vm118, %v731, 0.0
    %754 = vadd.xlane.f32.xlu0 %v753
    %v755 = vpop.xlane.xlu0 %754
    %v756 = vmul.f32 %v734, %v230
    %v757 = vmul.f32 %v737, %v230
    %v758 = vmul.f32 %v740, %v234
    %v759 = vmul.f32 %v743, %v234
    %v760 = vmul.f32 %v746, %v238
    %v761 = vmul.f32 %v749, %v238
    %v762 = vmul.f32 %v752, %v242
    %v763 = vmul.f32 %v755, %v242
    %764 = vrot.lane.b32.xlu0 %v192, 64
    %v765 = vpop.permute.xlu0 %764
    %766 = vrot.lane.b32.xlu0 %v197, 64
    %v767 = vpop.permute.xlu0 %766
    %v771 = vsel %vm118, %v716, 0
    %v774 = vsel %vm118, %v717, 0
    %776 = vmatprep.subr.mxu0 0.0
    %777 = vmatpush1.msra.mxu0 %v765
    %778 = vmatprep.subr.mxu0 0.0
    %779 = vmatpush1.msra.mxu0 %v767
    %780 = vmatprep.subr.mxu0 0.0
    %781 = vmatpush1.msra.mxu0 0.0
    %782 = vmatprep.subr.mxu0 0.0
    %783 = vmatpush1.msra.mxu0 0.0
    %784 = vmatprep.subr.mxu0 0.0
    %785 = vmatpush1.msra.mxu0 0.0
    %786 = vmatprep.subr.mxu0 0.0
    %787 = vmatpush1.msra.mxu0 0.0
    %788 = vmatprep.subr.mxu0 0.0
    %789 = vmatpush1.msra.mxu0 0.0
    %790 = vmatprep.subr.mxu0 0.0
    %791 = vmatpush1.msra.mxu0 0.0
    %792 = vmatprep.subr.mxu0 0.0
    %793 = vmatpush1.msra.mxu0 0.0
    %794 = vmatprep.subr.mxu0 0.0
    %795 = vmatpush1.msra.mxu0 0.0
    %796 = vmatprep.subr.mxu0 0.0
    %797 = vmatpush1.msra.mxu0 0.0
    %798 = vmatprep.subr.mxu0 0.0
    %799 = vmatpush1.msra.mxu0 0.0
    %800 = vmatprep.subr.mxu0 0.0
    %801 = vmatpush1.msra.mxu0 0.0
    %802 = vmatprep.subr.mxu0 0.0
    %803 = vmatpush1.msra.mxu0 0.0
    %804 = vmatprep.subr.mxu0 0.0
    %805 = vmatpush1.msra.mxu0 0.0
    %806 = vmatprep.subr.mxu0 0.0
    %807 = vmatpush1.msra.mxu0 0.0
    %808 = vmatprep.subr.mxu0 0.0
    %809 = vmatpush1.msra.mxu0 0.0
    %810 = vmatprep.subr.mxu0 0.0
    %811 = vmatpush1.msra.mxu0 0.0
    %812 = vmatprep.subr.mxu0 0.0
    %813 = vmatpush1.msra.mxu0 0.0
    %814 = vmatprep.subr.mxu0 0.0
    %815 = vmatpush1.msra.mxu0 0.0
    %816 = vmatprep.subr.mxu0 0.0
    %817 = vmatpush1.msra.mxu0 0.0
    %818 = vmatprep.subr.mxu0 0.0
    %819 = vmatpush1.msra.mxu0 0.0
    %820 = vmatprep.subr.mxu0 0.0
    %821 = vmatpush1.msra.mxu0 0.0
    %822 = vmatprep.subr.mxu0 0.0
    %823 = vmatpush1.msra.mxu0 0.0
    %824 = vmatprep.subr.mxu0 0.0
    %825 = vmatpush1.msra.mxu0 0.0
    %826 = vmatprep.subr.mxu0 0.0
    %827 = vmatpush1.msra.mxu0 0.0
    %828 = vmatprep.subr.mxu0 0.0
    %829 = vmatpush1.msra.mxu0 0.0
    %830 = vmatprep.subr.mxu0 0.0
    %831 = vmatpush1.msra.mxu0 0.0
    %832 = vmatprep.subr.mxu0 0.0
    %833 = vmatpush1.msra.mxu0 0.0
    %834 = vmatprep.subr.mxu0 0.0
    %835 = vmatpush1.msra.mxu0 0.0
    %836 = vmatprep.subr.mxu0 0.0
    %837 = vmatpush1.msra.mxu0 0.0
    %838 = vmatprep.subr.mxu0 0.0
    %839 = vmatpush1.msra.mxu0 0.0
    %840 = vmatprep.mubr.f32.mxu0 0.0
    %841 = vmatmul.mubr.f32.gmra.mrb[0].mxu0 %v771
    %v842 = vpop.f32.mrb[0].mxu0
    %v843 = vadd.f32 %v756, %v842
    %v844 = vpop.f32.mrb[0].mxu0
    %845 = vmatprep.mubr.f32.mxu0 0.0
    %846 = vmatmul.mubr.f32.gmra.mrb[0].mxu0 %v774
    %v847 = vpop.f32.mrb[0].mxu0
    %v848 = vadd.f32 %v757, %v847
    %v849 = vpop.f32.mrb[0].mxu0
    %850 = vdwg.mxu0
    %851 = vrot.lane.b32.xlu0 %v203, 64
    %v852 = vpop.permute.xlu0 %851
    %853 = vrot.lane.b32.xlu0 %v205, 64
    %v854 = vpop.permute.xlu0 %853
    %v858 = vsel %vm118, %v718, 0
    %v861 = vsel %vm118, %v719, 0
    %863 = vmatprep.subr.mxu0 0.0
    %864 = vmatpush1.msra.mxu0 %v852
    %865 = vmatprep.subr.mxu0 0.0
    %866 = vmatpush1.msra.mxu0 %v854
    %867 = vmatprep.subr.mxu0 0.0
    %868 = vmatpush1.msra.mxu0 0.0
    %869 = vmatprep.subr.mxu0 0.0
    %870 = vmatpush1.msra.mxu0 0.0
    %871 = vmatprep.subr.mxu0 0.0
    %872 = vmatpush1.msra.mxu0 0.0
    %873 = vmatprep.subr.mxu0 0.0
    %874 = vmatpush1.msra.mxu0 0.0
    %875 = vmatprep.subr.mxu0 0.0
    %876 = vmatpush1.msra.mxu0 0.0
    %877 = vmatprep.subr.mxu0 0.0
    %878 = vmatpush1.msra.mxu0 0.0
    %879 = vmatprep.subr.mxu0 0.0
    %880 = vmatpush1.msra.mxu0 0.0
    %881 = vmatprep.subr.mxu0 0.0
    %882 = vmatpush1.msra.mxu0 0.0
    %883 = vmatprep.subr.mxu0 0.0
    %884 = vmatpush1.msra.mxu0 0.0
    %885 = vmatprep.subr.mxu0 0.0
    %886 = vmatpush1.msra.mxu0 0.0
    %887 = vmatprep.subr.mxu0 0.0
    %888 = vmatpush1.msra.mxu0 0.0
    %889 = vmatprep.subr.mxu0 0.0
    %890 = vmatpush1.msra.mxu0 0.0
    %891 = vmatprep.subr.mxu0 0.0
    %892 = vmatpush1.msra.mxu0 0.0
    %893 = vmatprep.subr.mxu0 0.0
    %894 = vmatpush1.msra.mxu0 0.0
    %895 = vmatprep.subr.mxu0 0.0
    %896 = vmatpush1.msra.mxu0 0.0
    %897 = vmatprep.subr.mxu0 0.0
    %898 = vmatpush1.msra.mxu0 0.0
    %899 = vmatprep.subr.mxu0 0.0
    %900 = vmatpush1.msra.mxu0 0.0
    %901 = vmatprep.subr.mxu0 0.0
    %902 = vmatpush1.msra.mxu0 0.0
    %903 = vmatprep.subr.mxu0 0.0
    %904 = vmatpush1.msra.mxu0 0.0
    %905 = vmatprep.subr.mxu0 0.0
    %906 = vmatpush1.msra.mxu0 0.0
    %907 = vmatprep.subr.mxu0 0.0
    %908 = vmatpush1.msra.mxu0 0.0
    %909 = vmatprep.subr.mxu0 0.0
    %910 = vmatpush1.msra.mxu0 0.0
    %911 = vmatprep.subr.mxu0 0.0
    %912 = vmatpush1.msra.mxu0 0.0
    %913 = vmatprep.subr.mxu0 0.0
    %914 = vmatpush1.msra.mxu0 0.0
    %915 = vmatprep.subr.mxu0 0.0
    %916 = vmatpush1.msra.mxu0 0.0
    %917 = vmatprep.subr.mxu0 0.0
    %918 = vmatpush1.msra.mxu0 0.0
    %919 = vmatprep.subr.mxu0 0.0
    %920 = vmatpush1.msra.mxu0 0.0
    %921 = vmatprep.subr.mxu0 0.0
    %922 = vmatpush1.msra.mxu0 0.0
    %923 = vmatprep.subr.mxu0 0.0
    %924 = vmatpush1.msra.mxu0 0.0
    %925 = vmatprep.subr.mxu0 0.0
    %926 = vmatpush1.msra.mxu0 0.0
    %927 = vmatprep.mubr.f32.mxu0 0.0
    %928 = vmatmul.mubr.f32.gmra.mrb[0].mxu0 %v858
    %v929 = vpop.f32.mrb[0].mxu0
    %v930 = vadd.f32 %v758, %v929
    %v931 = vpop.f32.mrb[0].mxu0
    %932 = vmatprep.mubr.f32.mxu0 0.0
    %933 = vmatmul.mubr.f32.gmra.mrb[0].mxu0 %v861
    %v934 = vpop.f32.mrb[0].mxu0
    %v935 = vadd.f32 %v759, %v934
    %v936 = vpop.f32.mrb[0].mxu0
    %937 = vdwg.mxu0
    %938 = vrot.lane.b32.xlu0 %v209, 64
    %v939 = vpop.permute.xlu0 %938
    %940 = vrot.lane.b32.xlu0 %v211, 64
    %v941 = vpop.permute.xlu0 %940
    %v945 = vsel %vm118, %v720, 0
    %v948 = vsel %vm118, %v721, 0
    %950 = vmatprep.subr.mxu0 0.0
    %951 = vmatpush1.msra.mxu0 %v939
    %952 = vmatprep.subr.mxu0 0.0
    %953 = vmatpush1.msra.mxu0 %v941
    %954 = vmatprep.subr.mxu0 0.0
    %955 = vmatpush1.msra.mxu0 0.0
    %956 = vmatprep.subr.mxu0 0.0
    %957 = vmatpush1.msra.mxu0 0.0
    %958 = vmatprep.subr.mxu0 0.0
    %959 = vmatpush1.msra.mxu0 0.0
    %960 = vmatprep.subr.mxu0 0.0
    %961 = vmatpush1.msra.mxu0 0.0
    %962 = vmatprep.subr.mxu0 0.0
    %963 = vmatpush1.msra.mxu0 0.0
    %964 = vmatprep.subr.mxu0 0.0
    %965 = vmatpush1.msra.mxu0 0.0
    %966 = vmatprep.subr.mxu0 0.0
    %967 = vmatpush1.msra.mxu0 0.0
    %968 = vmatprep.subr.mxu0 0.0
    %969 = vmatpush1.msra.mxu0 0.0
    %970 = vmatprep.subr.mxu0 0.0
    %971 = vmatpush1.msra.mxu0 0.0
    %972 = vmatprep.subr.mxu0 0.0
    %973 = vmatpush1.msra.mxu0 0.0
    %974 = vmatprep.subr.mxu0 0.0
    %975 = vmatpush1.msra.mxu0 0.0
    %976 = vmatprep.subr.mxu0 0.0
    %977 = vmatpush1.msra.mxu0 0.0
    %978 = vmatprep.subr.mxu0 0.0
    %979 = vmatpush1.msra.mxu0 0.0
    %980 = vmatprep.subr.mxu0 0.0
    %981 = vmatpush1.msra.mxu0 0.0
    %982 = vmatprep.subr.mxu0 0.0
    %983 = vmatpush1.msra.mxu0 0.0
    %984 = vmatprep.subr.mxu0 0.0
    %985 = vmatpush1.msra.mxu0 0.0
    %986 = vmatprep.subr.mxu0 0.0
    %987 = vmatpush1.msra.mxu0 0.0
    %988 = vmatprep.subr.mxu0 0.0
    %989 = vmatpush1.msra.mxu0 0.0
    %990 = vmatprep.subr.mxu0 0.0
    %991 = vmatpush1.msra.mxu0 0.0
    %992 = vmatprep.subr.mxu0 0.0
    %993 = vmatpush1.msra.mxu0 0.0
    %994 = vmatprep.subr.mxu0 0.0
    %995 = vmatpush1.msra.mxu0 0.0
    %996 = vmatprep.subr.mxu0 0.0
    %997 = vmatpush1.msra.mxu0 0.0
    %998 = vmatprep.subr.mxu0 0.0
    %999 = vmatpush1.msra.mxu0 0.0
    %1000 = vmatprep.subr.mxu0 0.0
    %1001 = vmatpush1.msra.mxu0 0.0
    %1002 = vmatprep.subr.mxu0 0.0
    %1003 = vmatpush1.msra.mxu0 0.0
    %1004 = vmatprep.subr.mxu0 0.0
    %1005 = vmatpush1.msra.mxu0 0.0
    %1006 = vmatprep.subr.mxu0 0.0
    %1007 = vmatpush1.msra.mxu0 0.0
    %1008 = vmatprep.subr.mxu0 0.0
    %1009 = vmatpush1.msra.mxu0 0.0
    %1010 = vmatprep.subr.mxu0 0.0
    %1011 = vmatpush1.msra.mxu0 0.0
    %1012 = vmatprep.subr.mxu0 0.0
    %1013 = vmatpush1.msra.mxu0 0.0
    %1014 = vmatprep.mubr.f32.mxu0 0.0
    %1015 = vmatmul.mubr.f32.gmra.mrb[0].mxu0 %v945
    %v1016 = vpop.f32.mrb[0].mxu0
    %v1017 = vadd.f32 %v760, %v1016
    %v1018 = vpop.f32.mrb[0].mxu0
    %1019 = vmatprep.mubr.f32.mxu0 0.0
    %1020 = vmatmul.mubr.f32.gmra.mrb[0].mxu0 %v948
    %v1021 = vpop.f32.mrb[0].mxu0
    %v1022 = vadd.f32 %v761, %v1021
    %v1023 = vpop.f32.mrb[0].mxu0
    %1024 = vdwg.mxu0
    %1025 = vrot.lane.b32.xlu0 %v215, 64
    %v1026 = vpop.permute.xlu0 %1025
    %1027 = vrot.lane.b32.xlu0 %v217, 64
    %v1028 = vpop.permute.xlu0 %1027
    %v1032 = vsel %vm118, %v722, 0
    %v1035 = vsel %vm118, %v723, 0
    %1037 = vmatprep.subr.mxu0 0.0
    %1038 = vmatpush1.msra.mxu0 %v1026
    %1039 = vmatprep.subr.mxu0 0.0
    %1040 = vmatpush1.msra.mxu0 %v1028
    %1041 = vmatprep.subr.mxu0 0.0
    %1042 = vmatpush1.msra.mxu0 0.0
    %1043 = vmatprep.subr.mxu0 0.0
    %1044 = vmatpush1.msra.mxu0 0.0
    %1045 = vmatprep.subr.mxu0 0.0
    %1046 = vmatpush1.msra.mxu0 0.0
    %1047 = vmatprep.subr.mxu0 0.0
    %1048 = vmatpush1.msra.mxu0 0.0
    %1049 = vmatprep.subr.mxu0 0.0
    %1050 = vmatpush1.msra.mxu0 0.0
    %1051 = vmatprep.subr.mxu0 0.0
    %1052 = vmatpush1.msra.mxu0 0.0
    %1053 = vmatprep.subr.mxu0 0.0
    %1054 = vmatpush1.msra.mxu0 0.0
    %1055 = vmatprep.subr.mxu0 0.0
    %1056 = vmatpush1.msra.mxu0 0.0
    %1057 = vmatprep.subr.mxu0 0.0
    %1058 = vmatpush1.msra.mxu0 0.0
    %1059 = vmatprep.subr.mxu0 0.0
    %1060 = vmatpush1.msra.mxu0 0.0
    %1061 = vmatprep.subr.mxu0 0.0
    %1062 = vmatpush1.msra.mxu0 0.0
    %1063 = vmatprep.subr.mxu0 0.0
    %1064 = vmatpush1.msra.mxu0 0.0
    %1065 = vmatprep.subr.mxu0 0.0
    %1066 = vmatpush1.msra.mxu0 0.0
    %1067 = vmatprep.subr.mxu0 0.0
    %1068 = vmatpush1.msra.mxu0 0.0
    %1069 = vmatprep.subr.mxu0 0.0
    %1070 = vmatpush1.msra.mxu0 0.0
    %1071 = vmatprep.subr.mxu0 0.0
    %1072 = vmatpush1.msra.mxu0 0.0
    %1073 = vmatprep.subr.mxu0 0.0
    %1074 = vmatpush1.msra.mxu0 0.0
    %1075 = vmatprep.subr.mxu0 0.0
    %1076 = vmatpush1.msra.mxu0 0.0
    %1077 = vmatprep.subr.mxu0 0.0
    %1078 = vmatpush1.msra.mxu0 0.0
    %1079 = vmatprep.subr.mxu0 0.0
    %1080 = vmatpush1.msra.mxu0 0.0
    %1081 = vmatprep.subr.mxu0 0.0
    %1082 = vmatpush1.msra.mxu0 0.0
    %1083 = vmatprep.subr.mxu0 0.0
    %1084 = vmatpush1.msra.mxu0 0.0
    %1085 = vmatprep.subr.mxu0 0.0
    %1086 = vmatpush1.msra.mxu0 0.0
    %1087 = vmatprep.subr.mxu0 0.0
    %1088 = vmatpush1.msra.mxu0 0.0
    %1089 = vmatprep.subr.mxu0 0.0
    %1090 = vmatpush1.msra.mxu0 0.0
    %1091 = vmatprep.subr.mxu0 0.0
    %1092 = vmatpush1.msra.mxu0 0.0
    %1093 = vmatprep.subr.mxu0 0.0
    %1094 = vmatpush1.msra.mxu0 0.0
    %1095 = vmatprep.subr.mxu0 0.0
    %1096 = vmatpush1.msra.mxu0 0.0
    %1097 = vmatprep.subr.mxu0 0.0
    %1098 = vmatpush1.msra.mxu0 0.0
    %1099 = vmatprep.subr.mxu0 0.0
    %1100 = vmatpush1.msra.mxu0 0.0
    %1101 = vmatprep.mubr.f32.mxu0 0.0
    %1102 = vmatmul.mubr.f32.gmra.mrb[0].mxu0 %v1032
    %v1103 = vpop.f32.mrb[0].mxu0
    %v1104 = vadd.f32 %v762, %v1103
    %v1105 = vpop.f32.mrb[0].mxu0
    %1106 = vmatprep.mubr.f32.mxu0 0.0
    %1107 = vmatmul.mubr.f32.gmra.mrb[0].mxu0 %v1035
    %v1108 = vpop.f32.mrb[0].mxu0
    %v1109 = vadd.f32 %v763, %v1108
    %v1110 = vpop.f32.mrb[0].mxu0
    %1111 = vdwg.mxu0
    %1114 = vrot.lane.b32.xlu0 %v930, 8
    %v1115 = vpop.permute.xlu0 %1114
    %1116 = vrot.lane.b32.xlu0 %v935, 8
    %v1117 = vpop.permute.xlu0 %1116
    %1122 = vrot.lane.b32.xlu0 %v1017, 16
    %v1123 = vpop.permute.xlu0 %1122
    %1124 = vrot.lane.b32.xlu0 %v1022, 16
    %v1125 = vpop.permute.xlu0 %1124
    %1130 = vrot.lane.b32.xlu0 %v1104, 24
    %v1131 = vpop.permute.xlu0 %1130
    %1132 = vrot.lane.b32.xlu0 %v1109, 24
    %v1133 = vpop.permute.xlu0 %1132
    %v1136 = vsel %vm255, %v843, %v1115
    %v1137 = vsel %vm255, %v848, %v1117
    %v1138 = vsel %vm118, %v1136, %v1123
    %v1139 = vsel %vm118, %v1137, %v1125
    %vm1140 = vcmask 195584
    %v1141 = vsel %vm1140, %v1138, %v1131
    %v1142 = vsel %vm1140, %v1139, %v1133
    %1143 = vrot.lane.b32.xlu0 %v192, 32
    %v1144 = vpop.permute.xlu0 %1143
    %1145 = vrot.lane.b32.xlu0 %v197, 32
    %v1146 = vpop.permute.xlu0 %1145
    %v1149 = vadd.f32 %v1141, %v1144
    %v1150 = vadd.f32 %v1142, %v1146
    %v1151 = vld [vmem:[#allocation8 + $0xe] sm:$0x1]
    %v1152 = vld [vmem:[#allocation8 + $0xf] sm:$0x1]
    %v1153 = vld [vmem:[#allocation8 + $0x10] sm:$0x1]
    %vm1154 = vcmask 261120
    %v1155 = vsel %vm1154, %v1149, 0.0
    %v1156 = vsel %vm1154, %v1150, 0.0
    %v1157 = vadd.f32 %v1155, %v1156
    %v1158 = vrot.slane %v1157, 4
    %v1159 = vadd.f32 %v1157, %v1158
    %v1160 = vrot.slane %v1159, 2
    %v1161 = vadd.f32 %v1159, %v1160
    %v1162 = vrot.slane %v1161, 1
    %v1163 = vadd.f32 %v1161, %v1162
    %v1164 = vmul.f32 %v1163, 0.0625
    %v1165 = vmul.f32 %v1164, %v1153
    %v1166 = vlaneseq
    %v1167 = vshrl.u32 %v1166, 7
    %v1168 = vsub.s32 0, %v1167
    %v1169 = vrot.slane %v1165, %v1168
    %v1170 = vsub.f32 %v1149, %v1169
    %v1171 = vsub.f32 %v1150, %v1169
    %v1172 = vmul.f32 %v1170, %v1170
    %v1173 = vmul.f32 %v1171, %v1171
    %v1174 = vsel %vm1154, %v1172, 0.0
    %v1175 = vsel %vm1154, %v1173, 0.0
    %v1176 = vadd.f32 %v1174, %v1175
    %v1177 = vrot.slane %v1176, 4
    %v1178 = vadd.f32 %v1176, %v1177
    %v1179 = vrot.slane %v1178, 2
    %v1180 = vadd.f32 %v1178, %v1179
    %v1181 = vrot.slane %v1180, 1
    %v1182 = vadd.f32 %v1180, %v1181
    %v1183 = vmul.f32 %v1182, 0.0625
    %v1185 = vlaneseq
    %v1186 = vshrl.u32 %v1185, 7
    %v1187 = vsub.s32 0, %v1186
    %v1188 = vrot.slane %v1151, %v1187
    %v1190 = vmul.f32 %v1188, %v1170
    %v1191 = vmul.f32 %v1188, %v1171
    %v1192 = vadd.f32 %v1183, 1e-05
    %v1193 = vrsqrt.pop %v1192
    %v1194 = vmul.f32 %v1190, %v1193
    %v1195 = vmul.f32 %v1191, %v1193
    %v1197 = vlaneseq
    %v1198 = vshrl.u32 %v1197, 7
    %v1199 = vsub.s32 0, %v1198
    %v1200 = vrot.slane %v1152, %v1199
    %v1202 = vadd.f32 %v1194, %v1200
    %v1203 = vadd.f32 %v1195, %v1200
    %v1204 = vld [vmem:[#allocation5 + $0x20] sm:$0xff]
    %v1205 = vld [vmem:[#allocation5 + $0x28] sm:$0xff]
    %v1206 = vld [vmem:[#allocation5 + $0x30] sm:$0xff]
    %v1207 = vld [vmem:[#allocation5 + $0x38] sm:$0xff]
    %v1208 = vld [vmem:[#allocation5 + $0x40] sm:$0xff]
    %v1209 = vld [vmem:[#allocation5 + $0x48] sm:$0xff]
    %v1210 = vld [vmem:[#allocation5 + $0x50] sm:$0xff]
    %v1211 = vld [vmem:[#allocation5 + $0x58] sm:$0xff]
    %v1212 = vld [vmem:[#allocation8 + $0x1] sm:$0x3]
    %v1213 = vld [vmem:[#allocation8 + $0xd] sm:$0x1]
    %v1215 = vlaneseq
    %v1216 = vshrl.u32 %v1215, 7
    %v1217 = vsub.s32 0, %v1216
    %v1218 = vrot.slane %v1212, %v1217
    %v1219 = vlaneseq
    %v1220 = vshrl.u32 %v1219, 7
    %v1221 = vsub.s32 1, %v1220
    %v1222 = vrot.slane %v1212, %v1221
    %v1226 = vsel %vm1154, %v1202, 0
    %v1229 = vsel %vm1154, %v1203, 0
    %1231 = vmatprep.subr.mxu0 %v1205
    %1232 = vmatpush1.msra.mxu0 %v1204
    %1233 = vmatprep.subr.mxu0 %v1207
    %1234 = vmatpush1.msra.mxu0 %v1206
    %1235 = vmatprep.subr.mxu0 %v1209
    %1236 = vmatpush1.msra.mxu0 %v1208
    %1237 = vmatprep.subr.mxu0 %v1211
    %1238 = vmatpush1.msra.mxu0 %v1210
    %1239 = vmatprep.subr.mxu0 0.0
    %1240 = vmatpush1.msra.mxu0 0.0
    %1241 = vmatprep.subr.mxu0 0.0
    %1242 = vmatpush1.msra.mxu0 0.0
    %1243 = vmatprep.subr.mxu0 0.0
    %1244 = vmatpush1.msra.mxu0 0.0
    %1245 = vmatprep.subr.mxu0 0.0
    %1246 = vmatpush1.msra.mxu0 0.0
    %1247 = vmatprep.subr.mxu0 0.0
    %1248 = vmatpush1.msra.mxu0 0.0
    %1249 = vmatprep.subr.mxu0 0.0
    %1250 = vmatpush1.msra.mxu0 0.0
    %1251 = vmatprep.subr.mxu0 0.0
    %1252 = vmatpush1.msra.mxu0 0.0
    %1253 = vmatprep.subr.mxu0 0.0
    %1254 = vmatpush1.msra.mxu0 0.0
    %1255 = vmatprep.subr.mxu0 0.0
    %1256 = vmatpush1.msra.mxu0 0.0
    %1257 = vmatprep.subr.mxu0 0.0
    %1258 = vmatpush1.msra.mxu0 0.0
    %1259 = vmatprep.subr.mxu0 0.0
    %1260 = vmatpush1.msra.mxu0 0.0
    %1261 = vmatprep.subr.mxu0 0.0
    %1262 = vmatpush1.msra.mxu0 0.0
    %1263 = vmatprep.subr.mxu0 0.0
    %1264 = vmatpush1.msra.mxu0 0.0
    %1265 = vmatprep.subr.mxu0 0.0
    %1266 = vmatpush1.msra.mxu0 0.0
    %1267 = vmatprep.subr.mxu0 0.0
    %1268 = vmatpush1.msra.mxu0 0.0
    %1269 = vmatprep.subr.mxu0 0.0
    %1270 = vmatpush1.msra.mxu0 0.0
    %1271 = vmatprep.subr.mxu0 0.0
    %1272 = vmatpush1.msra.mxu0 0.0
    %1273 = vmatprep.subr.mxu0 0.0
    %1274 = vmatpush1.msra.mxu0 0.0
    %1275 = vmatprep.subr.mxu0 0.0
    %1276 = vmatpush1.msra.mxu0 0.0
    %1277 = vmatprep.subr.mxu0 0.0
    %1278 = vmatpush1.msra.mxu0 0.0
    %1279 = vmatprep.subr.mxu0 0.0
    %1280 = vmatpush1.msra.mxu0 0.0
    %1281 = vmatprep.subr.mxu0 0.0
    %1282 = vmatpush1.msra.mxu0 0.0
    %1283 = vmatprep.subr.mxu0 0.0
    %1284 = vmatpush1.msra.mxu0 0.0
    %1285 = vmatprep.subr.mxu0 0.0
    %1286 = vmatpush1.msra.mxu0 0.0
    %1287 = vmatprep.subr.mxu0 0.0
    %1288 = vmatpush1.msra.mxu0 0.0
    %1289 = vmatprep.subr.mxu0 0.0
    %1290 = vmatpush1.msra.mxu0 0.0
    %1291 = vmatprep.subr.mxu0 0.0
    %1292 = vmatpush1.msra.mxu0 0.0
    %1293 = vmatprep.subr.mxu0 0.0
    %1294 = vmatpush1.msra.mxu0 0.0
    %1295 = vmatprep.mubr.f32.mxu0 0.0
    %1296 = vmatmul.mubr.f32.gmra.mrb[0].mxu0 %v1226
    %v1297 = vpop.f32.mrb[0].mxu0
    %v1298 = vadd.f32 %v1218, %v1297
    %v1299 = vpop.f32.mrb[0].mxu0
    %v1300 = vadd.f32 %v1222, %v1299
    %1301 = vmatprep.mubr.f32.mxu0 0.0
    %1302 = vmatmul.mubr.f32.gmra.mrb[0].mxu0 %v1229
    %v1303 = vpop.f32.mrb[0].mxu0
    %v1304 = vadd.f32 %v1218, %v1303
    %v1305 = vpop.f32.mrb[0].mxu0
    %v1306 = vadd.f32 %v1222, %v1305
    %1307 = vdwg.mxu0
    %1310 = vrot.lane.b32.xlu0 %v1298, 120
    %v1311 = vpop.permute.xlu0 %1310
    %1312 = vrot.lane.b32.xlu0 %v1304, 120
    %v1313 = vpop.permute.xlu0 %1312
    %1316 = vrot.lane.b32.xlu0 %v1298, 112
    %v1317 = vpop.permute.xlu0 %1316
    %1318 = vrot.lane.b32.xlu0 %v1304, 112
    %v1319 = vpop.permute.xlu0 %1318
    %1322 = vrot.lane.b32.xlu0 %v1298, 104
    %v1323 = vpop.permute.xlu0 %1322
    %1324 = vrot.lane.b32.xlu0 %v1304, 104
    %v1325 = vpop.permute.xlu0 %1324
    %1328 = vrot.lane.b32.xlu0 %v1298, 96
    %v1329 = vpop.permute.xlu0 %1328
    %1330 = vrot.lane.b32.xlu0 %v1304, 96
    %v1331 = vpop.permute.xlu0 %1330
    %1334 = vrot.lane.b32.xlu0 %v1298, 88
    %v1335 = vpop.permute.xlu0 %1334
    %1336 = vrot.lane.b32.xlu0 %v1304, 88
    %v1337 = vpop.permute.xlu0 %1336
    %1340 = vrot.lane.b32.xlu0 %v1298, 80
    %v1341 = vpop.permute.xlu0 %1340
    %1342 = vrot.lane.b32.xlu0 %v1304, 80
    %v1343 = vpop.permute.xlu0 %1342
    %1346 = vrot.lane.b32.xlu0 %v1298, 72
    %v1347 = vpop.permute.xlu0 %1346
    %1348 = vrot.lane.b32.xlu0 %v1304, 72
    %v1349 = vpop.permute.xlu0 %1348
    %1354 = vrot.lane.b32.xlu0 %v1300, 120
    %v1355 = vpop.permute.xlu0 %1354
    %1356 = vrot.lane.b32.xlu0 %v1306, 120
    %v1357 = vpop.permute.xlu0 %1356
    %1360 = vrot.lane.b32.xlu0 %v1300, 112
    %v1361 = vpop.permute.xlu0 %1360
    %1362 = vrot.lane.b32.xlu0 %v1306, 112
    %v1363 = vpop.permute.xlu0 %1362
    %1366 = vrot.lane.b32.xlu0 %v1300, 104
    %v1367 = vpop.permute.xlu0 %1366
    %1368 = vrot.lane.b32.xlu0 %v1306, 104
    %v1369 = vpop.permute.xlu0 %1368
    %1372 = vrot.lane.b32.xlu0 %v1300, 96
    %v1373 = vpop.permute.xlu0 %1372
    %1374 = vrot.lane.b32.xlu0 %v1306, 96
    %v1375 = vpop.permute.xlu0 %1374
    %1378 = vrot.lane.b32.xlu0 %v1300, 88
    %v1379 = vpop.permute.xlu0 %1378
    %1380 = vrot.lane.b32.xlu0 %v1306, 88
    %v1381 = vpop.permute.xlu0 %1380
    %1384 = vrot.lane.b32.xlu0 %v1300, 80
    %v1385 = vpop.permute.xlu0 %1384
    %1386 = vrot.lane.b32.xlu0 %v1306, 80
    %v1387 = vpop.permute.xlu0 %1386
    %1390 = vrot.lane.b32.xlu0 %v1300, 72
    %v1391 = vpop.permute.xlu0 %1390
    %1392 = vrot.lane.b32.xlu0 %v1306, 72
    %v1393 = vpop.permute.xlu0 %1392
    %1397 = vrot.lane.b32.xlu0 %v1213, 120
    %v1398 = vpop.permute.xlu0 %1397
    %1399 = vrot.lane.b32.xlu0 %v1213, 112
    %v1400 = vpop.permute.xlu0 %1399
    %1401 = vrot.lane.b32.xlu0 %v1213, 104
    %v1402 = vpop.permute.xlu0 %1401
    %1403 = vrot.lane.b32.xlu0 %v1213, 96
    %v1404 = vpop.permute.xlu0 %1403
    %1405 = vrot.lane.b32.xlu0 %v1213, 88
    %v1406 = vpop.permute.xlu0 %1405
    %1407 = vrot.lane.b32.xlu0 %v1213, 80
    %v1408 = vpop.permute.xlu0 %1407
    %1409 = vrot.lane.b32.xlu0 %v1213, 72
    %v1410 = vpop.permute.xlu0 %1409
    %v1411 = vlaneseq
    %v1412 = vshrl.u32 %v1411, 7
    %v1413 = vsub.s32 0, %v1412
    %v1414 = vrot.slane %v1213, %v1413
    %v1415 = vlaneseq
    %v1416 = vshrl.u32 %v1415, 7
    %v1417 = vsub.s32 0, %v1416
    %v1418 = vrot.slane %v1398, %v1417
    %v1419 = vlaneseq
    %v1420 = vshrl.u32 %v1419, 7
    %v1421 = vsub.s32 0, %v1420
    %v1422 = vrot.slane %v1400, %v1421
    %v1423 = vlaneseq
    %v1424 = vshrl.u32 %v1423, 7
    %v1425 = vsub.s32 0, %v1424
    %v1426 = vrot.slane %v1402, %v1425
    %v1427 = vlaneseq
    %v1428 = vshrl.u32 %v1427, 7
    %v1429 = vsub.s32 0, %v1428
    %v1430 = vrot.slane %v1404, %v1429
    %v1431 = vlaneseq
    %v1432 = vshrl.u32 %v1431, 7
    %v1433 = vsub.s32 0, %v1432
    %v1434 = vrot.slane %v1406, %v1433
    %v1435 = vlaneseq
    %v1436 = vshrl.u32 %v1435, 7
    %v1437 = vsub.s32 0, %v1436
    %v1438 = vrot.slane %v1408, %v1437
    %v1439 = vlaneseq
    %v1440 = vshrl.u32 %v1439, 7
    %v1441 = vsub.s32 0, %v1440
    %v1442 = vrot.slane %v1410, %v1441
    %v1451 = vmul.f32 %v1298, %v1414
    %v1452 = vmul.f32 %v1304, %v1414
    %v1453 = vmul.f32 %v1311, %v1418
    %v1454 = vmul.f32 %v1313, %v1418
    %v1455 = vmul.f32 %v1317, %v1422
    %v1456 = vmul.f32 %v1319, %v1422
    %v1457 = vmul.f32 %v1323, %v1426
    %v1458 = vmul.f32 %v1325, %v1426
    %v1459 = vmul.f32 %v1329, %v1430
    %v1460 = vmul.f32 %v1331, %v1430
    %v1461 = vmul.f32 %v1335, %v1434
    %v1462 = vmul.f32 %v1337, %v1434
    %v1463 = vmul.f32 %v1341, %v1438
    %v1464 = vmul.f32 %v1343, %v1438
    %v1465 = vmul.f32 %v1347, %v1442
    %v1466 = vmul.f32 %v1349, %v1442
    %v1467 = vsel %vm255, %v1451, 0.0
    %1468 = vadd.xlane.f32.xlu0 %v1467
    %v1469 = vpop.xlane.xlu0 %1468
    %v1470 = vsel %vm255, %v1452, 0.0
    %1471 = vadd.xlane.f32.xlu0 %v1470
    %v1472 = vpop.xlane.xlu0 %1471
    %v1473 = vsel %vm255, %v1453, 0.0
    %1474 = vadd.xlane.f32.xlu0 %v1473
    %v1475 = vpop.xlane.xlu0 %1474
    %v1476 = vsel %vm255, %v1454, 0.0
    %1477 = vadd.xlane.f32.xlu0 %v1476
    %v1478 = vpop.xlane.xlu0 %1477
    %v1479 = vsel %vm255, %v1455, 0.0
    %1480 = vadd.xlane.f32.xlu0 %v1479
    %v1481 = vpop.xlane.xlu0 %1480
    %v1482 = vsel %vm255, %v1456, 0.0
    %1483 = vadd.xlane.f32.xlu0 %v1482
    %v1484 = vpop.xlane.xlu0 %1483
    %v1485 = vsel %vm255, %v1457, 0.0
    %1486 = vadd.xlane.f32.xlu0 %v1485
    %v1487 = vpop.xlane.xlu0 %1486
    %v1488 = vsel %vm255, %v1458, 0.0
    %1489 = vadd.xlane.f32.xlu0 %v1488
    %v1490 = vpop.xlane.xlu0 %1489
    %v1491 = vsel %vm255, %v1459, 0.0
    %1492 = vadd.xlane.f32.xlu0 %v1491
    %v1493 = vpop.xlane.xlu0 %1492
    %v1494 = vsel %vm255, %v1460, 0.0
    %1495 = vadd.xlane.f32.xlu0 %v1494
    %v1496 = vpop.xlane.xlu0 %1495
    %v1497 = vsel %vm255, %v1461, 0.0
    %1498 = vadd.xlane.f32.xlu0 %v1497
    %v1499 = vpop.xlane.xlu0 %1498
    %v1500 = vsel %vm255, %v1462, 0.0
    %1501 = vadd.xlane.f32.xlu0 %v1500
    %v1502 = vpop.xlane.xlu0 %1501
    %v1503 = vsel %vm255, %v1463, 0.0
    %1504 = vadd.xlane.f32.xlu0 %v1503
    %v1505 = vpop.xlane.xlu0 %1504
    %v1506 = vsel %vm255, %v1464, 0.0
    %1507 = vadd.xlane.f32.xlu0 %v1506
    %v1508 = vpop.xlane.xlu0 %1507
    %v1509 = vsel %vm255, %v1465, 0.0
    %1510 = vadd.xlane.f32.xlu0 %v1509
    %v1511 = vpop.xlane.xlu0 %1510
    %v1512 = vsel %vm255, %v1466, 0.0
    %1513 = vadd.xlane.f32.xlu0 %v1512
    %v1514 = vpop.xlane.xlu0 %1513
    %v1515 = vmul.f32 %v1469, %v92
    %v1516 = vmul.f32 %v1472, %v93
    %v1517 = vmul.f32 %v1475, %v92
    %v1518 = vmul.f32 %v1478, %v93
    %v1519 = vmul.f32 %v1481, %v92
    %v1520 = vmul.f32 %v1484, %v93
    %v1521 = vmul.f32 %v1487, %v92
    %v1522 = vmul.f32 %v1490, %v93
    %v1523 = vmul.f32 %v1493, %v92
    %v1524 = vmul.f32 %v1496, %v93
    %v1525 = vmul.f32 %v1499, %v92
    %v1526 = vmul.f32 %v1502, %v93
    %v1527 = vmul.f32 %v1505, %v92
    %v1528 = vmul.f32 %v1508, %v93
    %v1529 = vmul.f32 %v1511, %v92
    %v1530 = vmul.f32 %v1514, %v93
    %1531 = vrot.lane.b32.xlu0 %v1298, 64
    %v1532 = vpop.permute.xlu0 %1531
    %1533 = vrot.lane.b32.xlu0 %v1304, 64
    %v1534 = vpop.permute.xlu0 %1533
    %v1535 = vsel %vm255, %v1298, 0
    %v1537 = vsel %vm255, %v1304, 0
    %v1539 = vsel %vm255, %v1532, 0
    %v1541 = vsel %vm255, %v1534, 0
    %1543 = vmatprep.subr.mxu0 0.0
    %1544 = vmatpush1.xpose.msra.mxu0 %v1539
    %1545 = vmatprep.subr.mxu0 0.0
    %1546 = vmatpush1.xpose.msra.mxu0 %v1541
    %1547 = vmatprep.subr.mxu0 0.0
    %1548 = vmatpush1.xpose.msra.mxu0 0.0
    %1549 = vmatprep.subr.mxu0 0.0
    %1550 = vmatpush1.xpose.msra.mxu0 0.0
    %1551 = vmatprep.subr.mxu0 0.0
    %1552 = vmatpush1.xpose.msra.mxu0 0.0
    %1553 = vmatprep.subr.mxu0 0.0
    %1554 = vmatpush1.xpose.msra.mxu0 0.0
    %1555 = vmatprep.subr.mxu0 0.0
    %1556 = vmatpush1.xpose.msra.mxu0 0.0
    %1557 = vmatprep.subr.mxu0 0.0
    %1558 = vmatpush1.xpose.msra.mxu0 0.0
    %1559 = vmatprep.subr.mxu0 0.0
    %1560 = vmatpush1.xpose.msra.mxu0 0.0
    %1561 = vmatprep.subr.mxu0 0.0
    %1562 = vmatpush1.xpose.msra.mxu0 0.0
    %1563 = vmatprep.subr.mxu0 0.0
    %1564 = vmatpush1.xpose.msra.mxu0 0.0
    %1565 = vmatprep.subr.mxu0 0.0
    %1566 = vmatpush1.xpose.msra.mxu0 0.0
    %1567 = vmatprep.subr.mxu0 0.0
    %1568 = vmatpush1.xpose.msra.mxu0 0.0
    %1569 = vmatprep.subr.mxu0 0.0
    %1570 = vmatpush1.xpose.msra.mxu0 0.0
    %1571 = vmatprep.subr.mxu0 0.0
    %1572 = vmatpush1.xpose.msra.mxu0 0.0
    %1573 = vmatprep.subr.mxu0 0.0
    %1574 = vmatpush1.xpose.msra.mxu0 0.0
    %1575 = vmatprep.subr.mxu0 0.0
    %1576 = vmatpush1.xpose.msra.mxu0 0.0
    %1577 = vmatprep.subr.mxu0 0.0
    %1578 = vmatpush1.xpose.msra.mxu0 0.0
    %1579 = vmatprep.subr.mxu0 0.0
    %1580 = vmatpush1.xpose.msra.mxu0 0.0
    %1581 = vmatprep.subr.mxu0 0.0
    %1582 = vmatpush1.xpose.msra.mxu0 0.0
    %1583 = vmatprep.subr.mxu0 0.0
    %1584 = vmatpush1.xpose.msra.mxu0 0.0
    %1585 = vmatprep.subr.mxu0 0.0
    %1586 = vmatpush1.xpose.msra.mxu0 0.0
    %1587 = vmatprep.subr.mxu0 0.0
    %1588 = vmatpush1.xpose.msra.mxu0 0.0
    %1589 = vmatprep.subr.mxu0 0.0
    %1590 = vmatpush1.xpose.msra.mxu0 0.0
    %1591 = vmatprep.subr.mxu0 0.0
    %1592 = vmatpush1.xpose.msra.mxu0 0.0
    %1593 = vmatprep.subr.mxu0 0.0
    %1594 = vmatpush1.xpose.msra.mxu0 0.0
    %1595 = vmatprep.subr.mxu0 0.0
    %1596 = vmatpush1.xpose.msra.mxu0 0.0
    %1597 = vmatprep.subr.mxu0 0.0
    %1598 = vmatpush1.xpose.msra.mxu0 0.0
    %1599 = vmatprep.subr.mxu0 0.0
    %1600 = vmatpush1.xpose.msra.mxu0 0.0
    %1601 = vmatprep.subr.mxu0 0.0
    %1602 = vmatpush1.xpose.msra.mxu0 0.0
    %1603 = vmatprep.subr.mxu0 0.0
    %1604 = vmatpush1.xpose.msra.mxu0 0.0
    %1605 = vmatprep.subr.mxu0 0.0
    %1606 = vmatpush1.xpose.msra.mxu0 0.0
    %1607 = vmatprep.mubr.f32.mxu0 0.0
    %1608 = vmatmul.mubr.f32.gmra.mrb[0].mxu0 %v1535
    %v1609 = vpop.f32.mrb[0].mxu0
    %v1610 = vadd.f32 %v1515, %v1609
    %v1611 = vpop.f32.mrb[0].mxu0
    %1612 = vmatprep.mubr.f32.mxu0 0.0
    %1613 = vmatmul.mubr.f32.gmra.mrb[0].mxu0 %v1537
    %v1614 = vpop.f32.mrb[0].mxu0
    %v1615 = vadd.f32 %v1516, %v1614
    %v1616 = vpop.f32.mrb[0].mxu0
    %1617 = vdwg.mxu0
    %1618 = vrot.lane.b32.xlu0 %v1311, 64
    %v1619 = vpop.permute.xlu0 %1618
    %1620 = vrot.lane.b32.xlu0 %v1313, 64
    %v1621 = vpop.permute.xlu0 %1620
    %v1622 = vsel %vm255, %v1311, 0
    %v1624 = vsel %vm255, %v1313, 0
    %v1626 = vsel %vm255, %v1619, 0
    %v1628 = vsel %vm255, %v1621, 0
    %1630 = vmatprep.subr.mxu0 0.0
    %1631 = vmatpush1.xpose.msra.mxu0 %v1626
    %1632 = vmatprep.subr.mxu0 0.0
    %1633 = vmatpush1.xpose.msra.mxu0 %v1628
    %1634 = vmatprep.subr.mxu0 0.0
    %1635 = vmatpush1.xpose.msra.mxu0 0.0
    %1636 = vmatprep.subr.mxu0 0.0
    %1637 = vmatpush1.xpose.msra.mxu0 0.0
    %1638 = vmatprep.subr.mxu0 0.0
    %1639 = vmatpush1.xpose.msra.mxu0 0.0
    %1640 = vmatprep.subr.mxu0 0.0
    %1641 = vmatpush1.xpose.msra.mxu0 0.0
    %1642 = vmatprep.subr.mxu0 0.0
    %1643 = vmatpush1.xpose.msra.mxu0 0.0
    %1644 = vmatprep.subr.mxu0 0.0
    %1645 = vmatpush1.xpose.msra.mxu0 0.0
    %1646 = vmatprep.subr.mxu0 0.0
    %1647 = vmatpush1.xpose.msra.mxu0 0.0
    %1648 = vmatprep.subr.mxu0 0.0
    %1649 = vmatpush1.xpose.msra.mxu0 0.0
    %1650 = vmatprep.subr.mxu0 0.0
    %1651 = vmatpush1.xpose.msra.mxu0 0.0
    %1652 = vmatprep.subr.mxu0 0.0
    %1653 = vmatpush1.xpose.msra.mxu0 0.0
    %1654 = vmatprep.subr.mxu0 0.0
    %1655 = vmatpush1.xpose.msra.mxu0 0.0
    %1656 = vmatprep.subr.mxu0 0.0
    %1657 = vmatpush1.xpose.msra.mxu0 0.0
    %1658 = vmatprep.subr.mxu0 0.0
    %1659 = vmatpush1.xpose.msra.mxu0 0.0
    %1660 = vmatprep.subr.mxu0 0.0
    %1661 = vmatpush1.xpose.msra.mxu0 0.0
    %1662 = vmatprep.subr.mxu0 0.0
    %1663 = vmatpush1.xpose.msra.mxu0 0.0
    %1664 = vmatprep.subr.mxu0 0.0
    %1665 = vmatpush1.xpose.msra.mxu0 0.0
    %1666 = vmatprep.subr.mxu0 0.0
    %1667 = vmatpush1.xpose.msra.mxu0 0.0
    %1668 = vmatprep.subr.mxu0 0.0
    %1669 = vmatpush1.xpose.msra.mxu0 0.0
    %1670 = vmatprep.subr.mxu0 0.0
    %1671 = vmatpush1.xpose.msra.mxu0 0.0
    %1672 = vmatprep.subr.mxu0 0.0
    %1673 = vmatpush1.xpose.msra.mxu0 0.0
    %1674 = vmatprep.subr.mxu0 0.0
    %1675 = vmatpush1.xpose.msra.mxu0 0.0
    %1676 = vmatprep.subr.mxu0 0.0
    %1677 = vmatpush1.xpose.msra.mxu0 0.0
    %1678 = vmatprep.subr.mxu0 0.0
    %1679 = vmatpush1.xpose.msra.mxu0 0.0
    %1680 = vmatprep.subr.mxu0 0.0
    %1681 = vmatpush1.xpose.msra.mxu0 0.0
    %1682 = vmatprep.subr.mxu0 0.0
    %1683 = vmatpush1.xpose.msra.mxu0 0.0
    %1684 = vmatprep.subr.mxu0 0.0
    %1685 = vmatpush1.xpose.msra.mxu0 0.0
    %1686 = vmatprep.subr.mxu0 0.0
    %1687 = vmatpush1.xpose.msra.mxu0 0.0
    %1688 = vmatprep.subr.mxu0 0.0
    %1689 = vmatpush1.xpose.msra.mxu0 0.0
    %1690 = vmatprep.subr.mxu0 0.0
    %1691 = vmatpush1.xpose.msra.mxu0 0.0
    %1692 = vmatprep.subr.mxu0 0.0
    %1693 = vmatpush1.xpose.msra.mxu0 0.0
    %1694 = vmatprep.mubr.f32.mxu0 0.0
    %1695 = vmatmul.mubr.f32.gmra.mrb[0].mxu0 %v1622
    %v1696 = vpop.f32.mrb[0].mxu0
    %v1697 = vadd.f32 %v1517, %v1696
    %v1698 = vpop.f32.mrb[0].mxu0
    %1699 = vmatprep.mubr.f32.mxu0 0.0
    %1700 = vmatmul.mubr.f32.gmra.mrb[0].mxu0 %v1624
    %v1701 = vpop.f32.mrb[0].mxu0
    %v1702 = vadd.f32 %v1518, %v1701
    %v1703 = vpop.f32.mrb[0].mxu0
    %1704 = vdwg.mxu0
    %1705 = vrot.lane.b32.xlu0 %v1317, 64
    %v1706 = vpop.permute.xlu0 %1705
    %1707 = vrot.lane.b32.xlu0 %v1319, 64
    %v1708 = vpop.permute.xlu0 %1707
    %v1709 = vsel %vm255, %v1317, 0
    %v1711 = vsel %vm255, %v1319, 0
    %v1713 = vsel %vm255, %v1706, 0
    %v1715 = vsel %vm255, %v1708, 0
    %1717 = vmatprep.subr.mxu0 0.0
    %1718 = vmatpush1.xpose.msra.mxu0 %v1713
    %1719 = vmatprep.subr.mxu0 0.0
    %1720 = vmatpush1.xpose.msra.mxu0 %v1715
    %1721 = vmatprep.subr.mxu0 0.0
    %1722 = vmatpush1.xpose.msra.mxu0 0.0
    %1723 = vmatprep.subr.mxu0 0.0
    %1724 = vmatpush1.xpose.msra.mxu0 0.0
    %1725 = vmatprep.subr.mxu0 0.0
    %1726 = vmatpush1.xpose.msra.mxu0 0.0
    %1727 = vmatprep.subr.mxu0 0.0
    %1728 = vmatpush1.xpose.msra.mxu0 0.0
    %1729 = vmatprep.subr.mxu0 0.0
    %1730 = vmatpush1.xpose.msra.mxu0 0.0
    %1731 = vmatprep.subr.mxu0 0.0
    %1732 = vmatpush1.xpose.msra.mxu0 0.0
    %1733 = vmatprep.subr.mxu0 0.0
    %1734 = vmatpush1.xpose.msra.mxu0 0.0
    %1735 = vmatprep.subr.mxu0 0.0
    %1736 = vmatpush1.xpose.msra.mxu0 0.0
    %1737 = vmatprep.subr.mxu0 0.0
    %1738 = vmatpush1.xpose.msra.mxu0 0.0
    %1739 = vmatprep.subr.mxu0 0.0
    %1740 = vmatpush1.xpose.msra.mxu0 0.0
    %1741 = vmatprep.subr.mxu0 0.0
    %1742 = vmatpush1.xpose.msra.mxu0 0.0
    %1743 = vmatprep.subr.mxu0 0.0
    %1744 = vmatpush1.xpose.msra.mxu0 0.0
    %1745 = vmatprep.subr.mxu0 0.0
    %1746 = vmatpush1.xpose.msra.mxu0 0.0
    %1747 = vmatprep.subr.mxu0 0.0
    %1748 = vmatpush1.xpose.msra.mxu0 0.0
    %1749 = vmatprep.subr.mxu0 0.0
    %1750 = vmatpush1.xpose.msra.mxu0 0.0
    %1751 = vmatprep.subr.mxu0 0.0
    %1752 = vmatpush1.xpose.msra.mxu0 0.0
    %1753 = vmatprep.subr.mxu0 0.0
    %1754 = vmatpush1.xpose.msra.mxu0 0.0
    %1755 = vmatprep.subr.mxu0 0.0
    %1756 = vmatpush1.xpose.msra.mxu0 0.0
    %1757 = vmatprep.subr.mxu0 0.0
    %1758 = vmatpush1.xpose.msra.mxu0 0.0
    %1759 = vmatprep.subr.mxu0 0.0
    %1760 = vmatpush1.xpose.msra.mxu0 0.0
    %1761 = vmatprep.subr.mxu0 0.0
    %1762 = vmatpush1.xpose.msra.mxu0 0.0
    %1763 = vmatprep.subr.mxu0 0.0
    %1764 = vmatpush1.xpose.msra.mxu0 0.0
    %1765 = vmatprep.subr.mxu0 0.0
    %1766 = vmatpush1.xpose.msra.mxu0 0.0
    %1767 = vmatprep.subr.mxu0 0.0
    %1768 = vmatpush1.xpose.msra.mxu0 0.0
    %1769 = vmatprep.subr.mxu0 0.0
    %1770 = vmatpush1.xpose.msra.mxu0 0.0
    %1771 = vmatprep.subr.mxu0 0.0
    %1772 = vmatpush1.xpose.msra.mxu0 0.0
    %1773 = vmatprep.subr.mxu0 0.0
    %1774 = vmatpush1.xpose.msra.mxu0 0.0
    %1775 = vmatprep.subr.mxu0 0.0
    %1776 = vmatpush1.xpose.msra.mxu0 0.0
    %1777 = vmatprep.subr.mxu0 0.0
    %1778 = vmatpush1.xpose.msra.mxu0 0.0
    %1779 = vmatprep.subr.mxu0 0.0
    %1780 = vmatpush1.xpose.msra.mxu0 0.0
    %1781 = vmatprep.mubr.f32.mxu0 0.0
    %1782 = vmatmul.mubr.f32.gmra.mrb[0].mxu0 %v1709
    %v1783 = vpop.f32.mrb[0].mxu0
    %v1784 = vadd.f32 %v1519, %v1783
    %v1785 = vpop.f32.mrb[0].mxu0
    %1786 = vmatprep.mubr.f32.mxu0 0.0
    %1787 = vmatmul.mubr.f32.gmra.mrb[0].mxu0 %v1711
    %v1788 = vpop.f32.mrb[0].mxu0
    %v1789 = vadd.f32 %v1520, %v1788
    %v1790 = vpop.f32.mrb[0].mxu0
    %1791 = vdwg.mxu0
    %1792 = vrot.lane.b32.xlu0 %v1323, 64
    %v1793 = vpop.permute.xlu0 %1792
    %1794 = vrot.lane.b32.xlu0 %v1325, 64
    %v1795 = vpop.permute.xlu0 %1794
    %v1796 = vsel %vm255, %v1323, 0
    %v1798 = vsel %vm255, %v1325, 0
    %v1800 = vsel %vm255, %v1793, 0
    %v1802 = vsel %vm255, %v1795, 0
    %1804 = vmatprep.subr.mxu0 0.0
    %1805 = vmatpush1.xpose.msra.mxu0 %v1800
    %1806 = vmatprep.subr.mxu0 0.0
    %1807 = vmatpush1.xpose.msra.mxu0 %v1802
    %1808 = vmatprep.subr.mxu0 0.0
    %1809 = vmatpush1.xpose.msra.mxu0 0.0
    %1810 = vmatprep.subr.mxu0 0.0
    %1811 = vmatpush1.xpose.msra.mxu0 0.0
    %1812 = vmatprep.subr.mxu0 0.0
    %1813 = vmatpush1.xpose.msra.mxu0 0.0
    %1814 = vmatprep.subr.mxu0 0.0
    %1815 = vmatpush1.xpose.msra.mxu0 0.0
    %1816 = vmatprep.subr.mxu0 0.0
    %1817 = vmatpush1.xpose.msra.mxu0 0.0
    %1818 = vmatprep.subr.mxu0 0.0
    %1819 = vmatpush1.xpose.msra.mxu0 0.0
    %1820 = vmatprep.subr.mxu0 0.0
    %1821 = vmatpush1.xpose.msra.mxu0 0.0
    %1822 = vmatprep.subr.mxu0 0.0
    %1823 = vmatpush1.xpose.msra.mxu0 0.0
    %1824 = vmatprep.subr.mxu0 0.0
    %1825 = vmatpush1.xpose.msra.mxu0 0.0
    %1826 = vmatprep.subr.mxu0 0.0
    %1827 = vmatpush1.xpose.msra.mxu0 0.0
    %1828 = vmatprep.subr.mxu0 0.0
    %1829 = vmatpush1.xpose.msra.mxu0 0.0
    %1830 = vmatprep.subr.mxu0 0.0
    %1831 = vmatpush1.xpose.msra.mxu0 0.0
    %1832 = vmatprep.subr.mxu0 0.0
    %1833 = vmatpush1.xpose.msra.mxu0 0.0
    %1834 = vmatprep.subr.mxu0 0.0
    %1835 = vmatpush1.xpose.msra.mxu0 0.0
    %1836 = vmatprep.subr.mxu0 0.0
    %1837 = vmatpush1.xpose.msra.mxu0 0.0
    %1838 = vmatprep.subr.mxu0 0.0
    %1839 = vmatpush1.xpose.msra.mxu0 0.0
    %1840 = vmatprep.subr.mxu0 0.0
    %1841 = vmatpush1.xpose.msra.mxu0 0.0
    %1842 = vmatprep.subr.mxu0 0.0
    %1843 = vmatpush1.xpose.msra.mxu0 0.0
    %1844 = vmatprep.subr.mxu0 0.0
    %1845 = vmatpush1.xpose.msra.mxu0 0.0
    %1846 = vmatprep.subr.mxu0 0.0
    %1847 = vmatpush1.xpose.msra.mxu0 0.0
    %1848 = vmatprep.subr.mxu0 0.0
    %1849 = vmatpush1.xpose.msra.mxu0 0.0
    %1850 = vmatprep.subr.mxu0 0.0
    %1851 = vmatpush1.xpose.msra.mxu0 0.0
    %1852 = vmatprep.subr.mxu0 0.0
    %1853 = vmatpush1.xpose.msra.mxu0 0.0
    %1854 = vmatprep.subr.mxu0 0.0
    %1855 = vmatpush1.xpose.msra.mxu0 0.0
    %1856 = vmatprep.subr.mxu0 0.0
    %1857 = vmatpush1.xpose.msra.mxu0 0.0
    %1858 = vmatprep.subr.mxu0 0.0
    %1859 = vmatpush1.xpose.msra.mxu0 0.0
    %1860 = vmatprep.subr.mxu0 0.0
    %1861 = vmatpush1.xpose.msra.mxu0 0.0
    %1862 = vmatprep.subr.mxu0 0.0
    %1863 = vmatpush1.xpose.msra.mxu0 0.0
    %1864 = vmatprep.subr.mxu0 0.0
    %1865 = vmatpush1.xpose.msra.mxu0 0.0
    %1866 = vmatprep.subr.mxu0 0.0
    %1867 = vmatpush1.xpose.msra.mxu0 0.0
    %1868 = vmatprep.mubr.f32.mxu0 0.0
    %1869 = vmatmul.mubr.f32.gmra.mrb[0].mxu0 %v1796
    %v1870 = vpop.f32.mrb[0].mxu0
    %v1871 = vadd.f32 %v1521, %v1870
    %v1872 = vpop.f32.mrb[0].mxu0
    %1873 = vmatprep.mubr.f32.mxu0 0.0
    %1874 = vmatmul.mubr.f32.gmra.mrb[0].mxu0 %v1798
    %v1875 = vpop.f32.mrb[0].mxu0
    %v1876 = vadd.f32 %v1522, %v1875
    %v1877 = vpop.f32.mrb[0].mxu0
    %1878 = vdwg.mxu0
    %1879 = vrot.lane.b32.xlu0 %v1329, 64
    %v1880 = vpop.permute.xlu0 %1879
    %1881 = vrot.lane.b32.xlu0 %v1331, 64
    %v1882 = vpop.permute.xlu0 %1881
    %v1883 = vsel %vm255, %v1329, 0
    %v1885 = vsel %vm255, %v1331, 0
    %v1887 = vsel %vm255, %v1880, 0
    %v1889 = vsel %vm255, %v1882, 0
    %1891 = vmatprep.subr.mxu0 0.0
    %1892 = vmatpush1.xpose.msra.mxu0 %v1887
    %1893 = vmatprep.subr.mxu0 0.0
    %1894 = vmatpush1.xpose.msra.mxu0 %v1889
    %1895 = vmatprep.subr.mxu0 0.0
    %1896 = vmatpush1.xpose.msra.mxu0 0.0
    %1897 = vmatprep.subr.mxu0 0.0
    %1898 = vmatpush1.xpose.msra.mxu0 0.0
    %1899 = vmatprep.subr.mxu0 0.0
    %1900 = vmatpush1.xpose.msra.mxu0 0.0
    %1901 = vmatprep.subr.mxu0 0.0
    %1902 = vmatpush1.xpose.msra.mxu0 0.0
    %1903 = vmatprep.subr.mxu0 0.0
    %1904 = vmatpush1.xpose.msra.mxu0 0.0
    %1905 = vmatprep.subr.mxu0 0.0
    %1906 = vmatpush1.xpose.msra.mxu0 0.0
    %1907 = vmatprep.subr.mxu0 0.0
    %1908 = vmatpush1.xpose.msra.mxu0 0.0
    %1909 = vmatprep.subr.mxu0 0.0
    %1910 = vmatpush1.xpose.msra.mxu0 0.0
    %1911 = vmatprep.subr.mxu0 0.0
    %1912 = vmatpush1.xpose.msra.mxu0 0.0
    %1913 = vmatprep.subr.mxu0 0.0
    %1914 = vmatpush1.xpose.msra.mxu0 0.0
    %1915 = vmatprep.subr.mxu0 0.0
    %1916 = vmatpush1.xpose.msra.mxu0 0.0
    %1917 = vmatprep.subr.mxu0 0.0
    %1918 = vmatpush1.xpose.msra.mxu0 0.0
    %1919 = vmatprep.subr.mxu0 0.0
    %1920 = vmatpush1.xpose.msra.mxu0 0.0
    %1921 = vmatprep.subr.mxu0 0.0
    %1922 = vmatpush1.xpose.msra.mxu0 0.0
    %1923 = vmatprep.subr.mxu0 0.0
    %1924 = vmatpush1.xpose.msra.mxu0 0.0
    %1925 = vmatprep.subr.mxu0 0.0
    %1926 = vmatpush1.xpose.msra.mxu0 0.0
    %1927 = vmatprep.subr.mxu0 0.0
    %1928 = vmatpush1.xpose.msra.mxu0 0.0
    %1929 = vmatprep.subr.mxu0 0.0
    %1930 = vmatpush1.xpose.msra.mxu0 0.0
    %1931 = vmatprep.subr.mxu0 0.0
    %1932 = vmatpush1.xpose.msra.mxu0 0.0
    %1933 = vmatprep.subr.mxu0 0.0
    %1934 = vmatpush1.xpose.msra.mxu0 0.0
    %1935 = vmatprep.subr.mxu0 0.0
    %1936 = vmatpush1.xpose.msra.mxu0 0.0
    %1937 = vmatprep.subr.mxu0 0.0
    %1938 = vmatpush1.xpose.msra.mxu0 0.0
    %1939 = vmatprep.subr.mxu0 0.0
    %1940 = vmatpush1.xpose.msra.mxu0 0.0
    %1941 = vmatprep.subr.mxu0 0.0
    %1942 = vmatpush1.xpose.msra.mxu0 0.0
    %1943 = vmatprep.subr.mxu0 0.0
    %1944 = vmatpush1.xpose.msra.mxu0 0.0
    %1945 = vmatprep.subr.mxu0 0.0
    %1946 = vmatpush1.xpose.msra.mxu0 0.0
    %1947 = vmatprep.subr.mxu0 0.0
    %1948 = vmatpush1.xpose.msra.mxu0 0.0
    %1949 = vmatprep.subr.mxu0 0.0
    %1950 = vmatpush1.xpose.msra.mxu0 0.0
    %1951 = vmatprep.subr.mxu0 0.0
    %1952 = vmatpush1.xpose.msra.mxu0 0.0
    %1953 = vmatprep.subr.mxu0 0.0
    %1954 = vmatpush1.xpose.msra.mxu0 0.0
    %1955 = vmatprep.mubr.f32.mxu0 0.0
    %1956 = vmatmul.mubr.f32.gmra.mrb[0].mxu0 %v1883
    %v1957 = vpop.f32.mrb[0].mxu0
    %v1958 = vadd.f32 %v1523, %v1957
    %v1959 = vpop.f32.mrb[0].mxu0
    %1960 = vmatprep.mubr.f32.mxu0 0.0
    %1961 = vmatmul.mubr.f32.gmra.mrb[0].mxu0 %v1885
    %v1962 = vpop.f32.mrb[0].mxu0
    %v1963 = vadd.f32 %v1524, %v1962
    %v1964 = vpop.f32.mrb[0].mxu0
    %1965 = vdwg.mxu0
    %1966 = vrot.lane.b32.xlu0 %v1335, 64
    %v1967 = vpop.permute.xlu0 %1966
    %1968 = vrot.lane.b32.xlu0 %v1337, 64
    %v1969 = vpop.permute.xlu0 %1968
    %v1970 = vsel %vm255, %v1335, 0
    %v1972 = vsel %vm255, %v1337, 0
    %v1974 = vsel %vm255, %v1967, 0
    %v1976 = vsel %vm255, %v1969, 0
    %1978 = vmatprep.subr.mxu0 0.0
    %1979 = vmatpush1.xpose.msra.mxu0 %v1974
    %1980 = vmatprep.subr.mxu0 0.0
    %1981 = vmatpush1.xpose.msra.mxu0 %v1976
    %1982 = vmatprep.subr.mxu0 0.0
    %1983 = vmatpush1.xpose.msra.mxu0 0.0
    %1984 = vmatprep.subr.mxu0 0.0
    %1985 = vmatpush1.xpose.msra.mxu0 0.0
    %1986 = vmatprep.subr.mxu0 0.0
    %1987 = vmatpush1.xpose.msra.mxu0 0.0
    %1988 = vmatprep.subr.mxu0 0.0
    %1989 = vmatpush1.xpose.msra.mxu0 0.0
    %1990 = vmatprep.subr.mxu0 0.0
    %1991 = vmatpush1.xpose.msra.mxu0 0.0
    %1992 = vmatprep.subr.mxu0 0.0
    %1993 = vmatpush1.xpose.msra.mxu0 0.0
    %1994 = vmatprep.subr.mxu0 0.0
    %1995 = vmatpush1.xpose.msra.mxu0 0.0
    %1996 = vmatprep.subr.mxu0 0.0
    %1997 = vmatpush1.xpose.msra.mxu0 0.0
    %1998 = vmatprep.subr.mxu0 0.0
    %1999 = vmatpush1.xpose.msra.mxu0 0.0
    %2000 = vmatprep.subr.mxu0 0.0
    %2001 = vmatpush1.xpose.msra.mxu0 0.0
    %2002 = vmatprep.subr.mxu0 0.0
    %2003 = vmatpush1.xpose.msra.mxu0 0.0
    %2004 = vmatprep.subr.mxu0 0.0
    %2005 = vmatpush1.xpose.msra.mxu0 0.0
    %2006 = vmatprep.subr.mxu0 0.0
    %2007 = vmatpush1.xpose.msra.mxu0 0.0
    %2008 = vmatprep.subr.mxu0 0.0
    %2009 = vmatpush1.xpose.msra.mxu0 0.0
    %2010 = vmatprep.subr.mxu0 0.0
    %2011 = vmatpush1.xpose.msra.mxu0 0.0
    %2012 = vmatprep.subr.mxu0 0.0
    %2013 = vmatpush1.xpose.msra.mxu0 0.0
    %2014 = vmatprep.subr.mxu0 0.0
    %2015 = vmatpush1.xpose.msra.mxu0 0.0
    %2016 = vmatprep.subr.mxu0 0.0
    %2017 = vmatpush1.xpose.msra.mxu0 0.0
    %2018 = vmatprep.subr.mxu0 0.0
    %2019 = vmatpush1.xpose.msra.mxu0 0.0
    %2020 = vmatprep.subr.mxu0 0.0
    %2021 = vmatpush1.xpose.msra.mxu0 0.0
    %2022 = vmatprep.subr.mxu0 0.0
    %2023 = vmatpush1.xpose.msra.mxu0 0.0
    %2024 = vmatprep.subr.mxu0 0.0
    %2025 = vmatpush1.xpose.msra.mxu0 0.0
    %2026 = vmatprep.subr.mxu0 0.0
    %2027 = vmatpush1.xpose.msra.mxu0 0.0
    %2028 = vmatprep.subr.mxu0 0.0
    %2029 = vmatpush1.xpose.msra.mxu0 0.0
    %2030 = vmatprep.subr.mxu0 0.0
    %2031 = vmatpush1.xpose.msra.mxu0 0.0
    %2032 = vmatprep.subr.mxu0 0.0
    %2033 = vmatpush1.xpose.msra.mxu0 0.0
    %2034 = vmatprep.subr.mxu0 0.0
    %2035 = vmatpush1.xpose.msra.mxu0 0.0
    %2036 = vmatprep.subr.mxu0 0.0
    %2037 = vmatpush1.xpose.msra.mxu0 0.0
    %2038 = vmatprep.subr.mxu0 0.0
    %2039 = vmatpush1.xpose.msra.mxu0 0.0
    %2040 = vmatprep.subr.mxu0 0.0
    %2041 = vmatpush1.xpose.msra.mxu0 0.0
    %2042 = vmatprep.mubr.f32.mxu0 0.0
    %2043 = vmatmul.mubr.f32.gmra.mrb[0].mxu0 %v1970
    %v2044 = vpop.f32.mrb[0].mxu0
    %v2045 = vadd.f32 %v1525, %v2044
    %v2046 = vpop.f32.mrb[0].mxu0
    %2047 = vmatprep.mubr.f32.mxu0 0.0
    %2048 = vmatmul.mubr.f32.gmra.mrb[0].mxu0 %v1972
    %v2049 = vpop.f32.mrb[0].mxu0
    %v2050 = vadd.f32 %v1526, %v2049
    %v2051 = vpop.f32.mrb[0].mxu0
    %2052 = vdwg.mxu0
    %2053 = vrot.lane.b32.xlu0 %v1341, 64
    %v2054 = vpop.permute.xlu0 %2053
    %2055 = vrot.lane.b32.xlu0 %v1343, 64
    %v2056 = vpop.permute.xlu0 %2055
    %v2057 = vsel %vm255, %v1341, 0
    %v2059 = vsel %vm255, %v1343, 0
    %v2061 = vsel %vm255, %v2054, 0
    %v2063 = vsel %vm255, %v2056, 0
    %2065 = vmatprep.subr.mxu0 0.0
    %2066 = vmatpush1.xpose.msra.mxu0 %v2061
    %2067 = vmatprep.subr.mxu0 0.0
    %2068 = vmatpush1.xpose.msra.mxu0 %v2063
    %2069 = vmatprep.subr.mxu0 0.0
    %2070 = vmatpush1.xpose.msra.mxu0 0.0
    %2071 = vmatprep.subr.mxu0 0.0
    %2072 = vmatpush1.xpose.msra.mxu0 0.0
    %2073 = vmatprep.subr.mxu0 0.0
    %2074 = vmatpush1.xpose.msra.mxu0 0.0
    %2075 = vmatprep.subr.mxu0 0.0
    %2076 = vmatpush1.xpose.msra.mxu0 0.0
    %2077 = vmatprep.subr.mxu0 0.0
    %2078 = vmatpush1.xpose.msra.mxu0 0.0
    %2079 = vmatprep.subr.mxu0 0.0
    %2080 = vmatpush1.xpose.msra.mxu0 0.0
    %2081 = vmatprep.subr.mxu0 0.0
    %2082 = vmatpush1.xpose.msra.mxu0 0.0
    %2083 = vmatprep.subr.mxu0 0.0
    %2084 = vmatpush1.xpose.msra.mxu0 0.0
    %2085 = vmatprep.subr.mxu0 0.0
    %2086 = vmatpush1.xpose.msra.mxu0 0.0
    %2087 = vmatprep.subr.mxu0 0.0
    %2088 = vmatpush1.xpose.msra.mxu0 0.0
    %2089 = vmatprep.subr.mxu0 0.0
    %2090 = vmatpush1.xpose.msra.mxu0 0.0
    %2091 = vmatprep.subr.mxu0 0.0
    %2092 = vmatpush1.xpose.msra.mxu0 0.0
    %2093 = vmatprep.subr.mxu0 0.0
    %2094 = vmatpush1.xpose.msra.mxu0 0.0
    %2095 = vmatprep.subr.mxu0 0.0
    %2096 = vmatpush1.xpose.msra.mxu0 0.0
    %2097 = vmatprep.subr.mxu0 0.0
    %2098 = vmatpush1.xpose.msra.mxu0 0.0
    %2099 = vmatprep.subr.mxu0 0.0
    %2100 = vmatpush1.xpose.msra.mxu0 0.0
    %2101 = vmatprep.subr.mxu0 0.0
    %2102 = vmatpush1.xpose.msra.mxu0 0.0
    %2103 = vmatprep.subr.mxu0 0.0
    %2104 = vmatpush1.xpose.msra.mxu0 0.0
    %2105 = vmatprep.subr.mxu0 0.0
    %2106 = vmatpush1.xpose.msra.mxu0 0.0
    %2107 = vmatprep.subr.mxu0 0.0
    %2108 = vmatpush1.xpose.msra.mxu0 0.0
    %2109 = vmatprep.subr.mxu0 0.0
    %2110 = vmatpush1.xpose.msra.mxu0 0.0
    %2111 = vmatprep.subr.mxu0 0.0
    %2112 = vmatpush1.xpose.msra.mxu0 0.0
    %2113 = vmatprep.subr.mxu0 0.0
    %2114 = vmatpush1.xpose.msra.mxu0 0.0
    %2115 = vmatprep.subr.mxu0 0.0
    %2116 = vmatpush1.xpose.msra.mxu0 0.0
    %2117 = vmatprep.subr.mxu0 0.0
    %2118 = vmatpush1.xpose.msra.mxu0 0.0
    %2119 = vmatprep.subr.mxu0 0.0
    %2120 = vmatpush1.xpose.msra.mxu0 0.0
    %2121 = vmatprep.subr.mxu0 0.0
    %2122 = vmatpush1.xpose.msra.mxu0 0.0
    %2123 = vmatprep.subr.mxu0 0.0
    %2124 = vmatpush1.xpose.msra.mxu0 0.0
    %2125 = vmatprep.subr.mxu0 0.0
    %2126 = vmatpush1.xpose.msra.mxu0 0.0
    %2127 = vmatprep.subr.mxu0 0.0
    %2128 = vmatpush1.xpose.msra.mxu0 0.0
    %2129 = vmatprep.mubr.f32.mxu0 0.0
    %2130 = vmatmul.mubr.f32.gmra.mrb[0].mxu0 %v2057
    %v2131 = vpop.f32.mrb[0].mxu0
    %v2132 = vadd.f32 %v1527, %v2131
    %v2133 = vpop.f32.mrb[0].mxu0
    %2134 = vmatprep.mubr.f32.mxu0 0.0
    %2135 = vmatmul.mubr.f32.gmra.mrb[0].mxu0 %v2059
    %v2136 = vpop.f32.mrb[0].mxu0
    %v2137 = vadd.f32 %v1528, %v2136
    %v2138 = vpop.f32.mrb[0].mxu0
    %2139 = vdwg.mxu0
    %2140 = vrot.lane.b32.xlu0 %v1347, 64
    %v2141 = vpop.permute.xlu0 %2140
    %2142 = vrot.lane.b32.xlu0 %v1349, 64
    %v2143 = vpop.permute.xlu0 %2142
    %v2144 = vsel %vm255, %v1347, 0
    %v2146 = vsel %vm255, %v1349, 0
    %v2148 = vsel %vm255, %v2141, 0
    %v2150 = vsel %vm255, %v2143, 0
    %2152 = vmatprep.subr.mxu0 0.0
    %2153 = vmatpush1.xpose.msra.mxu0 %v2148
    %2154 = vmatprep.subr.mxu0 0.0
    %2155 = vmatpush1.xpose.msra.mxu0 %v2150
    %2156 = vmatprep.subr.mxu0 0.0
    %2157 = vmatpush1.xpose.msra.mxu0 0.0
    %2158 = vmatprep.subr.mxu0 0.0
    %2159 = vmatpush1.xpose.msra.mxu0 0.0
    %2160 = vmatprep.subr.mxu0 0.0
    %2161 = vmatpush1.xpose.msra.mxu0 0.0
    %2162 = vmatprep.subr.mxu0 0.0
    %2163 = vmatpush1.xpose.msra.mxu0 0.0
    %2164 = vmatprep.subr.mxu0 0.0
    %2165 = vmatpush1.xpose.msra.mxu0 0.0
    %2166 = vmatprep.subr.mxu0 0.0
    %2167 = vmatpush1.xpose.msra.mxu0 0.0
    %2168 = vmatprep.subr.mxu0 0.0
    %2169 = vmatpush1.xpose.msra.mxu0 0.0
    %2170 = vmatprep.subr.mxu0 0.0
    %2171 = vmatpush1.xpose.msra.mxu0 0.0
    %2172 = vmatprep.subr.mxu0 0.0
    %2173 = vmatpush1.xpose.msra.mxu0 0.0
    %2174 = vmatprep.subr.mxu0 0.0
    %2175 = vmatpush1.xpose.msra.mxu0 0.0
    %2176 = vmatprep.subr.mxu0 0.0
    %2177 = vmatpush1.xpose.msra.mxu0 0.0
    %2178 = vmatprep.subr.mxu0 0.0
    %2179 = vmatpush1.xpose.msra.mxu0 0.0
    %2180 = vmatprep.subr.mxu0 0.0
    %2181 = vmatpush1.xpose.msra.mxu0 0.0
    %2182 = vmatprep.subr.mxu0 0.0
    %2183 = vmatpush1.xpose.msra.mxu0 0.0
    %2184 = vmatprep.subr.mxu0 0.0
    %2185 = vmatpush1.xpose.msra.mxu0 0.0
    %2186 = vmatprep.subr.mxu0 0.0
    %2187 = vmatpush1.xpose.msra.mxu0 0.0
    %2188 = vmatprep.subr.mxu0 0.0
    %2189 = vmatpush1.xpose.msra.mxu0 0.0
    %2190 = vmatprep.subr.mxu0 0.0
    %2191 = vmatpush1.xpose.msra.mxu0 0.0
    %2192 = vmatprep.subr.mxu0 0.0
    %2193 = vmatpush1.xpose.msra.mxu0 0.0
    %2194 = vmatprep.subr.mxu0 0.0
    %2195 = vmatpush1.xpose.msra.mxu0 0.0
    %2196 = vmatprep.subr.mxu0 0.0
    %2197 = vmatpush1.xpose.msra.mxu0 0.0
    %2198 = vmatprep.subr.mxu0 0.0
    %2199 = vmatpush1.xpose.msra.mxu0 0.0
    %2200 = vmatprep.subr.mxu0 0.0
    %2201 = vmatpush1.xpose.msra.mxu0 0.0
    %2202 = vmatprep.subr.mxu0 0.0
    %2203 = vmatpush1.xpose.msra.mxu0 0.0
    %2204 = vmatprep.subr.mxu0 0.0
    %2205 = vmatpush1.xpose.msra.mxu0 0.0
    %2206 = vmatprep.subr.mxu0 0.0
    %2207 = vmatpush1.xpose.msra.mxu0 0.0
    %2208 = vmatprep.subr.mxu0 0.0
    %2209 = vmatpush1.xpose.msra.mxu0 0.0
    %2210 = vmatprep.subr.mxu0 0.0
    %2211 = vmatpush1.xpose.msra.mxu0 0.0
    %2212 = vmatprep.subr.mxu0 0.0
    %2213 = vmatpush1.xpose.msra.mxu0 0.0
    %2214 = vmatprep.subr.mxu0 0.0
    %2215 = vmatpush1.xpose.msra.mxu0 0.0
    %2216 = vmatprep.mubr.f32.mxu0 0.0
    %2217 = vmatmul.mubr.f32.gmra.mrb[0].mxu0 %v2144
    %v2218 = vpop.f32.mrb[0].mxu0
    %v2219 = vadd.f32 %v1529, %v2218
    %v2220 = vpop.f32.mrb[0].mxu0
    %2221 = vmatprep.mubr.f32.mxu0 0.0
    %2222 = vmatmul.mubr.f32.gmra.mrb[0].mxu0 %v2146
    %v2223 = vpop.f32.mrb[0].mxu0
    %v2224 = vadd.f32 %v1530, %v2223
    %v2225 = vpop.f32.mrb[0].mxu0
    %2226 = vdwg.mxu0
    %v2227 = vsel %vm118, %v1610, -inf
    %2228 = vmax.xlane.f32.xlu0 %v2227
    %v2229 = vpop.xlane.xlu0 %2228
    %v2230 = vsel %vm118, %v1615, -inf
    %2231 = vmax.xlane.f32.xlu0 %v2230
    %v2232 = vpop.xlane.xlu0 %2231
    %v2233 = vsel %vm118, %v1697, -inf
    %2234 = vmax.xlane.f32.xlu0 %v2233
    %v2235 = vpop.xlane.xlu0 %2234
    %v2236 = vsel %vm118, %v1702, -inf
    %2237 = vmax.xlane.f32.xlu0 %v2236
    %v2238 = vpop.xlane.xlu0 %2237
    %v2239 = vsel %vm118, %v1784, -inf
    %2240 = vmax.xlane.f32.xlu0 %v2239
    %v2241 = vpop.xlane.xlu0 %2240
    %v2242 = vsel %vm118, %v1789, -inf
    %2243 = vmax.xlane.f32.xlu0 %v2242
    %v2244 = vpop.xlane.xlu0 %2243
    %v2245 = vsel %vm118, %v1871, -inf
    %2246 = vmax.xlane.f32.xlu0 %v2245
    %v2247 = vpop.xlane.xlu0 %2246
    %v2248 = vsel %vm118, %v1876, -inf
    %2249 = vmax.xlane.f32.xlu0 %v2248
    %v2250 = vpop.xlane.xlu0 %2249
    %v2251 = vsel %vm118, %v1958, -inf
    %2252 = vmax.xlane.f32.xlu0 %v2251
    %v2253 = vpop.xlane.xlu0 %2252
    %v2254 = vsel %vm118, %v1963, -inf
    %2255 = vmax.xlane.f32.xlu0 %v2254
    %v2256 = vpop.xlane.xlu0 %2255
    %v2257 = vsel %vm118, %v2045, -inf
    %2258 = vmax.xlane.f32.xlu0 %v2257
    %v2259 = vpop.xlane.xlu0 %2258
    %v2260 = vsel %vm118, %v2050, -inf
    %2261 = vmax.xlane.f32.xlu0 %v2260
    %v2262 = vpop.xlane.xlu0 %2261
    %v2263 = vsel %vm118, %v2132, -inf
    %2264 = vmax.xlane.f32.xlu0 %v2263
    %v2265 = vpop.xlane.xlu0 %2264
    %v2266 = vsel %vm118, %v2137, -inf
    %2267 = vmax.xlane.f32.xlu0 %v2266
    %v2268 = vpop.xlane.xlu0 %2267
    %v2269 = vsel %vm118, %v2219, -inf
    %2270 = vmax.xlane.f32.xlu0 %v2269
    %v2271 = vpop.xlane.xlu0 %2270
    %v2272 = vsel %vm118, %v2224, -inf
    %2273 = vmax.xlane.f32.xlu0 %v2272
    %v2274 = vpop.xlane.xlu0 %2273
    %v2275 = vsub.f32 %v1610, %v2229
    %v2276 = vsub.f32 %v1615, %v2232
    %v2277 = vsub.f32 %v1697, %v2235
    %v2278 = vsub.f32 %v1702, %v2238
    %v2279 = vsub.f32 %v1784, %v2241
    %v2280 = vsub.f32 %v1789, %v2244
    %v2281 = vsub.f32 %v1871, %v2247
    %v2282 = vsub.f32 %v1876, %v2250
    %v2283 = vsub.f32 %v1958, %v2253
    %v2284 = vsub.f32 %v1963, %v2256
    %v2285 = vsub.f32 %v2045, %v2259
    %v2286 = vsub.f32 %v2050, %v2262
    %v2287 = vsub.f32 %v2132, %v2265
    %v2288 = vsub.f32 %v2137, %v2268
    %v2289 = vsub.f32 %v2219, %v2271
    %v2290 = vsub.f32 %v2224, %v2274
    %v2291 = vmul.f32 %v2275, 1.442695
    %v2292 = vpow.pop %v2291
    %v2293 = vmul.f32 %v2276, 1.442695
    %v2294 = vpow.pop %v2293
    %v2295 = vmul.f32 %v2277, 1.442695
    %v2296 = vpow.pop %v2295
    %v2297 = vmul.f32 %v2278, 1.442695
    %v2298 = vpow.pop %v2297
    %v2299 = vmul.f32 %v2279, 1.442695
    %v2300 = vpow.pop %v2299
    %v2301 = vmul.f32 %v2280, 1.442695
    %v2302 = vpow.pop %v2301
    %v2303 = vmul.f32 %v2281, 1.442695
    %v2304 = vpow.pop %v2303
    %v2305 = vmul.f32 %v2282, 1.442695
    %v2306 = vpow.pop %v2305
    %v2307 = vmul.f32 %v2283, 1.442695
    %v2308 = vpow.pop %v2307
    %v2309 = vmul.f32 %v2284, 1.442695
    %v2310 = vpow.pop %v2309
    %v2311 = vmul.f32 %v2285, 1.442695
    %v2312 = vpow.pop %v2311
    %v2313 = vmul.f32 %v2286, 1.442695
    %v2314 = vpow.pop %v2313
    %v2315 = vmul.f32 %v2287, 1.442695
    %v2316 = vpow.pop %v2315
    %v2317 = vmul.f32 %v2288, 1.442695
    %v2318 = vpow.pop %v2317
    %v2319 = vmul.f32 %v2289, 1.442695
    %v2320 = vpow.pop %v2319
    %v2321 = vmul.f32 %v2290, 1.442695
    %v2322 = vpow.pop %v2321
    %v2323 = vsel %vm118, %v2292, 0.0
    %2324 = vadd.xlane.f32.xlu0 %v2323
    %v2325 = vpop.xlane.xlu0 %2324
    %v2326 = vsel %vm118, %v2294, 0.0
    %2327 = vadd.xlane.f32.xlu0 %v2326
    %v2328 = vpop.xlane.xlu0 %2327
    %v2329 = vsel %vm118, %v2296, 0.0
    %2330 = vadd.xlane.f32.xlu0 %v2329
    %v2331 = vpop.xlane.xlu0 %2330
    %v2332 = vsel %vm118, %v2298, 0.0
    %2333 = vadd.xlane.f32.xlu0 %v2332
    %v2334 = vpop.xlane.xlu0 %2333
    %v2335 = vsel %vm118, %v2300, 0.0
    %2336 = vadd.xlane.f32.xlu0 %v2335
    %v2337 = vpop.xlane.xlu0 %2336
    %v2338 = vsel %vm118, %v2302, 0.0
    %2339 = vadd.xlane.f32.xlu0 %v2338
    %v2340 = vpop.xlane.xlu0 %2339
    %v2341 = vsel %vm118, %v2304, 0.0
    %2342 = vadd.xlane.f32.xlu0 %v2341
    %v2343 = vpop.xlane.xlu0 %2342
    %v2344 = vsel %vm118, %v2306, 0.0
    %2345 = vadd.xlane.f32.xlu0 %v2344
    %v2346 = vpop.xlane.xlu0 %2345
    %v2347 = vsel %vm118, %v2308, 0.0
    %2348 = vadd.xlane.f32.xlu0 %v2347
    %v2349 = vpop.xlane.xlu0 %2348
    %v2350 = vsel %vm118, %v2310, 0.0
    %2351 = vadd.xlane.f32.xlu0 %v2350
    %v2352 = vpop.xlane.xlu0 %2351
    %v2353 = vsel %vm118, %v2312, 0.0
    %2354 = vadd.xlane.f32.xlu0 %v2353
    %v2355 = vpop.xlane.xlu0 %2354
    %v2356 = vsel %vm118, %v2314, 0.0
    %2357 = vadd.xlane.f32.xlu0 %v2356
    %v2358 = vpop.xlane.xlu0 %2357
    %v2359 = vsel %vm118, %v2316, 0.0
    %2360 = vadd.xlane.f32.xlu0 %v2359
    %v2361 = vpop.xlane.xlu0 %2360
    %v2362 = vsel %vm118, %v2318, 0.0
    %2363 = vadd.xlane.f32.xlu0 %v2362
    %v2364 = vpop.xlane.xlu0 %2363
    %v2365 = vsel %vm118, %v2320, 0.0
    %2366 = vadd.xlane.f32.xlu0 %v2365
    %v2367 = vpop.xlane.xlu0 %2366
    %v2368 = vsel %vm118, %v2322, 0.0
    %2369 = vadd.xlane.f32.xlu0 %v2368
    %v2370 = vpop.xlane.xlu0 %2369
    %v2371 = vrcp.pop %v2325
    %v2372 = vrcp.pop %v2328
    %v2373 = vrcp.pop %v2331
    %v2374 = vrcp.pop %v2334
    %v2375 = vrcp.pop %v2337
    %v2376 = vrcp.pop %v2340
    %v2377 = vrcp.pop %v2343
    %v2378 = vrcp.pop %v2346
    %v2379 = vrcp.pop %v2349
    %v2380 = vrcp.pop %v2352
    %v2381 = vrcp.pop %v2355
    %v2382 = vrcp.pop %v2358
    %v2383 = vrcp.pop %v2361
    %v2384 = vrcp.pop %v2364
    %v2385 = vrcp.pop %v2367
    %v2386 = vrcp.pop %v2370
    %v2387 = vmul.f32 %v2292, %v2371
    %v2388 = vmul.f32 %v2294, %v2372
    %v2389 = vmul.f32 %v2296, %v2373
    %v2390 = vmul.f32 %v2298, %v2374
    %v2391 = vmul.f32 %v2300, %v2375
    %v2392 = vmul.f32 %v2302, %v2376
    %v2393 = vmul.f32 %v2304, %v2377
    %v2394 = vmul.f32 %v2306, %v2378
    %v2395 = vmul.f32 %v2308, %v2379
    %v2396 = vmul.f32 %v2310, %v2380
    %v2397 = vmul.f32 %v2312, %v2381
    %v2398 = vmul.f32 %v2314, %v2382
    %v2399 = vmul.f32 %v2316, %v2383
    %v2400 = vmul.f32 %v2318, %v2384
    %v2401 = vmul.f32 %v2320, %v2385
    %v2402 = vmul.f32 %v2322, %v2386
    %v2403 = vmul.f32 %v2387, %v92
    %v2404 = vmul.f32 %v2388, %v93
    %v2405 = vmul.f32 %v2389, %v92
    %v2406 = vmul.f32 %v2390, %v93
    %v2407 = vmul.f32 %v2391, %v92
    %v2408 = vmul.f32 %v2392, %v93
    %v2409 = vmul.f32 %v2393, %v92
    %v2410 = vmul.f32 %v2394, %v93
    %v2411 = vmul.f32 %v2395, %v92
    %v2412 = vmul.f32 %v2396, %v93
    %v2413 = vmul.f32 %v2397, %v92
    %v2414 = vmul.f32 %v2398, %v93
    %v2415 = vmul.f32 %v2399, %v92
    %v2416 = vmul.f32 %v2400, %v93
    %v2417 = vmul.f32 %v2401, %v92
    %v2418 = vmul.f32 %v2402, %v93
    %v2419 = vsel %vm118, %v2403, 0.0
    %2420 = vadd.xlane.f32.xlu0 %v2419
    %v2421 = vpop.xlane.xlu0 %2420
    %v2422 = vsel %vm118, %v2404, 0.0
    %2423 = vadd.xlane.f32.xlu0 %v2422
    %v2424 = vpop.xlane.xlu0 %2423
    %v2425 = vsel %vm118, %v2405, 0.0
    %2426 = vadd.xlane.f32.xlu0 %v2425
    %v2427 = vpop.xlane.xlu0 %2426
    %v2428 = vsel %vm118, %v2406, 0.0
    %2429 = vadd.xlane.f32.xlu0 %v2428
    %v2430 = vpop.xlane.xlu0 %2429
    %v2431 = vsel %vm118, %v2407, 0.0
    %2432 = vadd.xlane.f32.xlu0 %v2431
    %v2433 = vpop.xlane.xlu0 %2432
    %v2434 = vsel %vm118, %v2408, 0.0
    %2435 = vadd.xlane.f32.xlu0 %v2434
    %v2436 = vpop.xlane.xlu0 %2435
    %v2437 = vsel %vm118, %v2409, 0.0
    %2438 = vadd.xlane.f32.xlu0 %v2437
    %v2439 = vpop.xlane.xlu0 %2438
    %v2440 = vsel %vm118, %v2410, 0.0
    %2441 = vadd.xlane.f32.xlu0 %v2440
    %v2442 = vpop.xlane.xlu0 %2441
    %v2443 = vsel %vm118, %v2411, 0.0
    %2444 = vadd.xlane.f32.xlu0 %v2443
    %v2445 = vpop.xlane.xlu0 %2444
    %v2446 = vsel %vm118, %v2412, 0.0
    %2447 = vadd.xlane.f32.xlu0 %v2446
    %v2448 = vpop.xlane.xlu0 %2447
    %v2449 = vsel %vm118, %v2413, 0.0
    %2450 = vadd.xlane.f32.xlu0 %v2449
    %v2451 = vpop.xlane.xlu0 %2450
    %v2452 = vsel %vm118, %v2414, 0.0
    %2453 = vadd.xlane.f32.xlu0 %v2452
    %v2454 = vpop.xlane.xlu0 %2453
    %v2455 = vsel %vm118, %v2415, 0.0
    %2456 = vadd.xlane.f32.xlu0 %v2455
    %v2457 = vpop.xlane.xlu0 %2456
    %v2458 = vsel %vm118, %v2416, 0.0
    %2459 = vadd.xlane.f32.xlu0 %v2458
    %v2460 = vpop.xlane.xlu0 %2459
    %v2461 = vsel %vm118, %v2417, 0.0
    %2462 = vadd.xlane.f32.xlu0 %v2461
    %v2463 = vpop.xlane.xlu0 %2462
    %v2464 = vsel %vm118, %v2418, 0.0
    %2465 = vadd.xlane.f32.xlu0 %v2464
    %v2466 = vpop.xlane.xlu0 %2465
    %v2467 = vmul.f32 %v2421, %v1414
    %v2468 = vmul.f32 %v2424, %v1414
    %v2469 = vmul.f32 %v2427, %v1418
    %v2470 = vmul.f32 %v2430, %v1418
    %v2471 = vmul.f32 %v2433, %v1422
    %v2472 = vmul.f32 %v2436, %v1422
    %v2473 = vmul.f32 %v2439, %v1426
    %v2474 = vmul.f32 %v2442, %v1426
    %v2475 = vmul.f32 %v2445, %v1430
    %v2476 = vmul.f32 %v2448, %v1430
    %v2477 = vmul.f32 %v2451, %v1434
    %v2478 = vmul.f32 %v2454, %v1434
    %v2479 = vmul.f32 %v2457, %v1438
    %v2480 = vmul.f32 %v2460, %v1438
    %v2481 = vmul.f32 %v2463, %v1442
    %v2482 = vmul.f32 %v2466, %v1442
    %v2484 = vsel %vm118, %v2387, 0
    %v2487 = vsel %vm118, %v2388, 0
    %2489 = vmatprep.subr.mxu0 0.0
    %2490 = vmatpush1.msra.mxu0 %v1300
    %2491 = vmatprep.subr.mxu0 0.0
    %2492 = vmatpush1.msra.mxu0 %v1306
    %2493 = vmatprep.subr.mxu0 0.0
    %2494 = vmatpush1.msra.mxu0 0.0
    %2495 = vmatprep.subr.mxu0 0.0
    %2496 = vmatpush1.msra.mxu0 0.0
    %2497 = vmatprep.subr.mxu0 0.0
    %2498 = vmatpush1.msra.mxu0 0.0
    %2499 = vmatprep.subr.mxu0 0.0
    %2500 = vmatpush1.msra.mxu0 0.0
    %2501 = vmatprep.subr.mxu0 0.0
    %2502 = vmatpush1.msra.mxu0 0.0
    %2503 = vmatprep.subr.mxu0 0.0
    %2504 = vmatpush1.msra.mxu0 0.0
    %2505 = vmatprep.subr.mxu0 0.0
    %2506 = vmatpush1.msra.mxu0 0.0
    %2507 = vmatprep.subr.mxu0 0.0
    %2508 = vmatpush1.msra.mxu0 0.0
    %2509 = vmatprep.subr.mxu0 0.0
    %2510 = vmatpush1.msra.mxu0 0.0
    %2511 = vmatprep.subr.mxu0 0.0
    %2512 = vmatpush1.msra.mxu0 0.0
    %2513 = vmatprep.subr.mxu0 0.0
    %2514 = vmatpush1.msra.mxu0 0.0
    %2515 = vmatprep.subr.mxu0 0.0
    %2516 = vmatpush1.msra.mxu0 0.0
    %2517 = vmatprep.subr.mxu0 0.0
    %2518 = vmatpush1.msra.mxu0 0.0
    %2519 = vmatprep.subr.mxu0 0.0
    %2520 = vmatpush1.msra.mxu0 0.0
    %2521 = vmatprep.subr.mxu0 0.0
    %2522 = vmatpush1.msra.mxu0 0.0
    %2523 = vmatprep.subr.mxu0 0.0
    %2524 = vmatpush1.msra.mxu0 0.0
    %2525 = vmatprep.subr.mxu0 0.0
    %2526 = vmatpush1.msra.mxu0 0.0
    %2527 = vmatprep.subr.mxu0 0.0
    %2528 = vmatpush1.msra.mxu0 0.0
    %2529 = vmatprep.subr.mxu0 0.0
    %2530 = vmatpush1.msra.mxu0 0.0
    %2531 = vmatprep.subr.mxu0 0.0
    %2532 = vmatpush1.msra.mxu0 0.0
    %2533 = vmatprep.subr.mxu0 0.0
    %2534 = vmatpush1.msra.mxu0 0.0
    %2535 = vmatprep.subr.mxu0 0.0
    %2536 = vmatpush1.msra.mxu0 0.0
    %2537 = vmatprep.subr.mxu0 0.0
    %2538 = vmatpush1.msra.mxu0 0.0
    %2539 = vmatprep.subr.mxu0 0.0
    %2540 = vmatpush1.msra.mxu0 0.0
    %2541 = vmatprep.subr.mxu0 0.0
    %2542 = vmatpush1.msra.mxu0 0.0
    %2543 = vmatprep.subr.mxu0 0.0
    %2544 = vmatpush1.msra.mxu0 0.0
    %2545 = vmatprep.subr.mxu0 0.0
    %2546 = vmatpush1.msra.mxu0 0.0
    %2547 = vmatprep.subr.mxu0 0.0
    %2548 = vmatpush1.msra.mxu0 0.0
    %2549 = vmatprep.subr.mxu0 0.0
    %2550 = vmatpush1.msra.mxu0 0.0
    %2551 = vmatprep.subr.mxu0 0.0
    %2552 = vmatpush1.msra.mxu0 0.0
    %2553 = vmatprep.mubr.f32.mxu0 0.0
    %2554 = vmatmul.mubr.f32.gmra.mrb[0].mxu0 %v2484
    %v2555 = vpop.f32.mrb[0].mxu0
    %v2556 = vadd.f32 %v2467, %v2555
    %v2557 = vpop.f32.mrb[0].mxu0
    %2558 = vmatprep.mubr.f32.mxu0 0.0
    %2559 = vmatmul.mubr.f32.gmra.mrb[0].mxu0 %v2487
    %v2560 = vpop.f32.mrb[0].mxu0
    %v2561 = vadd.f32 %v2468, %v2560
    %v2562 = vpop.f32.mrb[0].mxu0
    %2563 = vdwg.mxu0
    %v2565 = vsel %vm118, %v2389, 0
    %v2568 = vsel %vm118, %v2390, 0
    %2570 = vmatprep.subr.mxu0 0.0
    %2571 = vmatpush1.msra.mxu0 %v1355
    %2572 = vmatprep.subr.mxu0 0.0
    %2573 = vmatpush1.msra.mxu0 %v1357
    %2574 = vmatprep.subr.mxu0 0.0
    %2575 = vmatpush1.msra.mxu0 0.0
    %2576 = vmatprep.subr.mxu0 0.0
    %2577 = vmatpush1.msra.mxu0 0.0
    %2578 = vmatprep.subr.mxu0 0.0
    %2579 = vmatpush1.msra.mxu0 0.0
    %2580 = vmatprep.subr.mxu0 0.0
    %2581 = vmatpush1.msra.mxu0 0.0
    %2582 = vmatprep.subr.mxu0 0.0
    %2583 = vmatpush1.msra.mxu0 0.0
    %2584 = vmatprep.subr.mxu0 0.0
    %2585 = vmatpush1.msra.mxu0 0.0
    %2586 = vmatprep.subr.mxu0 0.0
    %2587 = vmatpush1.msra.mxu0 0.0
    %2588 = vmatprep.subr.mxu0 0.0
    %2589 = vmatpush1.msra.mxu0 0.0
    %2590 = vmatprep.subr.mxu0 0.0
    %2591 = vmatpush1.msra.mxu0 0.0
    %2592 = vmatprep.subr.mxu0 0.0
    %2593 = vmatpush1.msra.mxu0 0.0
    %2594 = vmatprep.subr.mxu0 0.0
    %2595 = vmatpush1.msra.mxu0 0.0
    %2596 = vmatprep.subr.mxu0 0.0
    %2597 = vmatpush1.msra.mxu0 0.0
    %2598 = vmatprep.subr.mxu0 0.0
    %2599 = vmatpush1.msra.mxu0 0.0
    %2600 = vmatprep.subr.mxu0 0.0
    %2601 = vmatpush1.msra.mxu0 0.0
    %2602 = vmatprep.subr.mxu0 0.0
    %2603 = vmatpush1.msra.mxu0 0.0
    %2604 = vmatprep.subr.mxu0 0.0
    %2605 = vmatpush1.msra.mxu0 0.0
    %2606 = vmatprep.subr.mxu0 0.0
    %2607 = vmatpush1.msra.mxu0 0.0
    %2608 = vmatprep.subr.mxu0 0.0
    %2609 = vmatpush1.msra.mxu0 0.0
    %2610 = vmatprep.subr.mxu0 0.0
    %2611 = vmatpush1.msra.mxu0 0.0
    %2612 = vmatprep.subr.mxu0 0.0
    %2613 = vmatpush1.msra.mxu0 0.0
    %2614 = vmatprep.subr.mxu0 0.0
    %2615 = vmatpush1.msra.mxu0 0.0
    %2616 = vmatprep.subr.mxu0 0.0
    %2617 = vmatpush1.msra.mxu0 0.0
    %2618 = vmatprep.subr.mxu0 0.0
    %2619 = vmatpush1.msra.mxu0 0.0
    %2620 = vmatprep.subr.mxu0 0.0
    %2621 = vmatpush1.msra.mxu0 0.0
    %2622 = vmatprep.subr.mxu0 0.0
    %2623 = vmatpush1.msra.mxu0 0.0
    %2624 = vmatprep.subr.mxu0 0.0
    %2625 = vmatpush1.msra.mxu0 0.0
    %2626 = vmatprep.subr.mxu0 0.0
    %2627 = vmatpush1.msra.mxu0 0.0
    %2628 = vmatprep.subr.mxu0 0.0
    %2629 = vmatpush1.msra.mxu0 0.0
    %2630 = vmatprep.subr.mxu0 0.0
    %2631 = vmatpush1.msra.mxu0 0.0
    %2632 = vmatprep.subr.mxu0 0.0
    %2633 = vmatpush1.msra.mxu0 0.0
    %2634 = vmatprep.mubr.f32.mxu0 0.0
    %2635 = vmatmul.mubr.f32.gmra.mrb[0].mxu0 %v2565
    %v2636 = vpop.f32.mrb[0].mxu0
    %v2637 = vadd.f32 %v2469, %v2636
    %v2638 = vpop.f32.mrb[0].mxu0
    %2639 = vmatprep.mubr.f32.mxu0 0.0
    %2640 = vmatmul.mubr.f32.gmra.mrb[0].mxu0 %v2568
    %v2641 = vpop.f32.mrb[0].mxu0
    %v2642 = vadd.f32 %v2470, %v2641
    %v2643 = vpop.f32.mrb[0].mxu0
    %2644 = vdwg.mxu0
    %v2646 = vsel %vm118, %v2391, 0
    %v2649 = vsel %vm118, %v2392, 0
    %2651 = vmatprep.subr.mxu0 0.0
    %2652 = vmatpush1.msra.mxu0 %v1361
    %2653 = vmatprep.subr.mxu0 0.0
    %2654 = vmatpush1.msra.mxu0 %v1363
    %2655 = vmatprep.subr.mxu0 0.0
    %2656 = vmatpush1.msra.mxu0 0.0
    %2657 = vmatprep.subr.mxu0 0.0
    %2658 = vmatpush1.msra.mxu0 0.0
    %2659 = vmatprep.subr.mxu0 0.0
    %2660 = vmatpush1.msra.mxu0 0.0
    %2661 = vmatprep.subr.mxu0 0.0
    %2662 = vmatpush1.msra.mxu0 0.0
    %2663 = vmatprep.subr.mxu0 0.0
    %2664 = vmatpush1.msra.mxu0 0.0
    %2665 = vmatprep.subr.mxu0 0.0
    %2666 = vmatpush1.msra.mxu0 0.0
    %2667 = vmatprep.subr.mxu0 0.0
    %2668 = vmatpush1.msra.mxu0 0.0
    %2669 = vmatprep.subr.mxu0 0.0
    %2670 = vmatpush1.msra.mxu0 0.0
    %2671 = vmatprep.subr.mxu0 0.0
    %2672 = vmatpush1.msra.mxu0 0.0
    %2673 = vmatprep.subr.mxu0 0.0
    %2674 = vmatpush1.msra.mxu0 0.0
    %2675 = vmatprep.subr.mxu0 0.0
    %2676 = vmatpush1.msra.mxu0 0.0
    %2677 = vmatprep.subr.mxu0 0.0
    %2678 = vmatpush1.msra.mxu0 0.0
    %2679 = vmatprep.subr.mxu0 0.0
    %2680 = vmatpush1.msra.mxu0 0.0
    %2681 = vmatprep.subr.mxu0 0.0
    %2682 = vmatpush1.msra.mxu0 0.0
    %2683 = vmatprep.subr.mxu0 0.0
    %2684 = vmatpush1.msra.mxu0 0.0
    %2685 = vmatprep.subr.mxu0 0.0
    %2686 = vmatpush1.msra.mxu0 0.0
    %2687 = vmatprep.subr.mxu0 0.0
    %2688 = vmatpush1.msra.mxu0 0.0
    %2689 = vmatprep.subr.mxu0 0.0
    %2690 = vmatpush1.msra.mxu0 0.0
    %2691 = vmatprep.subr.mxu0 0.0
    %2692 = vmatpush1.msra.mxu0 0.0
    %2693 = vmatprep.subr.mxu0 0.0
    %2694 = vmatpush1.msra.mxu0 0.0
    %2695 = vmatprep.subr.mxu0 0.0
    %2696 = vmatpush1.msra.mxu0 0.0
    %2697 = vmatprep.subr.mxu0 0.0
    %2698 = vmatpush1.msra.mxu0 0.0
    %2699 = vmatprep.subr.mxu0 0.0
    %2700 = vmatpush1.msra.mxu0 0.0
    %2701 = vmatprep.subr.mxu0 0.0
    %2702 = vmatpush1.msra.mxu0 0.0
    %2703 = vmatprep.subr.mxu0 0.0
    %2704 = vmatpush1.msra.mxu0 0.0
    %2705 = vmatprep.subr.mxu0 0.0
    %2706 = vmatpush1.msra.mxu0 0.0
    %2707 = vmatprep.subr.mxu0 0.0
    %2708 = vmatpush1.msra.mxu0 0.0
    %2709 = vmatprep.subr.mxu0 0.0
    %2710 = vmatpush1.msra.mxu0 0.0
    %2711 = vmatprep.subr.mxu0 0.0
    %2712 = vmatpush1.msra.mxu0 0.0
    %2713 = vmatprep.subr.mxu0 0.0
    %2714 = vmatpush1.msra.mxu0 0.0
    %2715 = vmatprep.mubr.f32.mxu0 0.0
    %2716 = vmatmul.mubr.f32.gmra.mrb[0].mxu0 %v2646
    %v2717 = vpop.f32.mrb[0].mxu0
    %v2718 = vadd.f32 %v2471, %v2717
    %v2719 = vpop.f32.mrb[0].mxu0
    %2720 = vmatprep.mubr.f32.mxu0 0.0
    %2721 = vmatmul.mubr.f32.gmra.mrb[0].mxu0 %v2649
    %v2722 = vpop.f32.mrb[0].mxu0
    %v2723 = vadd.f32 %v2472, %v2722
    %v2724 = vpop.f32.mrb[0].mxu0
    %2725 = vdwg.mxu0
    %v2727 = vsel %vm118, %v2393, 0
    %v2730 = vsel %vm118, %v2394, 0
    %2732 = vmatprep.subr.mxu0 0.0
    %2733 = vmatpush1.msra.mxu0 %v1367
    %2734 = vmatprep.subr.mxu0 0.0
    %2735 = vmatpush1.msra.mxu0 %v1369
    %2736 = vmatprep.subr.mxu0 0.0
    %2737 = vmatpush1.msra.mxu0 0.0
    %2738 = vmatprep.subr.mxu0 0.0
    %2739 = vmatpush1.msra.mxu0 0.0
    %2740 = vmatprep.subr.mxu0 0.0
    %2741 = vmatpush1.msra.mxu0 0.0
    %2742 = vmatprep.subr.mxu0 0.0
    %2743 = vmatpush1.msra.mxu0 0.0
    %2744 = vmatprep.subr.mxu0 0.0
    %2745 = vmatpush1.msra.mxu0 0.0
    %2746 = vmatprep.subr.mxu0 0.0
    %2747 = vmatpush1.msra.mxu0 0.0
    %2748 = vmatprep.subr.mxu0 0.0
    %2749 = vmatpush1.msra.mxu0 0.0
    %2750 = vmatprep.subr.mxu0 0.0
    %2751 = vmatpush1.msra.mxu0 0.0
    %2752 = vmatprep.subr.mxu0 0.0
    %2753 = vmatpush1.msra.mxu0 0.0
    %2754 = vmatprep.subr.mxu0 0.0
    %2755 = vmatpush1.msra.mxu0 0.0
    %2756 = vmatprep.subr.mxu0 0.0
    %2757 = vmatpush1.msra.mxu0 0.0
    %2758 = vmatprep.subr.mxu0 0.0
    %2759 = vmatpush1.msra.mxu0 0.0
    %2760 = vmatprep.subr.mxu0 0.0
    %2761 = vmatpush1.msra.mxu0 0.0
    %2762 = vmatprep.subr.mxu0 0.0
    %2763 = vmatpush1.msra.mxu0 0.0
    %2764 = vmatprep.subr.mxu0 0.0
    %2765 = vmatpush1.msra.mxu0 0.0
    %2766 = vmatprep.subr.mxu0 0.0
    %2767 = vmatpush1.msra.mxu0 0.0
    %2768 = vmatprep.subr.mxu0 0.0
    %2769 = vmatpush1.msra.mxu0 0.0
    %2770 = vmatprep.subr.mxu0 0.0
    %2771 = vmatpush1.msra.mxu0 0.0
    %2772 = vmatprep.subr.mxu0 0.0
    %2773 = vmatpush1.msra.mxu0 0.0
    %2774 = vmatprep.subr.mxu0 0.0
    %2775 = vmatpush1.msra.mxu0 0.0
    %2776 = vmatprep.subr.mxu0 0.0
    %2777 = vmatpush1.msra.mxu0 0.0
    %2778 = vmatprep.subr.mxu0 0.0
    %2779 = vmatpush1.msra.mxu0 0.0
    %2780 = vmatprep.subr.mxu0 0.0
    %2781 = vmatpush1.msra.mxu0 0.0
    %2782 = vmatprep.subr.mxu0 0.0
    %2783 = vmatpush1.msra.mxu0 0.0
    %2784 = vmatprep.subr.mxu0 0.0
    %2785 = vmatpush1.msra.mxu0 0.0
    %2786 = vmatprep.subr.mxu0 0.0
    %2787 = vmatpush1.msra.mxu0 0.0
    %2788 = vmatprep.subr.mxu0 0.0
    %2789 = vmatpush1.msra.mxu0 0.0
    %2790 = vmatprep.subr.mxu0 0.0
    %2791 = vmatpush1.msra.mxu0 0.0
    %2792 = vmatprep.subr.mxu0 0.0
    %2793 = vmatpush1.msra.mxu0 0.0
    %2794 = vmatprep.subr.mxu0 0.0
    %2795 = vmatpush1.msra.mxu0 0.0
    %2796 = vmatprep.mubr.f32.mxu0 0.0
    %2797 = vmatmul.mubr.f32.gmra.mrb[0].mxu0 %v2727
    %v2798 = vpop.f32.mrb[0].mxu0
    %v2799 = vadd.f32 %v2473, %v2798
    %v2800 = vpop.f32.mrb[0].mxu0
    %2801 = vmatprep.mubr.f32.mxu0 0.0
    %2802 = vmatmul.mubr.f32.gmra.mrb[0].mxu0 %v2730
    %v2803 = vpop.f32.mrb[0].mxu0
    %v2804 = vadd.f32 %v2474, %v2803
    %v2805 = vpop.f32.mrb[0].mxu0
    %2806 = vdwg.mxu0
    %v2808 = vsel %vm118, %v2395, 0
    %v2811 = vsel %vm118, %v2396, 0
    %2813 = vmatprep.subr.mxu0 0.0
    %2814 = vmatpush1.msra.mxu0 %v1373
    %2815 = vmatprep.subr.mxu0 0.0
    %2816 = vmatpush1.msra.mxu0 %v1375
    %2817 = vmatprep.subr.mxu0 0.0
    %2818 = vmatpush1.msra.mxu0 0.0
    %2819 = vmatprep.subr.mxu0 0.0
    %2820 = vmatpush1.msra.mxu0 0.0
    %2821 = vmatprep.subr.mxu0 0.0
    %2822 = vmatpush1.msra.mxu0 0.0
    %2823 = vmatprep.subr.mxu0 0.0
    %2824 = vmatpush1.msra.mxu0 0.0
    %2825 = vmatprep.subr.mxu0 0.0
    %2826 = vmatpush1.msra.mxu0 0.0
    %2827 = vmatprep.subr.mxu0 0.0
    %2828 = vmatpush1.msra.mxu0 0.0
    %2829 = vmatprep.subr.mxu0 0.0
    %2830 = vmatpush1.msra.mxu0 0.0
    %2831 = vmatprep.subr.mxu0 0.0
    %2832 = vmatpush1.msra.mxu0 0.0
    %2833 = vmatprep.subr.mxu0 0.0
    %2834 = vmatpush1.msra.mxu0 0.0
    %2835 = vmatprep.subr.mxu0 0.0
    %2836 = vmatpush1.msra.mxu0 0.0
    %2837 = vmatprep.subr.mxu0 0.0
    %2838 = vmatpush1.msra.mxu0 0.0
    %2839 = vmatprep.subr.mxu0 0.0
    %2840 = vmatpush1.msra.mxu0 0.0
    %2841 = vmatprep.subr.mxu0 0.0
    %2842 = vmatpush1.msra.mxu0 0.0
    %2843 = vmatprep.subr.mxu0 0.0
    %2844 = vmatpush1.msra.mxu0 0.0
    %2845 = vmatprep.subr.mxu0 0.0
    %2846 = vmatpush1.msra.mxu0 0.0
    %2847 = vmatprep.subr.mxu0 0.0
    %2848 = vmatpush1.msra.mxu0 0.0
    %2849 = vmatprep.subr.mxu0 0.0
    %2850 = vmatpush1.msra.mxu0 0.0
    %2851 = vmatprep.subr.mxu0 0.0
    %2852 = vmatpush1.msra.mxu0 0.0
    %2853 = vmatprep.subr.mxu0 0.0
    %2854 = vmatpush1.msra.mxu0 0.0
    %2855 = vmatprep.subr.mxu0 0.0
    %2856 = vmatpush1.msra.mxu0 0.0
    %2857 = vmatprep.subr.mxu0 0.0
    %2858 = vmatpush1.msra.mxu0 0.0
    %2859 = vmatprep.subr.mxu0 0.0
    %2860 = vmatpush1.msra.mxu0 0.0
    %2861 = vmatprep.subr.mxu0 0.0
    %2862 = vmatpush1.msra.mxu0 0.0
    %2863 = vmatprep.subr.mxu0 0.0
    %2864 = vmatpush1.msra.mxu0 0.0
    %2865 = vmatprep.subr.mxu0 0.0
    %2866 = vmatpush1.msra.mxu0 0.0
    %2867 = vmatprep.subr.mxu0 0.0
    %2868 = vmatpush1.msra.mxu0 0.0
    %2869 = vmatprep.subr.mxu0 0.0
    %2870 = vmatpush1.msra.mxu0 0.0
    %2871 = vmatprep.subr.mxu0 0.0
    %2872 = vmatpush1.msra.mxu0 0.0
    %2873 = vmatprep.subr.mxu0 0.0
    %2874 = vmatpush1.msra.mxu0 0.0
    %2875 = vmatprep.subr.mxu0 0.0
    %2876 = vmatpush1.msra.mxu0 0.0
    %2877 = vmatprep.mubr.f32.mxu0 0.0
    %2878 = vmatmul.mubr.f32.gmra.mrb[0].mxu0 %v2808
    %v2879 = vpop.f32.mrb[0].mxu0
    %v2880 = vadd.f32 %v2475, %v2879
    %v2881 = vpop.f32.mrb[0].mxu0
    %2882 = vmatprep.mubr.f32.mxu0 0.0
    %2883 = vmatmul.mubr.f32.gmra.mrb[0].mxu0 %v2811
    %v2884 = vpop.f32.mrb[0].mxu0
    %v2885 = vadd.f32 %v2476, %v2884
    %v2886 = vpop.f32.mrb[0].mxu0
    %2887 = vdwg.mxu0
    %v2889 = vsel %vm118, %v2397, 0
    %v2892 = vsel %vm118, %v2398, 0
    %2894 = vmatprep.subr.mxu0 0.0
    %2895 = vmatpush1.msra.mxu0 %v1379
    %2896 = vmatprep.subr.mxu0 0.0
    %2897 = vmatpush1.msra.mxu0 %v1381
    %2898 = vmatprep.subr.mxu0 0.0
    %2899 = vmatpush1.msra.mxu0 0.0
    %2900 = vmatprep.subr.mxu0 0.0
    %2901 = vmatpush1.msra.mxu0 0.0
    %2902 = vmatprep.subr.mxu0 0.0
    %2903 = vmatpush1.msra.mxu0 0.0
    %2904 = vmatprep.subr.mxu0 0.0
    %2905 = vmatpush1.msra.mxu0 0.0
    %2906 = vmatprep.subr.mxu0 0.0
    %2907 = vmatpush1.msra.mxu0 0.0
    %2908 = vmatprep.subr.mxu0 0.0
    %2909 = vmatpush1.msra.mxu0 0.0
    %2910 = vmatprep.subr.mxu0 0.0
    %2911 = vmatpush1.msra.mxu0 0.0
    %2912 = vmatprep.subr.mxu0 0.0
    %2913 = vmatpush1.msra.mxu0 0.0
    %2914 = vmatprep.subr.mxu0 0.0
    %2915 = vmatpush1.msra.mxu0 0.0
    %2916 = vmatprep.subr.mxu0 0.0
    %2917 = vmatpush1.msra.mxu0 0.0
    %2918 = vmatprep.subr.mxu0 0.0
    %2919 = vmatpush1.msra.mxu0 0.0
    %2920 = vmatprep.subr.mxu0 0.0
    %2921 = vmatpush1.msra.mxu0 0.0
    %2922 = vmatprep.subr.mxu0 0.0
    %2923 = vmatpush1.msra.mxu0 0.0
    %2924 = vmatprep.subr.mxu0 0.0
    %2925 = vmatpush1.msra.mxu0 0.0
    %2926 = vmatprep.subr.mxu0 0.0
    %2927 = vmatpush1.msra.mxu0 0.0
    %2928 = vmatprep.subr.mxu0 0.0
    %2929 = vmatpush1.msra.mxu0 0.0
    %2930 = vmatprep.subr.mxu0 0.0
    %2931 = vmatpush1.msra.mxu0 0.0
    %2932 = vmatprep.subr.mxu0 0.0
    %2933 = vmatpush1.msra.mxu0 0.0
    %2934 = vmatprep.subr.mxu0 0.0
    %2935 = vmatpush1.msra.mxu0 0.0
    %2936 = vmatprep.subr.mxu0 0.0
    %2937 = vmatpush1.msra.mxu0 0.0
    %2938 = vmatprep.subr.mxu0 0.0
    %2939 = vmatpush1.msra.mxu0 0.0
    %2940 = vmatprep.subr.mxu0 0.0
    %2941 = vmatpush1.msra.mxu0 0.0
    %2942 = vmatprep.subr.mxu0 0.0
    %2943 = vmatpush1.msra.mxu0 0.0
    %2944 = vmatprep.subr.mxu0 0.0
    %2945 = vmatpush1.msra.mxu0 0.0
    %2946 = vmatprep.subr.mxu0 0.0
    %2947 = vmatpush1.msra.mxu0 0.0
    %2948 = vmatprep.subr.mxu0 0.0
    %2949 = vmatpush1.msra.mxu0 0.0
    %2950 = vmatprep.subr.mxu0 0.0
    %2951 = vmatpush1.msra.mxu0 0.0
    %2952 = vmatprep.subr.mxu0 0.0
    %2953 = vmatpush1.msra.mxu0 0.0
    %2954 = vmatprep.subr.mxu0 0.0
    %2955 = vmatpush1.msra.mxu0 0.0
    %2956 = vmatprep.subr.mxu0 0.0
    %2957 = vmatpush1.msra.mxu0 0.0
    %2958 = vmatprep.mubr.f32.mxu0 0.0
    %2959 = vmatmul.mubr.f32.gmra.mrb[0].mxu0 %v2889
    %v2960 = vpop.f32.mrb[0].mxu0
    %v2961 = vadd.f32 %v2477, %v2960
    %v2962 = vpop.f32.mrb[0].mxu0
    %2963 = vmatprep.mubr.f32.mxu0 0.0
    %2964 = vmatmul.mubr.f32.gmra.mrb[0].mxu0 %v2892
    %v2965 = vpop.f32.mrb[0].mxu0
    %v2966 = vadd.f32 %v2478, %v2965
    %v2967 = vpop.f32.mrb[0].mxu0
    %2968 = vdwg.mxu0
    %v2970 = vsel %vm118, %v2399, 0
    %v2973 = vsel %vm118, %v2400, 0
    %2975 = vmatprep.subr.mxu0 0.0
    %2976 = vmatpush1.msra.mxu0 %v1385
    %2977 = vmatprep.subr.mxu0 0.0
    %2978 = vmatpush1.msra.mxu0 %v1387
    %2979 = vmatprep.subr.mxu0 0.0
    %2980 = vmatpush1.msra.mxu0 0.0
    %2981 = vmatprep.subr.mxu0 0.0
    %2982 = vmatpush1.msra.mxu0 0.0
    %2983 = vmatprep.subr.mxu0 0.0
    %2984 = vmatpush1.msra.mxu0 0.0
    %2985 = vmatprep.subr.mxu0 0.0
    %2986 = vmatpush1.msra.mxu0 0.0
    %2987 = vmatprep.subr.mxu0 0.0
    %2988 = vmatpush1.msra.mxu0 0.0
    %2989 = vmatprep.subr.mxu0 0.0
    %2990 = vmatpush1.msra.mxu0 0.0
    %2991 = vmatprep.subr.mxu0 0.0
    %2992 = vmatpush1.msra.mxu0 0.0
    %2993 = vmatprep.subr.mxu0 0.0
    %2994 = vmatpush1.msra.mxu0 0.0
    %2995 = vmatprep.subr.mxu0 0.0
    %2996 = vmatpush1.msra.mxu0 0.0
    %2997 = vmatprep.subr.mxu0 0.0
    %2998 = vmatpush1.msra.mxu0 0.0
    %2999 = vmatprep.subr.mxu0 0.0
    %3000 = vmatpush1.msra.mxu0 0.0
    %3001 = vmatprep.subr.mxu0 0.0
    %3002 = vmatpush1.msra.mxu0 0.0
    %3003 = vmatprep.subr.mxu0 0.0
    %3004 = vmatpush1.msra.mxu0 0.0
    %3005 = vmatprep.subr.mxu0 0.0
    %3006 = vmatpush1.msra.mxu0 0.0
    %3007 = vmatprep.subr.mxu0 0.0
    %3008 = vmatpush1.msra.mxu0 0.0
    %3009 = vmatprep.subr.mxu0 0.0
    %3010 = vmatpush1.msra.mxu0 0.0
    %3011 = vmatprep.subr.mxu0 0.0
    %3012 = vmatpush1.msra.mxu0 0.0
    %3013 = vmatprep.subr.mxu0 0.0
    %3014 = vmatpush1.msra.mxu0 0.0
    %3015 = vmatprep.subr.mxu0 0.0
    %3016 = vmatpush1.msra.mxu0 0.0
    %3017 = vmatprep.subr.mxu0 0.0
    %3018 = vmatpush1.msra.mxu0 0.0
    %3019 = vmatprep.subr.mxu0 0.0
    %3020 = vmatpush1.msra.mxu0 0.0
    %3021 = vmatprep.subr.mxu0 0.0
    %3022 = vmatpush1.msra.mxu0 0.0
    %3023 = vmatprep.subr.mxu0 0.0
    %3024 = vmatpush1.msra.mxu0 0.0
    %3025 = vmatprep.subr.mxu0 0.0
    %3026 = vmatpush1.msra.mxu0 0.0
    %3027 = vmatprep.subr.mxu0 0.0
    %3028 = vmatpush1.msra.mxu0 0.0
    %3029 = vmatprep.subr.mxu0 0.0
    %3030 = vmatpush1.msra.mxu0 0.0
    %3031 = vmatprep.subr.mxu0 0.0
    %3032 = vmatpush1.msra.mxu0 0.0
    %3033 = vmatprep.subr.mxu0 0.0
    %3034 = vmatpush1.msra.mxu0 0.0
    %3035 = vmatprep.subr.mxu0 0.0
    %3036 = vmatpush1.msra.mxu0 0.0
    %3037 = vmatprep.subr.mxu0 0.0
    %3038 = vmatpush1.msra.mxu0 0.0
    %3039 = vmatprep.mubr.f32.mxu0 0.0
    %3040 = vmatmul.mubr.f32.gmra.mrb[0].mxu0 %v2970
    %v3041 = vpop.f32.mrb[0].mxu0
    %v3042 = vadd.f32 %v2479, %v3041
    %v3043 = vpop.f32.mrb[0].mxu0
    %3044 = vmatprep.mubr.f32.mxu0 0.0
    %3045 = vmatmul.mubr.f32.gmra.mrb[0].mxu0 %v2973
    %v3046 = vpop.f32.mrb[0].mxu0
    %v3047 = vadd.f32 %v2480, %v3046
    %v3048 = vpop.f32.mrb[0].mxu0
    %3049 = vdwg.mxu0
    %v3051 = vsel %vm118, %v2401, 0
    %v3054 = vsel %vm118, %v2402, 0
    %3056 = vmatprep.subr.mxu0 0.0
    %3057 = vmatpush1.msra.mxu0 %v1391
    %3058 = vmatprep.subr.mxu0 0.0
    %3059 = vmatpush1.msra.mxu0 %v1393
    %3060 = vmatprep.subr.mxu0 0.0
    %3061 = vmatpush1.msra.mxu0 0.0
    %3062 = vmatprep.subr.mxu0 0.0
    %3063 = vmatpush1.msra.mxu0 0.0
    %3064 = vmatprep.subr.mxu0 0.0
    %3065 = vmatpush1.msra.mxu0 0.0
    %3066 = vmatprep.subr.mxu0 0.0
    %3067 = vmatpush1.msra.mxu0 0.0
    %3068 = vmatprep.subr.mxu0 0.0
    %3069 = vmatpush1.msra.mxu0 0.0
    %3070 = vmatprep.subr.mxu0 0.0
    %3071 = vmatpush1.msra.mxu0 0.0
    %3072 = vmatprep.subr.mxu0 0.0
    %3073 = vmatpush1.msra.mxu0 0.0
    %3074 = vmatprep.subr.mxu0 0.0
    %3075 = vmatpush1.msra.mxu0 0.0
    %3076 = vmatprep.subr.mxu0 0.0
    %3077 = vmatpush1.msra.mxu0 0.0
    %3078 = vmatprep.subr.mxu0 0.0
    %3079 = vmatpush1.msra.mxu0 0.0
    %3080 = vmatprep.subr.mxu0 0.0
    %3081 = vmatpush1.msra.mxu0 0.0
    %3082 = vmatprep.subr.mxu0 0.0
    %3083 = vmatpush1.msra.mxu0 0.0
    %3084 = vmatprep.subr.mxu0 0.0
    %3085 = vmatpush1.msra.mxu0 0.0
    %3086 = vmatprep.subr.mxu0 0.0
    %3087 = vmatpush1.msra.mxu0 0.0
    %3088 = vmatprep.subr.mxu0 0.0
    %3089 = vmatpush1.msra.mxu0 0.0
    %3090 = vmatprep.subr.mxu0 0.0
    %3091 = vmatpush1.msra.mxu0 0.0
    %3092 = vmatprep.subr.mxu0 0.0
    %3093 = vmatpush1.msra.mxu0 0.0
    %3094 = vmatprep.subr.mxu0 0.0
    %3095 = vmatpush1.msra.mxu0 0.0
    %3096 = vmatprep.subr.mxu0 0.0
    %3097 = vmatpush1.msra.mxu0 0.0
    %3098 = vmatprep.subr.mxu0 0.0
    %3099 = vmatpush1.msra.mxu0 0.0
    %3100 = vmatprep.subr.mxu0 0.0
    %3101 = vmatpush1.msra.mxu0 0.0
    %3102 = vmatprep.subr.mxu0 0.0
    %3103 = vmatpush1.msra.mxu0 0.0
    %3104 = vmatprep.subr.mxu0 0.0
    %3105 = vmatpush1.msra.mxu0 0.0
    %3106 = vmatprep.subr.mxu0 0.0
    %3107 = vmatpush1.msra.mxu0 0.0
    %3108 = vmatprep.subr.mxu0 0.0
    %3109 = vmatpush1.msra.mxu0 0.0
    %3110 = vmatprep.subr.mxu0 0.0
    %3111 = vmatpush1.msra.mxu0 0.0
    %3112 = vmatprep.subr.mxu0 0.0
    %3113 = vmatpush1.msra.mxu0 0.0
    %3114 = vmatprep.subr.mxu0 0.0
    %3115 = vmatpush1.msra.mxu0 0.0
    %3116 = vmatprep.subr.mxu0 0.0
    %3117 = vmatpush1.msra.mxu0 0.0
    %3118 = vmatprep.subr.mxu0 0.0
    %3119 = vmatpush1.msra.mxu0 0.0
    %3120 = vmatprep.mubr.f32.mxu0 0.0
    %3121 = vmatmul.mubr.f32.gmra.mrb[0].mxu0 %v3051
    %v3122 = vpop.f32.mrb[0].mxu0
    %v3123 = vadd.f32 %v2481, %v3122
    %v3124 = vpop.f32.mrb[0].mxu0
    %3125 = vmatprep.mubr.f32.mxu0 0.0
    %3126 = vmatmul.mubr.f32.gmra.mrb[0].mxu0 %v3054
    %v3127 = vpop.f32.mrb[0].mxu0
    %v3128 = vadd.f32 %v2482, %v3127
    %v3129 = vpop.f32.mrb[0].mxu0
    %3130 = vdwg.mxu0
    %3133 = vrot.lane.b32.xlu0 %v2637, 8
    %v3134 = vpop.permute.xlu0 %3133
    %3135 = vrot.lane.b32.xlu0 %v2642, 8
    %v3136 = vpop.permute.xlu0 %3135
    %3141 = vrot.lane.b32.xlu0 %v2718, 16
    %v3142 = vpop.permute.xlu0 %3141
    %3143 = vrot.lane.b32.xlu0 %v2723, 16
    %v3144 = vpop.permute.xlu0 %3143
    %3149 = vrot.lane.b32.xlu0 %v2799, 24
    %v3150 = vpop.permute.xlu0 %3149
    %3151 = vrot.lane.b32.xlu0 %v2804, 24
    %v3152 = vpop.permute.xlu0 %3151
    %3157 = vrot.lane.b32.xlu0 %v2880, 32
    %v3158 = vpop.permute.xlu0 %3157
    %3159 = vrot.lane.b32.xlu0 %v2885, 32
    %v3160 = vpop.permute.xlu0 %3159
    %3165 = vrot.lane.b32.xlu0 %v2961, 40
    %v3166 = vpop.permute.xlu0 %3165
    %3167 = vrot.lane.b32.xlu0 %v2966, 40
    %v3168 = vpop.permute.xlu0 %3167
    %3173 = vrot.lane.b32.xlu0 %v3042, 48
    %v3174 = vpop.permute.xlu0 %3173
    %3175 = vrot.lane.b32.xlu0 %v3047, 48
    %v3176 = vpop.permute.xlu0 %3175
    %3181 = vrot.lane.b32.xlu0 %v3123, 56
    %v3182 = vpop.permute.xlu0 %3181
    %3183 = vrot.lane.b32.xlu0 %v3128, 56
    %v3184 = vpop.permute.xlu0 %3183
    %v3187 = vsel %vm255, %v2556, %v3134
    %v3188 = vsel %vm255, %v2561, %v3136
    %v3189 = vsel %vm118, %v3187, %v3142
    %v3190 = vsel %vm118, %v3188, %v3144
    %v3191 = vsel %vm1140, %v3189, %v3150
    %v3192 = vsel %vm1140, %v3190, %v3152
    %v3193 = vsel %vm1154, %v3191, %v3158
    %v3194 = vsel %vm1154, %v3192, %v3160
    %vm3195 = vcmask 326656
    %v3196 = vsel %vm3195, %v3193, %v3166
    %v3197 = vsel %vm3195, %v3194, %v3168
    %vm3198 = vcmask 392192
    %v3199 = vsel %vm3198, %v3196, %v3174
    %v3200 = vsel %vm3198, %v3197, %v3176
    %vm3201 = vcmask 457728
    %v3202 = vsel %vm3201, %v3199, %v3182
    %v3203 = vsel %vm3201, %v3200, %v3184
    %3204 = vrot.lane.b32.xlu0 %v1300, 64
    %v3205 = vpop.permute.xlu0 %3204
    %3206 = vrot.lane.b32.xlu0 %v1306, 64
    %v3207 = vpop.permute.xlu0 %3206
    %v3210 = vadd.f32 %v3202, %v3205
    %v3211 = vadd.f32 %v3203, %v3207
    %v3212 = vld [vmem:[#allocation8 + $0x11] sm:$0x1]
    %v3213 = vld [vmem:[#allocation8 + $0x12] sm:$0x1]
    %v3214 = vld [vmem:[#allocation8 + $0x13] sm:$0x1]
    %vm3215 = vcmask 523264
    %v3216 = vsel %vm3215, %v3210, 0.0
    %v3217 = vsel %vm3215, %v3211, 0.0
    %v3218 = vadd.f32 %v3216, %v3217
    %v3219 = vrot.slane %v3218, 4
    %v3220 = vadd.f32 %v3218, %v3219
    %v3221 = vrot.slane %v3220, 2
    %v3222 = vadd.f32 %v3220, %v3221
    %v3223 = vrot.slane %v3222, 1
    %v3224 = vadd.f32 %v3222, %v3223
    %v3225 = vmul.f32 %v3224, 0.0625
    %v3226 = vmul.f32 %v3225, %v3214
    %v3227 = vlaneseq
    %v3228 = vshrl.u32 %v3227, 7
    %v3229 = vsub.s32 0, %v3228
    %v3230 = vrot.slane %v3226, %v3229
    %v3231 = vsub.f32 %v3210, %v3230
    %v3232 = vsub.f32 %v3211, %v3230
    %v3233 = vmul.f32 %v3231, %v3231
    %v3234 = vmul.f32 %v3232, %v3232
    %v3235 = vsel %vm3215, %v3233, 0.0
    %v3236 = vsel %vm3215, %v3234, 0.0
    %v3237 = vadd.f32 %v3235, %v3236
    %v3238 = vrot.slane %v3237, 4
    %v3239 = vadd.f32 %v3237, %v3238
    %v3240 = vrot.slane %v3239, 2
    %v3241 = vadd.f32 %v3239, %v3240
    %v3242 = vrot.slane %v3241, 1
    %v3243 = vadd.f32 %v3241, %v3242
    %v3244 = vmul.f32 %v3243, 0.0625
    %v3246 = vlaneseq
    %v3247 = vshrl.u32 %v3246, 7
    %v3248 = vsub.s32 0, %v3247
    %v3249 = vrot.slane %v3212, %v3248
    %v3251 = vmul.f32 %v3249, %v3231
    %v3252 = vmul.f32 %v3249, %v3232
    %v3253 = vadd.f32 %v3244, 1e-05
    %v3254 = vrsqrt.pop %v3253
    %v3255 = vmul.f32 %v3251, %v3254
    %v3256 = vmul.f32 %v3252, %v3254
    %v3258 = vlaneseq
    %v3259 = vshrl.u32 %v3258, 7
    %v3260 = vsub.s32 0, %v3259
    %v3261 = vrot.slane %v3213, %v3260
    %v3263 = vadd.f32 %v3255, %v3261
    %v3264 = vadd.f32 %v3256, %v3261
    %v3265 = vmul.f32 %v3263, %v3263
    %v3266 = vmul.f32 %v3264, %v3264
    %v3267 = vsel %vm3215, %v3265, 0.0
    %3268 = vadd.xlane.f32.xlu0 %v3267
    %v3269 = vpop.xlane.xlu0 %3268
    %v3270 = vsel %vm3215, %v3266, 0.0
    %3271 = vadd.xlane.f32.xlu0 %v3270
    %v3272 = vpop.xlane.xlu0 %3271
    %v3273 = vadd.f32 %v3269, 1e-24
    %v3274 = vadd.f32 %v3272, 1e-24
    %v3275 = vrsqrt.pop %v3273
    %v3276 = vrsqrt.pop %v3274
    %v3277 = vmul.f32 %v3263, %v3275
    %v3278 = vmul.f32 %v3264, %v3276
    %v3280 = vsel %vm3215, %v3277, 0
    %v3283 = vsel %vm3215, %v3278, 0
    %3285 = vmatprep.subr.mxu0 0.0
    %3286 = vmatpush1.xpose.msra.mxu0 %v3280
    %3287 = vmatprep.subr.mxu0 0.0
    %3288 = vmatpush1.xpose.msra.mxu0 %v3283
    %3289 = vmatprep.subr.mxu0 0.0
    %3290 = vmatpush1.xpose.msra.mxu0 0.0
    %3291 = vmatprep.subr.mxu0 0.0
    %3292 = vmatpush1.xpose.msra.mxu0 0.0
    %3293 = vmatprep.subr.mxu0 0.0
    %3294 = vmatpush1.xpose.msra.mxu0 0.0
    %3295 = vmatprep.subr.mxu0 0.0
    %3296 = vmatpush1.xpose.msra.mxu0 0.0
    %3297 = vmatprep.subr.mxu0 0.0
    %3298 = vmatpush1.xpose.msra.mxu0 0.0
    %3299 = vmatprep.subr.mxu0 0.0
    %3300 = vmatpush1.xpose.msra.mxu0 0.0
    %3301 = vmatprep.subr.mxu0 0.0
    %3302 = vmatpush1.xpose.msra.mxu0 0.0
    %3303 = vmatprep.subr.mxu0 0.0
    %3304 = vmatpush1.xpose.msra.mxu0 0.0
    %3305 = vmatprep.subr.mxu0 0.0
    %3306 = vmatpush1.xpose.msra.mxu0 0.0
    %3307 = vmatprep.subr.mxu0 0.0
    %3308 = vmatpush1.xpose.msra.mxu0 0.0
    %3309 = vmatprep.subr.mxu0 0.0
    %3310 = vmatpush1.xpose.msra.mxu0 0.0
    %3311 = vmatprep.subr.mxu0 0.0
    %3312 = vmatpush1.xpose.msra.mxu0 0.0
    %3313 = vmatprep.subr.mxu0 0.0
    %3314 = vmatpush1.xpose.msra.mxu0 0.0
    %3315 = vmatprep.subr.mxu0 0.0
    %3316 = vmatpush1.xpose.msra.mxu0 0.0
    %3317 = vmatprep.subr.mxu0 0.0
    %3318 = vmatpush1.xpose.msra.mxu0 0.0
    %3319 = vmatprep.subr.mxu0 0.0
    %3320 = vmatpush1.xpose.msra.mxu0 0.0
    %3321 = vmatprep.subr.mxu0 0.0
    %3322 = vmatpush1.xpose.msra.mxu0 0.0
    %3323 = vmatprep.subr.mxu0 0.0
    %3324 = vmatpush1.xpose.msra.mxu0 0.0
    %3325 = vmatprep.subr.mxu0 0.0
    %3326 = vmatpush1.xpose.msra.mxu0 0.0
    %3327 = vmatprep.subr.mxu0 0.0
    %3328 = vmatpush1.xpose.msra.mxu0 0.0
    %3329 = vmatprep.subr.mxu0 0.0
    %3330 = vmatpush1.xpose.msra.mxu0 0.0
    %3331 = vmatprep.subr.mxu0 0.0
    %3332 = vmatpush1.xpose.msra.mxu0 0.0
    %3333 = vmatprep.subr.mxu0 0.0
    %3334 = vmatpush1.xpose.msra.mxu0 0.0
    %3335 = vmatprep.subr.mxu0 0.0
    %3336 = vmatpush1.xpose.msra.mxu0 0.0
    %3337 = vmatprep.subr.mxu0 0.0
    %3338 = vmatpush1.xpose.msra.mxu0 0.0
    %3339 = vmatprep.subr.mxu0 0.0
    %3340 = vmatpush1.xpose.msra.mxu0 0.0
    %3341 = vmatprep.subr.mxu0 0.0
    %3342 = vmatpush1.xpose.msra.mxu0 0.0
    %3343 = vmatprep.subr.mxu0 0.0
    %3344 = vmatpush1.xpose.msra.mxu0 0.0
    %3345 = vmatprep.subr.mxu0 0.0
    %3346 = vmatpush1.xpose.msra.mxu0 0.0
    %3347 = vmatprep.subr.mxu0 0.0
    %3348 = vmatpush1.xpose.msra.mxu0 0.0
    %3349 = vmatprep.mubr.f32.mxu0 0.0
    %3350 = vmatmul.mubr.f32.gmra.mrb[0].mxu0 %v3280
    %v3351 = vpop.f32.mrb[0].mxu0
    %v3352 = vadd.f32 0.0, %v3351
    %v3353 = vpop.f32.mrb[0].mxu0
    %3354 = vmatprep.mubr.f32.mxu0 0.0
    %3355 = vmatmul.mubr.f32.gmra.mrb[0].mxu0 %v3283
    %v3356 = vpop.f32.mrb[0].mxu0
    %v3357 = vadd.f32 0.0, %v3356
    %v3358 = vpop.f32.mrb[0].mxu0
    %3359 = vdwg.mxu0
    %v3360 = vmax.f32 %v3352, 0.0
    %v3361 = vmax.f32 %v3357, 0.0
    %3362 = vst.msk [vmem:[#allocation11] sm:$0xff] %vm118, %v3360
    %3363 = vst.msk [vmem:[#allocation11 + $0x8] sm:$0xff] %vm118, %v3361
    %3364 = vxpose.xlu0.b32.start [1/16] %v3277, 128
    %3365 = vxpose.xlu0.b32.cont [2/16] %v3278, 128
    %3366 = vxpose.xlu0.b32.cont [3/16] 0.0, 128
    %3367 = vxpose.xlu0.b32.cont [4/16] 0.0, 128
    %3368 = vxpose.xlu0.b32.cont [5/16] 0.0, 128
    %3369 = vxpose.xlu0.b32.cont [6/16] 0.0, 128
    %3370 = vxpose.xlu0.b32.cont [7/16] 0.0, 128
    %3371 = vxpose.xlu0.b32.cont [8/16] 0.0, 128
    %3372 = vxpose.xlu0.b32.cont [9/16] 0.0, 128
    %3373 = vxpose.xlu0.b32.cont [10/16] 0.0, 128
    %3374 = vxpose.xlu0.b32.cont [11/16] 0.0, 128
    %3375 = vxpose.xlu0.b32.cont [12/16] 0.0, 128
    %3376 = vxpose.xlu0.b32.cont [13/16] 0.0, 128
    %3377 = vxpose.xlu0.b32.cont [14/16] 0.0, 128
    %3378 = vxpose.xlu0.b32.cont [15/16] 0.0, 128
    %3379 = vxpose.xlu0.b32.end [16/16] 0.0, 128
    %v3380 = vpop.trf.xlu0
    %v3381 = vpop.trf.xlu0
    %v3382 = vpop.trf.xlu0
    %v3383 = vpop.trf.xlu0
    %v3384 = vpop.trf.xlu0
    %v3385 = vpop.trf.xlu0
    %v3386 = vpop.trf.xlu0
    %v3387 = vpop.trf.xlu0
    %v3388 = vpop.trf.xlu0
    %v3389 = vpop.trf.xlu0
    %v3390 = vpop.trf.xlu0
    %v3391 = vpop.trf.xlu0
    %v3392 = vpop.trf.xlu0
    %v3393 = vpop.trf.xlu0
    %v3394 = vpop.trf.xlu0
    %v3395 = vpop.trf.xlu0
    %v3396 = vld [vmem:[#allocation7] sm:$0xff]
    %v3397 = vld [vmem:[#allocation7 + $0x8] sm:$0xff]
    %v3398 = vld [vmem:[#allocation7 + $0x10] sm:$0xff]
    %v3399 = vld [vmem:[#allocation7 + $0x18] sm:$0xff]
    %v3400 = vld [vmem:[#allocation7 + $0x20] sm:$0xff]
    %v3401 = vld [vmem:[#allocation7 + $0x28] sm:$0xff]
    %v3402 = vld [vmem:[#allocation7 + $0x30] sm:$0xff]
    %v3403 = vld [vmem:[#allocation7 + $0x38] sm:$0xff]
    %v3404 = vld [vmem:[#allocation7 + $0x40] sm:$0xff]
    %v3405 = vld [vmem:[#allocation7 + $0x48] sm:$0xff]
    %v3406 = vld [vmem:[#allocation7 + $0x50] sm:$0xff]
    %v3407 = vld [vmem:[#allocation7 + $0x58] sm:$0xff]
    %v3408 = vld [vmem:[#allocation7 + $0x60] sm:$0xff]
    %v3409 = vld [vmem:[#allocation7 + $0x68] sm:$0xff]
    %v3410 = vld [vmem:[#allocation7 + $0x70] sm:$0xff]
    %v3411 = vld [vmem:[#allocation7 + $0x78] sm:$0xff]
    %v3412 = vld [vmem:[#allocation8 + $0x3] sm:$0xff]
    %v3414 = vlaneseq
    %v3415 = vshrl.u32 %v3414, 7
    %v3416 = vsub.s32 0, %v3415
    %v3417 = vrot.slane %v3412, %v3416
    %v3418 = vlaneseq
    %v3419 = vshrl.u32 %v3418, 7
    %v3420 = vsub.s32 1, %v3419
    %v3421 = vrot.slane %v3412, %v3420
    %v3422 = vlaneseq
    %v3423 = vshrl.u32 %v3422, 7
    %v3424 = vsub.s32 2, %v3423
    %v3425 = vrot.slane %v3412, %v3424
    %v3426 = vlaneseq
    %v3427 = vshrl.u32 %v3426, 7
    %v3428 = vsub.s32 3, %v3427
    %v3429 = vrot.slane %v3412, %v3428
    %v3430 = vlaneseq
    %v3431 = vshrl.u32 %v3430, 7
    %v3432 = vsub.s32 4, %v3431
    %v3433 = vrot.slane %v3412, %v3432
    %v3434 = vlaneseq
    %v3435 = vshrl.u32 %v3434, 7
    %v3436 = vsub.s32 5, %v3435
    %v3437 = vrot.slane %v3412, %v3436
    %v3438 = vlaneseq
    %v3439 = vshrl.u32 %v3438, 7
    %v3440 = vsub.s32 6, %v3439
    %v3441 = vrot.slane %v3412, %v3440
    %v3442 = vlaneseq
    %v3443 = vshrl.u32 %v3442, 7
    %v3444 = vsub.s32 7, %v3443
    %v3445 = vrot.slane %v3412, %v3444
    %v3455 = vsel %vm118, %v3380, 0
    %v3458 = vsel %vm118, %v3381, 0
    %v3461 = vsel %vm118, %v3382, 0
    %v3464 = vsel %vm118, %v3383, 0
    %v3467 = vsel %vm118, %v3384, 0
    %v3470 = vsel %vm118, %v3385, 0
    %v3473 = vsel %vm118, %v3386, 0
    %v3476 = vsel %vm118, %v3387, 0
    %3478 = vmatprep.subr.mxu0 %v3397
    %3479 = vmatpush1.msra.mxu0 %v3396
    %3480 = vmatprep.subr.mxu0 %v3405
    %3481 = vmatpush1.msra.mxu0 %v3404
    %3482 = vmatprep.subr.mxu0 0.0
    %3483 = vmatpush1.msra.mxu0 0.0
    %3484 = vmatprep.subr.mxu0 0.0
    %3485 = vmatpush1.msra.mxu0 0.0
    %3486 = vmatprep.subr.mxu0 0.0
    %3487 = vmatpush1.msra.mxu0 0.0
    %3488 = vmatprep.subr.mxu0 0.0
    %3489 = vmatpush1.msra.mxu0 0.0
    %3490 = vmatprep.subr.mxu0 0.0
    %3491 = vmatpush1.msra.mxu0 0.0
    %3492 = vmatprep.subr.mxu0 0.0
    %3493 = vmatpush1.msra.mxu0 0.0
    %3494 = vmatprep.subr.mxu0 0.0
    %3495 = vmatpush1.msra.mxu0 0.0
    %3496 = vmatprep.subr.mxu0 0.0
    %3497 = vmatpush1.msra.mxu0 0.0
    %3498 = vmatprep.subr.mxu0 0.0
    %3499 = vmatpush1.msra.mxu0 0.0
    %3500 = vmatprep.subr.mxu0 0.0
    %3501 = vmatpush1.msra.mxu0 0.0
    %3502 = vmatprep.subr.mxu0 0.0
    %3503 = vmatpush1.msra.mxu0 0.0
    %3504 = vmatprep.subr.mxu0 0.0
    %3505 = vmatpush1.msra.mxu0 0.0
    %3506 = vmatprep.subr.mxu0 0.0
    %3507 = vmatpush1.msra.mxu0 0.0
    %3508 = vmatprep.subr.mxu0 0.0
    %3509 = vmatpush1.msra.mxu0 0.0
    %3510 = vmatprep.subr.mxu0 0.0
    %3511 = vmatpush1.msra.mxu0 0.0
    %3512 = vmatprep.subr.mxu0 0.0
    %3513 = vmatpush1.msra.mxu0 0.0
    %3514 = vmatprep.subr.mxu0 0.0
    %3515 = vmatpush1.msra.mxu0 0.0
    %3516 = vmatprep.subr.mxu0 0.0
    %3517 = vmatpush1.msra.mxu0 0.0
    %3518 = vmatprep.subr.mxu0 0.0
    %3519 = vmatpush1.msra.mxu0 0.0
    %3520 = vmatprep.subr.mxu0 0.0
    %3521 = vmatpush1.msra.mxu0 0.0
    %3522 = vmatprep.subr.mxu0 0.0
    %3523 = vmatpush1.msra.mxu0 0.0
    %3524 = vmatprep.subr.mxu0 0.0
    %3525 = vmatpush1.msra.mxu0 0.0
    %3526 = vmatprep.subr.mxu0 0.0
    %3527 = vmatpush1.msra.mxu0 0.0
    %3528 = vmatprep.subr.mxu0 0.0
    %3529 = vmatpush1.msra.mxu0 0.0
    %3530 = vmatprep.subr.mxu0 0.0
    %3531 = vmatpush1.msra.mxu0 0.0
    %3532 = vmatprep.subr.mxu0 0.0
    %3533 = vmatpush1.msra.mxu0 0.0
    %3534 = vmatprep.subr.mxu0 0.0
    %3535 = vmatpush1.msra.mxu0 0.0
    %3536 = vmatprep.subr.mxu0 0.0
    %3537 = vmatpush1.msra.mxu0 0.0
    %3538 = vmatprep.subr.mxu0 0.0
    %3539 = vmatpush1.msra.mxu0 0.0
    %3540 = vmatprep.subr.mxu0 0.0
    %3541 = vmatpush1.msra.mxu0 0.0
    %3542 = vmatprep.mubr.f32.mxu0 0.0
    %3543 = vmatmul.mubr.f32.gmra.mrb[0].mxu0 %v3455
    %v3544 = vpop.f32.mrb[0].mxu0
    %v3545 = vadd.f32 %v3417, %v3544
    %v3546 = vpop.f32.mrb[0].mxu0
    %v3547 = vadd.f32 %v3421, %v3546
    %3548 = vmatprep.mubr.f32.mxu0 0.0
    %3549 = vmatmul.mubr.f32.gmra.mrb[0].mxu0 %v3458
    %v3550 = vpop.f32.mrb[0].mxu0
    %v3551 = vadd.f32 %v3417, %v3550
    %v3552 = vpop.f32.mrb[0].mxu0
    %v3553 = vadd.f32 %v3421, %v3552
    %3554 = vmatprep.mubr.f32.mxu0 0.0
    %3555 = vmatmul.mubr.f32.gmra.mrb[0].mxu0 %v3461
    %v3556 = vpop.f32.mrb[0].mxu0
    %v3557 = vadd.f32 %v3417, %v3556
    %v3558 = vpop.f32.mrb[0].mxu0
    %v3559 = vadd.f32 %v3421, %v3558
    %3560 = vmatprep.mubr.f32.mxu0 0.0
    %3561 = vmatmul.mubr.f32.gmra.mrb[0].mxu0 %v3464
    %v3562 = vpop.f32.mrb[0].mxu0
    %v3563 = vadd.f32 %v3417, %v3562
    %v3564 = vpop.f32.mrb[0].mxu0
    %v3565 = vadd.f32 %v3421, %v3564
    %3566 = vmatprep.mubr.f32.mxu0 0.0
    %3567 = vmatmul.mubr.f32.gmra.mrb[0].mxu0 %v3467
    %v3568 = vpop.f32.mrb[0].mxu0
    %v3569 = vadd.f32 %v3417, %v3568
    %v3570 = vpop.f32.mrb[0].mxu0
    %v3571 = vadd.f32 %v3421, %v3570
    %3572 = vmatprep.mubr.f32.mxu0 0.0
    %3573 = vmatmul.mubr.f32.gmra.mrb[0].mxu0 %v3470
    %v3574 = vpop.f32.mrb[0].mxu0
    %v3575 = vadd.f32 %v3417, %v3574
    %v3576 = vpop.f32.mrb[0].mxu0
    %v3577 = vadd.f32 %v3421, %v3576
    %3578 = vmatprep.mubr.f32.mxu0 0.0
    %3579 = vmatmul.mubr.f32.gmra.mrb[0].mxu0 %v3473
    %v3580 = vpop.f32.mrb[0].mxu0
    %v3581 = vadd.f32 %v3417, %v3580
    %v3582 = vpop.f32.mrb[0].mxu0
    %v3583 = vadd.f32 %v3421, %v3582
    %3584 = vmatprep.mubr.f32.mxu0 0.0
    %3585 = vmatmul.mubr.f32.gmra.mrb[0].mxu0 %v3476
    %v3586 = vpop.f32.mrb[0].mxu0
    %v3587 = vadd.f32 %v3417, %v3586
    %v3588 = vpop.f32.mrb[0].mxu0
    %v3589 = vadd.f32 %v3421, %v3588
    %3590 = vdwg.mxu0
    %3591 = vmatprep.subr.mxu0 %v3399
    %3592 = vmatpush1.msra.mxu0 %v3398
    %3593 = vmatprep.subr.mxu0 %v3407
    %3594 = vmatpush1.msra.mxu0 %v3406
    %3595 = vmatprep.subr.mxu0 0.0
    %3596 = vmatpush1.msra.mxu0 0.0
    %3597 = vmatprep.subr.mxu0 0.0
    %3598 = vmatpush1.msra.mxu0 0.0
    %3599 = vmatprep.subr.mxu0 0.0
    %3600 = vmatpush1.msra.mxu0 0.0
    %3601 = vmatprep.subr.mxu0 0.0
    %3602 = vmatpush1.msra.mxu0 0.0
    %3603 = vmatprep.subr.mxu0 0.0
    %3604 = vmatpush1.msra.mxu0 0.0
    %3605 = vmatprep.subr.mxu0 0.0
    %3606 = vmatpush1.msra.mxu0 0.0
    %3607 = vmatprep.subr.mxu0 0.0
    %3608 = vmatpush1.msra.mxu0 0.0
    %3609 = vmatprep.subr.mxu0 0.0
    %3610 = vmatpush1.msra.mxu0 0.0
    %3611 = vmatprep.subr.mxu0 0.0
    %3612 = vmatpush1.msra.mxu0 0.0
    %3613 = vmatprep.subr.mxu0 0.0
    %3614 = vmatpush1.msra.mxu0 0.0
    %3615 = vmatprep.subr.mxu0 0.0
    %3616 = vmatpush1.msra.mxu0 0.0
    %3617 = vmatprep.subr.mxu0 0.0
    %3618 = vmatpush1.msra.mxu0 0.0
    %3619 = vmatprep.subr.mxu0 0.0
    %3620 = vmatpush1.msra.mxu0 0.0
    %3621 = vmatprep.subr.mxu0 0.0
    %3622 = vmatpush1.msra.mxu0 0.0
    %3623 = vmatprep.subr.mxu0 0.0
    %3624 = vmatpush1.msra.mxu0 0.0
    %3625 = vmatprep.subr.mxu0 0.0
    %3626 = vmatpush1.msra.mxu0 0.0
    %3627 = vmatprep.subr.mxu0 0.0
    %3628 = vmatpush1.msra.mxu0 0.0
    %3629 = vmatprep.subr.mxu0 0.0
    %3630 = vmatpush1.msra.mxu0 0.0
    %3631 = vmatprep.subr.mxu0 0.0
    %3632 = vmatpush1.msra.mxu0 0.0
    %3633 = vmatprep.subr.mxu0 0.0
    %3634 = vmatpush1.msra.mxu0 0.0
    %3635 = vmatprep.subr.mxu0 0.0
    %3636 = vmatpush1.msra.mxu0 0.0
    %3637 = vmatprep.subr.mxu0 0.0
    %3638 = vmatpush1.msra.mxu0 0.0
    %3639 = vmatprep.subr.mxu0 0.0
    %3640 = vmatpush1.msra.mxu0 0.0
    %3641 = vmatprep.subr.mxu0 0.0
    %3642 = vmatpush1.msra.mxu0 0.0
    %3643 = vmatprep.subr.mxu0 0.0
    %3644 = vmatpush1.msra.mxu0 0.0
    %3645 = vmatprep.subr.mxu0 0.0
    %3646 = vmatpush1.msra.mxu0 0.0
    %3647 = vmatprep.subr.mxu0 0.0
    %3648 = vmatpush1.msra.mxu0 0.0
    %3649 = vmatprep.subr.mxu0 0.0
    %3650 = vmatpush1.msra.mxu0 0.0
    %3651 = vmatprep.subr.mxu0 0.0
    %3652 = vmatpush1.msra.mxu0 0.0
    %3653 = vmatprep.subr.mxu0 0.0
    %3654 = vmatpush1.msra.mxu0 0.0
    %3655 = vmatprep.mubr.f32.mxu0 0.0
    %3656 = vmatmul.mubr.f32.gmra.mrb[0].mxu0 %v3455
    %v3657 = vpop.f32.mrb[0].mxu0
    %v3658 = vadd.f32 %v3425, %v3657
    %v3659 = vpop.f32.mrb[0].mxu0
    %v3660 = vadd.f32 %v3429, %v3659
    %3661 = vmatprep.mubr.f32.mxu0 0.0
    %3662 = vmatmul.mubr.f32.gmra.mrb[0].mxu0 %v3458
    %v3663 = vpop.f32.mrb[0].mxu0
    %v3664 = vadd.f32 %v3425, %v3663
    %v3665 = vpop.f32.mrb[0].mxu0
    %v3666 = vadd.f32 %v3429, %v3665
    %3667 = vmatprep.mubr.f32.mxu0 0.0
    %3668 = vmatmul.mubr.f32.gmra.mrb[0].mxu0 %v3461
    %v3669 = vpop.f32.mrb[0].mxu0
    %v3670 = vadd.f32 %v3425, %v3669
    %v3671 = vpop.f32.mrb[0].mxu0
    %v3672 = vadd.f32 %v3429, %v3671
    %3673 = vmatprep.mubr.f32.mxu0 0.0
    %3674 = vmatmul.mubr.f32.gmra.mrb[0].mxu0 %v3464
    %v3675 = vpop.f32.mrb[0].mxu0
    %v3676 = vadd.f32 %v3425, %v3675
    %v3677 = vpop.f32.mrb[0].mxu0
    %v3678 = vadd.f32 %v3429, %v3677
    %3679 = vmatprep.mubr.f32.mxu0 0.0
    %3680 = vmatmul.mubr.f32.gmra.mrb[0].mxu0 %v3467
    %v3681 = vpop.f32.mrb[0].mxu0
    %v3682 = vadd.f32 %v3425, %v3681
    %v3683 = vpop.f32.mrb[0].mxu0
    %v3684 = vadd.f32 %v3429, %v3683
    %3685 = vmatprep.mubr.f32.mxu0 0.0
    %3686 = vmatmul.mubr.f32.gmra.mrb[0].mxu0 %v3470
    %v3687 = vpop.f32.mrb[0].mxu0
    %v3688 = vadd.f32 %v3425, %v3687
    %v3689 = vpop.f32.mrb[0].mxu0
    %v3690 = vadd.f32 %v3429, %v3689
    %3691 = vmatprep.mubr.f32.mxu0 0.0
    %3692 = vmatmul.mubr.f32.gmra.mrb[0].mxu0 %v3473
    %v3693 = vpop.f32.mrb[0].mxu0
    %v3694 = vadd.f32 %v3425, %v3693
    %v3695 = vpop.f32.mrb[0].mxu0
    %v3696 = vadd.f32 %v3429, %v3695
    %3697 = vmatprep.mubr.f32.mxu0 0.0
    %3698 = vmatmul.mubr.f32.gmra.mrb[0].mxu0 %v3476
    %v3699 = vpop.f32.mrb[0].mxu0
    %v3700 = vadd.f32 %v3425, %v3699
    %v3701 = vpop.f32.mrb[0].mxu0
    %v3702 = vadd.f32 %v3429, %v3701
    %3703 = vdwg.mxu0
    %3704 = vmatprep.subr.mxu0 %v3401
    %3705 = vmatpush1.msra.mxu0 %v3400
    %3706 = vmatprep.subr.mxu0 %v3409
    %3707 = vmatpush1.msra.mxu0 %v3408
    %3708 = vmatprep.subr.mxu0 0.0
    %3709 = vmatpush1.msra.mxu0 0.0
    %3710 = vmatprep.subr.mxu0 0.0
    %3711 = vmatpush1.msra.mxu0 0.0
    %3712 = vmatprep.subr.mxu0 0.0
    %3713 = vmatpush1.msra.mxu0 0.0
    %3714 = vmatprep.subr.mxu0 0.0
    %3715 = vmatpush1.msra.mxu0 0.0
    %3716 = vmatprep.subr.mxu0 0.0
    %3717 = vmatpush1.msra.mxu0 0.0
    %3718 = vmatprep.subr.mxu0 0.0
    %3719 = vmatpush1.msra.mxu0 0.0
    %3720 = vmatprep.subr.mxu0 0.0
    %3721 = vmatpush1.msra.mxu0 0.0
    %3722 = vmatprep.subr.mxu0 0.0
    %3723 = vmatpush1.msra.mxu0 0.0
    %3724 = vmatprep.subr.mxu0 0.0
    %3725 = vmatpush1.msra.mxu0 0.0
    %3726 = vmatprep.subr.mxu0 0.0
    %3727 = vmatpush1.msra.mxu0 0.0
    %3728 = vmatprep.subr.mxu0 0.0
    %3729 = vmatpush1.msra.mxu0 0.0
    %3730 = vmatprep.subr.mxu0 0.0
    %3731 = vmatpush1.msra.mxu0 0.0
    %3732 = vmatprep.subr.mxu0 0.0
    %3733 = vmatpush1.msra.mxu0 0.0
    %3734 = vmatprep.subr.mxu0 0.0
    %3735 = vmatpush1.msra.mxu0 0.0
    %3736 = vmatprep.subr.mxu0 0.0
    %3737 = vmatpush1.msra.mxu0 0.0
    %3738 = vmatprep.subr.mxu0 0.0
    %3739 = vmatpush1.msra.mxu0 0.0
    %3740 = vmatprep.subr.mxu0 0.0
    %3741 = vmatpush1.msra.mxu0 0.0
    %3742 = vmatprep.subr.mxu0 0.0
    %3743 = vmatpush1.msra.mxu0 0.0
    %3744 = vmatprep.subr.mxu0 0.0
    %3745 = vmatpush1.msra.mxu0 0.0
    %3746 = vmatprep.subr.mxu0 0.0
    %3747 = vmatpush1.msra.mxu0 0.0
    %3748 = vmatprep.subr.mxu0 0.0
    %3749 = vmatpush1.msra.mxu0 0.0
    %3750 = vmatprep.subr.mxu0 0.0
    %3751 = vmatpush1.msra.mxu0 0.0
    %3752 = vmatprep.subr.mxu0 0.0
    %3753 = vmatpush1.msra.mxu0 0.0
    %3754 = vmatprep.subr.mxu0 0.0
    %3755 = vmatpush1.msra.mxu0 0.0
    %3756 = vmatprep.subr.mxu0 0.0
    %3757 = vmatpush1.msra.mxu0 0.0
    %3758 = vmatprep.subr.mxu0 0.0
    %3759 = vmatpush1.msra.mxu0 0.0
    %3760 = vmatprep.subr.mxu0 0.0
    %3761 = vmatpush1.msra.mxu0 0.0
    %3762 = vmatprep.subr.mxu0 0.0
    %3763 = vmatpush1.msra.mxu0 0.0
    %3764 = vmatprep.subr.mxu0 0.0
    %3765 = vmatpush1.msra.mxu0 0.0
    %3766 = vmatprep.subr.mxu0 0.0
    %3767 = vmatpush1.msra.mxu0 0.0
    %3768 = vmatprep.mubr.f32.mxu0 0.0
    %3769 = vmatmul.mubr.f32.gmra.mrb[0].mxu0 %v3455
    %v3770 = vpop.f32.mrb[0].mxu0
    %v3771 = vadd.f32 %v3433, %v3770
    %v3772 = vpop.f32.mrb[0].mxu0
    %v3773 = vadd.f32 %v3437, %v3772
    %3774 = vmatprep.mubr.f32.mxu0 0.0
    %3775 = vmatmul.mubr.f32.gmra.mrb[0].mxu0 %v3458
    %v3776 = vpop.f32.mrb[0].mxu0
    %v3777 = vadd.f32 %v3433, %v3776
    %v3778 = vpop.f32.mrb[0].mxu0
    %v3779 = vadd.f32 %v3437, %v3778
    %3780 = vmatprep.mubr.f32.mxu0 0.0
    %3781 = vmatmul.mubr.f32.gmra.mrb[0].mxu0 %v3461
    %v3782 = vpop.f32.mrb[0].mxu0
    %v3783 = vadd.f32 %v3433, %v3782
    %v3784 = vpop.f32.mrb[0].mxu0
    %v3785 = vadd.f32 %v3437, %v3784
    %3786 = vmatprep.mubr.f32.mxu0 0.0
    %3787 = vmatmul.mubr.f32.gmra.mrb[0].mxu0 %v3464
    %v3788 = vpop.f32.mrb[0].mxu0
    %v3789 = vadd.f32 %v3433, %v3788
    %v3790 = vpop.f32.mrb[0].mxu0
    %v3791 = vadd.f32 %v3437, %v3790
    %3792 = vmatprep.mubr.f32.mxu0 0.0
    %3793 = vmatmul.mubr.f32.gmra.mrb[0].mxu0 %v3467
    %v3794 = vpop.f32.mrb[0].mxu0
    %v3795 = vadd.f32 %v3433, %v3794
    %v3796 = vpop.f32.mrb[0].mxu0
    %v3797 = vadd.f32 %v3437, %v3796
    %3798 = vmatprep.mubr.f32.mxu0 0.0
    %3799 = vmatmul.mubr.f32.gmra.mrb[0].mxu0 %v3470
    %v3800 = vpop.f32.mrb[0].mxu0
    %v3801 = vadd.f32 %v3433, %v3800
    %v3802 = vpop.f32.mrb[0].mxu0
    %v3803 = vadd.f32 %v3437, %v3802
    %3804 = vmatprep.mubr.f32.mxu0 0.0
    %3805 = vmatmul.mubr.f32.gmra.mrb[0].mxu0 %v3473
    %v3806 = vpop.f32.mrb[0].mxu0
    %v3807 = vadd.f32 %v3433, %v3806
    %v3808 = vpop.f32.mrb[0].mxu0
    %v3809 = vadd.f32 %v3437, %v3808
    %3810 = vmatprep.mubr.f32.mxu0 0.0
    %3811 = vmatmul.mubr.f32.gmra.mrb[0].mxu0 %v3476
    %v3812 = vpop.f32.mrb[0].mxu0
    %v3813 = vadd.f32 %v3433, %v3812
    %v3814 = vpop.f32.mrb[0].mxu0
    %v3815 = vadd.f32 %v3437, %v3814
    %3816 = vdwg.mxu0
    %3817 = vmatprep.subr.mxu0 %v3403
    %3818 = vmatpush1.msra.mxu0 %v3402
    %3819 = vmatprep.subr.mxu0 %v3411
    %3820 = vmatpush1.msra.mxu0 %v3410
    %3821 = vmatprep.subr.mxu0 0.0
    %3822 = vmatpush1.msra.mxu0 0.0
    %3823 = vmatprep.subr.mxu0 0.0
    %3824 = vmatpush1.msra.mxu0 0.0
    %3825 = vmatprep.subr.mxu0 0.0
    %3826 = vmatpush1.msra.mxu0 0.0
    %3827 = vmatprep.subr.mxu0 0.0
    %3828 = vmatpush1.msra.mxu0 0.0
    %3829 = vmatprep.subr.mxu0 0.0
    %3830 = vmatpush1.msra.mxu0 0.0
    %3831 = vmatprep.subr.mxu0 0.0
    %3832 = vmatpush1.msra.mxu0 0.0
    %3833 = vmatprep.subr.mxu0 0.0
    %3834 = vmatpush1.msra.mxu0 0.0
    %3835 = vmatprep.subr.mxu0 0.0
    %3836 = vmatpush1.msra.mxu0 0.0
    %3837 = vmatprep.subr.mxu0 0.0
    %3838 = vmatpush1.msra.mxu0 0.0
    %3839 = vmatprep.subr.mxu0 0.0
    %3840 = vmatpush1.msra.mxu0 0.0
    %3841 = vmatprep.subr.mxu0 0.0
    %3842 = vmatpush1.msra.mxu0 0.0
    %3843 = vmatprep.subr.mxu0 0.0
    %3844 = vmatpush1.msra.mxu0 0.0
    %3845 = vmatprep.subr.mxu0 0.0
    %3846 = vmatpush1.msra.mxu0 0.0
    %3847 = vmatprep.subr.mxu0 0.0
    %3848 = vmatpush1.msra.mxu0 0.0
    %3849 = vmatprep.subr.mxu0 0.0
    %3850 = vmatpush1.msra.mxu0 0.0
    %3851 = vmatprep.subr.mxu0 0.0
    %3852 = vmatpush1.msra.mxu0 0.0
    %3853 = vmatprep.subr.mxu0 0.0
    %3854 = vmatpush1.msra.mxu0 0.0
    %3855 = vmatprep.subr.mxu0 0.0
    %3856 = vmatpush1.msra.mxu0 0.0
    %3857 = vmatprep.subr.mxu0 0.0
    %3858 = vmatpush1.msra.mxu0 0.0
    %3859 = vmatprep.subr.mxu0 0.0
    %3860 = vmatpush1.msra.mxu0 0.0
    %3861 = vmatprep.subr.mxu0 0.0
    %3862 = vmatpush1.msra.mxu0 0.0
    %3863 = vmatprep.subr.mxu0 0.0
    %3864 = vmatpush1.msra.mxu0 0.0
    %3865 = vmatprep.subr.mxu0 0.0
    %3866 = vmatpush1.msra.mxu0 0.0
    %3867 = vmatprep.subr.mxu0 0.0
    %3868 = vmatpush1.msra.mxu0 0.0
    %3869 = vmatprep.subr.mxu0 0.0
    %3870 = vmatpush1.msra.mxu0 0.0
    %3871 = vmatprep.subr.mxu0 0.0
    %3872 = vmatpush1.msra.mxu0 0.0
    %3873 = vmatprep.subr.mxu0 0.0
    %3874 = vmatpush1.msra.mxu0 0.0
    %3875 = vmatprep.subr.mxu0 0.0
    %3876 = vmatpush1.msra.mxu0 0.0
    %3877 = vmatprep.subr.mxu0 0.0
    %3878 = vmatpush1.msra.mxu0 0.0
    %3879 = vmatprep.subr.mxu0 0.0
    %3880 = vmatpush1.msra.mxu0 0.0
    %3881 = vmatprep.mubr.f32.mxu0 0.0
    %3882 = vmatmul.mubr.f32.gmra.mrb[0].mxu0 %v3455
    %v3883 = vpop.f32.mrb[0].mxu0
    %v3884 = vadd.f32 %v3441, %v3883
    %v3885 = vpop.f32.mrb[0].mxu0
    %v3886 = vadd.f32 %v3445, %v3885
    %3887 = vmatprep.mubr.f32.mxu0 0.0
    %3888 = vmatmul.mubr.f32.gmra.mrb[0].mxu0 %v3458
    %v3889 = vpop.f32.mrb[0].mxu0
    %v3890 = vadd.f32 %v3441, %v3889
    %v3891 = vpop.f32.mrb[0].mxu0
    %v3892 = vadd.f32 %v3445, %v3891
    %3893 = vmatprep.mubr.f32.mxu0 0.0
    %3894 = vmatmul.mubr.f32.gmra.mrb[0].mxu0 %v3461
    %v3895 = vpop.f32.mrb[0].mxu0
    %v3896 = vadd.f32 %v3441, %v3895
    %v3897 = vpop.f32.mrb[0].mxu0
    %v3898 = vadd.f32 %v3445, %v3897
    %3899 = vmatprep.mubr.f32.mxu0 0.0
    %3900 = vmatmul.mubr.f32.gmra.mrb[0].mxu0 %v3464
    %v3901 = vpop.f32.mrb[0].mxu0
    %v3902 = vadd.f32 %v3441, %v3901
    %v3903 = vpop.f32.mrb[0].mxu0
    %v3904 = vadd.f32 %v3445, %v3903
    %3905 = vmatprep.mubr.f32.mxu0 0.0
    %3906 = vmatmul.mubr.f32.gmra.mrb[0].mxu0 %v3467
    %v3907 = vpop.f32.mrb[0].mxu0
    %v3908 = vadd.f32 %v3441, %v3907
    %v3909 = vpop.f32.mrb[0].mxu0
    %v3910 = vadd.f32 %v3445, %v3909
    %3911 = vmatprep.mubr.f32.mxu0 0.0
    %3912 = vmatmul.mubr.f32.gmra.mrb[0].mxu0 %v3470
    %v3913 = vpop.f32.mrb[0].mxu0
    %v3914 = vadd.f32 %v3441, %v3913
    %v3915 = vpop.f32.mrb[0].mxu0
    %v3916 = vadd.f32 %v3445, %v3915
    %3917 = vmatprep.mubr.f32.mxu0 0.0
    %3918 = vmatmul.mubr.f32.gmra.mrb[0].mxu0 %v3473
    %v3919 = vpop.f32.mrb[0].mxu0
    %v3920 = vadd.f32 %v3441, %v3919
    %v3921 = vpop.f32.mrb[0].mxu0
    %v3922 = vadd.f32 %v3445, %v3921
    %3923 = vmatprep.mubr.f32.mxu0 0.0
    %3924 = vmatmul.mubr.f32.gmra.mrb[0].mxu0 %v3476
    %v3925 = vpop.f32.mrb[0].mxu0
    %v3926 = vadd.f32 %v3441, %v3925
    %v3927 = vpop.f32.mrb[0].mxu0
    %v3928 = vadd.f32 %v3445, %v3927
    %3929 = vdwg.mxu0
    %3938 = vrot.lane.b32.xlu0 %v3545, 64
    %v3939 = vpop.permute.xlu0 %3938
    %3940 = vrot.lane.b32.xlu0 %v3551, 64
    %v3941 = vpop.permute.xlu0 %3940
    %3942 = vrot.lane.b32.xlu0 %v3557, 64
    %v3943 = vpop.permute.xlu0 %3942
    %3944 = vrot.lane.b32.xlu0 %v3563, 64
    %v3945 = vpop.permute.xlu0 %3944
    %3946 = vrot.lane.b32.xlu0 %v3569, 64
    %v3947 = vpop.permute.xlu0 %3946
    %3948 = vrot.lane.b32.xlu0 %v3575, 64
    %v3949 = vpop.permute.xlu0 %3948
    %3950 = vrot.lane.b32.xlu0 %v3581, 64
    %v3951 = vpop.permute.xlu0 %3950
    %3952 = vrot.lane.b32.xlu0 %v3587, 64
    %v3953 = vpop.permute.xlu0 %3952
    %3962 = vrot.lane.b32.xlu0 %v3547, 64
    %v3963 = vpop.permute.xlu0 %3962
    %3964 = vrot.lane.b32.xlu0 %v3553, 64
    %v3965 = vpop.permute.xlu0 %3964
    %3966 = vrot.lane.b32.xlu0 %v3559, 64
    %v3967 = vpop.permute.xlu0 %3966
    %3968 = vrot.lane.b32.xlu0 %v3565, 64
    %v3969 = vpop.permute.xlu0 %3968
    %3970 = vrot.lane.b32.xlu0 %v3571, 64
    %v3971 = vpop.permute.xlu0 %3970
    %3972 = vrot.lane.b32.xlu0 %v3577, 64
    %v3973 = vpop.permute.xlu0 %3972
    %3974 = vrot.lane.b32.xlu0 %v3583, 64
    %v3975 = vpop.permute.xlu0 %3974
    %3976 = vrot.lane.b32.xlu0 %v3589, 64
    %v3977 = vpop.permute.xlu0 %3976
    %3986 = vrot.lane.b32.xlu0 %v3658, 64
    %v3987 = vpop.permute.xlu0 %3986
    %3988 = vrot.lane.b32.xlu0 %v3664, 64
    %v3989 = vpop.permute.xlu0 %3988
    %3990 = vrot.lane.b32.xlu0 %v3670, 64
    %v3991 = vpop.permute.xlu0 %3990
    %3992 = vrot.lane.b32.xlu0 %v3676, 64
    %v3993 = vpop.permute.xlu0 %3992
    %3994 = vrot.lane.b32.xlu0 %v3682, 64
    %v3995 = vpop.permute.xlu0 %3994
    %3996 = vrot.lane.b32.xlu0 %v3688, 64
    %v3997 = vpop.permute.xlu0 %3996
    %3998 = vrot.lane.b32.xlu0 %v3694, 64
    %v3999 = vpop.permute.xlu0 %3998
    %4000 = vrot.lane.b32.xlu0 %v3700, 64
    %v4001 = vpop.permute.xlu0 %4000
    %4010 = vrot.lane.b32.xlu0 %v3660, 64
    %v4011 = vpop.permute.xlu0 %4010
    %4012 = vrot.lane.b32.xlu0 %v3666, 64
    %v4013 = vpop.permute.xlu0 %4012
    %4014 = vrot.lane.b32.xlu0 %v3672, 64
    %v4015 = vpop.permute.xlu0 %4014
    %4016 = vrot.lane.b32.xlu0 %v3678, 64
    %v4017 = vpop.permute.xlu0 %4016
    %4018 = vrot.lane.b32.xlu0 %v3684, 64
    %v4019 = vpop.permute.xlu0 %4018
    %4020 = vrot.lane.b32.xlu0 %v3690, 64
    %v4021 = vpop.permute.xlu0 %4020
    %4022 = vrot.lane.b32.xlu0 %v3696, 64
    %v4023 = vpop.permute.xlu0 %4022
    %4024 = vrot.lane.b32.xlu0 %v3702, 64
    %v4025 = vpop.permute.xlu0 %4024
    %4034 = vrot.lane.b32.xlu0 %v3771, 64
    %v4035 = vpop.permute.xlu0 %4034
    %4036 = vrot.lane.b32.xlu0 %v3777, 64
    %v4037 = vpop.permute.xlu0 %4036
    %4038 = vrot.lane.b32.xlu0 %v3783, 64
    %v4039 = vpop.permute.xlu0 %4038
    %4040 = vrot.lane.b32.xlu0 %v3789, 64
    %v4041 = vpop.permute.xlu0 %4040
    %4042 = vrot.lane.b32.xlu0 %v3795, 64
    %v4043 = vpop.permute.xlu0 %4042
    %4044 = vrot.lane.b32.xlu0 %v3801, 64
    %v4045 = vpop.permute.xlu0 %4044
    %4046 = vrot.lane.b32.xlu0 %v3807, 64
    %v4047 = vpop.permute.xlu0 %4046
    %4048 = vrot.lane.b32.xlu0 %v3813, 64
    %v4049 = vpop.permute.xlu0 %4048
    %4066 = vrot.lane.b32.xlu0 %v3773, 64
    %v4067 = vpop.permute.xlu0 %4066
    %4068 = vrot.lane.b32.xlu0 %v3779, 64
    %v4069 = vpop.permute.xlu0 %4068
    %4070 = vrot.lane.b32.xlu0 %v3785, 64
    %v4071 = vpop.permute.xlu0 %4070
    %4072 = vrot.lane.b32.xlu0 %v3791, 64
    %v4073 = vpop.permute.xlu0 %4072
    %4074 = vrot.lane.b32.xlu0 %v3797, 64
    %v4075 = vpop.permute.xlu0 %4074
    %4076 = vrot.lane.b32.xlu0 %v3803, 64
    %v4077 = vpop.permute.xlu0 %4076
    %4078 = vrot.lane.b32.xlu0 %v3809, 64
    %v4079 = vpop.permute.xlu0 %4078
    %4080 = vrot.lane.b32.xlu0 %v3815, 64
    %v4081 = vpop.permute.xlu0 %4080
    %v4090 = vsel %vm3215, %v3545, 0
    %v4092 = vsel %vm3215, %v3551, 0
    %v4094 = vsel %vm3215, %v3557, 0
    %v4096 = vsel %vm3215, %v3563, 0
    %v4098 = vsel %vm3215, %v3569, 0
    %v4100 = vsel %vm3215, %v3575, 0
    %v4102 = vsel %vm3215, %v3581, 0
    %v4104 = vsel %vm3215, %v3587, 0
    %v4106 = vsel %vm3215, %v3658, 0
    %v4108 = vsel %vm3215, %v3664, 0
    %v4110 = vsel %vm3215, %v3670, 0
    %v4112 = vsel %vm3215, %v3676, 0
    %v4114 = vsel %vm3215, %v3682, 0
    %v4116 = vsel %vm3215, %v3688, 0
    %v4118 = vsel %vm3215, %v3694, 0
    %v4120 = vsel %vm3215, %v3700, 0
    %4122 = vmatprep.subr.mxu0 0.0
    %4123 = vmatpush1.xpose.msra.mxu0 %v4106
    %4124 = vmatprep.subr.mxu0 0.0
    %4125 = vmatpush1.xpose.msra.mxu0 %v4108
    %4126 = vmatprep.subr.mxu0 0.0
    %4127 = vmatpush1.xpose.msra.mxu0 %v4110
    %4128 = vmatprep.subr.mxu0 0.0
    %4129 = vmatpush1.xpose.msra.mxu0 %v4112
    %4130 = vmatprep.subr.mxu0 0.0
    %4131 = vmatpush1.xpose.msra.mxu0 %v4114
    %4132 = vmatprep.subr.mxu0 0.0
    %4133 = vmatpush1.xpose.msra.mxu0 %v4116
    %4134 = vmatprep.subr.mxu0 0.0
    %4135 = vmatpush1.xpose.msra.mxu0 %v4118
    %4136 = vmatprep.subr.mxu0 0.0
    %4137 = vmatpush1.xpose.msra.mxu0 %v4120
    %4138 = vmatprep.subr.mxu0 0.0
    %4139 = vmatpush1.xpose.msra.mxu0 0.0
    %4140 = vmatprep.subr.mxu0 0.0
    %4141 = vmatpush1.xpose.msra.mxu0 0.0
    %4142 = vmatprep.subr.mxu0 0.0
    %4143 = vmatpush1.xpose.msra.mxu0 0.0
    %4144 = vmatprep.subr.mxu0 0.0
    %4145 = vmatpush1.xpose.msra.mxu0 0.0
    %4146 = vmatprep.subr.mxu0 0.0
    %4147 = vmatpush1.xpose.msra.mxu0 0.0
    %4148 = vmatprep.subr.mxu0 0.0
    %4149 = vmatpush1.xpose.msra.mxu0 0.0
    %4150 = vmatprep.subr.mxu0 0.0
    %4151 = vmatpush1.xpose.msra.mxu0 0.0
    %4152 = vmatprep.subr.mxu0 0.0
    %4153 = vmatpush1.xpose.msra.mxu0 0.0
    %4154 = vmatprep.subr.mxu0 0.0
    %4155 = vmatpush1.xpose.msra.mxu0 0.0
    %4156 = vmatprep.subr.mxu0 0.0
    %4157 = vmatpush1.xpose.msra.mxu0 0.0
    %4158 = vmatprep.subr.mxu0 0.0
    %4159 = vmatpush1.xpose.msra.mxu0 0.0
    %4160 = vmatprep.subr.mxu0 0.0
    %4161 = vmatpush1.xpose.msra.mxu0 0.0
    %4162 = vmatprep.subr.mxu0 0.0
    %4163 = vmatpush1.xpose.msra.mxu0 0.0
    %4164 = vmatprep.subr.mxu0 0.0
    %4165 = vmatpush1.xpose.msra.mxu0 0.0
    %4166 = vmatprep.subr.mxu0 0.0
    %4167 = vmatpush1.xpose.msra.mxu0 0.0
    %4168 = vmatprep.subr.mxu0 0.0
    %4169 = vmatpush1.xpose.msra.mxu0 0.0
    %4170 = vmatprep.subr.mxu0 0.0
    %4171 = vmatpush1.xpose.msra.mxu0 0.0
    %4172 = vmatprep.subr.mxu0 0.0
    %4173 = vmatpush1.xpose.msra.mxu0 0.0
    %4174 = vmatprep.subr.mxu0 0.0
    %4175 = vmatpush1.xpose.msra.mxu0 0.0
    %4176 = vmatprep.subr.mxu0 0.0
    %4177 = vmatpush1.xpose.msra.mxu0 0.0
    %4178 = vmatprep.subr.mxu0 0.0
    %4179 = vmatpush1.xpose.msra.mxu0 0.0
    %4180 = vmatprep.subr.mxu0 0.0
    %4181 = vmatpush1.xpose.msra.mxu0 0.0
    %4182 = vmatprep.subr.mxu0 0.0
    %4183 = vmatpush1.xpose.msra.mxu0 0.0
    %4184 = vmatprep.subr.mxu0 0.0
    %4185 = vmatpush1.xpose.msra.mxu0 0.0
    %4186 = vmatprep.mubr.f32.mxu0 0.0
    %4187 = vmatmul.mubr.f32.gmra.mrb[0].mxu0 %v4090
    %v4188 = vpop.f32.mrb[0].mxu0
    %v4189 = vadd.f32 0.0, %v4188
    %v4190 = vpop.f32.mrb[0].mxu0
    %4191 = vmatprep.mubr.f32.mxu0 0.0
    %4192 = vmatmul.mubr.f32.gmra.mrb[0].mxu0 %v4092
    %v4193 = vpop.f32.mrb[0].mxu0
    %v4194 = vadd.f32 0.0, %v4193
    %v4195 = vpop.f32.mrb[0].mxu0
    %4196 = vmatprep.mubr.f32.mxu0 0.0
    %4197 = vmatmul.mubr.f32.gmra.mrb[0].mxu0 %v4094
    %v4198 = vpop.f32.mrb[0].mxu0
    %v4199 = vadd.f32 0.0, %v4198
    %v4200 = vpop.f32.mrb[0].mxu0
    %4201 = vmatprep.mubr.f32.mxu0 0.0
    %4202 = vmatmul.mubr.f32.gmra.mrb[0].mxu0 %v4096
    %v4203 = vpop.f32.mrb[0].mxu0
    %v4204 = vadd.f32 0.0, %v4203
    %v4205 = vpop.f32.mrb[0].mxu0
    %4206 = vmatprep.mubr.f32.mxu0 0.0
    %4207 = vmatmul.mubr.f32.gmra.mrb[0].mxu0 %v4098
    %v4208 = vpop.f32.mrb[0].mxu0
    %v4209 = vadd.f32 0.0, %v4208
    %v4210 = vpop.f32.mrb[0].mxu0
    %4211 = vmatprep.mubr.f32.mxu0 0.0
    %4212 = vmatmul.mubr.f32.gmra.mrb[0].mxu0 %v4100
    %v4213 = vpop.f32.mrb[0].mxu0
    %v4214 = vadd.f32 0.0, %v4213
    %v4215 = vpop.f32.mrb[0].mxu0
    %4216 = vmatprep.mubr.f32.mxu0 0.0
    %4217 = vmatmul.mubr.f32.gmra.mrb[0].mxu0 %v4102
    %v4218 = vpop.f32.mrb[0].mxu0
    %v4219 = vadd.f32 0.0, %v4218
    %v4220 = vpop.f32.mrb[0].mxu0
    %4221 = vmatprep.mubr.f32.mxu0 0.0
    %4222 = vmatmul.mubr.f32.gmra.mrb[0].mxu0 %v4104
    %v4223 = vpop.f32.mrb[0].mxu0
    %v4224 = vadd.f32 0.0, %v4223
    %v4225 = vpop.f32.mrb[0].mxu0
    %4226 = vdwg.mxu0
    %v4227 = vsel %vm3215, %v3939, 0
    %v4229 = vsel %vm3215, %v3941, 0
    %v4231 = vsel %vm3215, %v3943, 0
    %v4233 = vsel %vm3215, %v3945, 0
    %v4235 = vsel %vm3215, %v3947, 0
    %v4237 = vsel %vm3215, %v3949, 0
    %v4239 = vsel %vm3215, %v3951, 0
    %v4241 = vsel %vm3215, %v3953, 0
    %v4243 = vsel %vm3215, %v3987, 0
    %v4245 = vsel %vm3215, %v3989, 0
    %v4247 = vsel %vm3215, %v3991, 0
    %v4249 = vsel %vm3215, %v3993, 0
    %v4251 = vsel %vm3215, %v3995, 0
    %v4253 = vsel %vm3215, %v3997, 0
    %v4255 = vsel %vm3215, %v3999, 0
    %v4257 = vsel %vm3215, %v4001, 0
    %4259 = vmatprep.subr.mxu0 0.0
    %4260 = vmatpush1.xpose.msra.mxu0 %v4243
    %4261 = vmatprep.subr.mxu0 0.0
    %4262 = vmatpush1.xpose.msra.mxu0 %v4245
    %4263 = vmatprep.subr.mxu0 0.0
    %4264 = vmatpush1.xpose.msra.mxu0 %v4247
    %4265 = vmatprep.subr.mxu0 0.0
    %4266 = vmatpush1.xpose.msra.mxu0 %v4249
    %4267 = vmatprep.subr.mxu0 0.0
    %4268 = vmatpush1.xpose.msra.mxu0 %v4251
    %4269 = vmatprep.subr.mxu0 0.0
    %4270 = vmatpush1.xpose.msra.mxu0 %v4253
    %4271 = vmatprep.subr.mxu0 0.0
    %4272 = vmatpush1.xpose.msra.mxu0 %v4255
    %4273 = vmatprep.subr.mxu0 0.0
    %4274 = vmatpush1.xpose.msra.mxu0 %v4257
    %4275 = vmatprep.subr.mxu0 0.0
    %4276 = vmatpush1.xpose.msra.mxu0 0.0
    %4277 = vmatprep.subr.mxu0 0.0
    %4278 = vmatpush1.xpose.msra.mxu0 0.0
    %4279 = vmatprep.subr.mxu0 0.0
    %4280 = vmatpush1.xpose.msra.mxu0 0.0
    %4281 = vmatprep.subr.mxu0 0.0
    %4282 = vmatpush1.xpose.msra.mxu0 0.0
    %4283 = vmatprep.subr.mxu0 0.0
    %4284 = vmatpush1.xpose.msra.mxu0 0.0
    %4285 = vmatprep.subr.mxu0 0.0
    %4286 = vmatpush1.xpose.msra.mxu0 0.0
    %4287 = vmatprep.subr.mxu0 0.0
    %4288 = vmatpush1.xpose.msra.mxu0 0.0
    %4289 = vmatprep.subr.mxu0 0.0
    %4290 = vmatpush1.xpose.msra.mxu0 0.0
    %4291 = vmatprep.subr.mxu0 0.0
    %4292 = vmatpush1.xpose.msra.mxu0 0.0
    %4293 = vmatprep.subr.mxu0 0.0
    %4294 = vmatpush1.xpose.msra.mxu0 0.0
    %4295 = vmatprep.subr.mxu0 0.0
    %4296 = vmatpush1.xpose.msra.mxu0 0.0
    %4297 = vmatprep.subr.mxu0 0.0
    %4298 = vmatpush1.xpose.msra.mxu0 0.0
    %4299 = vmatprep.subr.mxu0 0.0
    %4300 = vmatpush1.xpose.msra.mxu0 0.0
    %4301 = vmatprep.subr.mxu0 0.0
    %4302 = vmatpush1.xpose.msra.mxu0 0.0
    %4303 = vmatprep.subr.mxu0 0.0
    %4304 = vmatpush1.xpose.msra.mxu0 0.0
    %4305 = vmatprep.subr.mxu0 0.0
    %4306 = vmatpush1.xpose.msra.mxu0 0.0
    %4307 = vmatprep.subr.mxu0 0.0
    %4308 = vmatpush1.xpose.msra.mxu0 0.0
    %4309 = vmatprep.subr.mxu0 0.0
    %4310 = vmatpush1.xpose.msra.mxu0 0.0
    %4311 = vmatprep.subr.mxu0 0.0
    %4312 = vmatpush1.xpose.msra.mxu0 0.0
    %4313 = vmatprep.subr.mxu0 0.0
    %4314 = vmatpush1.xpose.msra.mxu0 0.0
    %4315 = vmatprep.subr.mxu0 0.0
    %4316 = vmatpush1.xpose.msra.mxu0 0.0
    %4317 = vmatprep.subr.mxu0 0.0
    %4318 = vmatpush1.xpose.msra.mxu0 0.0
    %4319 = vmatprep.subr.mxu0 0.0
    %4320 = vmatpush1.xpose.msra.mxu0 0.0
    %4321 = vmatprep.subr.mxu0 0.0
    %4322 = vmatpush1.xpose.msra.mxu0 0.0
    %4323 = vmatprep.mubr.f32.mxu0 0.0
    %4324 = vmatmul.mubr.f32.gmra.mrb[0].mxu0 %v4227
    %v4325 = vpop.f32.mrb[0].mxu0
    %v4326 = vadd.f32 0.0, %v4325
    %v4327 = vpop.f32.mrb[0].mxu0
    %4328 = vmatprep.mubr.f32.mxu0 0.0
    %4329 = vmatmul.mubr.f32.gmra.mrb[0].mxu0 %v4229
    %v4330 = vpop.f32.mrb[0].mxu0
    %v4331 = vadd.f32 0.0, %v4330
    %v4332 = vpop.f32.mrb[0].mxu0
    %4333 = vmatprep.mubr.f32.mxu0 0.0
    %4334 = vmatmul.mubr.f32.gmra.mrb[0].mxu0 %v4231
    %v4335 = vpop.f32.mrb[0].mxu0
    %v4336 = vadd.f32 0.0, %v4335
    %v4337 = vpop.f32.mrb[0].mxu0
    %4338 = vmatprep.mubr.f32.mxu0 0.0
    %4339 = vmatmul.mubr.f32.gmra.mrb[0].mxu0 %v4233
    %v4340 = vpop.f32.mrb[0].mxu0
    %v4341 = vadd.f32 0.0, %v4340
    %v4342 = vpop.f32.mrb[0].mxu0
    %4343 = vmatprep.mubr.f32.mxu0 0.0
    %4344 = vmatmul.mubr.f32.gmra.mrb[0].mxu0 %v4235
    %v4345 = vpop.f32.mrb[0].mxu0
    %v4346 = vadd.f32 0.0, %v4345
    %v4347 = vpop.f32.mrb[0].mxu0
    %4348 = vmatprep.mubr.f32.mxu0 0.0
    %4349 = vmatmul.mubr.f32.gmra.mrb[0].mxu0 %v4237
    %v4350 = vpop.f32.mrb[0].mxu0
    %v4351 = vadd.f32 0.0, %v4350
    %v4352 = vpop.f32.mrb[0].mxu0
    %4353 = vmatprep.mubr.f32.mxu0 0.0
    %4354 = vmatmul.mubr.f32.gmra.mrb[0].mxu0 %v4239
    %v4355 = vpop.f32.mrb[0].mxu0
    %v4356 = vadd.f32 0.0, %v4355
    %v4357 = vpop.f32.mrb[0].mxu0
    %4358 = vmatprep.mubr.f32.mxu0 0.0
    %4359 = vmatmul.mubr.f32.gmra.mrb[0].mxu0 %v4241
    %v4360 = vpop.f32.mrb[0].mxu0
    %v4361 = vadd.f32 0.0, %v4360
    %v4362 = vpop.f32.mrb[0].mxu0
    %4363 = vdwg.mxu0
    %v4364 = vsel %vm3215, %v3547, 0
    %v4366 = vsel %vm3215, %v3553, 0
    %v4368 = vsel %vm3215, %v3559, 0
    %v4370 = vsel %vm3215, %v3565, 0
    %v4372 = vsel %vm3215, %v3571, 0
    %v4374 = vsel %vm3215, %v3577, 0
    %v4376 = vsel %vm3215, %v3583, 0
    %v4378 = vsel %vm3215, %v3589, 0
    %v4380 = vsel %vm3215, %v3660, 0
    %v4382 = vsel %vm3215, %v3666, 0
    %v4384 = vsel %vm3215, %v3672, 0
    %v4386 = vsel %vm3215, %v3678, 0
    %v4388 = vsel %vm3215, %v3684, 0
    %v4390 = vsel %vm3215, %v3690, 0
    %v4392 = vsel %vm3215, %v3696, 0
    %v4394 = vsel %vm3215, %v3702, 0
    %4396 = vmatprep.subr.mxu0 0.0
    %4397 = vmatpush1.xpose.msra.mxu0 %v4380
    %4398 = vmatprep.subr.mxu0 0.0
    %4399 = vmatpush1.xpose.msra.mxu0 %v4382
    %4400 = vmatprep.subr.mxu0 0.0
    %4401 = vmatpush1.xpose.msra.mxu0 %v4384
    %4402 = vmatprep.subr.mxu0 0.0
    %4403 = vmatpush1.xpose.msra.mxu0 %v4386
    %4404 = vmatprep.subr.mxu0 0.0
    %4405 = vmatpush1.xpose.msra.mxu0 %v4388
    %4406 = vmatprep.subr.mxu0 0.0
    %4407 = vmatpush1.xpose.msra.mxu0 %v4390
    %4408 = vmatprep.subr.mxu0 0.0
    %4409 = vmatpush1.xpose.msra.mxu0 %v4392
    %4410 = vmatprep.subr.mxu0 0.0
    %4411 = vmatpush1.xpose.msra.mxu0 %v4394
    %4412 = vmatprep.subr.mxu0 0.0
    %4413 = vmatpush1.xpose.msra.mxu0 0.0
    %4414 = vmatprep.subr.mxu0 0.0
    %4415 = vmatpush1.xpose.msra.mxu0 0.0
    %4416 = vmatprep.subr.mxu0 0.0
    %4417 = vmatpush1.xpose.msra.mxu0 0.0
    %4418 = vmatprep.subr.mxu0 0.0
    %4419 = vmatpush1.xpose.msra.mxu0 0.0
    %4420 = vmatprep.subr.mxu0 0.0
    %4421 = vmatpush1.xpose.msra.mxu0 0.0
    %4422 = vmatprep.subr.mxu0 0.0
    %4423 = vmatpush1.xpose.msra.mxu0 0.0
    %4424 = vmatprep.subr.mxu0 0.0
    %4425 = vmatpush1.xpose.msra.mxu0 0.0
    %4426 = vmatprep.subr.mxu0 0.0
    %4427 = vmatpush1.xpose.msra.mxu0 0.0
    %4428 = vmatprep.subr.mxu0 0.0
    %4429 = vmatpush1.xpose.msra.mxu0 0.0
    %4430 = vmatprep.subr.mxu0 0.0
    %4431 = vmatpush1.xpose.msra.mxu0 0.0
    %4432 = vmatprep.subr.mxu0 0.0
    %4433 = vmatpush1.xpose.msra.mxu0 0.0
    %4434 = vmatprep.subr.mxu0 0.0
    %4435 = vmatpush1.xpose.msra.mxu0 0.0
    %4436 = vmatprep.subr.mxu0 0.0
    %4437 = vmatpush1.xpose.msra.mxu0 0.0
    %4438 = vmatprep.subr.mxu0 0.0
    %4439 = vmatpush1.xpose.msra.mxu0 0.0
    %4440 = vmatprep.subr.mxu0 0.0
    %4441 = vmatpush1.xpose.msra.mxu0 0.0
    %4442 = vmatprep.subr.mxu0 0.0
    %4443 = vmatpush1.xpose.msra.mxu0 0.0
    %4444 = vmatprep.subr.mxu0 0.0
    %4445 = vmatpush1.xpose.msra.mxu0 0.0
    %4446 = vmatprep.subr.mxu0 0.0
    %4447 = vmatpush1.xpose.msra.mxu0 0.0
    %4448 = vmatprep.subr.mxu0 0.0
    %4449 = vmatpush1.xpose.msra.mxu0 0.0
    %4450 = vmatprep.subr.mxu0 0.0
    %4451 = vmatpush1.xpose.msra.mxu0 0.0
    %4452 = vmatprep.subr.mxu0 0.0
    %4453 = vmatpush1.xpose.msra.mxu0 0.0
    %4454 = vmatprep.subr.mxu0 0.0
    %4455 = vmatpush1.xpose.msra.mxu0 0.0
    %4456 = vmatprep.subr.mxu0 0.0
    %4457 = vmatpush1.xpose.msra.mxu0 0.0
    %4458 = vmatprep.subr.mxu0 0.0
    %4459 = vmatpush1.xpose.msra.mxu0 0.0
    %4460 = vmatprep.mubr.f32.mxu0 0.0
    %4461 = vmatmul.mubr.f32.gmra.mrb[0].mxu0 %v4364
    %v4462 = vpop.f32.mrb[0].mxu0
    %v4463 = vadd.f32 0.0, %v4462
    %v4464 = vpop.f32.mrb[0].mxu0
    %4465 = vmatprep.mubr.f32.mxu0 0.0
    %4466 = vmatmul.mubr.f32.gmra.mrb[0].mxu0 %v4366
    %v4467 = vpop.f32.mrb[0].mxu0
    %v4468 = vadd.f32 0.0, %v4467
    %v4469 = vpop.f32.mrb[0].mxu0
    %4470 = vmatprep.mubr.f32.mxu0 0.0
    %4471 = vmatmul.mubr.f32.gmra.mrb[0].mxu0 %v4368
    %v4472 = vpop.f32.mrb[0].mxu0
    %v4473 = vadd.f32 0.0, %v4472
    %v4474 = vpop.f32.mrb[0].mxu0
    %4475 = vmatprep.mubr.f32.mxu0 0.0
    %4476 = vmatmul.mubr.f32.gmra.mrb[0].mxu0 %v4370
    %v4477 = vpop.f32.mrb[0].mxu0
    %v4478 = vadd.f32 0.0, %v4477
    %v4479 = vpop.f32.mrb[0].mxu0
    %4480 = vmatprep.mubr.f32.mxu0 0.0
    %4481 = vmatmul.mubr.f32.gmra.mrb[0].mxu0 %v4372
    %v4482 = vpop.f32.mrb[0].mxu0
    %v4483 = vadd.f32 0.0, %v4482
    %v4484 = vpop.f32.mrb[0].mxu0
    %4485 = vmatprep.mubr.f32.mxu0 0.0
    %4486 = vmatmul.mubr.f32.gmra.mrb[0].mxu0 %v4374
    %v4487 = vpop.f32.mrb[0].mxu0
    %v4488 = vadd.f32 0.0, %v4487
    %v4489 = vpop.f32.mrb[0].mxu0
    %4490 = vmatprep.mubr.f32.mxu0 0.0
    %4491 = vmatmul.mubr.f32.gmra.mrb[0].mxu0 %v4376
    %v4492 = vpop.f32.mrb[0].mxu0
    %v4493 = vadd.f32 0.0, %v4492
    %v4494 = vpop.f32.mrb[0].mxu0
    %4495 = vmatprep.mubr.f32.mxu0 0.0
    %4496 = vmatmul.mubr.f32.gmra.mrb[0].mxu0 %v4378
    %v4497 = vpop.f32.mrb[0].mxu0
    %v4498 = vadd.f32 0.0, %v4497
    %v4499 = vpop.f32.mrb[0].mxu0
    %4500 = vdwg.mxu0
    %v4501 = vsel %vm3215, %v3963, 0
    %v4503 = vsel %vm3215, %v3965, 0
    %v4505 = vsel %vm3215, %v3967, 0
    %v4507 = vsel %vm3215, %v3969, 0
    %v4509 = vsel %vm3215, %v3971, 0
    %v4511 = vsel %vm3215, %v3973, 0
    %v4513 = vsel %vm3215, %v3975, 0
    %v4515 = vsel %vm3215, %v3977, 0
    %v4517 = vsel %vm3215, %v4011, 0
    %v4519 = vsel %vm3215, %v4013, 0
    %v4521 = vsel %vm3215, %v4015, 0
    %v4523 = vsel %vm3215, %v4017, 0
    %v4525 = vsel %vm3215, %v4019, 0
    %v4527 = vsel %vm3215, %v4021, 0
    %v4529 = vsel %vm3215, %v4023, 0
    %v4531 = vsel %vm3215, %v4025, 0
    %4533 = vmatprep.subr.mxu0 0.0
    %4534 = vmatpush1.xpose.msra.mxu0 %v4517
    %4535 = vmatprep.subr.mxu0 0.0
    %4536 = vmatpush1.xpose.msra.mxu0 %v4519
    %4537 = vmatprep.subr.mxu0 0.0
    %4538 = vmatpush1.xpose.msra.mxu0 %v4521
    %4539 = vmatprep.subr.mxu0 0.0
    %4540 = vmatpush1.xpose.msra.mxu0 %v4523
    %4541 = vmatprep.subr.mxu0 0.0
    %4542 = vmatpush1.xpose.msra.mxu0 %v4525
    %4543 = vmatprep.subr.mxu0 0.0
    %4544 = vmatpush1.xpose.msra.mxu0 %v4527
    %4545 = vmatprep.subr.mxu0 0.0
    %4546 = vmatpush1.xpose.msra.mxu0 %v4529
    %4547 = vmatprep.subr.mxu0 0.0
    %4548 = vmatpush1.xpose.msra.mxu0 %v4531
    %4549 = vmatprep.subr.mxu0 0.0
    %4550 = vmatpush1.xpose.msra.mxu0 0.0
    %4551 = vmatprep.subr.mxu0 0.0
    %4552 = vmatpush1.xpose.msra.mxu0 0.0
    %4553 = vmatprep.subr.mxu0 0.0
    %4554 = vmatpush1.xpose.msra.mxu0 0.0
    %4555 = vmatprep.subr.mxu0 0.0
    %4556 = vmatpush1.xpose.msra.mxu0 0.0
    %4557 = vmatprep.subr.mxu0 0.0
    %4558 = vmatpush1.xpose.msra.mxu0 0.0
    %4559 = vmatprep.subr.mxu0 0.0
    %4560 = vmatpush1.xpose.msra.mxu0 0.0
    %4561 = vmatprep.subr.mxu0 0.0
    %4562 = vmatpush1.xpose.msra.mxu0 0.0
    %4563 = vmatprep.subr.mxu0 0.0
    %4564 = vmatpush1.xpose.msra.mxu0 0.0
    %4565 = vmatprep.subr.mxu0 0.0
    %4566 = vmatpush1.xpose.msra.mxu0 0.0
    %4567 = vmatprep.subr.mxu0 0.0
    %4568 = vmatpush1.xpose.msra.mxu0 0.0
    %4569 = vmatprep.subr.mxu0 0.0
    %4570 = vmatpush1.xpose.msra.mxu0 0.0
    %4571 = vmatprep.subr.mxu0 0.0
    %4572 = vmatpush1.xpose.msra.mxu0 0.0
    %4573 = vmatprep.subr.mxu0 0.0
    %4574 = vmatpush1.xpose.msra.mxu0 0.0
    %4575 = vmatprep.subr.mxu0 0.0
    %4576 = vmatpush1.xpose.msra.mxu0 0.0
    %4577 = vmatprep.subr.mxu0 0.0
    %4578 = vmatpush1.xpose.msra.mxu0 0.0
    %4579 = vmatprep.subr.mxu0 0.0
    %4580 = vmatpush1.xpose.msra.mxu0 0.0
    %4581 = vmatprep.subr.mxu0 0.0
    %4582 = vmatpush1.xpose.msra.mxu0 0.0
    %4583 = vmatprep.subr.mxu0 0.0
    %4584 = vmatpush1.xpose.msra.mxu0 0.0
    %4585 = vmatprep.subr.mxu0 0.0
    %4586 = vmatpush1.xpose.msra.mxu0 0.0
    %4587 = vmatprep.subr.mxu0 0.0
    %4588 = vmatpush1.xpose.msra.mxu0 0.0
    %4589 = vmatprep.subr.mxu0 0.0
    %4590 = vmatpush1.xpose.msra.mxu0 0.0
    %4591 = vmatprep.subr.mxu0 0.0
    %4592 = vmatpush1.xpose.msra.mxu0 0.0
    %4593 = vmatprep.subr.mxu0 0.0
    %4594 = vmatpush1.xpose.msra.mxu0 0.0
    %4595 = vmatprep.subr.mxu0 0.0
    %4596 = vmatpush1.xpose.msra.mxu0 0.0
    %4597 = vmatprep.mubr.f32.mxu0 0.0
    %4598 = vmatmul.mubr.f32.gmra.mrb[0].mxu0 %v4501
    %v4599 = vpop.f32.mrb[0].mxu0
    %v4600 = vadd.f32 0.0, %v4599
    %v4601 = vpop.f32.mrb[0].mxu0
    %4602 = vmatprep.mubr.f32.mxu0 0.0
    %4603 = vmatmul.mubr.f32.gmra.mrb[0].mxu0 %v4503
    %v4604 = vpop.f32.mrb[0].mxu0
    %v4605 = vadd.f32 0.0, %v4604
    %v4606 = vpop.f32.mrb[0].mxu0
    %4607 = vmatprep.mubr.f32.mxu0 0.0
    %4608 = vmatmul.mubr.f32.gmra.mrb[0].mxu0 %v4505
    %v4609 = vpop.f32.mrb[0].mxu0
    %v4610 = vadd.f32 0.0, %v4609
    %v4611 = vpop.f32.mrb[0].mxu0
    %4612 = vmatprep.mubr.f32.mxu0 0.0
    %4613 = vmatmul.mubr.f32.gmra.mrb[0].mxu0 %v4507
    %v4614 = vpop.f32.mrb[0].mxu0
    %v4615 = vadd.f32 0.0, %v4614
    %v4616 = vpop.f32.mrb[0].mxu0
    %4617 = vmatprep.mubr.f32.mxu0 0.0
    %4618 = vmatmul.mubr.f32.gmra.mrb[0].mxu0 %v4509
    %v4619 = vpop.f32.mrb[0].mxu0
    %v4620 = vadd.f32 0.0, %v4619
    %v4621 = vpop.f32.mrb[0].mxu0
    %4622 = vmatprep.mubr.f32.mxu0 0.0
    %4623 = vmatmul.mubr.f32.gmra.mrb[0].mxu0 %v4511
    %v4624 = vpop.f32.mrb[0].mxu0
    %v4625 = vadd.f32 0.0, %v4624
    %v4626 = vpop.f32.mrb[0].mxu0
    %4627 = vmatprep.mubr.f32.mxu0 0.0
    %4628 = vmatmul.mubr.f32.gmra.mrb[0].mxu0 %v4513
    %v4629 = vpop.f32.mrb[0].mxu0
    %v4630 = vadd.f32 0.0, %v4629
    %v4631 = vpop.f32.mrb[0].mxu0
    %4632 = vmatprep.mubr.f32.mxu0 0.0
    %4633 = vmatmul.mubr.f32.gmra.mrb[0].mxu0 %v4515
    %v4634 = vpop.f32.mrb[0].mxu0
    %v4635 = vadd.f32 0.0, %v4634
    %v4636 = vpop.f32.mrb[0].mxu0
    %4637 = vdwg.mxu0
    %v4638 = vsel %vm3215, %v4189, -inf
    %4639 = vmax.xlane.f32.xlu0 %v4638
    %v4640 = vpop.xlane.xlu0 %4639
    %v4641 = vsel %vm3215, %v4194, -inf
    %4642 = vmax.xlane.f32.xlu0 %v4641
    %v4643 = vpop.xlane.xlu0 %4642
    %v4644 = vsel %vm3215, %v4199, -inf
    %4645 = vmax.xlane.f32.xlu0 %v4644
    %v4646 = vpop.xlane.xlu0 %4645
    %v4647 = vsel %vm3215, %v4204, -inf
    %4648 = vmax.xlane.f32.xlu0 %v4647
    %v4649 = vpop.xlane.xlu0 %4648
    %v4650 = vsel %vm3215, %v4209, -inf
    %4651 = vmax.xlane.f32.xlu0 %v4650
    %v4652 = vpop.xlane.xlu0 %4651
    %v4653 = vsel %vm3215, %v4214, -inf
    %4654 = vmax.xlane.f32.xlu0 %v4653
    %v4655 = vpop.xlane.xlu0 %4654
    %v4656 = vsel %vm3215, %v4219, -inf
    %4657 = vmax.xlane.f32.xlu0 %v4656
    %v4658 = vpop.xlane.xlu0 %4657
    %v4659 = vsel %vm3215, %v4224, -inf
    %4660 = vmax.xlane.f32.xlu0 %v4659
    %v4661 = vpop.xlane.xlu0 %4660
    %v4662 = vsel %vm3215, %v4326, -inf
    %4663 = vmax.xlane.f32.xlu0 %v4662
    %v4664 = vpop.xlane.xlu0 %4663
    %v4665 = vsel %vm3215, %v4331, -inf
    %4666 = vmax.xlane.f32.xlu0 %v4665
    %v4667 = vpop.xlane.xlu0 %4666
    %v4668 = vsel %vm3215, %v4336, -inf
    %4669 = vmax.xlane.f32.xlu0 %v4668
    %v4670 = vpop.xlane.xlu0 %4669
    %v4671 = vsel %vm3215, %v4341, -inf
    %4672 = vmax.xlane.f32.xlu0 %v4671
    %v4673 = vpop.xlane.xlu0 %4672
    %v4674 = vsel %vm3215, %v4346, -inf
    %4675 = vmax.xlane.f32.xlu0 %v4674
    %v4676 = vpop.xlane.xlu0 %4675
    %v4677 = vsel %vm3215, %v4351, -inf
    %4678 = vmax.xlane.f32.xlu0 %v4677
    %v4679 = vpop.xlane.xlu0 %4678
    %v4680 = vsel %vm3215, %v4356, -inf
    %4681 = vmax.xlane.f32.xlu0 %v4680
    %v4682 = vpop.xlane.xlu0 %4681
    %v4683 = vsel %vm3215, %v4361, -inf
    %4684 = vmax.xlane.f32.xlu0 %v4683
    %v4685 = vpop.xlane.xlu0 %4684
    %v4686 = vsel %vm3215, %v4463, -inf
    %4687 = vmax.xlane.f32.xlu0 %v4686
    %v4688 = vpop.xlane.xlu0 %4687
    %v4689 = vsel %vm3215, %v4468, -inf
    %4690 = vmax.xlane.f32.xlu0 %v4689
    %v4691 = vpop.xlane.xlu0 %4690
    %v4692 = vsel %vm3215, %v4473, -inf
    %4693 = vmax.xlane.f32.xlu0 %v4692
    %v4694 = vpop.xlane.xlu0 %4693
    %v4695 = vsel %vm3215, %v4478, -inf
    %4696 = vmax.xlane.f32.xlu0 %v4695
    %v4697 = vpop.xlane.xlu0 %4696
    %v4698 = vsel %vm3215, %v4483, -inf
    %4699 = vmax.xlane.f32.xlu0 %v4698
    %v4700 = vpop.xlane.xlu0 %4699
    %v4701 = vsel %vm3215, %v4488, -inf
    %4702 = vmax.xlane.f32.xlu0 %v4701
    %v4703 = vpop.xlane.xlu0 %4702
    %v4704 = vsel %vm3215, %v4493, -inf
    %4705 = vmax.xlane.f32.xlu0 %v4704
    %v4706 = vpop.xlane.xlu0 %4705
    %v4707 = vsel %vm3215, %v4498, -inf
    %4708 = vmax.xlane.f32.xlu0 %v4707
    %v4709 = vpop.xlane.xlu0 %4708
    %v4710 = vsel %vm3215, %v4600, -inf
    %4711 = vmax.xlane.f32.xlu0 %v4710
    %v4712 = vpop.xlane.xlu0 %4711
    %v4713 = vsel %vm3215, %v4605, -inf
    %4714 = vmax.xlane.f32.xlu0 %v4713
    %v4715 = vpop.xlane.xlu0 %4714
    %v4716 = vsel %vm3215, %v4610, -inf
    %4717 = vmax.xlane.f32.xlu0 %v4716
    %v4718 = vpop.xlane.xlu0 %4717
    %v4719 = vsel %vm3215, %v4615, -inf
    %4720 = vmax.xlane.f32.xlu0 %v4719
    %v4721 = vpop.xlane.xlu0 %4720
    %v4722 = vsel %vm3215, %v4620, -inf
    %4723 = vmax.xlane.f32.xlu0 %v4722
    %v4724 = vpop.xlane.xlu0 %4723
    %v4725 = vsel %vm3215, %v4625, -inf
    %4726 = vmax.xlane.f32.xlu0 %v4725
    %v4727 = vpop.xlane.xlu0 %4726
    %v4728 = vsel %vm3215, %v4630, -inf
    %4729 = vmax.xlane.f32.xlu0 %v4728
    %v4730 = vpop.xlane.xlu0 %4729
    %v4731 = vsel %vm3215, %v4635, -inf
    %4732 = vmax.xlane.f32.xlu0 %v4731
    %v4733 = vpop.xlane.xlu0 %4732
    %v4734 = vsub.f32 %v4189, %v4640
    %v4735 = vsub.f32 %v4194, %v4643
    %v4736 = vsub.f32 %v4199, %v4646
    %v4737 = vsub.f32 %v4204, %v4649
    %v4738 = vsub.f32 %v4209, %v4652
    %v4739 = vsub.f32 %v4214, %v4655
    %v4740 = vsub.f32 %v4219, %v4658
    %v4741 = vsub.f32 %v4224, %v4661
    %v4742 = vsub.f32 %v4326, %v4664
    %v4743 = vsub.f32 %v4331, %v4667
    %v4744 = vsub.f32 %v4336, %v4670
    %v4745 = vsub.f32 %v4341, %v4673
    %v4746 = vsub.f32 %v4346, %v4676
    %v4747 = vsub.f32 %v4351, %v4679
    %v4748 = vsub.f32 %v4356, %v4682
    %v4749 = vsub.f32 %v4361, %v4685
    %v4750 = vsub.f32 %v4463, %v4688
    %v4751 = vsub.f32 %v4468, %v4691
    %v4752 = vsub.f32 %v4473, %v4694
    %v4753 = vsub.f32 %v4478, %v4697
    %v4754 = vsub.f32 %v4483, %v4700
    %v4755 = vsub.f32 %v4488, %v4703
    %v4756 = vsub.f32 %v4493, %v4706
    %v4757 = vsub.f32 %v4498, %v4709
    %v4758 = vsub.f32 %v4600, %v4712
    %v4759 = vsub.f32 %v4605, %v4715
    %v4760 = vsub.f32 %v4610, %v4718
    %v4761 = vsub.f32 %v4615, %v4721
    %v4762 = vsub.f32 %v4620, %v4724
    %v4763 = vsub.f32 %v4625, %v4727
    %v4764 = vsub.f32 %v4630, %v4730
    %v4765 = vsub.f32 %v4635, %v4733
    %v4766 = vmul.f32 %v4734, 1.442695
    %v4767 = vpow.pop %v4766
    %v4768 = vmul.f32 %v4735, 1.442695
    %v4769 = vpow.pop %v4768
    %v4770 = vmul.f32 %v4736, 1.442695
    %v4771 = vpow.pop %v4770
    %v4772 = vmul.f32 %v4737, 1.442695
    %v4773 = vpow.pop %v4772
    %v4774 = vmul.f32 %v4738, 1.442695
    %v4775 = vpow.pop %v4774
    %v4776 = vmul.f32 %v4739, 1.442695
    %v4777 = vpow.pop %v4776
    %v4778 = vmul.f32 %v4740, 1.442695
    %v4779 = vpow.pop %v4778
    %v4780 = vmul.f32 %v4741, 1.442695
    %v4781 = vpow.pop %v4780
    %v4782 = vmul.f32 %v4742, 1.442695
    %v4783 = vpow.pop %v4782
    %v4784 = vmul.f32 %v4743, 1.442695
    %v4785 = vpow.pop %v4784
    %v4786 = vmul.f32 %v4744, 1.442695
    %v4787 = vpow.pop %v4786
    %v4788 = vmul.f32 %v4745, 1.442695
    %v4789 = vpow.pop %v4788
    %v4790 = vmul.f32 %v4746, 1.442695
    %v4791 = vpow.pop %v4790
    %v4792 = vmul.f32 %v4747, 1.442695
    %v4793 = vpow.pop %v4792
    %v4794 = vmul.f32 %v4748, 1.442695
    %v4795 = vpow.pop %v4794
    %v4796 = vmul.f32 %v4749, 1.442695
    %v4797 = vpow.pop %v4796
    %v4798 = vmul.f32 %v4750, 1.442695
    %v4799 = vpow.pop %v4798
    %v4800 = vmul.f32 %v4751, 1.442695
    %v4801 = vpow.pop %v4800
    %v4802 = vmul.f32 %v4752, 1.442695
    %v4803 = vpow.pop %v4802
    %v4804 = vmul.f32 %v4753, 1.442695
    %v4805 = vpow.pop %v4804
    %v4806 = vmul.f32 %v4754, 1.442695
    %v4807 = vpow.pop %v4806
    %v4808 = vmul.f32 %v4755, 1.442695
    %v4809 = vpow.pop %v4808
    %v4810 = vmul.f32 %v4756, 1.442695
    %v4811 = vpow.pop %v4810
    %v4812 = vmul.f32 %v4757, 1.442695
    %v4813 = vpow.pop %v4812
    %v4814 = vmul.f32 %v4758, 1.442695
    %v4815 = vpow.pop %v4814
    %v4816 = vmul.f32 %v4759, 1.442695
    %v4817 = vpow.pop %v4816
    %v4818 = vmul.f32 %v4760, 1.442695
    %v4819 = vpow.pop %v4818
    %v4820 = vmul.f32 %v4761, 1.442695
    %v4821 = vpow.pop %v4820
    %v4822 = vmul.f32 %v4762, 1.442695
    %v4823 = vpow.pop %v4822
    %v4824 = vmul.f32 %v4763, 1.442695
    %v4825 = vpow.pop %v4824
    %v4826 = vmul.f32 %v4764, 1.442695
    %v4827 = vpow.pop %v4826
    %v4828 = vmul.f32 %v4765, 1.442695
    %v4829 = vpow.pop %v4828
    %v4830 = vsel %vm3215, %v4767, 0.0
    %4831 = vadd.xlane.f32.xlu0 %v4830
    %v4832 = vpop.xlane.xlu0 %4831
    %v4833 = vsel %vm3215, %v4769, 0.0
    %4834 = vadd.xlane.f32.xlu0 %v4833
    %v4835 = vpop.xlane.xlu0 %4834
    %v4836 = vsel %vm3215, %v4771, 0.0
    %4837 = vadd.xlane.f32.xlu0 %v4836
    %v4838 = vpop.xlane.xlu0 %4837
    %v4839 = vsel %vm3215, %v4773, 0.0
    %4840 = vadd.xlane.f32.xlu0 %v4839
    %v4841 = vpop.xlane.xlu0 %4840
    %v4842 = vsel %vm3215, %v4775, 0.0
    %4843 = vadd.xlane.f32.xlu0 %v4842
    %v4844 = vpop.xlane.xlu0 %4843
    %v4845 = vsel %vm3215, %v4777, 0.0
    %4846 = vadd.xlane.f32.xlu0 %v4845
    %v4847 = vpop.xlane.xlu0 %4846
    %v4848 = vsel %vm3215, %v4779, 0.0
    %4849 = vadd.xlane.f32.xlu0 %v4848
    %v4850 = vpop.xlane.xlu0 %4849
    %v4851 = vsel %vm3215, %v4781, 0.0
    %4852 = vadd.xlane.f32.xlu0 %v4851
    %v4853 = vpop.xlane.xlu0 %4852
    %v4854 = vsel %vm3215, %v4783, 0.0
    %4855 = vadd.xlane.f32.xlu0 %v4854
    %v4856 = vpop.xlane.xlu0 %4855
    %v4857 = vsel %vm3215, %v4785, 0.0
    %4858 = vadd.xlane.f32.xlu0 %v4857
    %v4859 = vpop.xlane.xlu0 %4858
    %v4860 = vsel %vm3215, %v4787, 0.0
    %4861 = vadd.xlane.f32.xlu0 %v4860
    %v4862 = vpop.xlane.xlu0 %4861
    %v4863 = vsel %vm3215, %v4789, 0.0
    %4864 = vadd.xlane.f32.xlu0 %v4863
    %v4865 = vpop.xlane.xlu0 %4864
    %v4866 = vsel %vm3215, %v4791, 0.0
    %4867 = vadd.xlane.f32.xlu0 %v4866
    %v4868 = vpop.xlane.xlu0 %4867
    %v4869 = vsel %vm3215, %v4793, 0.0
    %4870 = vadd.xlane.f32.xlu0 %v4869
    %v4871 = vpop.xlane.xlu0 %4870
    %v4872 = vsel %vm3215, %v4795, 0.0
    %4873 = vadd.xlane.f32.xlu0 %v4872
    %v4874 = vpop.xlane.xlu0 %4873
    %v4875 = vsel %vm3215, %v4797, 0.0
    %4876 = vadd.xlane.f32.xlu0 %v4875
    %v4877 = vpop.xlane.xlu0 %4876
    %v4878 = vsel %vm3215, %v4799, 0.0
    %4879 = vadd.xlane.f32.xlu0 %v4878
    %v4880 = vpop.xlane.xlu0 %4879
    %v4881 = vsel %vm3215, %v4801, 0.0
    %4882 = vadd.xlane.f32.xlu0 %v4881
    %v4883 = vpop.xlane.xlu0 %4882
    %v4884 = vsel %vm3215, %v4803, 0.0
    %4885 = vadd.xlane.f32.xlu0 %v4884
    %v4886 = vpop.xlane.xlu0 %4885
    %v4887 = vsel %vm3215, %v4805, 0.0
    %4888 = vadd.xlane.f32.xlu0 %v4887
    %v4889 = vpop.xlane.xlu0 %4888
    %v4890 = vsel %vm3215, %v4807, 0.0
    %4891 = vadd.xlane.f32.xlu0 %v4890
    %v4892 = vpop.xlane.xlu0 %4891
    %v4893 = vsel %vm3215, %v4809, 0.0
    %4894 = vadd.xlane.f32.xlu0 %v4893
    %v4895 = vpop.xlane.xlu0 %4894
    %v4896 = vsel %vm3215, %v4811, 0.0
    %4897 = vadd.xlane.f32.xlu0 %v4896
    %v4898 = vpop.xlane.xlu0 %4897
    %v4899 = vsel %vm3215, %v4813, 0.0
    %4900 = vadd.xlane.f32.xlu0 %v4899
    %v4901 = vpop.xlane.xlu0 %4900
    %v4902 = vsel %vm3215, %v4815, 0.0
    %4903 = vadd.xlane.f32.xlu0 %v4902
    %v4904 = vpop.xlane.xlu0 %4903
    %v4905 = vsel %vm3215, %v4817, 0.0
    %4906 = vadd.xlane.f32.xlu0 %v4905
    %v4907 = vpop.xlane.xlu0 %4906
    %v4908 = vsel %vm3215, %v4819, 0.0
    %4909 = vadd.xlane.f32.xlu0 %v4908
    %v4910 = vpop.xlane.xlu0 %4909
    %v4911 = vsel %vm3215, %v4821, 0.0
    %4912 = vadd.xlane.f32.xlu0 %v4911
    %v4913 = vpop.xlane.xlu0 %4912
    %v4914 = vsel %vm3215, %v4823, 0.0
    %4915 = vadd.xlane.f32.xlu0 %v4914
    %v4916 = vpop.xlane.xlu0 %4915
    %v4917 = vsel %vm3215, %v4825, 0.0
    %4918 = vadd.xlane.f32.xlu0 %v4917
    %v4919 = vpop.xlane.xlu0 %4918
    %v4920 = vsel %vm3215, %v4827, 0.0
    %4921 = vadd.xlane.f32.xlu0 %v4920
    %v4922 = vpop.xlane.xlu0 %4921
    %v4923 = vsel %vm3215, %v4829, 0.0
    %4924 = vadd.xlane.f32.xlu0 %v4923
    %v4925 = vpop.xlane.xlu0 %4924
    %v4926 = vrcp.pop %v4832
    %v4927 = vrcp.pop %v4835
    %v4928 = vrcp.pop %v4838
    %v4929 = vrcp.pop %v4841
    %v4930 = vrcp.pop %v4844
    %v4931 = vrcp.pop %v4847
    %v4932 = vrcp.pop %v4850
    %v4933 = vrcp.pop %v4853
    %v4934 = vrcp.pop %v4856
    %v4935 = vrcp.pop %v4859
    %v4936 = vrcp.pop %v4862
    %v4937 = vrcp.pop %v4865
    %v4938 = vrcp.pop %v4868
    %v4939 = vrcp.pop %v4871
    %v4940 = vrcp.pop %v4874
    %v4941 = vrcp.pop %v4877
    %v4942 = vrcp.pop %v4880
    %v4943 = vrcp.pop %v4883
    %v4944 = vrcp.pop %v4886
    %v4945 = vrcp.pop %v4889
    %v4946 = vrcp.pop %v4892
    %v4947 = vrcp.pop %v4895
    %v4948 = vrcp.pop %v4898
    %v4949 = vrcp.pop %v4901
    %v4950 = vrcp.pop %v4904
    %v4951 = vrcp.pop %v4907
    %v4952 = vrcp.pop %v4910
    %v4953 = vrcp.pop %v4913
    %v4954 = vrcp.pop %v4916
    %v4955 = vrcp.pop %v4919
    %v4956 = vrcp.pop %v4922
    %v4957 = vrcp.pop %v4925
    %v4958 = vmul.f32 %v4767, %v4926
    %v4959 = vmul.f32 %v4769, %v4927
    %v4960 = vmul.f32 %v4771, %v4928
    %v4961 = vmul.f32 %v4773, %v4929
    %v4962 = vmul.f32 %v4775, %v4930
    %v4963 = vmul.f32 %v4777, %v4931
    %v4964 = vmul.f32 %v4779, %v4932
    %v4965 = vmul.f32 %v4781, %v4933
    %v4966 = vmul.f32 %v4783, %v4934
    %v4967 = vmul.f32 %v4785, %v4935
    %v4968 = vmul.f32 %v4787, %v4936
    %v4969 = vmul.f32 %v4789, %v4937
    %v4970 = vmul.f32 %v4791, %v4938
    %v4971 = vmul.f32 %v4793, %v4939
    %v4972 = vmul.f32 %v4795, %v4940
    %v4973 = vmul.f32 %v4797, %v4941
    %v4974 = vmul.f32 %v4799, %v4942
    %v4975 = vmul.f32 %v4801, %v4943
    %v4976 = vmul.f32 %v4803, %v4944
    %v4977 = vmul.f32 %v4805, %v4945
    %v4978 = vmul.f32 %v4807, %v4946
    %v4979 = vmul.f32 %v4809, %v4947
    %v4980 = vmul.f32 %v4811, %v4948
    %v4981 = vmul.f32 %v4813, %v4949
    %v4982 = vmul.f32 %v4815, %v4950
    %v4983 = vmul.f32 %v4817, %v4951
    %v4984 = vmul.f32 %v4819, %v4952
    %v4985 = vmul.f32 %v4821, %v4953
    %v4986 = vmul.f32 %v4823, %v4954
    %v4987 = vmul.f32 %v4825, %v4955
    %v4988 = vmul.f32 %v4827, %v4956
    %v4989 = vmul.f32 %v4829, %v4957
    %v4991 = vsel %vm3215, %v4958, 0
    %v4994 = vsel %vm3215, %v4959, 0
    %v4997 = vsel %vm3215, %v4960, 0
    %v5000 = vsel %vm3215, %v4961, 0
    %v5003 = vsel %vm3215, %v4962, 0
    %v5006 = vsel %vm3215, %v4963, 0
    %v5009 = vsel %vm3215, %v4964, 0
    %v5012 = vsel %vm3215, %v4965, 0
    %5014 = vmatprep.subr.mxu0 0.0
    %5015 = vmatpush1.msra.mxu0 %v3771
    %5016 = vmatprep.subr.mxu0 0.0
    %5017 = vmatpush1.msra.mxu0 %v3777
    %5018 = vmatprep.subr.mxu0 0.0
    %5019 = vmatpush1.msra.mxu0 %v3783
    %5020 = vmatprep.subr.mxu0 0.0
    %5021 = vmatpush1.msra.mxu0 %v3789
    %5022 = vmatprep.subr.mxu0 0.0
    %5023 = vmatpush1.msra.mxu0 %v3795
    %5024 = vmatprep.subr.mxu0 0.0
    %5025 = vmatpush1.msra.mxu0 %v3801
    %5026 = vmatprep.subr.mxu0 0.0
    %5027 = vmatpush1.msra.mxu0 %v3807
    %5028 = vmatprep.subr.mxu0 0.0
    %5029 = vmatpush1.msra.mxu0 %v3813
    %5030 = vmatprep.subr.mxu0 0.0
    %5031 = vmatpush1.msra.mxu0 0.0
    %5032 = vmatprep.subr.mxu0 0.0
    %5033 = vmatpush1.msra.mxu0 0.0
    %5034 = vmatprep.subr.mxu0 0.0
    %5035 = vmatpush1.msra.mxu0 0.0
    %5036 = vmatprep.subr.mxu0 0.0
    %5037 = vmatpush1.msra.mxu0 0.0
    %5038 = vmatprep.subr.mxu0 0.0
    %5039 = vmatpush1.msra.mxu0 0.0
    %5040 = vmatprep.subr.mxu0 0.0
    %5041 = vmatpush1.msra.mxu0 0.0
    %5042 = vmatprep.subr.mxu0 0.0
    %5043 = vmatpush1.msra.mxu0 0.0
    %5044 = vmatprep.subr.mxu0 0.0
    %5045 = vmatpush1.msra.mxu0 0.0
    %5046 = vmatprep.subr.mxu0 0.0
    %5047 = vmatpush1.msra.mxu0 0.0
    %5048 = vmatprep.subr.mxu0 0.0
    %5049 = vmatpush1.msra.mxu0 0.0
    %5050 = vmatprep.subr.mxu0 0.0
    %5051 = vmatpush1.msra.mxu0 0.0
    %5052 = vmatprep.subr.mxu0 0.0
    %5053 = vmatpush1.msra.mxu0 0.0
    %5054 = vmatprep.subr.mxu0 0.0
    %5055 = vmatpush1.msra.mxu0 0.0
    %5056 = vmatprep.subr.mxu0 0.0
    %5057 = vmatpush1.msra.mxu0 0.0
    %5058 = vmatprep.subr.mxu0 0.0
    %5059 = vmatpush1.msra.mxu0 0.0
    %5060 = vmatprep.subr.mxu0 0.0
    %5061 = vmatpush1.msra.mxu0 0.0
    %5062 = vmatprep.subr.mxu0 0.0
    %5063 = vmatpush1.msra.mxu0 0.0
    %5064 = vmatprep.subr.mxu0 0.0
    %5065 = vmatpush1.msra.mxu0 0.0
    %5066 = vmatprep.subr.mxu0 0.0
    %5067 = vmatpush1.msra.mxu0 0.0
    %5068 = vmatprep.subr.mxu0 0.0
    %5069 = vmatpush1.msra.mxu0 0.0
    %5070 = vmatprep.subr.mxu0 0.0
    %5071 = vmatpush1.msra.mxu0 0.0
    %5072 = vmatprep.subr.mxu0 0.0
    %5073 = vmatpush1.msra.mxu0 0.0
    %5074 = vmatprep.subr.mxu0 0.0
    %5075 = vmatpush1.msra.mxu0 0.0
    %5076 = vmatprep.subr.mxu0 0.0
    %5077 = vmatpush1.msra.mxu0 0.0
    %5078 = vmatprep.mubr.f32.mxu0 0.0
    %5079 = vmatmul.mubr.f32.gmra.mrb[0].mxu0 %v4991
    %v5080 = vpop.f32.mrb[0].mxu0
    %v5081 = vadd.f32 0.0, %v5080
    %v5082 = vpop.f32.mrb[0].mxu0
    %5083 = vmatprep.mubr.f32.mxu0 0.0
    %5084 = vmatmul.mubr.f32.gmra.mrb[0].mxu0 %v4994
    %v5085 = vpop.f32.mrb[0].mxu0
    %v5086 = vadd.f32 0.0, %v5085
    %v5087 = vpop.f32.mrb[0].mxu0
    %5088 = vmatprep.mubr.f32.mxu0 0.0
    %5089 = vmatmul.mubr.f32.gmra.mrb[0].mxu0 %v4997
    %v5090 = vpop.f32.mrb[0].mxu0
    %v5091 = vadd.f32 0.0, %v5090
    %v5092 = vpop.f32.mrb[0].mxu0
    %5093 = vmatprep.mubr.f32.mxu0 0.0
    %5094 = vmatmul.mubr.f32.gmra.mrb[0].mxu0 %v5000
    %v5095 = vpop.f32.mrb[0].mxu0
    %v5096 = vadd.f32 0.0, %v5095
    %v5097 = vpop.f32.mrb[0].mxu0
    %5098 = vmatprep.mubr.f32.mxu0 0.0
    %5099 = vmatmul.mubr.f32.gmra.mrb[0].mxu0 %v5003
    %v5100 = vpop.f32.mrb[0].mxu0
    %v5101 = vadd.f32 0.0, %v5100
    %v5102 = vpop.f32.mrb[0].mxu0
    %5103 = vmatprep.mubr.f32.mxu0 0.0
    %5104 = vmatmul.mubr.f32.gmra.mrb[0].mxu0 %v5006
    %v5105 = vpop.f32.mrb[0].mxu0
    %v5106 = vadd.f32 0.0, %v5105
    %v5107 = vpop.f32.mrb[0].mxu0
    %5108 = vmatprep.mubr.f32.mxu0 0.0
    %5109 = vmatmul.mubr.f32.gmra.mrb[0].mxu0 %v5009
    %v5110 = vpop.f32.mrb[0].mxu0
    %v5111 = vadd.f32 0.0, %v5110
    %v5112 = vpop.f32.mrb[0].mxu0
    %5113 = vmatprep.mubr.f32.mxu0 0.0
    %5114 = vmatmul.mubr.f32.gmra.mrb[0].mxu0 %v5012
    %v5115 = vpop.f32.mrb[0].mxu0
    %v5116 = vadd.f32 0.0, %v5115
    %v5117 = vpop.f32.mrb[0].mxu0
    %5118 = vdwg.mxu0
    %v5120 = vsel %vm3215, %v4966, 0
    %v5123 = vsel %vm3215, %v4967, 0
    %v5126 = vsel %vm3215, %v4968, 0
    %v5129 = vsel %vm3215, %v4969, 0
    %v5132 = vsel %vm3215, %v4970, 0
    %v5135 = vsel %vm3215, %v4971, 0
    %v5138 = vsel %vm3215, %v4972, 0
    %v5141 = vsel %vm3215, %v4973, 0
    %5143 = vmatprep.subr.mxu0 0.0
    %5144 = vmatpush1.msra.mxu0 %v4035
    %5145 = vmatprep.subr.mxu0 0.0
    %5146 = vmatpush1.msra.mxu0 %v4037
    %5147 = vmatprep.subr.mxu0 0.0
    %5148 = vmatpush1.msra.mxu0 %v4039
    %5149 = vmatprep.subr.mxu0 0.0
    %5150 = vmatpush1.msra.mxu0 %v4041
    %5151 = vmatprep.subr.mxu0 0.0
    %5152 = vmatpush1.msra.mxu0 %v4043
    %5153 = vmatprep.subr.mxu0 0.0
    %5154 = vmatpush1.msra.mxu0 %v4045
    %5155 = vmatprep.subr.mxu0 0.0
    %5156 = vmatpush1.msra.mxu0 %v4047
    %5157 = vmatprep.subr.mxu0 0.0
    %5158 = vmatpush1.msra.mxu0 %v4049
    %5159 = vmatprep.subr.mxu0 0.0
    %5160 = vmatpush1.msra.mxu0 0.0
    %5161 = vmatprep.subr.mxu0 0.0
    %5162 = vmatpush1.msra.mxu0 0.0
    %5163 = vmatprep.subr.mxu0 0.0
    %5164 = vmatpush1.msra.mxu0 0.0
    %5165 = vmatprep.subr.mxu0 0.0
    %5166 = vmatpush1.msra.mxu0 0.0
    %5167 = vmatprep.subr.mxu0 0.0
    %5168 = vmatpush1.msra.mxu0 0.0
    %5169 = vmatprep.subr.mxu0 0.0
    %5170 = vmatpush1.msra.mxu0 0.0
    %5171 = vmatprep.subr.mxu0 0.0
    %5172 = vmatpush1.msra.mxu0 0.0
    %5173 = vmatprep.subr.mxu0 0.0
    %5174 = vmatpush1.msra.mxu0 0.0
    %5175 = vmatprep.subr.mxu0 0.0
    %5176 = vmatpush1.msra.mxu0 0.0
    %5177 = vmatprep.subr.mxu0 0.0
    %5178 = vmatpush1.msra.mxu0 0.0
    %5179 = vmatprep.subr.mxu0 0.0
    %5180 = vmatpush1.msra.mxu0 0.0
    %5181 = vmatprep.subr.mxu0 0.0
    %5182 = vmatpush1.msra.mxu0 0.0
    %5183 = vmatprep.subr.mxu0 0.0
    %5184 = vmatpush1.msra.mxu0 0.0
    %5185 = vmatprep.subr.mxu0 0.0
    %5186 = vmatpush1.msra.mxu0 0.0
    %5187 = vmatprep.subr.mxu0 0.0
    %5188 = vmatpush1.msra.mxu0 0.0
    %5189 = vmatprep.subr.mxu0 0.0
    %5190 = vmatpush1.msra.mxu0 0.0
    %5191 = vmatprep.subr.mxu0 0.0
    %5192 = vmatpush1.msra.mxu0 0.0
    %5193 = vmatprep.subr.mxu0 0.0
    %5194 = vmatpush1.msra.mxu0 0.0
    %5195 = vmatprep.subr.mxu0 0.0
    %5196 = vmatpush1.msra.mxu0 0.0
    %5197 = vmatprep.subr.mxu0 0.0
    %5198 = vmatpush1.msra.mxu0 0.0
    %5199 = vmatprep.subr.mxu0 0.0
    %5200 = vmatpush1.msra.mxu0 0.0
    %5201 = vmatprep.subr.mxu0 0.0
    %5202 = vmatpush1.msra.mxu0 0.0
    %5203 = vmatprep.subr.mxu0 0.0
    %5204 = vmatpush1.msra.mxu0 0.0
    %5205 = vmatprep.subr.mxu0 0.0
    %5206 = vmatpush1.msra.mxu0 0.0
    %5207 = vmatprep.mubr.f32.mxu0 0.0
    %5208 = vmatmul.mubr.f32.gmra.mrb[0].mxu0 %v5120
    %v5209 = vpop.f32.mrb[0].mxu0
    %v5210 = vadd.f32 0.0, %v5209
    %v5211 = vpop.f32.mrb[0].mxu0
    %5212 = vmatprep.mubr.f32.mxu0 0.0
    %5213 = vmatmul.mubr.f32.gmra.mrb[0].mxu0 %v5123
    %v5214 = vpop.f32.mrb[0].mxu0
    %v5215 = vadd.f32 0.0, %v5214
    %v5216 = vpop.f32.mrb[0].mxu0
    %5217 = vmatprep.mubr.f32.mxu0 0.0
    %5218 = vmatmul.mubr.f32.gmra.mrb[0].mxu0 %v5126
    %v5219 = vpop.f32.mrb[0].mxu0
    %v5220 = vadd.f32 0.0, %v5219
    %v5221 = vpop.f32.mrb[0].mxu0
    %5222 = vmatprep.mubr.f32.mxu0 0.0
    %5223 = vmatmul.mubr.f32.gmra.mrb[0].mxu0 %v5129
    %v5224 = vpop.f32.mrb[0].mxu0
    %v5225 = vadd.f32 0.0, %v5224
    %v5226 = vpop.f32.mrb[0].mxu0
    %5227 = vmatprep.mubr.f32.mxu0 0.0
    %5228 = vmatmul.mubr.f32.gmra.mrb[0].mxu0 %v5132
    %v5229 = vpop.f32.mrb[0].mxu0
    %v5230 = vadd.f32 0.0, %v5229
    %v5231 = vpop.f32.mrb[0].mxu0
    %5232 = vmatprep.mubr.f32.mxu0 0.0
    %5233 = vmatmul.mubr.f32.gmra.mrb[0].mxu0 %v5135
    %v5234 = vpop.f32.mrb[0].mxu0
    %v5235 = vadd.f32 0.0, %v5234
    %v5236 = vpop.f32.mrb[0].mxu0
    %5237 = vmatprep.mubr.f32.mxu0 0.0
    %5238 = vmatmul.mubr.f32.gmra.mrb[0].mxu0 %v5138
    %v5239 = vpop.f32.mrb[0].mxu0
    %v5240 = vadd.f32 0.0, %v5239
    %v5241 = vpop.f32.mrb[0].mxu0
    %5242 = vmatprep.mubr.f32.mxu0 0.0
    %5243 = vmatmul.mubr.f32.gmra.mrb[0].mxu0 %v5141
    %v5244 = vpop.f32.mrb[0].mxu0
    %v5245 = vadd.f32 0.0, %v5244
    %v5246 = vpop.f32.mrb[0].mxu0
    %5247 = vdwg.mxu0
    %v5249 = vsel %vm3215, %v4974, 0
    %v5252 = vsel %vm3215, %v4975, 0
    %v5255 = vsel %vm3215, %v4976, 0
    %v5258 = vsel %vm3215, %v4977, 0
    %v5261 = vsel %vm3215, %v4978, 0
    %v5264 = vsel %vm3215, %v4979, 0
    %v5267 = vsel %vm3215, %v4980, 0
    %v5270 = vsel %vm3215, %v4981, 0
    %5272 = vmatprep.subr.mxu0 0.0
    %5273 = vmatpush1.msra.mxu0 %v3773
    %5274 = vmatprep.subr.mxu0 0.0
    %5275 = vmatpush1.msra.mxu0 %v3779
    %5276 = vmatprep.subr.mxu0 0.0
    %5277 = vmatpush1.msra.mxu0 %v3785
    %5278 = vmatprep.subr.mxu0 0.0
    %5279 = vmatpush1.msra.mxu0 %v3791
    %5280 = vmatprep.subr.mxu0 0.0
    %5281 = vmatpush1.msra.mxu0 %v3797
    %5282 = vmatprep.subr.mxu0 0.0
    %5283 = vmatpush1.msra.mxu0 %v3803
    %5284 = vmatprep.subr.mxu0 0.0
    %5285 = vmatpush1.msra.mxu0 %v3809
    %5286 = vmatprep.subr.mxu0 0.0
    %5287 = vmatpush1.msra.mxu0 %v3815
    %5288 = vmatprep.subr.mxu0 0.0
    %5289 = vmatpush1.msra.mxu0 0.0
    %5290 = vmatprep.subr.mxu0 0.0
    %5291 = vmatpush1.msra.mxu0 0.0
    %5292 = vmatprep.subr.mxu0 0.0
    %5293 = vmatpush1.msra.mxu0 0.0
    %5294 = vmatprep.subr.mxu0 0.0
    %5295 = vmatpush1.msra.mxu0 0.0
    %5296 = vmatprep.subr.mxu0 0.0
    %5297 = vmatpush1.msra.mxu0 0.0
    %5298 = vmatprep.subr.mxu0 0.0
    %5299 = vmatpush1.msra.mxu0 0.0
    %5300 = vmatprep.subr.mxu0 0.0
    %5301 = vmatpush1.msra.mxu0 0.0
    %5302 = vmatprep.subr.mxu0 0.0
    %5303 = vmatpush1.msra.mxu0 0.0
    %5304 = vmatprep.subr.mxu0 0.0
    %5305 = vmatpush1.msra.mxu0 0.0
    %5306 = vmatprep.subr.mxu0 0.0
    %5307 = vmatpush1.msra.mxu0 0.0
    %5308 = vmatprep.subr.mxu0 0.0
    %5309 = vmatpush1.msra.mxu0 0.0
    %5310 = vmatprep.subr.mxu0 0.0
    %5311 = vmatpush1.msra.mxu0 0.0
    %5312 = vmatprep.subr.mxu0 0.0
    %5313 = vmatpush1.msra.mxu0 0.0
    %5314 = vmatprep.subr.mxu0 0.0
    %5315 = vmatpush1.msra.mxu0 0.0
    %5316 = vmatprep.subr.mxu0 0.0
    %5317 = vmatpush1.msra.mxu0 0.0
    %5318 = vmatprep.subr.mxu0 0.0
    %5319 = vmatpush1.msra.mxu0 0.0
    %5320 = vmatprep.subr.mxu0 0.0
    %5321 = vmatpush1.msra.mxu0 0.0
    %5322 = vmatprep.subr.mxu0 0.0
    %5323 = vmatpush1.msra.mxu0 0.0
    %5324 = vmatprep.subr.mxu0 0.0
    %5325 = vmatpush1.msra.mxu0 0.0
    %5326 = vmatprep.subr.mxu0 0.0
    %5327 = vmatpush1.msra.mxu0 0.0
    %5328 = vmatprep.subr.mxu0 0.0
    %5329 = vmatpush1.msra.mxu0 0.0
    %5330 = vmatprep.subr.mxu0 0.0
    %5331 = vmatpush1.msra.mxu0 0.0
    %5332 = vmatprep.subr.mxu0 0.0
    %5333 = vmatpush1.msra.mxu0 0.0
    %5334 = vmatprep.subr.mxu0 0.0
    %5335 = vmatpush1.msra.mxu0 0.0
    %5336 = vmatprep.mubr.f32.mxu0 0.0
    %5337 = vmatmul.mubr.f32.gmra.mrb[0].mxu0 %v5249
    %v5338 = vpop.f32.mrb[0].mxu0
    %v5339 = vadd.f32 0.0, %v5338
    %v5340 = vpop.f32.mrb[0].mxu0
    %5341 = vmatprep.mubr.f32.mxu0 0.0
    %5342 = vmatmul.mubr.f32.gmra.mrb[0].mxu0 %v5252
    %v5343 = vpop.f32.mrb[0].mxu0
    %v5344 = vadd.f32 0.0, %v5343
    %v5345 = vpop.f32.mrb[0].mxu0
    %5346 = vmatprep.mubr.f32.mxu0 0.0
    %5347 = vmatmul.mubr.f32.gmra.mrb[0].mxu0 %v5255
    %v5348 = vpop.f32.mrb[0].mxu0
    %v5349 = vadd.f32 0.0, %v5348
    %v5350 = vpop.f32.mrb[0].mxu0
    %5351 = vmatprep.mubr.f32.mxu0 0.0
    %5352 = vmatmul.mubr.f32.gmra.mrb[0].mxu0 %v5258
    %v5353 = vpop.f32.mrb[0].mxu0
    %v5354 = vadd.f32 0.0, %v5353
    %v5355 = vpop.f32.mrb[0].mxu0
    %5356 = vmatprep.mubr.f32.mxu0 0.0
    %5357 = vmatmul.mubr.f32.gmra.mrb[0].mxu0 %v5261
    %v5358 = vpop.f32.mrb[0].mxu0
    %v5359 = vadd.f32 0.0, %v5358
    %v5360 = vpop.f32.mrb[0].mxu0
    %5361 = vmatprep.mubr.f32.mxu0 0.0
    %5362 = vmatmul.mubr.f32.gmra.mrb[0].mxu0 %v5264
    %v5363 = vpop.f32.mrb[0].mxu0
    %v5364 = vadd.f32 0.0, %v5363
    %v5365 = vpop.f32.mrb[0].mxu0
    %5366 = vmatprep.mubr.f32.mxu0 0.0
    %5367 = vmatmul.mubr.f32.gmra.mrb[0].mxu0 %v5267
    %v5368 = vpop.f32.mrb[0].mxu0
    %v5369 = vadd.f32 0.0, %v5368
    %v5370 = vpop.f32.mrb[0].mxu0
    %5371 = vmatprep.mubr.f32.mxu0 0.0
    %5372 = vmatmul.mubr.f32.gmra.mrb[0].mxu0 %v5270
    %v5373 = vpop.f32.mrb[0].mxu0
    %v5374 = vadd.f32 0.0, %v5373
    %v5375 = vpop.f32.mrb[0].mxu0
    %5376 = vdwg.mxu0
    %v5378 = vsel %vm3215, %v4982, 0
    %v5381 = vsel %vm3215, %v4983, 0
    %v5384 = vsel %vm3215, %v4984, 0
    %v5387 = vsel %vm3215, %v4985, 0
    %v5390 = vsel %vm3215, %v4986, 0
    %v5393 = vsel %vm3215, %v4987, 0
    %v5396 = vsel %vm3215, %v4988, 0
    %v5399 = vsel %vm3215, %v4989, 0
    %5401 = vmatprep.subr.mxu0 0.0
    %5402 = vmatpush1.msra.mxu0 %v4067
    %5403 = vmatprep.subr.mxu0 0.0
    %5404 = vmatpush1.msra.mxu0 %v4069
    %5405 = vmatprep.subr.mxu0 0.0
    %5406 = vmatpush1.msra.mxu0 %v4071
    %5407 = vmatprep.subr.mxu0 0.0
    %5408 = vmatpush1.msra.mxu0 %v4073
    %5409 = vmatprep.subr.mxu0 0.0
    %5410 = vmatpush1.msra.mxu0 %v4075
    %5411 = vmatprep.subr.mxu0 0.0
    %5412 = vmatpush1.msra.mxu0 %v4077
    %5413 = vmatprep.subr.mxu0 0.0
    %5414 = vmatpush1.msra.mxu0 %v4079
    %5415 = vmatprep.subr.mxu0 0.0
    %5416 = vmatpush1.msra.mxu0 %v4081
    %5417 = vmatprep.subr.mxu0 0.0
    %5418 = vmatpush1.msra.mxu0 0.0
    %5419 = vmatprep.subr.mxu0 0.0
    %5420 = vmatpush1.msra.mxu0 0.0
    %5421 = vmatprep.subr.mxu0 0.0
    %5422 = vmatpush1.msra.mxu0 0.0
    %5423 = vmatprep.subr.mxu0 0.0
    %5424 = vmatpush1.msra.mxu0 0.0
    %5425 = vmatprep.subr.mxu0 0.0
    %5426 = vmatpush1.msra.mxu0 0.0
    %5427 = vmatprep.subr.mxu0 0.0
    %5428 = vmatpush1.msra.mxu0 0.0
    %5429 = vmatprep.subr.mxu0 0.0
    %5430 = vmatpush1.msra.mxu0 0.0
    %5431 = vmatprep.subr.mxu0 0.0
    %5432 = vmatpush1.msra.mxu0 0.0
    %5433 = vmatprep.subr.mxu0 0.0
    %5434 = vmatpush1.msra.mxu0 0.0
    %5435 = vmatprep.subr.mxu0 0.0
    %5436 = vmatpush1.msra.mxu0 0.0
    %5437 = vmatprep.subr.mxu0 0.0
    %5438 = vmatpush1.msra.mxu0 0.0
    %5439 = vmatprep.subr.mxu0 0.0
    %5440 = vmatpush1.msra.mxu0 0.0
    %5441 = vmatprep.subr.mxu0 0.0
    %5442 = vmatpush1.msra.mxu0 0.0
    %5443 = vmatprep.subr.mxu0 0.0
    %5444 = vmatpush1.msra.mxu0 0.0
    %5445 = vmatprep.subr.mxu0 0.0
    %5446 = vmatpush1.msra.mxu0 0.0
    %5447 = vmatprep.subr.mxu0 0.0
    %5448 = vmatpush1.msra.mxu0 0.0
    %5449 = vmatprep.subr.mxu0 0.0
    %5450 = vmatpush1.msra.mxu0 0.0
    %5451 = vmatprep.subr.mxu0 0.0
    %5452 = vmatpush1.msra.mxu0 0.0
    %5453 = vmatprep.subr.mxu0 0.0
    %5454 = vmatpush1.msra.mxu0 0.0
    %5455 = vmatprep.subr.mxu0 0.0
    %5456 = vmatpush1.msra.mxu0 0.0
    %5457 = vmatprep.subr.mxu0 0.0
    %5458 = vmatpush1.msra.mxu0 0.0
    %5459 = vmatprep.subr.mxu0 0.0
    %5460 = vmatpush1.msra.mxu0 0.0
    %5461 = vmatprep.subr.mxu0 0.0
    %5462 = vmatpush1.msra.mxu0 0.0
    %5463 = vmatprep.subr.mxu0 0.0
    %5464 = vmatpush1.msra.mxu0 0.0
    %5465 = vmatprep.mubr.f32.mxu0 0.0
    %5466 = vmatmul.mubr.f32.gmra.mrb[0].mxu0 %v5378
    %v5467 = vpop.f32.mrb[0].mxu0
    %v5468 = vadd.f32 0.0, %v5467
    %v5469 = vpop.f32.mrb[0].mxu0
    %5470 = vmatprep.mubr.f32.mxu0 0.0
    %5471 = vmatmul.mubr.f32.gmra.mrb[0].mxu0 %v5381
    %v5472 = vpop.f32.mrb[0].mxu0
    %v5473 = vadd.f32 0.0, %v5472
    %v5474 = vpop.f32.mrb[0].mxu0
    %5475 = vmatprep.mubr.f32.mxu0 0.0
    %5476 = vmatmul.mubr.f32.gmra.mrb[0].mxu0 %v5384
    %v5477 = vpop.f32.mrb[0].mxu0
    %v5478 = vadd.f32 0.0, %v5477
    %v5479 = vpop.f32.mrb[0].mxu0
    %5480 = vmatprep.mubr.f32.mxu0 0.0
    %5481 = vmatmul.mubr.f32.gmra.mrb[0].mxu0 %v5387
    %v5482 = vpop.f32.mrb[0].mxu0
    %v5483 = vadd.f32 0.0, %v5482
    %v5484 = vpop.f32.mrb[0].mxu0
    %5485 = vmatprep.mubr.f32.mxu0 0.0
    %5486 = vmatmul.mubr.f32.gmra.mrb[0].mxu0 %v5390
    %v5487 = vpop.f32.mrb[0].mxu0
    %v5488 = vadd.f32 0.0, %v5487
    %v5489 = vpop.f32.mrb[0].mxu0
    %5490 = vmatprep.mubr.f32.mxu0 0.0
    %5491 = vmatmul.mubr.f32.gmra.mrb[0].mxu0 %v5393
    %v5492 = vpop.f32.mrb[0].mxu0
    %v5493 = vadd.f32 0.0, %v5492
    %v5494 = vpop.f32.mrb[0].mxu0
    %5495 = vmatprep.mubr.f32.mxu0 0.0
    %5496 = vmatmul.mubr.f32.gmra.mrb[0].mxu0 %v5396
    %v5497 = vpop.f32.mrb[0].mxu0
    %v5498 = vadd.f32 0.0, %v5497
    %v5499 = vpop.f32.mrb[0].mxu0
    %5500 = vmatprep.mubr.f32.mxu0 0.0
    %5501 = vmatmul.mubr.f32.gmra.mrb[0].mxu0 %v5399
    %v5502 = vpop.f32.mrb[0].mxu0
    %v5503 = vadd.f32 0.0, %v5502
    %v5504 = vpop.f32.mrb[0].mxu0
    %5505 = vdwg.mxu0
    %5514 = vrot.lane.b32.xlu0 %v5210, 64
    %v5515 = vpop.permute.xlu0 %5514
    %5516 = vrot.lane.b32.xlu0 %v5215, 64
    %v5517 = vpop.permute.xlu0 %5516
    %5518 = vrot.lane.b32.xlu0 %v5220, 64
    %v5519 = vpop.permute.xlu0 %5518
    %5520 = vrot.lane.b32.xlu0 %v5225, 64
    %v5521 = vpop.permute.xlu0 %5520
    %5522 = vrot.lane.b32.xlu0 %v5230, 64
    %v5523 = vpop.permute.xlu0 %5522
    %5524 = vrot.lane.b32.xlu0 %v5235, 64
    %v5525 = vpop.permute.xlu0 %5524
    %5526 = vrot.lane.b32.xlu0 %v5240, 64
    %v5527 = vpop.permute.xlu0 %5526
    %5528 = vrot.lane.b32.xlu0 %v5245, 64
    %v5529 = vpop.permute.xlu0 %5528
    %5546 = vrot.lane.b32.xlu0 %v5468, 64
    %v5547 = vpop.permute.xlu0 %5546
    %5548 = vrot.lane.b32.xlu0 %v5473, 64
    %v5549 = vpop.permute.xlu0 %5548
    %5550 = vrot.lane.b32.xlu0 %v5478, 64
    %v5551 = vpop.permute.xlu0 %5550
    %5552 = vrot.lane.b32.xlu0 %v5483, 64
    %v5553 = vpop.permute.xlu0 %5552
    %5554 = vrot.lane.b32.xlu0 %v5488, 64
    %v5555 = vpop.permute.xlu0 %5554
    %5556 = vrot.lane.b32.xlu0 %v5493, 64
    %v5557 = vpop.permute.xlu0 %5556
    %5558 = vrot.lane.b32.xlu0 %v5498, 64
    %v5559 = vpop.permute.xlu0 %5558
    %5560 = vrot.lane.b32.xlu0 %v5503, 64
    %v5561 = vpop.permute.xlu0 %5560
    %v5570 = vsel %vm3215, %v5081, %v5515
    %v5571 = vsel %vm3215, %v5086, %v5517
    %v5572 = vsel %vm3215, %v5091, %v5519
    %v5573 = vsel %vm3215, %v5096, %v5521
    %v5574 = vsel %vm3215, %v5101, %v5523
    %v5575 = vsel %vm3215, %v5106, %v5525
    %v5576 = vsel %vm3215, %v5111, %v5527
    %v5577 = vsel %vm3215, %v5116, %v5529
    %v5578 = vsel %vm3215, %v5339, %v5547
    %v5579 = vsel %vm3215, %v5344, %v5549
    %v5580 = vsel %vm3215, %v5349, %v5551
    %v5581 = vsel %vm3215, %v5354, %v5553
    %v5582 = vsel %vm3215, %v5359, %v5555
    %v5583 = vsel %vm3215, %v5364, %v5557
    %v5584 = vsel %vm3215, %v5369, %v5559
    %v5585 = vsel %vm3215, %v5374, %v5561
    %v5586 = vadd.f32 %v5570, %v3884
    %v5587 = vadd.f32 %v5578, %v3886
    %v5588 = vadd.f32 %v5571, %v3890
    %v5589 = vadd.f32 %v5579, %v3892
    %v5590 = vadd.f32 %v5572, %v3896
    %v5591 = vadd.f32 %v5580, %v3898
    %v5592 = vadd.f32 %v5573, %v3902
    %v5593 = vadd.f32 %v5581, %v3904
    %v5594 = vadd.f32 %v5574, %v3908
    %v5595 = vadd.f32 %v5582, %v3910
    %v5596 = vadd.f32 %v5575, %v3914
    %v5597 = vadd.f32 %v5583, %v3916
    %v5598 = vadd.f32 %v5576, %v3920
    %v5599 = vadd.f32 %v5584, %v3922
    %v5600 = vadd.f32 %v5577, %v3926
    %v5601 = vadd.f32 %v5585, %v3928
    %v5602 = vld [vmem:[#allocation8 + $0x14] sm:$0x3]
    %v5603 = vld [vmem:[#allocation8 + $0x16] sm:$0x3]
    %v5604 = vld [vmem:[#allocation8 + $0x18] sm:$0x3]
    %v5605 = vadd.f32 %v5586, %v5588
    %v5606 = vadd.f32 %v5605, %v5590
    %v5607 = vadd.f32 %v5606, %v5592
    %v5608 = vadd.f32 %v5607, %v5594
    %v5609 = vadd.f32 %v5608, %v5596
    %v5610 = vadd.f32 %v5609, %v5598
    %v5611 = vadd.f32 %v5610, %v5600
    %v5612 = vrot.slane %v5611, 4
    %v5613 = vadd.f32 %v5611, %v5612
    %v5614 = vrot.slane %v5613, 2
    %v5615 = vadd.f32 %v5613, %v5614
    %v5616 = vrot.slane %v5615, 1
    %v5617 = vadd.f32 %v5615, %v5616
    %v5618 = vadd.f32 %v5587, %v5589
    %v5619 = vadd.f32 %v5618, %v5591
    %v5620 = vadd.f32 %v5619, %v5593
    %v5621 = vadd.f32 %v5620, %v5595
    %v5622 = vadd.f32 %v5621, %v5597
    %v5623 = vadd.f32 %v5622, %v5599
    %v5624 = vadd.f32 %v5623, %v5601
    %v5625 = vrot.slane %v5624, 4
    %v5626 = vadd.f32 %v5624, %v5625
    %v5627 = vrot.slane %v5626, 2
    %v5628 = vadd.f32 %v5626, %v5627
    %v5629 = vrot.slane %v5628, 1
    %v5630 = vadd.f32 %v5628, %v5629
    %v5631 = vmul.f32 %v5617, 0.015625
    %v5632 = vmul.f32 %v5630, 0.015625
    %v5634 = vlaneseq
    %v5635 = vshrl.u32 %v5634, 7
    %v5636 = vsub.s32 0, %v5635
    %v5637 = vrot.slane %v5604, %v5636
    %v5638 = vlaneseq
    %v5639 = vshrl.u32 %v5638, 7
    %v5640 = vsub.s32 1, %v5639
    %v5641 = vrot.slane %v5604, %v5640
    %v5644 = vmul.f32 %v5631, %v5637
    %v5645 = vmul.f32 %v5632, %v5641
    %v5646 = vlaneseq
    %v5647 = vshrl.u32 %v5646, 7
    %v5648 = vsub.s32 0, %v5647
    %v5649 = vrot.slane %v5644, %v5648
    %v5650 = vlaneseq
    %v5651 = vshrl.u32 %v5650, 7
    %v5652 = vsub.s32 0, %v5651
    %v5653 = vrot.slane %v5645, %v5652
    %v5654 = vsub.f32 %v5586, %v5649
    %v5655 = vsub.f32 %v5587, %v5653
    %v5656 = vsub.f32 %v5588, %v5649
    %v5657 = vsub.f32 %v5589, %v5653
    %v5658 = vsub.f32 %v5590, %v5649
    %v5659 = vsub.f32 %v5591, %v5653
    %v5660 = vsub.f32 %v5592, %v5649
    %v5661 = vsub.f32 %v5593, %v5653
    %v5662 = vsub.f32 %v5594, %v5649
    %v5663 = vsub.f32 %v5595, %v5653
    %v5664 = vsub.f32 %v5596, %v5649
    %v5665 = vsub.f32 %v5597, %v5653
    %v5666 = vsub.f32 %v5598, %v5649
    %v5667 = vsub.f32 %v5599, %v5653
    %v5668 = vsub.f32 %v5600, %v5649
    %v5669 = vsub.f32 %v5601, %v5653
    %v5670 = vmul.f32 %v5654, %v5654
    %v5671 = vmul.f32 %v5655, %v5655
    %v5672 = vmul.f32 %v5656, %v5656
    %v5673 = vmul.f32 %v5657, %v5657
    %v5674 = vmul.f32 %v5658, %v5658
    %v5675 = vmul.f32 %v5659, %v5659
    %v5676 = vmul.f32 %v5660, %v5660
    %v5677 = vmul.f32 %v5661, %v5661
    %v5678 = vmul.f32 %v5662, %v5662
    %v5679 = vmul.f32 %v5663, %v5663
    %v5680 = vmul.f32 %v5664, %v5664
    %v5681 = vmul.f32 %v5665, %v5665
    %v5682 = vmul.f32 %v5666, %v5666
    %v5683 = vmul.f32 %v5667, %v5667
    %v5684 = vmul.f32 %v5668, %v5668
    %v5685 = vmul.f32 %v5669, %v5669
    %v5686 = vadd.f32 %v5670, %v5672
    %v5687 = vadd.f32 %v5686, %v5674
    %v5688 = vadd.f32 %v5687, %v5676
    %v5689 = vadd.f32 %v5688, %v5678
    %v5690 = vadd.f32 %v5689, %v5680
    %v5691 = vadd.f32 %v5690, %v5682
    %v5692 = vadd.f32 %v5691, %v5684
    %v5693 = vrot.slane %v5692, 4
    %v5694 = vadd.f32 %v5692, %v5693
    %v5695 = vrot.slane %v5694, 2
    %v5696 = vadd.f32 %v5694, %v5695
    %v5697 = vrot.slane %v5696, 1
    %v5698 = vadd.f32 %v5696, %v5697
    %v5699 = vadd.f32 %v5671, %v5673
    %v5700 = vadd.f32 %v5699, %v5675
    %v5701 = vadd.f32 %v5700, %v5677
    %v5702 = vadd.f32 %v5701, %v5679
    %v5703 = vadd.f32 %v5702, %v5681
    %v5704 = vadd.f32 %v5703, %v5683
    %v5705 = vadd.f32 %v5704, %v5685
    %v5706 = vrot.slane %v5705, 4
    %v5707 = vadd.f32 %v5705, %v5706
    %v5708 = vrot.slane %v5707, 2
    %v5709 = vadd.f32 %v5707, %v5708
    %v5710 = vrot.slane %v5709, 1
    %v5711 = vadd.f32 %v5709, %v5710
    %v5712 = vmul.f32 %v5698, 0.015625
    %v5713 = vmul.f32 %v5711, 0.015625
    %v5715 = vlaneseq
    %v5716 = vshrl.u32 %v5715, 7
    %v5717 = vsub.s32 0, %v5716
    %v5718 = vrot.slane %v5602, %v5717
    %v5719 = vlaneseq
    %v5720 = vshrl.u32 %v5719, 7
    %v5721 = vsub.s32 1, %v5720
    %v5722 = vrot.slane %v5602, %v5721
    %v5725 = vmul.f32 %v5718, %v5654
    %v5726 = vmul.f32 %v5722, %v5655
    %v5727 = vmul.f32 %v5718, %v5656
    %v5728 = vmul.f32 %v5722, %v5657
    %v5729 = vmul.f32 %v5718, %v5658
    %v5730 = vmul.f32 %v5722, %v5659
    %v5731 = vmul.f32 %v5718, %v5660
    %v5732 = vmul.f32 %v5722, %v5661
    %v5733 = vmul.f32 %v5718, %v5662
    %v5734 = vmul.f32 %v5722, %v5663
    %v5735 = vmul.f32 %v5718, %v5664
    %v5736 = vmul.f32 %v5722, %v5665
    %v5737 = vmul.f32 %v5718, %v5666
    %v5738 = vmul.f32 %v5722, %v5667
    %v5739 = vmul.f32 %v5718, %v5668
    %v5740 = vmul.f32 %v5722, %v5669
    %v5741 = vadd.f32 %v5712, 1e-05
    %v5742 = vadd.f32 %v5713, 1e-05
    %v5743 = vrsqrt.pop %v5741
    %v5744 = vrsqrt.pop %v5742
    %v5745 = vmul.f32 %v5725, %v5743
    %v5746 = vmul.f32 %v5726, %v5744
    %v5747 = vmul.f32 %v5727, %v5743
    %v5748 = vmul.f32 %v5728, %v5744
    %v5749 = vmul.f32 %v5729, %v5743
    %v5750 = vmul.f32 %v5730, %v5744
    %v5751 = vmul.f32 %v5731, %v5743
    %v5752 = vmul.f32 %v5732, %v5744
    %v5753 = vmul.f32 %v5733, %v5743
    %v5754 = vmul.f32 %v5734, %v5744
    %v5755 = vmul.f32 %v5735, %v5743
    %v5756 = vmul.f32 %v5736, %v5744
    %v5757 = vmul.f32 %v5737, %v5743
    %v5758 = vmul.f32 %v5738, %v5744
    %v5759 = vmul.f32 %v5739, %v5743
    %v5760 = vmul.f32 %v5740, %v5744
    %v5762 = vlaneseq
    %v5763 = vshrl.u32 %v5762, 7
    %v5764 = vsub.s32 0, %v5763
    %v5765 = vrot.slane %v5603, %v5764
    %v5766 = vlaneseq
    %v5767 = vshrl.u32 %v5766, 7
    %v5768 = vsub.s32 1, %v5767
    %v5769 = vrot.slane %v5603, %v5768
    %v5772 = vadd.f32 %v5745, %v5765
    %v5773 = vadd.f32 %v5746, %v5769
    %v5774 = vadd.f32 %v5747, %v5765
    %v5775 = vadd.f32 %v5748, %v5769
    %v5776 = vadd.f32 %v5749, %v5765
    %v5777 = vadd.f32 %v5750, %v5769
    %v5778 = vadd.f32 %v5751, %v5765
    %v5779 = vadd.f32 %v5752, %v5769
    %v5780 = vadd.f32 %v5753, %v5765
    %v5781 = vadd.f32 %v5754, %v5769
    %v5782 = vadd.f32 %v5755, %v5765
    %v5783 = vadd.f32 %v5756, %v5769
    %v5784 = vadd.f32 %v5757, %v5765
    %v5785 = vadd.f32 %v5758, %v5769
    %v5786 = vadd.f32 %v5759, %v5765
    %v5787 = vadd.f32 %v5760, %v5769
    %v5788 = vld [vmem:[#allocation5 + $0x60] sm:$0xff]
    %v5789 = vld [vmem:[#allocation5 + $0x70] sm:$0xff]
    %v5790 = vld [vmem:[#allocation5 + $0x80] sm:$0xff]
    %v5791 = vld [vmem:[#allocation5 + $0x90] sm:$0xff]
    %v5792 = vld [vmem:[#allocation5 + $0xa0] sm:$0xff]
    %v5793 = vld [vmem:[#allocation5 + $0xb0] sm:$0xff]
    %v5794 = vld [vmem:[#allocation5 + $0xc0] sm:$0xff]
    %v5795 = vld [vmem:[#allocation5 + $0xd0] sm:$0xff]
    %v5796 = vld [vmem:[#allocation5 + $0xe0] sm:$0xff]
    %v5797 = vld [vmem:[#allocation5 + $0xf0] sm:$0xff]
    %v5798 = vld [vmem:[#allocation5 + $0x100] sm:$0xff]
    %v5799 = vld [vmem:[#allocation5 + $0x110] sm:$0xff]
    %v5800 = vld [vmem:[#allocation5 + $0x120] sm:$0xff]
    %v5801 = vld [vmem:[#allocation5 + $0x130] sm:$0xff]
    %v5802 = vld [vmem:[#allocation5 + $0x140] sm:$0xff]
    %v5803 = vld [vmem:[#allocation5 + $0x150] sm:$0xff]
    %v5804 = vld [vmem:[#allocation5 + $0x160] sm:$0xff]
    %v5805 = vld [vmem:[#allocation5 + $0x170] sm:$0xff]
    %v5806 = vld [vmem:[#allocation5 + $0x180] sm:$0xff]
    %v5807 = vld [vmem:[#allocation5 + $0x190] sm:$0xff]
    %v5808 = vld [vmem:[#allocation5 + $0x1a0] sm:$0xff]
    %v5809 = vld [vmem:[#allocation5 + $0x1b0] sm:$0xff]
    %v5810 = vld [vmem:[#allocation5 + $0x1c0] sm:$0xff]
    %v5811 = vld [vmem:[#allocation5 + $0x1d0] sm:$0xff]
    %v5812 = vld [vmem:[#allocation5 + $0x1e0] sm:$0xff]
    %v5813 = vld [vmem:[#allocation5 + $0x1f0] sm:$0xff]
    %v5814 = vld [vmem:[#allocation5 + $0x200] sm:$0xff]
    %v5815 = vld [vmem:[#allocation5 + $0x210] sm:$0xff]
    %v5816 = vld [vmem:[#allocation5 + $0x220] sm:$0xff]
    %v5817 = vld [vmem:[#allocation5 + $0x230] sm:$0xff]
    %v5818 = vld [vmem:[#allocation5 + $0x240] sm:$0xff]
    %v5819 = vld [vmem:[#allocation5 + $0x250] sm:$0xff]
    %v5820 = vld [vmem:[#allocation8 + $0xb] sm:$0x1]
    %v5822 = vlaneseq
    %v5823 = vshrl.u32 %v5822, 7
    %v5824 = vsub.s32 0, %v5823
    %v5825 = vrot.slane %v5820, %v5824
    %5827 = vmatprep.subr.mxu0 0.0
    %5828 = vmatpush1.msra.mxu0 %v5788
    %5829 = vmatprep.subr.mxu0 0.0
    %5830 = vmatpush1.msra.mxu0 %v5789
    %5831 = vmatprep.subr.mxu0 0.0
    %5832 = vmatpush1.msra.mxu0 %v5790
    %5833 = vmatprep.subr.mxu0 0.0
    %5834 = vmatpush1.msra.mxu0 %v5791
    %5835 = vmatprep.subr.mxu0 0.0
    %5836 = vmatpush1.msra.mxu0 %v5792
    %5837 = vmatprep.subr.mxu0 0.0
    %5838 = vmatpush1.msra.mxu0 %v5793
    %5839 = vmatprep.subr.mxu0 0.0
    %5840 = vmatpush1.msra.mxu0 %v5794
    %5841 = vmatprep.subr.mxu0 0.0
    %5842 = vmatpush1.msra.mxu0 %v5795
    %5843 = vmatprep.subr.mxu0 0.0
    %5844 = vmatpush1.msra.mxu0 %v5796
    %5845 = vmatprep.subr.mxu0 0.0
    %5846 = vmatpush1.msra.mxu0 %v5797
    %5847 = vmatprep.subr.mxu0 0.0
    %5848 = vmatpush1.msra.mxu0 %v5798
    %5849 = vmatprep.subr.mxu0 0.0
    %5850 = vmatpush1.msra.mxu0 %v5799
    %5851 = vmatprep.subr.mxu0 0.0
    %5852 = vmatpush1.msra.mxu0 %v5800
    %5853 = vmatprep.subr.mxu0 0.0
    %5854 = vmatpush1.msra.mxu0 %v5801
    %5855 = vmatprep.subr.mxu0 0.0
    %5856 = vmatpush1.msra.mxu0 %v5802
    %5857 = vmatprep.subr.mxu0 0.0
    %5858 = vmatpush1.msra.mxu0 %v5803
    %5859 = vmatprep.subr.mxu0 0.0
    %5860 = vmatpush1.msra.mxu0 %v5804
    %5861 = vmatprep.subr.mxu0 0.0
    %5862 = vmatpush1.msra.mxu0 %v5805
    %5863 = vmatprep.subr.mxu0 0.0
    %5864 = vmatpush1.msra.mxu0 %v5806
    %5865 = vmatprep.subr.mxu0 0.0
    %5866 = vmatpush1.msra.mxu0 %v5807
    %5867 = vmatprep.subr.mxu0 0.0
    %5868 = vmatpush1.msra.mxu0 %v5808
    %5869 = vmatprep.subr.mxu0 0.0
    %5870 = vmatpush1.msra.mxu0 %v5809
    %5871 = vmatprep.subr.mxu0 0.0
    %5872 = vmatpush1.msra.mxu0 %v5810
    %5873 = vmatprep.subr.mxu0 0.0
    %5874 = vmatpush1.msra.mxu0 %v5811
    %5875 = vmatprep.subr.mxu0 0.0
    %5876 = vmatpush1.msra.mxu0 %v5812
    %5877 = vmatprep.subr.mxu0 0.0
    %5878 = vmatpush1.msra.mxu0 %v5813
    %5879 = vmatprep.subr.mxu0 0.0
    %5880 = vmatpush1.msra.mxu0 %v5814
    %5881 = vmatprep.subr.mxu0 0.0
    %5882 = vmatpush1.msra.mxu0 %v5815
    %5883 = vmatprep.subr.mxu0 0.0
    %5884 = vmatpush1.msra.mxu0 %v5816
    %5885 = vmatprep.subr.mxu0 0.0
    %5886 = vmatpush1.msra.mxu0 %v5817
    %5887 = vmatprep.subr.mxu0 0.0
    %5888 = vmatpush1.msra.mxu0 %v5818
    %5889 = vmatprep.subr.mxu0 0.0
    %5890 = vmatpush1.msra.mxu0 %v5819
    %5891 = vmatprep.mubr.f32.mxu0 %v5773
    %5892 = vmatmul.mubr.f32.gmra.mrb[0].mxu0 %v5772
    %v5893 = vpop.f32.mrb[0].mxu0
    %v5894 = vadd.f32 %v5825, %v5893
    %v5895 = vpop.f32.mrb[0].mxu0
    %5896 = vmatprep.mubr.f32.mxu0 %v5775
    %5897 = vmatmul.mubr.f32.gmra.mrb[0].mxu0 %v5774
    %v5898 = vpop.f32.mrb[0].mxu0
    %v5899 = vadd.f32 %v5825, %v5898
    %v5900 = vpop.f32.mrb[0].mxu0
    %5901 = vmatprep.mubr.f32.mxu0 %v5777
    %5902 = vmatmul.mubr.f32.gmra.mrb[0].mxu0 %v5776
    %v5903 = vpop.f32.mrb[0].mxu0
    %v5904 = vadd.f32 %v5825, %v5903
    %v5905 = vpop.f32.mrb[0].mxu0
    %5906 = vmatprep.mubr.f32.mxu0 %v5779
    %5907 = vmatmul.mubr.f32.gmra.mrb[0].mxu0 %v5778
    %v5908 = vpop.f32.mrb[0].mxu0
    %v5909 = vadd.f32 %v5825, %v5908
    %v5910 = vpop.f32.mrb[0].mxu0
    %5911 = vmatprep.mubr.f32.mxu0 %v5781
    %5912 = vmatmul.mubr.f32.gmra.mrb[0].mxu0 %v5780
    %v5913 = vpop.f32.mrb[0].mxu0
    %v5914 = vadd.f32 %v5825, %v5913
    %v5915 = vpop.f32.mrb[0].mxu0
    %5916 = vmatprep.mubr.f32.mxu0 %v5783
    %5917 = vmatmul.mubr.f32.gmra.mrb[0].mxu0 %v5782
    %v5918 = vpop.f32.mrb[0].mxu0
    %v5919 = vadd.f32 %v5825, %v5918
    %v5920 = vpop.f32.mrb[0].mxu0
    %5921 = vmatprep.mubr.f32.mxu0 %v5785
    %5922 = vmatmul.mubr.f32.gmra.mrb[0].mxu0 %v5784
    %v5923 = vpop.f32.mrb[0].mxu0
    %v5924 = vadd.f32 %v5825, %v5923
    %v5925 = vpop.f32.mrb[0].mxu0
    %5926 = vmatprep.mubr.f32.mxu0 %v5787
    %5927 = vmatmul.mubr.f32.gmra.mrb[0].mxu0 %v5786
    %v5928 = vpop.f32.mrb[0].mxu0
    %v5929 = vadd.f32 %v5825, %v5928
    %v5930 = vpop.f32.mrb[0].mxu0
    %5931 = vdwg.mxu0
    %5940 = vrot.lane.b32.xlu0 %v5894, 120
    %v5941 = vpop.permute.xlu0 %5940
    %5942 = vrot.lane.b32.xlu0 %v5899, 120
    %v5943 = vpop.permute.xlu0 %5942
    %5944 = vrot.lane.b32.xlu0 %v5904, 120
    %v5945 = vpop.permute.xlu0 %5944
    %5946 = vrot.lane.b32.xlu0 %v5909, 120
    %v5947 = vpop.permute.xlu0 %5946
    %5948 = vrot.lane.b32.xlu0 %v5914, 120
    %v5949 = vpop.permute.xlu0 %5948
    %5950 = vrot.lane.b32.xlu0 %v5919, 120
    %v5951 = vpop.permute.xlu0 %5950
    %5952 = vrot.lane.b32.xlu0 %v5924, 120
    %v5953 = vpop.permute.xlu0 %5952
    %5954 = vrot.lane.b32.xlu0 %v5929, 120
    %v5955 = vpop.permute.xlu0 %5954
    %5956 = vrot.lane.b32.xlu0 %v5894, 112
    %v5957 = vpop.permute.xlu0 %5956
    %5958 = vrot.lane.b32.xlu0 %v5899, 112
    %v5959 = vpop.permute.xlu0 %5958
    %5960 = vrot.lane.b32.xlu0 %v5904, 112
    %v5961 = vpop.permute.xlu0 %5960
    %5962 = vrot.lane.b32.xlu0 %v5909, 112
    %v5963 = vpop.permute.xlu0 %5962
    %5964 = vrot.lane.b32.xlu0 %v5914, 112
    %v5965 = vpop.permute.xlu0 %5964
    %5966 = vrot.lane.b32.xlu0 %v5919, 112
    %v5967 = vpop.permute.xlu0 %5966
    %5968 = vrot.lane.b32.xlu0 %v5924, 112
    %v5969 = vpop.permute.xlu0 %5968
    %5970 = vrot.lane.b32.xlu0 %v5929, 112
    %v5971 = vpop.permute.xlu0 %5970
    %5972 = vrot.lane.b32.xlu0 %v5894, 104
    %v5973 = vpop.permute.xlu0 %5972
    %5974 = vrot.lane.b32.xlu0 %v5899, 104
    %v5975 = vpop.permute.xlu0 %5974
    %5976 = vrot.lane.b32.xlu0 %v5904, 104
    %v5977 = vpop.permute.xlu0 %5976
    %5978 = vrot.lane.b32.xlu0 %v5909, 104
    %v5979 = vpop.permute.xlu0 %5978
    %5980 = vrot.lane.b32.xlu0 %v5914, 104
    %v5981 = vpop.permute.xlu0 %5980
    %5982 = vrot.lane.b32.xlu0 %v5919, 104
    %v5983 = vpop.permute.xlu0 %5982
    %5984 = vrot.lane.b32.xlu0 %v5924, 104
    %v5985 = vpop.permute.xlu0 %5984
    %5986 = vrot.lane.b32.xlu0 %v5929, 104
    %v5987 = vpop.permute.xlu0 %5986
    %5988 = vrot.lane.b32.xlu0 %v5894, 96
    %v5989 = vpop.permute.xlu0 %5988
    %5990 = vrot.lane.b32.xlu0 %v5899, 96
    %v5991 = vpop.permute.xlu0 %5990
    %5992 = vrot.lane.b32.xlu0 %v5904, 96
    %v5993 = vpop.permute.xlu0 %5992
    %5994 = vrot.lane.b32.xlu0 %v5909, 96
    %v5995 = vpop.permute.xlu0 %5994
    %5996 = vrot.lane.b32.xlu0 %v5914, 96
    %v5997 = vpop.permute.xlu0 %5996
    %5998 = vrot.lane.b32.xlu0 %v5919, 96
    %v5999 = vpop.permute.xlu0 %5998
    %6000 = vrot.lane.b32.xlu0 %v5924, 96
    %v6001 = vpop.permute.xlu0 %6000
    %6002 = vrot.lane.b32.xlu0 %v5929, 96
    %v6003 = vpop.permute.xlu0 %6002
    %v6004 = vsel %vm255, %v5894, 0
    %v6006 = vsel %vm255, %v5899, 0
    %v6008 = vsel %vm255, %v5904, 0
    %v6010 = vsel %vm255, %v5909, 0
    %v6012 = vsel %vm255, %v5914, 0
    %v6014 = vsel %vm255, %v5919, 0
    %v6016 = vsel %vm255, %v5924, 0
    %v6018 = vsel %vm255, %v5929, 0
    %v6020 = vsel %vm255, %v5989, 0
    %v6022 = vsel %vm255, %v5991, 0
    %v6024 = vsel %vm255, %v5993, 0
    %v6026 = vsel %vm255, %v5995, 0
    %v6028 = vsel %vm255, %v5997, 0
    %v6030 = vsel %vm255, %v5999, 0
    %v6032 = vsel %vm255, %v6001, 0
    %v6034 = vsel %vm255, %v6003, 0
    %6036 = vmatprep.subr.mxu0 0.0
    %6037 = vmatpush1.xpose.msra.mxu0 %v6020
    %6038 = vmatprep.subr.mxu0 0.0
    %6039 = vmatpush1.xpose.msra.mxu0 %v6022
    %6040 = vmatprep.subr.mxu0 0.0
    %6041 = vmatpush1.xpose.msra.mxu0 %v6024
    %6042 = vmatprep.subr.mxu0 0.0
    %6043 = vmatpush1.xpose.msra.mxu0 %v6026
    %6044 = vmatprep.subr.mxu0 0.0
    %6045 = vmatpush1.xpose.msra.mxu0 %v6028
    %6046 = vmatprep.subr.mxu0 0.0
    %6047 = vmatpush1.xpose.msra.mxu0 %v6030
    %6048 = vmatprep.subr.mxu0 0.0
    %6049 = vmatpush1.xpose.msra.mxu0 %v6032
    %6050 = vmatprep.subr.mxu0 0.0
    %6051 = vmatpush1.xpose.msra.mxu0 %v6034
    %6052 = vmatprep.subr.mxu0 0.0
    %6053 = vmatpush1.xpose.msra.mxu0 0.0
    %6054 = vmatprep.subr.mxu0 0.0
    %6055 = vmatpush1.xpose.msra.mxu0 0.0
    %6056 = vmatprep.subr.mxu0 0.0
    %6057 = vmatpush1.xpose.msra.mxu0 0.0
    %6058 = vmatprep.subr.mxu0 0.0
    %6059 = vmatpush1.xpose.msra.mxu0 0.0
    %6060 = vmatprep.subr.mxu0 0.0
    %6061 = vmatpush1.xpose.msra.mxu0 0.0
    %6062 = vmatprep.subr.mxu0 0.0
    %6063 = vmatpush1.xpose.msra.mxu0 0.0
    %6064 = vmatprep.subr.mxu0 0.0
    %6065 = vmatpush1.xpose.msra.mxu0 0.0
    %6066 = vmatprep.subr.mxu0 0.0
    %6067 = vmatpush1.xpose.msra.mxu0 0.0
    %6068 = vmatprep.subr.mxu0 0.0
    %6069 = vmatpush1.xpose.msra.mxu0 0.0
    %6070 = vmatprep.subr.mxu0 0.0
    %6071 = vmatpush1.xpose.msra.mxu0 0.0
    %6072 = vmatprep.subr.mxu0 0.0
    %6073 = vmatpush1.xpose.msra.mxu0 0.0
    %6074 = vmatprep.subr.mxu0 0.0
    %6075 = vmatpush1.xpose.msra.mxu0 0.0
    %6076 = vmatprep.subr.mxu0 0.0
    %6077 = vmatpush1.xpose.msra.mxu0 0.0
    %6078 = vmatprep.subr.mxu0 0.0
    %6079 = vmatpush1.xpose.msra.mxu0 0.0
    %6080 = vmatprep.subr.mxu0 0.0
    %6081 = vmatpush1.xpose.msra.mxu0 0.0
    %6082 = vmatprep.subr.mxu0 0.0
    %6083 = vmatpush1.xpose.msra.mxu0 0.0
    %6084 = vmatprep.subr.mxu0 0.0
    %6085 = vmatpush1.xpose.msra.mxu0 0.0
    %6086 = vmatprep.subr.mxu0 0.0
    %6087 = vmatpush1.xpose.msra.mxu0 0.0
    %6088 = vmatprep.subr.mxu0 0.0
    %6089 = vmatpush1.xpose.msra.mxu0 0.0
    %6090 = vmatprep.subr.mxu0 0.0
    %6091 = vmatpush1.xpose.msra.mxu0 0.0
    %6092 = vmatprep.subr.mxu0 0.0
    %6093 = vmatpush1.xpose.msra.mxu0 0.0
    %6094 = vmatprep.subr.mxu0 0.0
    %6095 = vmatpush1.xpose.msra.mxu0 0.0
    %6096 = vmatprep.subr.mxu0 0.0
    %6097 = vmatpush1.xpose.msra.mxu0 0.0
    %6098 = vmatprep.subr.mxu0 0.0
    %6099 = vmatpush1.xpose.msra.mxu0 0.0
    %6100 = vmatprep.mubr.f32.mxu0 0.0
    %6101 = vmatmul.mubr.f32.gmra.mrb[0].mxu0 %v6004
    %v6102 = vpop.f32.mrb[0].mxu0
    %v6103 = vadd.f32 0.0, %v6102
    %v6104 = vpop.f32.mrb[0].mxu0
    %6105 = vmatprep.mubr.f32.mxu0 0.0
    %6106 = vmatmul.mubr.f32.gmra.mrb[0].mxu0 %v6006
    %v6107 = vpop.f32.mrb[0].mxu0
    %v6108 = vadd.f32 0.0, %v6107
    %v6109 = vpop.f32.mrb[0].mxu0
    %6110 = vmatprep.mubr.f32.mxu0 0.0
    %6111 = vmatmul.mubr.f32.gmra.mrb[0].mxu0 %v6008
    %v6112 = vpop.f32.mrb[0].mxu0
    %v6113 = vadd.f32 0.0, %v6112
    %v6114 = vpop.f32.mrb[0].mxu0
    %6115 = vmatprep.mubr.f32.mxu0 0.0
    %6116 = vmatmul.mubr.f32.gmra.mrb[0].mxu0 %v6010
    %v6117 = vpop.f32.mrb[0].mxu0
    %v6118 = vadd.f32 0.0, %v6117
    %v6119 = vpop.f32.mrb[0].mxu0
    %6120 = vmatprep.mubr.f32.mxu0 0.0
    %6121 = vmatmul.mubr.f32.gmra.mrb[0].mxu0 %v6012
    %v6122 = vpop.f32.mrb[0].mxu0
    %v6123 = vadd.f32 0.0, %v6122
    %v6124 = vpop.f32.mrb[0].mxu0
    %6125 = vmatprep.mubr.f32.mxu0 0.0
    %6126 = vmatmul.mubr.f32.gmra.mrb[0].mxu0 %v6014
    %v6127 = vpop.f32.mrb[0].mxu0
    %v6128 = vadd.f32 0.0, %v6127
    %v6129 = vpop.f32.mrb[0].mxu0
    %6130 = vmatprep.mubr.f32.mxu0 0.0
    %6131 = vmatmul.mubr.f32.gmra.mrb[0].mxu0 %v6016
    %v6132 = vpop.f32.mrb[0].mxu0
    %v6133 = vadd.f32 0.0, %v6132
    %v6134 = vpop.f32.mrb[0].mxu0
    %6135 = vmatprep.mubr.f32.mxu0 0.0
    %6136 = vmatmul.mubr.f32.gmra.mrb[0].mxu0 %v6018
    %v6137 = vpop.f32.mrb[0].mxu0
    %v6138 = vadd.f32 0.0, %v6137
    %v6139 = vpop.f32.mrb[0].mxu0
    %6140 = vdwg.mxu0
    %6141 = vrot.lane.b32.xlu0 %v5941, 96
    %v6142 = vpop.permute.xlu0 %6141
    %6143 = vrot.lane.b32.xlu0 %v5943, 96
    %v6144 = vpop.permute.xlu0 %6143
    %6145 = vrot.lane.b32.xlu0 %v5945, 96
    %v6146 = vpop.permute.xlu0 %6145
    %6147 = vrot.lane.b32.xlu0 %v5947, 96
    %v6148 = vpop.permute.xlu0 %6147
    %6149 = vrot.lane.b32.xlu0 %v5949, 96
    %v6150 = vpop.permute.xlu0 %6149
    %6151 = vrot.lane.b32.xlu0 %v5951, 96
    %v6152 = vpop.permute.xlu0 %6151
    %6153 = vrot.lane.b32.xlu0 %v5953, 96
    %v6154 = vpop.permute.xlu0 %6153
    %6155 = vrot.lane.b32.xlu0 %v5955, 96
    %v6156 = vpop.permute.xlu0 %6155
    %v6157 = vsel %vm255, %v5941, 0
    %v6159 = vsel %vm255, %v5943, 0
    %v6161 = vsel %vm255, %v5945, 0
    %v6163 = vsel %vm255, %v5947, 0
    %v6165 = vsel %vm255, %v5949, 0
    %v6167 = vsel %vm255, %v5951, 0
    %v6169 = vsel %vm255, %v5953, 0
    %v6171 = vsel %vm255, %v5955, 0
    %v6173 = vsel %vm255, %v6142, 0
    %v6175 = vsel %vm255, %v6144, 0
    %v6177 = vsel %vm255, %v6146, 0
    %v6179 = vsel %vm255, %v6148, 0
    %v6181 = vsel %vm255, %v6150, 0
    %v6183 = vsel %vm255, %v6152, 0
    %v6185 = vsel %vm255, %v6154, 0
    %v6187 = vsel %vm255, %v6156, 0
    %6189 = vmatprep.subr.mxu0 0.0
    %6190 = vmatpush1.xpose.msra.mxu0 %v6173
    %6191 = vmatprep.subr.mxu0 0.0
    %6192 = vmatpush1.xpose.msra.mxu0 %v6175
    %6193 = vmatprep.subr.mxu0 0.0
    %6194 = vmatpush1.xpose.msra.mxu0 %v6177
    %6195 = vmatprep.subr.mxu0 0.0
    %6196 = vmatpush1.xpose.msra.mxu0 %v6179
    %6197 = vmatprep.subr.mxu0 0.0
    %6198 = vmatpush1.xpose.msra.mxu0 %v6181
    %6199 = vmatprep.subr.mxu0 0.0
    %6200 = vmatpush1.xpose.msra.mxu0 %v6183
    %6201 = vmatprep.subr.mxu0 0.0
    %6202 = vmatpush1.xpose.msra.mxu0 %v6185
    %6203 = vmatprep.subr.mxu0 0.0
    %6204 = vmatpush1.xpose.msra.mxu0 %v6187
    %6205 = vmatprep.subr.mxu0 0.0
    %6206 = vmatpush1.xpose.msra.mxu0 0.0
    %6207 = vmatprep.subr.mxu0 0.0
    %6208 = vmatpush1.xpose.msra.mxu0 0.0
    %6209 = vmatprep.subr.mxu0 0.0
    %6210 = vmatpush1.xpose.msra.mxu0 0.0
    %6211 = vmatprep.subr.mxu0 0.0
    %6212 = vmatpush1.xpose.msra.mxu0 0.0
    %6213 = vmatprep.subr.mxu0 0.0
    %6214 = vmatpush1.xpose.msra.mxu0 0.0
    %6215 = vmatprep.subr.mxu0 0.0
    %6216 = vmatpush1.xpose.msra.mxu0 0.0
    %6217 = vmatprep.subr.mxu0 0.0
    %6218 = vmatpush1.xpose.msra.mxu0 0.0
    %6219 = vmatprep.subr.mxu0 0.0
    %6220 = vmatpush1.xpose.msra.mxu0 0.0
    %6221 = vmatprep.subr.mxu0 0.0
    %6222 = vmatpush1.xpose.msra.mxu0 0.0
    %6223 = vmatprep.subr.mxu0 0.0
    %6224 = vmatpush1.xpose.msra.mxu0 0.0
    %6225 = vmatprep.subr.mxu0 0.0
    %6226 = vmatpush1.xpose.msra.mxu0 0.0
    %6227 = vmatprep.subr.mxu0 0.0
    %6228 = vmatpush1.xpose.msra.mxu0 0.0
    %6229 = vmatprep.subr.mxu0 0.0
    %6230 = vmatpush1.xpose.msra.mxu0 0.0
    %6231 = vmatprep.subr.mxu0 0.0
    %6232 = vmatpush1.xpose.msra.mxu0 0.0
    %6233 = vmatprep.subr.mxu0 0.0
    %6234 = vmatpush1.xpose.msra.mxu0 0.0
    %6235 = vmatprep.subr.mxu0 0.0
    %6236 = vmatpush1.xpose.msra.mxu0 0.0
    %6237 = vmatprep.subr.mxu0 0.0
    %6238 = vmatpush1.xpose.msra.mxu0 0.0
    %6239 = vmatprep.subr.mxu0 0.0
    %6240 = vmatpush1.xpose.msra.mxu0 0.0
    %6241 = vmatprep.subr.mxu0 0.0
    %6242 = vmatpush1.xpose.msra.mxu0 0.0
    %6243 = vmatprep.subr.mxu0 0.0
    %6244 = vmatpush1.xpose.msra.mxu0 0.0
    %6245 = vmatprep.subr.mxu0 0.0
    %6246 = vmatpush1.xpose.msra.mxu0 0.0
    %6247 = vmatprep.subr.mxu0 0.0
    %6248 = vmatpush1.xpose.msra.mxu0 0.0
    %6249 = vmatprep.subr.mxu0 0.0
    %6250 = vmatpush1.xpose.msra.mxu0 0.0
    %6251 = vmatprep.subr.mxu0 0.0
    %6252 = vmatpush1.xpose.msra.mxu0 0.0
    %6253 = vmatprep.mubr.f32.mxu0 0.0
    %6254 = vmatmul.mubr.f32.gmra.mrb[0].mxu0 %v6157
    %v6255 = vpop.f32.mrb[0].mxu0
    %v6256 = vadd.f32 0.0, %v6255
    %v6257 = vpop.f32.mrb[0].mxu0
    %6258 = vmatprep.mubr.f32.mxu0 0.0
    %6259 = vmatmul.mubr.f32.gmra.mrb[0].mxu0 %v6159
    %v6260 = vpop.f32.mrb[0].mxu0
    %v6261 = vadd.f32 0.0, %v6260
    %v6262 = vpop.f32.mrb[0].mxu0
    %6263 = vmatprep.mubr.f32.mxu0 0.0
    %6264 = vmatmul.mubr.f32.gmra.mrb[0].mxu0 %v6161
    %v6265 = vpop.f32.mrb[0].mxu0
    %v6266 = vadd.f32 0.0, %v6265
    %v6267 = vpop.f32.mrb[0].mxu0
    %6268 = vmatprep.mubr.f32.mxu0 0.0
    %6269 = vmatmul.mubr.f32.gmra.mrb[0].mxu0 %v6163
    %v6270 = vpop.f32.mrb[0].mxu0
    %v6271 = vadd.f32 0.0, %v6270
    %v6272 = vpop.f32.mrb[0].mxu0
    %6273 = vmatprep.mubr.f32.mxu0 0.0
    %6274 = vmatmul.mubr.f32.gmra.mrb[0].mxu0 %v6165
    %v6275 = vpop.f32.mrb[0].mxu0
    %v6276 = vadd.f32 0.0, %v6275
    %v6277 = vpop.f32.mrb[0].mxu0
    %6278 = vmatprep.mubr.f32.mxu0 0.0
    %6279 = vmatmul.mubr.f32.gmra.mrb[0].mxu0 %v6167
    %v6280 = vpop.f32.mrb[0].mxu0
    %v6281 = vadd.f32 0.0, %v6280
    %v6282 = vpop.f32.mrb[0].mxu0
    %6283 = vmatprep.mubr.f32.mxu0 0.0
    %6284 = vmatmul.mubr.f32.gmra.mrb[0].mxu0 %v6169
    %v6285 = vpop.f32.mrb[0].mxu0
    %v6286 = vadd.f32 0.0, %v6285
    %v6287 = vpop.f32.mrb[0].mxu0
    %6288 = vmatprep.mubr.f32.mxu0 0.0
    %6289 = vmatmul.mubr.f32.gmra.mrb[0].mxu0 %v6171
    %v6290 = vpop.f32.mrb[0].mxu0
    %v6291 = vadd.f32 0.0, %v6290
    %v6292 = vpop.f32.mrb[0].mxu0
    %6293 = vdwg.mxu0
    %6294 = vrot.lane.b32.xlu0 %v5957, 96
    %v6295 = vpop.permute.xlu0 %6294
    %6296 = vrot.lane.b32.xlu0 %v5959, 96
    %v6297 = vpop.permute.xlu0 %6296
    %6298 = vrot.lane.b32.xlu0 %v5961, 96
    %v6299 = vpop.permute.xlu0 %6298
    %6300 = vrot.lane.b32.xlu0 %v5963, 96
    %v6301 = vpop.permute.xlu0 %6300
    %6302 = vrot.lane.b32.xlu0 %v5965, 96
    %v6303 = vpop.permute.xlu0 %6302
    %6304 = vrot.lane.b32.xlu0 %v5967, 96
    %v6305 = vpop.permute.xlu0 %6304
    %6306 = vrot.lane.b32.xlu0 %v5969, 96
    %v6307 = vpop.permute.xlu0 %6306
    %6308 = vrot.lane.b32.xlu0 %v5971, 96
    %v6309 = vpop.permute.xlu0 %6308
    %v6310 = vsel %vm255, %v5957, 0
    %v6312 = vsel %vm255, %v5959, 0
    %v6314 = vsel %vm255, %v5961, 0
    %v6316 = vsel %vm255, %v5963, 0
    %v6318 = vsel %vm255, %v5965, 0
    %v6320 = vsel %vm255, %v5967, 0
    %v6322 = vsel %vm255, %v5969, 0
    %v6324 = vsel %vm255, %v5971, 0
    %v6326 = vsel %vm255, %v6295, 0
    %v6328 = vsel %vm255, %v6297, 0
    %v6330 = vsel %vm255, %v6299, 0
    %v6332 = vsel %vm255, %v6301, 0
    %v6334 = vsel %vm255, %v6303, 0
    %v6336 = vsel %vm255, %v6305, 0
    %v6338 = vsel %vm255, %v6307, 0
    %v6340 = vsel %vm255, %v6309, 0
    %6342 = vmatprep.subr.mxu0 0.0
    %6343 = vmatpush1.xpose.msra.mxu0 %v6326
    %6344 = vmatprep.subr.mxu0 0.0
    %6345 = vmatpush1.xpose.msra.mxu0 %v6328
    %6346 = vmatprep.subr.mxu0 0.0
    %6347 = vmatpush1.xpose.msra.mxu0 %v6330
    %6348 = vmatprep.subr.mxu0 0.0
    %6349 = vmatpush1.xpose.msra.mxu0 %v6332
    %6350 = vmatprep.subr.mxu0 0.0
    %6351 = vmatpush1.xpose.msra.mxu0 %v6334
    %6352 = vmatprep.subr.mxu0 0.0
    %6353 = vmatpush1.xpose.msra.mxu0 %v6336
    %6354 = vmatprep.subr.mxu0 0.0
    %6355 = vmatpush1.xpose.msra.mxu0 %v6338
    %6356 = vmatprep.subr.mxu0 0.0
    %6357 = vmatpush1.xpose.msra.mxu0 %v6340
    %6358 = vmatprep.subr.mxu0 0.0
    %6359 = vmatpush1.xpose.msra.mxu0 0.0
    %6360 = vmatprep.subr.mxu0 0.0
    %6361 = vmatpush1.xpose.msra.mxu0 0.0
    %6362 = vmatprep.subr.mxu0 0.0
    %6363 = vmatpush1.xpose.msra.mxu0 0.0
    %6364 = vmatprep.subr.mxu0 0.0
    %6365 = vmatpush1.xpose.msra.mxu0 0.0
    %6366 = vmatprep.subr.mxu0 0.0
    %6367 = vmatpush1.xpose.msra.mxu0 0.0
    %6368 = vmatprep.subr.mxu0 0.0
    %6369 = vmatpush1.xpose.msra.mxu0 0.0
    %6370 = vmatprep.subr.mxu0 0.0
    %6371 = vmatpush1.xpose.msra.mxu0 0.0
    %6372 = vmatprep.subr.mxu0 0.0
    %6373 = vmatpush1.xpose.msra.mxu0 0.0
    %6374 = vmatprep.subr.mxu0 0.0
    %6375 = vmatpush1.xpose.msra.mxu0 0.0
    %6376 = vmatprep.subr.mxu0 0.0
    %6377 = vmatpush1.xpose.msra.mxu0 0.0
    %6378 = vmatprep.subr.mxu0 0.0
    %6379 = vmatpush1.xpose.msra.mxu0 0.0
    %6380 = vmatprep.subr.mxu0 0.0
    %6381 = vmatpush1.xpose.msra.mxu0 0.0
    %6382 = vmatprep.subr.mxu0 0.0
    %6383 = vmatpush1.xpose.msra.mxu0 0.0
    %6384 = vmatprep.subr.mxu0 0.0
    %6385 = vmatpush1.xpose.msra.mxu0 0.0
    %6386 = vmatprep.subr.mxu0 0.0
    %6387 = vmatpush1.xpose.msra.mxu0 0.0
    %6388 = vmatprep.subr.mxu0 0.0
    %6389 = vmatpush1.xpose.msra.mxu0 0.0
    %6390 = vmatprep.subr.mxu0 0.0
    %6391 = vmatpush1.xpose.msra.mxu0 0.0
    %6392 = vmatprep.subr.mxu0 0.0
    %6393 = vmatpush1.xpose.msra.mxu0 0.0
    %6394 = vmatprep.subr.mxu0 0.0
    %6395 = vmatpush1.xpose.msra.mxu0 0.0
    %6396 = vmatprep.subr.mxu0 0.0
    %6397 = vmatpush1.xpose.msra.mxu0 0.0
    %6398 = vmatprep.subr.mxu0 0.0
    %6399 = vmatpush1.xpose.msra.mxu0 0.0
    %6400 = vmatprep.subr.mxu0 0.0
    %6401 = vmatpush1.xpose.msra.mxu0 0.0
    %6402 = vmatprep.subr.mxu0 0.0
    %6403 = vmatpush1.xpose.msra.mxu0 0.0
    %6404 = vmatprep.subr.mxu0 0.0
    %6405 = vmatpush1.xpose.msra.mxu0 0.0
    %6406 = vmatprep.mubr.f32.mxu0 0.0
    %6407 = vmatmul.mubr.f32.gmra.mrb[0].mxu0 %v6310
    %v6408 = vpop.f32.mrb[0].mxu0
    %v6409 = vadd.f32 0.0, %v6408
    %v6410 = vpop.f32.mrb[0].mxu0
    %6411 = vmatprep.mubr.f32.mxu0 0.0
    %6412 = vmatmul.mubr.f32.gmra.mrb[0].mxu0 %v6312
    %v6413 = vpop.f32.mrb[0].mxu0
    %v6414 = vadd.f32 0.0, %v6413
    %v6415 = vpop.f32.mrb[0].mxu0
    %6416 = vmatprep.mubr.f32.mxu0 0.0
    %6417 = vmatmul.mubr.f32.gmra.mrb[0].mxu0 %v6314
    %v6418 = vpop.f32.mrb[0].mxu0
    %v6419 = vadd.f32 0.0, %v6418
    %v6420 = vpop.f32.mrb[0].mxu0
    %6421 = vmatprep.mubr.f32.mxu0 0.0
    %6422 = vmatmul.mubr.f32.gmra.mrb[0].mxu0 %v6316
    %v6423 = vpop.f32.mrb[0].mxu0
    %v6424 = vadd.f32 0.0, %v6423
    %v6425 = vpop.f32.mrb[0].mxu0
    %6426 = vmatprep.mubr.f32.mxu0 0.0
    %6427 = vmatmul.mubr.f32.gmra.mrb[0].mxu0 %v6318
    %v6428 = vpop.f32.mrb[0].mxu0
    %v6429 = vadd.f32 0.0, %v6428
    %v6430 = vpop.f32.mrb[0].mxu0
    %6431 = vmatprep.mubr.f32.mxu0 0.0
    %6432 = vmatmul.mubr.f32.gmra.mrb[0].mxu0 %v6320
    %v6433 = vpop.f32.mrb[0].mxu0
    %v6434 = vadd.f32 0.0, %v6433
    %v6435 = vpop.f32.mrb[0].mxu0
    %6436 = vmatprep.mubr.f32.mxu0 0.0
    %6437 = vmatmul.mubr.f32.gmra.mrb[0].mxu0 %v6322
    %v6438 = vpop.f32.mrb[0].mxu0
    %v6439 = vadd.f32 0.0, %v6438
    %v6440 = vpop.f32.mrb[0].mxu0
    %6441 = vmatprep.mubr.f32.mxu0 0.0
    %6442 = vmatmul.mubr.f32.gmra.mrb[0].mxu0 %v6324
    %v6443 = vpop.f32.mrb[0].mxu0
    %v6444 = vadd.f32 0.0, %v6443
    %v6445 = vpop.f32.mrb[0].mxu0
    %6446 = vdwg.mxu0
    %6447 = vrot.lane.b32.xlu0 %v5973, 96
    %v6448 = vpop.permute.xlu0 %6447
    %6449 = vrot.lane.b32.xlu0 %v5975, 96
    %v6450 = vpop.permute.xlu0 %6449
    %6451 = vrot.lane.b32.xlu0 %v5977, 96
    %v6452 = vpop.permute.xlu0 %6451
    %6453 = vrot.lane.b32.xlu0 %v5979, 96
    %v6454 = vpop.permute.xlu0 %6453
    %6455 = vrot.lane.b32.xlu0 %v5981, 96
    %v6456 = vpop.permute.xlu0 %6455
    %6457 = vrot.lane.b32.xlu0 %v5983, 96
    %v6458 = vpop.permute.xlu0 %6457
    %6459 = vrot.lane.b32.xlu0 %v5985, 96
    %v6460 = vpop.permute.xlu0 %6459
    %6461 = vrot.lane.b32.xlu0 %v5987, 96
    %v6462 = vpop.permute.xlu0 %6461
    %v6463 = vsel %vm255, %v5973, 0
    %v6465 = vsel %vm255, %v5975, 0
    %v6467 = vsel %vm255, %v5977, 0
    %v6469 = vsel %vm255, %v5979, 0
    %v6471 = vsel %vm255, %v5981, 0
    %v6473 = vsel %vm255, %v5983, 0
    %v6475 = vsel %vm255, %v5985, 0
    %v6477 = vsel %vm255, %v5987, 0
    %v6479 = vsel %vm255, %v6448, 0
    %v6481 = vsel %vm255, %v6450, 0
    %v6483 = vsel %vm255, %v6452, 0
    %v6485 = vsel %vm255, %v6454, 0
    %v6487 = vsel %vm255, %v6456, 0
    %v6489 = vsel %vm255, %v6458, 0
    %v6491 = vsel %vm255, %v6460, 0
    %v6493 = vsel %vm255, %v6462, 0
    %6495 = vmatprep.subr.mxu0 0.0
    %6496 = vmatpush1.xpose.msra.mxu0 %v6479
    %6497 = vmatprep.subr.mxu0 0.0
    %6498 = vmatpush1.xpose.msra.mxu0 %v6481
    %6499 = vmatprep.subr.mxu0 0.0
    %6500 = vmatpush1.xpose.msra.mxu0 %v6483
    %6501 = vmatprep.subr.mxu0 0.0
    %6502 = vmatpush1.xpose.msra.mxu0 %v6485
    %6503 = vmatprep.subr.mxu0 0.0
    %6504 = vmatpush1.xpose.msra.mxu0 %v6487
    %6505 = vmatprep.subr.mxu0 0.0
    %6506 = vmatpush1.xpose.msra.mxu0 %v6489
    %6507 = vmatprep.subr.mxu0 0.0
    %6508 = vmatpush1.xpose.msra.mxu0 %v6491
    %6509 = vmatprep.subr.mxu0 0.0
    %6510 = vmatpush1.xpose.msra.mxu0 %v6493
    %6511 = vmatprep.subr.mxu0 0.0
    %6512 = vmatpush1.xpose.msra.mxu0 0.0
    %6513 = vmatprep.subr.mxu0 0.0
    %6514 = vmatpush1.xpose.msra.mxu0 0.0
    %6515 = vmatprep.subr.mxu0 0.0
    %6516 = vmatpush1.xpose.msra.mxu0 0.0
    %6517 = vmatprep.subr.mxu0 0.0
    %6518 = vmatpush1.xpose.msra.mxu0 0.0
    %6519 = vmatprep.subr.mxu0 0.0
    %6520 = vmatpush1.xpose.msra.mxu0 0.0
    %6521 = vmatprep.subr.mxu0 0.0
    %6522 = vmatpush1.xpose.msra.mxu0 0.0
    %6523 = vmatprep.subr.mxu0 0.0
    %6524 = vmatpush1.xpose.msra.mxu0 0.0
    %6525 = vmatprep.subr.mxu0 0.0
    %6526 = vmatpush1.xpose.msra.mxu0 0.0
    %6527 = vmatprep.subr.mxu0 0.0
    %6528 = vmatpush1.xpose.msra.mxu0 0.0
    %6529 = vmatprep.subr.mxu0 0.0
    %6530 = vmatpush1.xpose.msra.mxu0 0.0
    %6531 = vmatprep.subr.mxu0 0.0
    %6532 = vmatpush1.xpose.msra.mxu0 0.0
    %6533 = vmatprep.subr.mxu0 0.0
    %6534 = vmatpush1.xpose.msra.mxu0 0.0
    %6535 = vmatprep.subr.mxu0 0.0
    %6536 = vmatpush1.xpose.msra.mxu0 0.0
    %6537 = vmatprep.subr.mxu0 0.0
    %6538 = vmatpush1.xpose.msra.mxu0 0.0
    %6539 = vmatprep.subr.mxu0 0.0
    %6540 = vmatpush1.xpose.msra.mxu0 0.0
    %6541 = vmatprep.subr.mxu0 0.0
    %6542 = vmatpush1.xpose.msra.mxu0 0.0
    %6543 = vmatprep.subr.mxu0 0.0
    %6544 = vmatpush1.xpose.msra.mxu0 0.0
    %6545 = vmatprep.subr.mxu0 0.0
    %6546 = vmatpush1.xpose.msra.mxu0 0.0
    %6547 = vmatprep.subr.mxu0 0.0
    %6548 = vmatpush1.xpose.msra.mxu0 0.0
    %6549 = vmatprep.subr.mxu0 0.0
    %6550 = vmatpush1.xpose.msra.mxu0 0.0
    %6551 = vmatprep.subr.mxu0 0.0
    %6552 = vmatpush1.xpose.msra.mxu0 0.0
    %6553 = vmatprep.subr.mxu0 0.0
    %6554 = vmatpush1.xpose.msra.mxu0 0.0
    %6555 = vmatprep.subr.mxu0 0.0
    %6556 = vmatpush1.xpose.msra.mxu0 0.0
    %6557 = vmatprep.subr.mxu0 0.0
    %6558 = vmatpush1.xpose.msra.mxu0 0.0
    %6559 = vmatprep.mubr.f32.mxu0 0.0
    %6560 = vmatmul.mubr.f32.gmra.mrb[0].mxu0 %v6463
    %v6561 = vpop.f32.mrb[0].mxu0
    %v6562 = vadd.f32 0.0, %v6561
    %v6563 = vpop.f32.mrb[0].mxu0
    %6564 = vmatprep.mubr.f32.mxu0 0.0
    %6565 = vmatmul.mubr.f32.gmra.mrb[0].mxu0 %v6465
    %v6566 = vpop.f32.mrb[0].mxu0
    %v6567 = vadd.f32 0.0, %v6566
    %v6568 = vpop.f32.mrb[0].mxu0
    %6569 = vmatprep.mubr.f32.mxu0 0.0
    %6570 = vmatmul.mubr.f32.gmra.mrb[0].mxu0 %v6467
    %v6571 = vpop.f32.mrb[0].mxu0
    %v6572 = vadd.f32 0.0, %v6571
    %v6573 = vpop.f32.mrb[0].mxu0
    %6574 = vmatprep.mubr.f32.mxu0 0.0
    %6575 = vmatmul.mubr.f32.gmra.mrb[0].mxu0 %v6469
    %v6576 = vpop.f32.mrb[0].mxu0
    %v6577 = vadd.f32 0.0, %v6576
    %v6578 = vpop.f32.mrb[0].mxu0
    %6579 = vmatprep.mubr.f32.mxu0 0.0
    %6580 = vmatmul.mubr.f32.gmra.mrb[0].mxu0 %v6471
    %v6581 = vpop.f32.mrb[0].mxu0
    %v6582 = vadd.f32 0.0, %v6581
    %v6583 = vpop.f32.mrb[0].mxu0
    %6584 = vmatprep.mubr.f32.mxu0 0.0
    %6585 = vmatmul.mubr.f32.gmra.mrb[0].mxu0 %v6473
    %v6586 = vpop.f32.mrb[0].mxu0
    %v6587 = vadd.f32 0.0, %v6586
    %v6588 = vpop.f32.mrb[0].mxu0
    %6589 = vmatprep.mubr.f32.mxu0 0.0
    %6590 = vmatmul.mubr.f32.gmra.mrb[0].mxu0 %v6475
    %v6591 = vpop.f32.mrb[0].mxu0
    %v6592 = vadd.f32 0.0, %v6591
    %v6593 = vpop.f32.mrb[0].mxu0
    %6594 = vmatprep.mubr.f32.mxu0 0.0
    %6595 = vmatmul.mubr.f32.gmra.mrb[0].mxu0 %v6477
    %v6596 = vpop.f32.mrb[0].mxu0
    %v6597 = vadd.f32 0.0, %v6596
    %v6598 = vpop.f32.mrb[0].mxu0
    %6599 = vdwg.mxu0
    %v6600 = vsel %vm3215, %v6103, -inf
    %6601 = vmax.xlane.f32.xlu0 %v6600
    %v6602 = vpop.xlane.xlu0 %6601
    %v6603 = vsel %vm3215, %v6108, -inf
    %6604 = vmax.xlane.f32.xlu0 %v6603
    %v6605 = vpop.xlane.xlu0 %6604
    %v6606 = vsel %vm3215, %v6113, -inf
    %6607 = vmax.xlane.f32.xlu0 %v6606
    %v6608 = vpop.xlane.xlu0 %6607
    %v6609 = vsel %vm3215, %v6118, -inf
    %6610 = vmax.xlane.f32.xlu0 %v6609
    %v6611 = vpop.xlane.xlu0 %6610
    %v6612 = vsel %vm3215, %v6123, -inf
    %6613 = vmax.xlane.f32.xlu0 %v6612
    %v6614 = vpop.xlane.xlu0 %6613
    %v6615 = vsel %vm3215, %v6128, -inf
    %6616 = vmax.xlane.f32.xlu0 %v6615
    %v6617 = vpop.xlane.xlu0 %6616
    %v6618 = vsel %vm3215, %v6133, -inf
    %6619 = vmax.xlane.f32.xlu0 %v6618
    %v6620 = vpop.xlane.xlu0 %6619
    %v6621 = vsel %vm3215, %v6138, -inf
    %6622 = vmax.xlane.f32.xlu0 %v6621
    %v6623 = vpop.xlane.xlu0 %6622
    %v6624 = vsel %vm3215, %v6256, -inf
    %6625 = vmax.xlane.f32.xlu0 %v6624
    %v6626 = vpop.xlane.xlu0 %6625
    %v6627 = vsel %vm3215, %v6261, -inf
    %6628 = vmax.xlane.f32.xlu0 %v6627
    %v6629 = vpop.xlane.xlu0 %6628
    %v6630 = vsel %vm3215, %v6266, -inf
    %6631 = vmax.xlane.f32.xlu0 %v6630
    %v6632 = vpop.xlane.xlu0 %6631
    %v6633 = vsel %vm3215, %v6271, -inf
    %6634 = vmax.xlane.f32.xlu0 %v6633
    %v6635 = vpop.xlane.xlu0 %6634
    %v6636 = vsel %vm3215, %v6276, -inf
    %6637 = vmax.xlane.f32.xlu0 %v6636
    %v6638 = vpop.xlane.xlu0 %6637
    %v6639 = vsel %vm3215, %v6281, -inf
    %6640 = vmax.xlane.f32.xlu0 %v6639
    %v6641 = vpop.xlane.xlu0 %6640
    %v6642 = vsel %vm3215, %v6286, -inf
    %6643 = vmax.xlane.f32.xlu0 %v6642
    %v6644 = vpop.xlane.xlu0 %6643
    %v6645 = vsel %vm3215, %v6291, -inf
    %6646 = vmax.xlane.f32.xlu0 %v6645
    %v6647 = vpop.xlane.xlu0 %6646
    %v6648 = vsel %vm3215, %v6409, -inf
    %6649 = vmax.xlane.f32.xlu0 %v6648
    %v6650 = vpop.xlane.xlu0 %6649
    %v6651 = vsel %vm3215, %v6414, -inf
    %6652 = vmax.xlane.f32.xlu0 %v6651
    %v6653 = vpop.xlane.xlu0 %6652
    %v6654 = vsel %vm3215, %v6419, -inf
    %6655 = vmax.xlane.f32.xlu0 %v6654
    %v6656 = vpop.xlane.xlu0 %6655
    %v6657 = vsel %vm3215, %v6424, -inf
    %6658 = vmax.xlane.f32.xlu0 %v6657
    %v6659 = vpop.xlane.xlu0 %6658
    %v6660 = vsel %vm3215, %v6429, -inf
    %6661 = vmax.xlane.f32.xlu0 %v6660
    %v6662 = vpop.xlane.xlu0 %6661
    %v6663 = vsel %vm3215, %v6434, -inf
    %6664 = vmax.xlane.f32.xlu0 %v6663
    %v6665 = vpop.xlane.xlu0 %6664
    %v6666 = vsel %vm3215, %v6439, -inf
    %6667 = vmax.xlane.f32.xlu0 %v6666
    %v6668 = vpop.xlane.xlu0 %6667
    %v6669 = vsel %vm3215, %v6444, -inf
    %6670 = vmax.xlane.f32.xlu0 %v6669
    %v6671 = vpop.xlane.xlu0 %6670
    %v6672 = vsel %vm3215, %v6562, -inf
    %6673 = vmax.xlane.f32.xlu0 %v6672
    %v6674 = vpop.xlane.xlu0 %6673
    %v6675 = vsel %vm3215, %v6567, -inf
    %6676 = vmax.xlane.f32.xlu0 %v6675
    %v6677 = vpop.xlane.xlu0 %6676
    %v6678 = vsel %vm3215, %v6572, -inf
    %6679 = vmax.xlane.f32.xlu0 %v6678
    %v6680 = vpop.xlane.xlu0 %6679
    %v6681 = vsel %vm3215, %v6577, -inf
    %6682 = vmax.xlane.f32.xlu0 %v6681
    %v6683 = vpop.xlane.xlu0 %6682
    %v6684 = vsel %vm3215, %v6582, -inf
    %6685 = vmax.xlane.f32.xlu0 %v6684
    %v6686 = vpop.xlane.xlu0 %6685
    %v6687 = vsel %vm3215, %v6587, -inf
    %6688 = vmax.xlane.f32.xlu0 %v6687
    %v6689 = vpop.xlane.xlu0 %6688
    %v6690 = vsel %vm3215, %v6592, -inf
    %6691 = vmax.xlane.f32.xlu0 %v6690
    %v6692 = vpop.xlane.xlu0 %6691
    %v6693 = vsel %vm3215, %v6597, -inf
    %6694 = vmax.xlane.f32.xlu0 %v6693
    %v6695 = vpop.xlane.xlu0 %6694
    %v6696 = vsub.f32 %v6103, %v6602
    %v6697 = vsub.f32 %v6108, %v6605
    %v6698 = vsub.f32 %v6113, %v6608
    %v6699 = vsub.f32 %v6118, %v6611
    %v6700 = vsub.f32 %v6123, %v6614
    %v6701 = vsub.f32 %v6128, %v6617
    %v6702 = vsub.f32 %v6133, %v6620
    %v6703 = vsub.f32 %v6138, %v6623
    %v6704 = vsub.f32 %v6256, %v6626
    %v6705 = vsub.f32 %v6261, %v6629
    %v6706 = vsub.f32 %v6266, %v6632
    %v6707 = vsub.f32 %v6271, %v6635
    %v6708 = vsub.f32 %v6276, %v6638
    %v6709 = vsub.f32 %v6281, %v6641
    %v6710 = vsub.f32 %v6286, %v6644
    %v6711 = vsub.f32 %v6291, %v6647
    %v6712 = vsub.f32 %v6409, %v6650
    %v6713 = vsub.f32 %v6414, %v6653
    %v6714 = vsub.f32 %v6419, %v6656
    %v6715 = vsub.f32 %v6424, %v6659
    %v6716 = vsub.f32 %v6429, %v6662
    %v6717 = vsub.f32 %v6434, %v6665
    %v6718 = vsub.f32 %v6439, %v6668
    %v6719 = vsub.f32 %v6444, %v6671
    %v6720 = vsub.f32 %v6562, %v6674
    %v6721 = vsub.f32 %v6567, %v6677
    %v6722 = vsub.f32 %v6572, %v6680
    %v6723 = vsub.f32 %v6577, %v6683
    %v6724 = vsub.f32 %v6582, %v6686
    %v6725 = vsub.f32 %v6587, %v6689
    %v6726 = vsub.f32 %v6592, %v6692
    %v6727 = vsub.f32 %v6597, %v6695
    %v6728 = vmul.f32 %v6696, 1.442695
    %v6729 = vpow.pop %v6728
    %v6730 = vmul.f32 %v6697, 1.442695
    %v6731 = vpow.pop %v6730
    %v6732 = vmul.f32 %v6698, 1.442695
    %v6733 = vpow.pop %v6732
    %v6734 = vmul.f32 %v6699, 1.442695
    %v6735 = vpow.pop %v6734
    %v6736 = vmul.f32 %v6700, 1.442695
    %v6737 = vpow.pop %v6736
    %v6738 = vmul.f32 %v6701, 1.442695
    %v6739 = vpow.pop %v6738
    %v6740 = vmul.f32 %v6702, 1.442695
    %v6741 = vpow.pop %v6740
    %v6742 = vmul.f32 %v6703, 1.442695
    %v6743 = vpow.pop %v6742
    %v6744 = vmul.f32 %v6704, 1.442695
    %v6745 = vpow.pop %v6744
    %v6746 = vmul.f32 %v6705, 1.442695
    %v6747 = vpow.pop %v6746
    %v6748 = vmul.f32 %v6706, 1.442695
    %v6749 = vpow.pop %v6748
    %v6750 = vmul.f32 %v6707, 1.442695
    %v6751 = vpow.pop %v6750
    %v6752 = vmul.f32 %v6708, 1.442695
    %v6753 = vpow.pop %v6752
    %v6754 = vmul.f32 %v6709, 1.442695
    %v6755 = vpow.pop %v6754
    %v6756 = vmul.f32 %v6710, 1.442695
    %v6757 = vpow.pop %v6756
    %v6758 = vmul.f32 %v6711, 1.442695
    %v6759 = vpow.pop %v6758
    %v6760 = vmul.f32 %v6712, 1.442695
    %v6761 = vpow.pop %v6760
    %v6762 = vmul.f32 %v6713, 1.442695
    %v6763 = vpow.pop %v6762
    %v6764 = vmul.f32 %v6714, 1.442695
    %v6765 = vpow.pop %v6764
    %v6766 = vmul.f32 %v6715, 1.442695
    %v6767 = vpow.pop %v6766
    %v6768 = vmul.f32 %v6716, 1.442695
    %v6769 = vpow.pop %v6768
    %v6770 = vmul.f32 %v6717, 1.442695
    %v6771 = vpow.pop %v6770
    %v6772 = vmul.f32 %v6718, 1.442695
    %v6773 = vpow.pop %v6772
    %v6774 = vmul.f32 %v6719, 1.442695
    %v6775 = vpow.pop %v6774
    %v6776 = vmul.f32 %v6720, 1.442695
    %v6777 = vpow.pop %v6776
    %v6778 = vmul.f32 %v6721, 1.442695
    %v6779 = vpow.pop %v6778
    %v6780 = vmul.f32 %v6722, 1.442695
    %v6781 = vpow.pop %v6780
    %v6782 = vmul.f32 %v6723, 1.442695
    %v6783 = vpow.pop %v6782
    %v6784 = vmul.f32 %v6724, 1.442695
    %v6785 = vpow.pop %v6784
    %v6786 = vmul.f32 %v6725, 1.442695
    %v6787 = vpow.pop %v6786
    %v6788 = vmul.f32 %v6726, 1.442695
    %v6789 = vpow.pop %v6788
    %v6790 = vmul.f32 %v6727, 1.442695
    %v6791 = vpow.pop %v6790
    %v6792 = vsel %vm3215, %v6729, 0.0
    %6793 = vadd.xlane.f32.xlu0 %v6792
    %v6794 = vpop.xlane.xlu0 %6793
    %v6795 = vsel %vm3215, %v6731, 0.0
    %6796 = vadd.xlane.f32.xlu0 %v6795
    %v6797 = vpop.xlane.xlu0 %6796
    %v6798 = vsel %vm3215, %v6733, 0.0
    %6799 = vadd.xlane.f32.xlu0 %v6798
    %v6800 = vpop.xlane.xlu0 %6799
    %v6801 = vsel %vm3215, %v6735, 0.0
    %6802 = vadd.xlane.f32.xlu0 %v6801
    %v6803 = vpop.xlane.xlu0 %6802
    %v6804 = vsel %vm3215, %v6737, 0.0
    %6805 = vadd.xlane.f32.xlu0 %v6804
    %v6806 = vpop.xlane.xlu0 %6805
    %v6807 = vsel %vm3215, %v6739, 0.0
    %6808 = vadd.xlane.f32.xlu0 %v6807
    %v6809 = vpop.xlane.xlu0 %6808
    %v6810 = vsel %vm3215, %v6741, 0.0
    %6811 = vadd.xlane.f32.xlu0 %v6810
    %v6812 = vpop.xlane.xlu0 %6811
    %v6813 = vsel %vm3215, %v6743, 0.0
    %6814 = vadd.xlane.f32.xlu0 %v6813
    %v6815 = vpop.xlane.xlu0 %6814
    %v6816 = vsel %vm3215, %v6745, 0.0
    %6817 = vadd.xlane.f32.xlu0 %v6816
    %v6818 = vpop.xlane.xlu0 %6817
    %v6819 = vsel %vm3215, %v6747, 0.0
    %6820 = vadd.xlane.f32.xlu0 %v6819
    %v6821 = vpop.xlane.xlu0 %6820
    %v6822 = vsel %vm3215, %v6749, 0.0
    %6823 = vadd.xlane.f32.xlu0 %v6822
    %v6824 = vpop.xlane.xlu0 %6823
    %v6825 = vsel %vm3215, %v6751, 0.0
    %6826 = vadd.xlane.f32.xlu0 %v6825
    %v6827 = vpop.xlane.xlu0 %6826
    %v6828 = vsel %vm3215, %v6753, 0.0
    %6829 = vadd.xlane.f32.xlu0 %v6828
    %v6830 = vpop.xlane.xlu0 %6829
    %v6831 = vsel %vm3215, %v6755, 0.0
    %6832 = vadd.xlane.f32.xlu0 %v6831
    %v6833 = vpop.xlane.xlu0 %6832
    %v6834 = vsel %vm3215, %v6757, 0.0
    %6835 = vadd.xlane.f32.xlu0 %v6834
    %v6836 = vpop.xlane.xlu0 %6835
    %v6837 = vsel %vm3215, %v6759, 0.0
    %6838 = vadd.xlane.f32.xlu0 %v6837
    %v6839 = vpop.xlane.xlu0 %6838
    %v6840 = vsel %vm3215, %v6761, 0.0
    %6841 = vadd.xlane.f32.xlu0 %v6840
    %v6842 = vpop.xlane.xlu0 %6841
    %v6843 = vsel %vm3215, %v6763, 0.0
    %6844 = vadd.xlane.f32.xlu0 %v6843
    %v6845 = vpop.xlane.xlu0 %6844
    %v6846 = vsel %vm3215, %v6765, 0.0
    %6847 = vadd.xlane.f32.xlu0 %v6846
    %v6848 = vpop.xlane.xlu0 %6847
    %v6849 = vsel %vm3215, %v6767, 0.0
    %6850 = vadd.xlane.f32.xlu0 %v6849
    %v6851 = vpop.xlane.xlu0 %6850
    %v6852 = vsel %vm3215, %v6769, 0.0
    %6853 = vadd.xlane.f32.xlu0 %v6852
    %v6854 = vpop.xlane.xlu0 %6853
    %v6855 = vsel %vm3215, %v6771, 0.0
    %6856 = vadd.xlane.f32.xlu0 %v6855
    %v6857 = vpop.xlane.xlu0 %6856
    %v6858 = vsel %vm3215, %v6773, 0.0
    %6859 = vadd.xlane.f32.xlu0 %v6858
    %v6860 = vpop.xlane.xlu0 %6859
    %v6861 = vsel %vm3215, %v6775, 0.0
    %6862 = vadd.xlane.f32.xlu0 %v6861
    %v6863 = vpop.xlane.xlu0 %6862
    %v6864 = vsel %vm3215, %v6777, 0.0
    %6865 = vadd.xlane.f32.xlu0 %v6864
    %v6866 = vpop.xlane.xlu0 %6865
    %v6867 = vsel %vm3215, %v6779, 0.0
    %6868 = vadd.xlane.f32.xlu0 %v6867
    %v6869 = vpop.xlane.xlu0 %6868
    %v6870 = vsel %vm3215, %v6781, 0.0
    %6871 = vadd.xlane.f32.xlu0 %v6870
    %v6872 = vpop.xlane.xlu0 %6871
    %v6873 = vsel %vm3215, %v6783, 0.0
    %6874 = vadd.xlane.f32.xlu0 %v6873
    %v6875 = vpop.xlane.xlu0 %6874
    %v6876 = vsel %vm3215, %v6785, 0.0
    %6877 = vadd.xlane.f32.xlu0 %v6876
    %v6878 = vpop.xlane.xlu0 %6877
    %v6879 = vsel %vm3215, %v6787, 0.0
    %6880 = vadd.xlane.f32.xlu0 %v6879
    %v6881 = vpop.xlane.xlu0 %6880
    %v6882 = vsel %vm3215, %v6789, 0.0
    %6883 = vadd.xlane.f32.xlu0 %v6882
    %v6884 = vpop.xlane.xlu0 %6883
    %v6885 = vsel %vm3215, %v6791, 0.0
    %6886 = vadd.xlane.f32.xlu0 %v6885
    %v6887 = vpop.xlane.xlu0 %6886
    %v6888 = vrcp.pop %v6794
    %v6889 = vrcp.pop %v6797
    %v6890 = vrcp.pop %v6800
    %v6891 = vrcp.pop %v6803
    %v6892 = vrcp.pop %v6806
    %v6893 = vrcp.pop %v6809
    %v6894 = vrcp.pop %v6812
    %v6895 = vrcp.pop %v6815
    %v6896 = vrcp.pop %v6818
    %v6897 = vrcp.pop %v6821
    %v6898 = vrcp.pop %v6824
    %v6899 = vrcp.pop %v6827
    %v6900 = vrcp.pop %v6830
    %v6901 = vrcp.pop %v6833
    %v6902 = vrcp.pop %v6836
    %v6903 = vrcp.pop %v6839
    %v6904 = vrcp.pop %v6842
    %v6905 = vrcp.pop %v6845
    %v6906 = vrcp.pop %v6848
    %v6907 = vrcp.pop %v6851
    %v6908 = vrcp.pop %v6854
    %v6909 = vrcp.pop %v6857
    %v6910 = vrcp.pop %v6860
    %v6911 = vrcp.pop %v6863
    %v6912 = vrcp.pop %v6866
    %v6913 = vrcp.pop %v6869
    %v6914 = vrcp.pop %v6872
    %v6915 = vrcp.pop %v6875
    %v6916 = vrcp.pop %v6878
    %v6917 = vrcp.pop %v6881
    %v6918 = vrcp.pop %v6884
    %v6919 = vrcp.pop %v6887
    %v6920 = vmul.f32 %v6729, %v6888
    %v6921 = vmul.f32 %v6731, %v6889
    %v6922 = vmul.f32 %v6733, %v6890
    %v6923 = vmul.f32 %v6735, %v6891
    %v6924 = vmul.f32 %v6737, %v6892
    %v6925 = vmul.f32 %v6739, %v6893
    %v6926 = vmul.f32 %v6741, %v6894
    %v6927 = vmul.f32 %v6743, %v6895
    %v6928 = vmul.f32 %v6745, %v6896
    %v6929 = vmul.f32 %v6747, %v6897
    %v6930 = vmul.f32 %v6749, %v6898
    %v6931 = vmul.f32 %v6751, %v6899
    %v6932 = vmul.f32 %v6753, %v6900
    %v6933 = vmul.f32 %v6755, %v6901
    %v6934 = vmul.f32 %v6757, %v6902
    %v6935 = vmul.f32 %v6759, %v6903
    %v6936 = vmul.f32 %v6761, %v6904
    %v6937 = vmul.f32 %v6763, %v6905
    %v6938 = vmul.f32 %v6765, %v6906
    %v6939 = vmul.f32 %v6767, %v6907
    %v6940 = vmul.f32 %v6769, %v6908
    %v6941 = vmul.f32 %v6771, %v6909
    %v6942 = vmul.f32 %v6773, %v6910
    %v6943 = vmul.f32 %v6775, %v6911
    %v6944 = vmul.f32 %v6777, %v6912
    %v6945 = vmul.f32 %v6779, %v6913
    %v6946 = vmul.f32 %v6781, %v6914
    %v6947 = vmul.f32 %v6783, %v6915
    %v6948 = vmul.f32 %v6785, %v6916
    %v6949 = vmul.f32 %v6787, %v6917
    %v6950 = vmul.f32 %v6789, %v6918
    %v6951 = vmul.f32 %v6791, %v6919
    %6952 = vrot.lane.b32.xlu0 %v5894, 64
    %v6953 = vpop.permute.xlu0 %6952
    %6954 = vrot.lane.b32.xlu0 %v5899, 64
    %v6955 = vpop.permute.xlu0 %6954
    %6956 = vrot.lane.b32.xlu0 %v5904, 64
    %v6957 = vpop.permute.xlu0 %6956
    %6958 = vrot.lane.b32.xlu0 %v5909, 64
    %v6959 = vpop.permute.xlu0 %6958
    %6960 = vrot.lane.b32.xlu0 %v5914, 64
    %v6961 = vpop.permute.xlu0 %6960
    %6962 = vrot.lane.b32.xlu0 %v5919, 64
    %v6963 = vpop.permute.xlu0 %6962
    %6964 = vrot.lane.b32.xlu0 %v5924, 64
    %v6965 = vpop.permute.xlu0 %6964
    %6966 = vrot.lane.b32.xlu0 %v5929, 64
    %v6967 = vpop.permute.xlu0 %6966
    %v6977 = vsel %vm3215, %v6920, 0
    %v6980 = vsel %vm3215, %v6921, 0
    %v6983 = vsel %vm3215, %v6922, 0
    %v6986 = vsel %vm3215, %v6923, 0
    %v6989 = vsel %vm3215, %v6924, 0
    %v6992 = vsel %vm3215, %v6925, 0
    %v6995 = vsel %vm3215, %v6926, 0
    %v6998 = vsel %vm3215, %v6927, 0
    %7000 = vmatprep.subr.mxu0 0.0
    %7001 = vmatpush1.msra.mxu0 %v6953
    %7002 = vmatprep.subr.mxu0 0.0
    %7003 = vmatpush1.msra.mxu0 %v6955
    %7004 = vmatprep.subr.mxu0 0.0
    %7005 = vmatpush1.msra.mxu0 %v6957
    %7006 = vmatprep.subr.mxu0 0.0
    %7007 = vmatpush1.msra.mxu0 %v6959
    %7008 = vmatprep.subr.mxu0 0.0
    %7009 = vmatpush1.msra.mxu0 %v6961
    %7010 = vmatprep.subr.mxu0 0.0
    %7011 = vmatpush1.msra.mxu0 %v6963
    %7012 = vmatprep.subr.mxu0 0.0
    %7013 = vmatpush1.msra.mxu0 %v6965
    %7014 = vmatprep.subr.mxu0 0.0
    %7015 = vmatpush1.msra.mxu0 %v6967
    %7016 = vmatprep.subr.mxu0 0.0
    %7017 = vmatpush1.msra.mxu0 0.0
    %7018 = vmatprep.subr.mxu0 0.0
    %7019 = vmatpush1.msra.mxu0 0.0
    %7020 = vmatprep.subr.mxu0 0.0
    %7021 = vmatpush1.msra.mxu0 0.0
    %7022 = vmatprep.subr.mxu0 0.0
    %7023 = vmatpush1.msra.mxu0 0.0
    %7024 = vmatprep.subr.mxu0 0.0
    %7025 = vmatpush1.msra.mxu0 0.0
    %7026 = vmatprep.subr.mxu0 0.0
    %7027 = vmatpush1.msra.mxu0 0.0
    %7028 = vmatprep.subr.mxu0 0.0
    %7029 = vmatpush1.msra.mxu0 0.0
    %7030 = vmatprep.subr.mxu0 0.0
    %7031 = vmatpush1.msra.mxu0 0.0
    %7032 = vmatprep.subr.mxu0 0.0
    %7033 = vmatpush1.msra.mxu0 0.0
    %7034 = vmatprep.subr.mxu0 0.0
    %7035 = vmatpush1.msra.mxu0 0.0
    %7036 = vmatprep.subr.mxu0 0.0
    %7037 = vmatpush1.msra.mxu0 0.0
    %7038 = vmatprep.subr.mxu0 0.0
    %7039 = vmatpush1.msra.mxu0 0.0
    %7040 = vmatprep.subr.mxu0 0.0
    %7041 = vmatpush1.msra.mxu0 0.0
    %7042 = vmatprep.subr.mxu0 0.0
    %7043 = vmatpush1.msra.mxu0 0.0
    %7044 = vmatprep.subr.mxu0 0.0
    %7045 = vmatpush1.msra.mxu0 0.0
    %7046 = vmatprep.subr.mxu0 0.0
    %7047 = vmatpush1.msra.mxu0 0.0
    %7048 = vmatprep.subr.mxu0 0.0
    %7049 = vmatpush1.msra.mxu0 0.0
    %7050 = vmatprep.subr.mxu0 0.0
    %7051 = vmatpush1.msra.mxu0 0.0
    %7052 = vmatprep.subr.mxu0 0.0
    %7053 = vmatpush1.msra.mxu0 0.0
    %7054 = vmatprep.subr.mxu0 0.0
    %7055 = vmatpush1.msra.mxu0 0.0
    %7056 = vmatprep.subr.mxu0 0.0
    %7057 = vmatpush1.msra.mxu0 0.0
    %7058 = vmatprep.subr.mxu0 0.0
    %7059 = vmatpush1.msra.mxu0 0.0
    %7060 = vmatprep.subr.mxu0 0.0
    %7061 = vmatpush1.msra.mxu0 0.0
    %7062 = vmatprep.subr.mxu0 0.0
    %7063 = vmatpush1.msra.mxu0 0.0
    %7064 = vmatprep.mubr.f32.mxu0 0.0
    %7065 = vmatmul.mubr.f32.gmra.mrb[0].mxu0 %v6977
    %v7066 = vpop.f32.mrb[0].mxu0
    %v7067 = vadd.f32 0.0, %v7066
    %v7068 = vpop.f32.mrb[0].mxu0
    %7069 = vmatprep.mubr.f32.mxu0 0.0
    %7070 = vmatmul.mubr.f32.gmra.mrb[0].mxu0 %v6980
    %v7071 = vpop.f32.mrb[0].mxu0
    %v7072 = vadd.f32 0.0, %v7071
    %v7073 = vpop.f32.mrb[0].mxu0
    %7074 = vmatprep.mubr.f32.mxu0 0.0
    %7075 = vmatmul.mubr.f32.gmra.mrb[0].mxu0 %v6983
    %v7076 = vpop.f32.mrb[0].mxu0
    %v7077 = vadd.f32 0.0, %v7076
    %v7078 = vpop.f32.mrb[0].mxu0
    %7079 = vmatprep.mubr.f32.mxu0 0.0
    %7080 = vmatmul.mubr.f32.gmra.mrb[0].mxu0 %v6986
    %v7081 = vpop.f32.mrb[0].mxu0
    %v7082 = vadd.f32 0.0, %v7081
    %v7083 = vpop.f32.mrb[0].mxu0
    %7084 = vmatprep.mubr.f32.mxu0 0.0
    %7085 = vmatmul.mubr.f32.gmra.mrb[0].mxu0 %v6989
    %v7086 = vpop.f32.mrb[0].mxu0
    %v7087 = vadd.f32 0.0, %v7086
    %v7088 = vpop.f32.mrb[0].mxu0
    %7089 = vmatprep.mubr.f32.mxu0 0.0
    %7090 = vmatmul.mubr.f32.gmra.mrb[0].mxu0 %v6992
    %v7091 = vpop.f32.mrb[0].mxu0
    %v7092 = vadd.f32 0.0, %v7091
    %v7093 = vpop.f32.mrb[0].mxu0
    %7094 = vmatprep.mubr.f32.mxu0 0.0
    %7095 = vmatmul.mubr.f32.gmra.mrb[0].mxu0 %v6995
    %v7096 = vpop.f32.mrb[0].mxu0
    %v7097 = vadd.f32 0.0, %v7096
    %v7098 = vpop.f32.mrb[0].mxu0
    %7099 = vmatprep.mubr.f32.mxu0 0.0
    %7100 = vmatmul.mubr.f32.gmra.mrb[0].mxu0 %v6998
    %v7101 = vpop.f32.mrb[0].mxu0
    %v7102 = vadd.f32 0.0, %v7101
    %v7103 = vpop.f32.mrb[0].mxu0
    %7104 = vdwg.mxu0
    %7105 = vrot.lane.b32.xlu0 %v5941, 64
    %v7106 = vpop.permute.xlu0 %7105
    %7107 = vrot.lane.b32.xlu0 %v5943, 64
    %v7108 = vpop.permute.xlu0 %7107
    %7109 = vrot.lane.b32.xlu0 %v5945, 64
    %v7110 = vpop.permute.xlu0 %7109
    %7111 = vrot.lane.b32.xlu0 %v5947, 64
    %v7112 = vpop.permute.xlu0 %7111
    %7113 = vrot.lane.b32.xlu0 %v5949, 64
    %v7114 = vpop.permute.xlu0 %7113
    %7115 = vrot.lane.b32.xlu0 %v5951, 64
    %v7116 = vpop.permute.xlu0 %7115
    %7117 = vrot.lane.b32.xlu0 %v5953, 64
    %v7118 = vpop.permute.xlu0 %7117
    %7119 = vrot.lane.b32.xlu0 %v5955, 64
    %v7120 = vpop.permute.xlu0 %7119
    %v7130 = vsel %vm3215, %v6928, 0
    %v7133 = vsel %vm3215, %v6929, 0
    %v7136 = vsel %vm3215, %v6930, 0
    %v7139 = vsel %vm3215, %v6931, 0
    %v7142 = vsel %vm3215, %v6932, 0
    %v7145 = vsel %vm3215, %v6933, 0
    %v7148 = vsel %vm3215, %v6934, 0
    %v7151 = vsel %vm3215, %v6935, 0
    %7153 = vmatprep.subr.mxu0 0.0
    %7154 = vmatpush1.msra.mxu0 %v7106
    %7155 = vmatprep.subr.mxu0 0.0
    %7156 = vmatpush1.msra.mxu0 %v7108
    %7157 = vmatprep.subr.mxu0 0.0
    %7158 = vmatpush1.msra.mxu0 %v7110
    %7159 = vmatprep.subr.mxu0 0.0
    %7160 = vmatpush1.msra.mxu0 %v7112
    %7161 = vmatprep.subr.mxu0 0.0
    %7162 = vmatpush1.msra.mxu0 %v7114
    %7163 = vmatprep.subr.mxu0 0.0
    %7164 = vmatpush1.msra.mxu0 %v7116
    %7165 = vmatprep.subr.mxu0 0.0
    %7166 = vmatpush1.msra.mxu0 %v7118
    %7167 = vmatprep.subr.mxu0 0.0
    %7168 = vmatpush1.msra.mxu0 %v7120
    %7169 = vmatprep.subr.mxu0 0.0
    %7170 = vmatpush1.msra.mxu0 0.0
    %7171 = vmatprep.subr.mxu0 0.0
    %7172 = vmatpush1.msra.mxu0 0.0
    %7173 = vmatprep.subr.mxu0 0.0
    %7174 = vmatpush1.msra.mxu0 0.0
    %7175 = vmatprep.subr.mxu0 0.0
    %7176 = vmatpush1.msra.mxu0 0.0
    %7177 = vmatprep.subr.mxu0 0.0
    %7178 = vmatpush1.msra.mxu0 0.0
    %7179 = vmatprep.subr.mxu0 0.0
    %7180 = vmatpush1.msra.mxu0 0.0
    %7181 = vmatprep.subr.mxu0 0.0
    %7182 = vmatpush1.msra.mxu0 0.0
    %7183 = vmatprep.subr.mxu0 0.0
    %7184 = vmatpush1.msra.mxu0 0.0
    %7185 = vmatprep.subr.mxu0 0.0
    %7186 = vmatpush1.msra.mxu0 0.0
    %7187 = vmatprep.subr.mxu0 0.0
    %7188 = vmatpush1.msra.mxu0 0.0
    %7189 = vmatprep.subr.mxu0 0.0
    %7190 = vmatpush1.msra.mxu0 0.0
    %7191 = vmatprep.subr.mxu0 0.0
    %7192 = vmatpush1.msra.mxu0 0.0
    %7193 = vmatprep.subr.mxu0 0.0
    %7194 = vmatpush1.msra.mxu0 0.0
    %7195 = vmatprep.subr.mxu0 0.0
    %7196 = vmatpush1.msra.mxu0 0.0
    %7197 = vmatprep.subr.mxu0 0.0
    %7198 = vmatpush1.msra.mxu0 0.0
    %7199 = vmatprep.subr.mxu0 0.0
    %7200 = vmatpush1.msra.mxu0 0.0
    %7201 = vmatprep.subr.mxu0 0.0
    %7202 = vmatpush1.msra.mxu0 0.0
    %7203 = vmatprep.subr.mxu0 0.0
    %7204 = vmatpush1.msra.mxu0 0.0
    %7205 = vmatprep.subr.mxu0 0.0
    %7206 = vmatpush1.msra.mxu0 0.0
    %7207 = vmatprep.subr.mxu0 0.0
    %7208 = vmatpush1.msra.mxu0 0.0
    %7209 = vmatprep.subr.mxu0 0.0
    %7210 = vmatpush1.msra.mxu0 0.0
    %7211 = vmatprep.subr.mxu0 0.0
    %7212 = vmatpush1.msra.mxu0 0.0
    %7213 = vmatprep.subr.mxu0 0.0
    %7214 = vmatpush1.msra.mxu0 0.0
    %7215 = vmatprep.subr.mxu0 0.0
    %7216 = vmatpush1.msra.mxu0 0.0
    %7217 = vmatprep.mubr.f32.mxu0 0.0
    %7218 = vmatmul.mubr.f32.gmra.mrb[0].mxu0 %v7130
    %v7219 = vpop.f32.mrb[0].mxu0
    %v7220 = vadd.f32 0.0, %v7219
    %v7221 = vpop.f32.mrb[0].mxu0
    %7222 = vmatprep.mubr.f32.mxu0 0.0
    %7223 = vmatmul.mubr.f32.gmra.mrb[0].mxu0 %v7133
    %v7224 = vpop.f32.mrb[0].mxu0
    %v7225 = vadd.f32 0.0, %v7224
    %v7226 = vpop.f32.mrb[0].mxu0
    %7227 = vmatprep.mubr.f32.mxu0 0.0
    %7228 = vmatmul.mubr.f32.gmra.mrb[0].mxu0 %v7136
    %v7229 = vpop.f32.mrb[0].mxu0
    %v7230 = vadd.f32 0.0, %v7229
    %v7231 = vpop.f32.mrb[0].mxu0
    %7232 = vmatprep.mubr.f32.mxu0 0.0
    %7233 = vmatmul.mubr.f32.gmra.mrb[0].mxu0 %v7139
    %v7234 = vpop.f32.mrb[0].mxu0
    %v7235 = vadd.f32 0.0, %v7234
    %v7236 = vpop.f32.mrb[0].mxu0
    %7237 = vmatprep.mubr.f32.mxu0 0.0
    %7238 = vmatmul.mubr.f32.gmra.mrb[0].mxu0 %v7142
    %v7239 = vpop.f32.mrb[0].mxu0
    %v7240 = vadd.f32 0.0, %v7239
    %v7241 = vpop.f32.mrb[0].mxu0
    %7242 = vmatprep.mubr.f32.mxu0 0.0
    %7243 = vmatmul.mubr.f32.gmra.mrb[0].mxu0 %v7145
    %v7244 = vpop.f32.mrb[0].mxu0
    %v7245 = vadd.f32 0.0, %v7244
    %v7246 = vpop.f32.mrb[0].mxu0
    %7247 = vmatprep.mubr.f32.mxu0 0.0
    %7248 = vmatmul.mubr.f32.gmra.mrb[0].mxu0 %v7148
    %v7249 = vpop.f32.mrb[0].mxu0
    %v7250 = vadd.f32 0.0, %v7249
    %v7251 = vpop.f32.mrb[0].mxu0
    %7252 = vmatprep.mubr.f32.mxu0 0.0
    %7253 = vmatmul.mubr.f32.gmra.mrb[0].mxu0 %v7151
    %v7254 = vpop.f32.mrb[0].mxu0
    %v7255 = vadd.f32 0.0, %v7254
    %v7256 = vpop.f32.mrb[0].mxu0
    %7257 = vdwg.mxu0
    %7258 = vrot.lane.b32.xlu0 %v5957, 64
    %v7259 = vpop.permute.xlu0 %7258
    %7260 = vrot.lane.b32.xlu0 %v5959, 64
    %v7261 = vpop.permute.xlu0 %7260
    %7262 = vrot.lane.b32.xlu0 %v5961, 64
    %v7263 = vpop.permute.xlu0 %7262
    %7264 = vrot.lane.b32.xlu0 %v5963, 64
    %v7265 = vpop.permute.xlu0 %7264
    %7266 = vrot.lane.b32.xlu0 %v5965, 64
    %v7267 = vpop.permute.xlu0 %7266
    %7268 = vrot.lane.b32.xlu0 %v5967, 64
    %v7269 = vpop.permute.xlu0 %7268
    %7270 = vrot.lane.b32.xlu0 %v5969, 64
    %v7271 = vpop.permute.xlu0 %7270
    %7272 = vrot.lane.b32.xlu0 %v5971, 64
    %v7273 = vpop.permute.xlu0 %7272
    %v7283 = vsel %vm3215, %v6936, 0
    %v7286 = vsel %vm3215, %v6937, 0
    %v7289 = vsel %vm3215, %v6938, 0
    %v7292 = vsel %vm3215, %v6939, 0
    %v7295 = vsel %vm3215, %v6940, 0
    %v7298 = vsel %vm3215, %v6941, 0
    %v7301 = vsel %vm3215, %v6942, 0
    %v7304 = vsel %vm3215, %v6943, 0
    %7306 = vmatprep.subr.mxu0 0.0
    %7307 = vmatpush1.msra.mxu0 %v7259
    %7308 = vmatprep.subr.mxu0 0.0
    %7309 = vmatpush1.msra.mxu0 %v7261
    %7310 = vmatprep.subr.mxu0 0.0
    %7311 = vmatpush1.msra.mxu0 %v7263
    %7312 = vmatprep.subr.mxu0 0.0
    %7313 = vmatpush1.msra.mxu0 %v7265
    %7314 = vmatprep.subr.mxu0 0.0
    %7315 = vmatpush1.msra.mxu0 %v7267
    %7316 = vmatprep.subr.mxu0 0.0
    %7317 = vmatpush1.msra.mxu0 %v7269
    %7318 = vmatprep.subr.mxu0 0.0
    %7319 = vmatpush1.msra.mxu0 %v7271
    %7320 = vmatprep.subr.mxu0 0.0
    %7321 = vmatpush1.msra.mxu0 %v7273
    %7322 = vmatprep.subr.mxu0 0.0
    %7323 = vmatpush1.msra.mxu0 0.0
    %7324 = vmatprep.subr.mxu0 0.0
    %7325 = vmatpush1.msra.mxu0 0.0
    %7326 = vmatprep.subr.mxu0 0.0
    %7327 = vmatpush1.msra.mxu0 0.0
    %7328 = vmatprep.subr.mxu0 0.0
    %7329 = vmatpush1.msra.mxu0 0.0
    %7330 = vmatprep.subr.mxu0 0.0
    %7331 = vmatpush1.msra.mxu0 0.0
    %7332 = vmatprep.subr.mxu0 0.0
    %7333 = vmatpush1.msra.mxu0 0.0
    %7334 = vmatprep.subr.mxu0 0.0
    %7335 = vmatpush1.msra.mxu0 0.0
    %7336 = vmatprep.subr.mxu0 0.0
    %7337 = vmatpush1.msra.mxu0 0.0
    %7338 = vmatprep.subr.mxu0 0.0
    %7339 = vmatpush1.msra.mxu0 0.0
    %7340 = vmatprep.subr.mxu0 0.0
    %7341 = vmatpush1.msra.mxu0 0.0
    %7342 = vmatprep.subr.mxu0 0.0
    %7343 = vmatpush1.msra.mxu0 0.0
    %7344 = vmatprep.subr.mxu0 0.0
    %7345 = vmatpush1.msra.mxu0 0.0
    %7346 = vmatprep.subr.mxu0 0.0
    %7347 = vmatpush1.msra.mxu0 0.0
    %7348 = vmatprep.subr.mxu0 0.0
    %7349 = vmatpush1.msra.mxu0 0.0
    %7350 = vmatprep.subr.mxu0 0.0
    %7351 = vmatpush1.msra.mxu0 0.0
    %7352 = vmatprep.subr.mxu0 0.0
    %7353 = vmatpush1.msra.mxu0 0.0
    %7354 = vmatprep.subr.mxu0 0.0
    %7355 = vmatpush1.msra.mxu0 0.0
    %7356 = vmatprep.subr.mxu0 0.0
    %7357 = vmatpush1.msra.mxu0 0.0
    %7358 = vmatprep.subr.mxu0 0.0
    %7359 = vmatpush1.msra.mxu0 0.0
    %7360 = vmatprep.subr.mxu0 0.0
    %7361 = vmatpush1.msra.mxu0 0.0
    %7362 = vmatprep.subr.mxu0 0.0
    %7363 = vmatpush1.msra.mxu0 0.0
    %7364 = vmatprep.subr.mxu0 0.0
    %7365 = vmatpush1.msra.mxu0 0.0
    %7366 = vmatprep.subr.mxu0 0.0
    %7367 = vmatpush1.msra.mxu0 0.0
    %7368 = vmatprep.subr.mxu0 0.0
    %7369 = vmatpush1.msra.mxu0 0.0
    %7370 = vmatprep.mubr.f32.mxu0 0.0
    %7371 = vmatmul.mubr.f32.gmra.mrb[0].mxu0 %v7283
    %v7372 = vpop.f32.mrb[0].mxu0
    %v7373 = vadd.f32 0.0, %v7372
    %v7374 = vpop.f32.mrb[0].mxu0
    %7375 = vmatprep.mubr.f32.mxu0 0.0
    %7376 = vmatmul.mubr.f32.gmra.mrb[0].mxu0 %v7286
    %v7377 = vpop.f32.mrb[0].mxu0
    %v7378 = vadd.f32 0.0, %v7377
    %v7379 = vpop.f32.mrb[0].mxu0
    %7380 = vmatprep.mubr.f32.mxu0 0.0
    %7381 = vmatmul.mubr.f32.gmra.mrb[0].mxu0 %v7289
    %v7382 = vpop.f32.mrb[0].mxu0
    %v7383 = vadd.f32 0.0, %v7382
    %v7384 = vpop.f32.mrb[0].mxu0
    %7385 = vmatprep.mubr.f32.mxu0 0.0
    %7386 = vmatmul.mubr.f32.gmra.mrb[0].mxu0 %v7292
    %v7387 = vpop.f32.mrb[0].mxu0
    %v7388 = vadd.f32 0.0, %v7387
    %v7389 = vpop.f32.mrb[0].mxu0
    %7390 = vmatprep.mubr.f32.mxu0 0.0
    %7391 = vmatmul.mubr.f32.gmra.mrb[0].mxu0 %v7295
    %v7392 = vpop.f32.mrb[0].mxu0
    %v7393 = vadd.f32 0.0, %v7392
    %v7394 = vpop.f32.mrb[0].mxu0
    %7395 = vmatprep.mubr.f32.mxu0 0.0
    %7396 = vmatmul.mubr.f32.gmra.mrb[0].mxu0 %v7298
    %v7397 = vpop.f32.mrb[0].mxu0
    %v7398 = vadd.f32 0.0, %v7397
    %v7399 = vpop.f32.mrb[0].mxu0
    %7400 = vmatprep.mubr.f32.mxu0 0.0
    %7401 = vmatmul.mubr.f32.gmra.mrb[0].mxu0 %v7301
    %v7402 = vpop.f32.mrb[0].mxu0
    %v7403 = vadd.f32 0.0, %v7402
    %v7404 = vpop.f32.mrb[0].mxu0
    %7405 = vmatprep.mubr.f32.mxu0 0.0
    %7406 = vmatmul.mubr.f32.gmra.mrb[0].mxu0 %v7304
    %v7407 = vpop.f32.mrb[0].mxu0
    %v7408 = vadd.f32 0.0, %v7407
    %v7409 = vpop.f32.mrb[0].mxu0
    %7410 = vdwg.mxu0
    %7411 = vrot.lane.b32.xlu0 %v5973, 64
    %v7412 = vpop.permute.xlu0 %7411
    %7413 = vrot.lane.b32.xlu0 %v5975, 64
    %v7414 = vpop.permute.xlu0 %7413
    %7415 = vrot.lane.b32.xlu0 %v5977, 64
    %v7416 = vpop.permute.xlu0 %7415
    %7417 = vrot.lane.b32.xlu0 %v5979, 64
    %v7418 = vpop.permute.xlu0 %7417
    %7419 = vrot.lane.b32.xlu0 %v5981, 64
    %v7420 = vpop.permute.xlu0 %7419
    %7421 = vrot.lane.b32.xlu0 %v5983, 64
    %v7422 = vpop.permute.xlu0 %7421
    %7423 = vrot.lane.b32.xlu0 %v5985, 64
    %v7424 = vpop.permute.xlu0 %7423
    %7425 = vrot.lane.b32.xlu0 %v5987, 64
    %v7426 = vpop.permute.xlu0 %7425
    %v7436 = vsel %vm3215, %v6944, 0
    %v7439 = vsel %vm3215, %v6945, 0
    %v7442 = vsel %vm3215, %v6946, 0
    %v7445 = vsel %vm3215, %v6947, 0
    %v7448 = vsel %vm3215, %v6948, 0
    %v7451 = vsel %vm3215, %v6949, 0
    %v7454 = vsel %vm3215, %v6950, 0
    %v7457 = vsel %vm3215, %v6951, 0
    %7459 = vmatprep.subr.mxu0 0.0
    %7460 = vmatpush1.msra.mxu0 %v7412
    %7461 = vmatprep.subr.mxu0 0.0
    %7462 = vmatpush1.msra.mxu0 %v7414
    %7463 = vmatprep.subr.mxu0 0.0
    %7464 = vmatpush1.msra.mxu0 %v7416
    %7465 = vmatprep.subr.mxu0 0.0
    %7466 = vmatpush1.msra.mxu0 %v7418
    %7467 = vmatprep.subr.mxu0 0.0
    %7468 = vmatpush1.msra.mxu0 %v7420
    %7469 = vmatprep.subr.mxu0 0.0
    %7470 = vmatpush1.msra.mxu0 %v7422
    %7471 = vmatprep.subr.mxu0 0.0
    %7472 = vmatpush1.msra.mxu0 %v7424
    %7473 = vmatprep.subr.mxu0 0.0
    %7474 = vmatpush1.msra.mxu0 %v7426
    %7475 = vmatprep.subr.mxu0 0.0
    %7476 = vmatpush1.msra.mxu0 0.0
    %7477 = vmatprep.subr.mxu0 0.0
    %7478 = vmatpush1.msra.mxu0 0.0
    %7479 = vmatprep.subr.mxu0 0.0
    %7480 = vmatpush1.msra.mxu0 0.0
    %7481 = vmatprep.subr.mxu0 0.0
    %7482 = vmatpush1.msra.mxu0 0.0
    %7483 = vmatprep.subr.mxu0 0.0
    %7484 = vmatpush1.msra.mxu0 0.0
    %7485 = vmatprep.subr.mxu0 0.0
    %7486 = vmatpush1.msra.mxu0 0.0
    %7487 = vmatprep.subr.mxu0 0.0
    %7488 = vmatpush1.msra.mxu0 0.0
    %7489 = vmatprep.subr.mxu0 0.0
    %7490 = vmatpush1.msra.mxu0 0.0
    %7491 = vmatprep.subr.mxu0 0.0
    %7492 = vmatpush1.msra.mxu0 0.0
    %7493 = vmatprep.subr.mxu0 0.0
    %7494 = vmatpush1.msra.mxu0 0.0
    %7495 = vmatprep.subr.mxu0 0.0
    %7496 = vmatpush1.msra.mxu0 0.0
    %7497 = vmatprep.subr.mxu0 0.0
    %7498 = vmatpush1.msra.mxu0 0.0
    %7499 = vmatprep.subr.mxu0 0.0
    %7500 = vmatpush1.msra.mxu0 0.0
    %7501 = vmatprep.subr.mxu0 0.0
    %7502 = vmatpush1.msra.mxu0 0.0
    %7503 = vmatprep.subr.mxu0 0.0
    %7504 = vmatpush1.msra.mxu0 0.0
    %7505 = vmatprep.subr.mxu0 0.0
    %7506 = vmatpush1.msra.mxu0 0.0
    %7507 = vmatprep.subr.mxu0 0.0
    %7508 = vmatpush1.msra.mxu0 0.0
    %7509 = vmatprep.subr.mxu0 0.0
    %7510 = vmatpush1.msra.mxu0 0.0
    %7511 = vmatprep.subr.mxu0 0.0
    %7512 = vmatpush1.msra.mxu0 0.0
    %7513 = vmatprep.subr.mxu0 0.0
    %7514 = vmatpush1.msra.mxu0 0.0
    %7515 = vmatprep.subr.mxu0 0.0
    %7516 = vmatpush1.msra.mxu0 0.0
    %7517 = vmatprep.subr.mxu0 0.0
    %7518 = vmatpush1.msra.mxu0 0.0
    %7519 = vmatprep.subr.mxu0 0.0
    %7520 = vmatpush1.msra.mxu0 0.0
    %7521 = vmatprep.subr.mxu0 0.0
    %7522 = vmatpush1.msra.mxu0 0.0
    %7523 = vmatprep.mubr.f32.mxu0 0.0
    %7524 = vmatmul.mubr.f32.gmra.mrb[0].mxu0 %v7436
    %v7525 = vpop.f32.mrb[0].mxu0
    %v7526 = vadd.f32 0.0, %v7525
    %v7527 = vpop.f32.mrb[0].mxu0
    %7528 = vmatprep.mubr.f32.mxu0 0.0
    %7529 = vmatmul.mubr.f32.gmra.mrb[0].mxu0 %v7439
    %v7530 = vpop.f32.mrb[0].mxu0
    %v7531 = vadd.f32 0.0, %v7530
    %v7532 = vpop.f32.mrb[0].mxu0
    %7533 = vmatprep.mubr.f32.mxu0 0.0
    %7534 = vmatmul.mubr.f32.gmra.mrb[0].mxu0 %v7442
    %v7535 = vpop.f32.mrb[0].mxu0
    %v7536 = vadd.f32 0.0, %v7535
    %v7537 = vpop.f32.mrb[0].mxu0
    %7538 = vmatprep.mubr.f32.mxu0 0.0
    %7539 = vmatmul.mubr.f32.gmra.mrb[0].mxu0 %v7445
    %v7540 = vpop.f32.mrb[0].mxu0
    %v7541 = vadd.f32 0.0, %v7540
    %v7542 = vpop.f32.mrb[0].mxu0
    %7543 = vmatprep.mubr.f32.mxu0 0.0
    %7544 = vmatmul.mubr.f32.gmra.mrb[0].mxu0 %v7448
    %v7545 = vpop.f32.mrb[0].mxu0
    %v7546 = vadd.f32 0.0, %v7545
    %v7547 = vpop.f32.mrb[0].mxu0
    %7548 = vmatprep.mubr.f32.mxu0 0.0
    %7549 = vmatmul.mubr.f32.gmra.mrb[0].mxu0 %v7451
    %v7550 = vpop.f32.mrb[0].mxu0
    %v7551 = vadd.f32 0.0, %v7550
    %v7552 = vpop.f32.mrb[0].mxu0
    %7553 = vmatprep.mubr.f32.mxu0 0.0
    %7554 = vmatmul.mubr.f32.gmra.mrb[0].mxu0 %v7454
    %v7555 = vpop.f32.mrb[0].mxu0
    %v7556 = vadd.f32 0.0, %v7555
    %v7557 = vpop.f32.mrb[0].mxu0
    %7558 = vmatprep.mubr.f32.mxu0 0.0
    %7559 = vmatmul.mubr.f32.gmra.mrb[0].mxu0 %v7457
    %v7560 = vpop.f32.mrb[0].mxu0
    %v7561 = vadd.f32 0.0, %v7560
    %v7562 = vpop.f32.mrb[0].mxu0
    %7563 = vdwg.mxu0
    %7572 = vrot.lane.b32.xlu0 %v7220, 8
    %v7573 = vpop.permute.xlu0 %7572
    %7574 = vrot.lane.b32.xlu0 %v7225, 8
    %v7575 = vpop.permute.xlu0 %7574
    %7576 = vrot.lane.b32.xlu0 %v7230, 8
    %v7577 = vpop.permute.xlu0 %7576
    %7578 = vrot.lane.b32.xlu0 %v7235, 8
    %v7579 = vpop.permute.xlu0 %7578
    %7580 = vrot.lane.b32.xlu0 %v7240, 8
    %v7581 = vpop.permute.xlu0 %7580
    %7582 = vrot.lane.b32.xlu0 %v7245, 8
    %v7583 = vpop.permute.xlu0 %7582
    %7584 = vrot.lane.b32.xlu0 %v7250, 8
    %v7585 = vpop.permute.xlu0 %7584
    %7586 = vrot.lane.b32.xlu0 %v7255, 8
    %v7587 = vpop.permute.xlu0 %7586
    %7604 = vrot.lane.b32.xlu0 %v7373, 16
    %v7605 = vpop.permute.xlu0 %7604
    %7606 = vrot.lane.b32.xlu0 %v7378, 16
    %v7607 = vpop.permute.xlu0 %7606
    %7608 = vrot.lane.b32.xlu0 %v7383, 16
    %v7609 = vpop.permute.xlu0 %7608
    %7610 = vrot.lane.b32.xlu0 %v7388, 16
    %v7611 = vpop.permute.xlu0 %7610
    %7612 = vrot.lane.b32.xlu0 %v7393, 16
    %v7613 = vpop.permute.xlu0 %7612
    %7614 = vrot.lane.b32.xlu0 %v7398, 16
    %v7615 = vpop.permute.xlu0 %7614
    %7616 = vrot.lane.b32.xlu0 %v7403, 16
    %v7617 = vpop.permute.xlu0 %7616
    %7618 = vrot.lane.b32.xlu0 %v7408, 16
    %v7619 = vpop.permute.xlu0 %7618
    %7636 = vrot.lane.b32.xlu0 %v7526, 24
    %v7637 = vpop.permute.xlu0 %7636
    %7638 = vrot.lane.b32.xlu0 %v7531, 24
    %v7639 = vpop.permute.xlu0 %7638
    %7640 = vrot.lane.b32.xlu0 %v7536, 24
    %v7641 = vpop.permute.xlu0 %7640
    %7642 = vrot.lane.b32.xlu0 %v7541, 24
    %v7643 = vpop.permute.xlu0 %7642
    %7644 = vrot.lane.b32.xlu0 %v7546, 24
    %v7645 = vpop.permute.xlu0 %7644
    %7646 = vrot.lane.b32.xlu0 %v7551, 24
    %v7647 = vpop.permute.xlu0 %7646
    %7648 = vrot.lane.b32.xlu0 %v7556, 24
    %v7649 = vpop.permute.xlu0 %7648
    %7650 = vrot.lane.b32.xlu0 %v7561, 24
    %v7651 = vpop.permute.xlu0 %7650
    %v7660 = vsel %vm255, %v7067, %v7573
    %v7661 = vsel %vm255, %v7072, %v7575
    %v7662 = vsel %vm255, %v7077, %v7577
    %v7663 = vsel %vm255, %v7082, %v7579
    %v7664 = vsel %vm255, %v7087, %v7581
    %v7665 = vsel %vm255, %v7092, %v7583
    %v7666 = vsel %vm255, %v7097, %v7585
    %v7667 = vsel %vm255, %v7102, %v7587
    %v7668 = vsel %vm118, %v7660, %v7605
    %v7669 = vsel %vm118, %v7661, %v7607
    %v7670 = vsel %vm118, %v7662, %v7609
    %v7671 = vsel %vm118, %v7663, %v7611
    %v7672 = vsel %vm118, %v7664, %v7613
    %v7673 = vsel %vm118, %v7665, %v7615
    %v7674 = vsel %vm118, %v7666, %v7617
    %v7675 = vsel %vm118, %v7667, %v7619
    %v7676 = vsel %vm1140, %v7668, %v7637
    %v7677 = vsel %vm1140, %v7669, %v7639
    %v7678 = vsel %vm1140, %v7670, %v7641
    %v7679 = vsel %vm1140, %v7671, %v7643
    %v7680 = vsel %vm1140, %v7672, %v7645
    %v7681 = vsel %vm1140, %v7673, %v7647
    %v7682 = vsel %vm1140, %v7674, %v7649
    %v7683 = vsel %vm1140, %v7675, %v7651
    %7684 = vrot.lane.b32.xlu0 %v5894, 32
    %v7685 = vpop.permute.xlu0 %7684
    %7686 = vrot.lane.b32.xlu0 %v5899, 32
    %v7687 = vpop.permute.xlu0 %7686
    %7688 = vrot.lane.b32.xlu0 %v5904, 32
    %v7689 = vpop.permute.xlu0 %7688
    %7690 = vrot.lane.b32.xlu0 %v5909, 32
    %v7691 = vpop.permute.xlu0 %7690
    %7692 = vrot.lane.b32.xlu0 %v5914, 32
    %v7693 = vpop.permute.xlu0 %7692
    %7694 = vrot.lane.b32.xlu0 %v5919, 32
    %v7695 = vpop.permute.xlu0 %7694
    %7696 = vrot.lane.b32.xlu0 %v5924, 32
    %v7697 = vpop.permute.xlu0 %7696
    %7698 = vrot.lane.b32.xlu0 %v5929, 32
    %v7699 = vpop.permute.xlu0 %7698
    %v7708 = vadd.f32 %v7676, %v7685
    %v7709 = vadd.f32 %v7677, %v7687
    %v7710 = vadd.f32 %v7678, %v7689
    %v7711 = vadd.f32 %v7679, %v7691
    %v7712 = vadd.f32 %v7680, %v7693
    %v7713 = vadd.f32 %v7681, %v7695
    %v7714 = vadd.f32 %v7682, %v7697
    %v7715 = vadd.f32 %v7683, %v7699
    %v7716 = vld [vmem:[#allocation8 + $0x1a] sm:$0x1]
    %v7717 = vld [vmem:[#allocation8 + $0x1b] sm:$0x1]
    %v7718 = vld [vmem:[#allocation8 + $0x1c] sm:$0x1]
    %v7719 = vsel %vm1154, %v7708, 0.0
    %v7720 = vsel %vm1154, %v7709, 0.0
    %v7721 = vadd.f32 %v7719, %v7720
    %v7722 = vsel %vm1154, %v7710, 0.0
    %v7723 = vadd.f32 %v7721, %v7722
    %v7724 = vsel %vm1154, %v7711, 0.0
    %v7725 = vadd.f32 %v7723, %v7724
    %v7726 = vsel %vm1154, %v7712, 0.0
    %v7727 = vadd.f32 %v7725, %v7726
    %v7728 = vsel %vm1154, %v7713, 0.0
    %v7729 = vadd.f32 %v7727, %v7728
    %v7730 = vsel %vm1154, %v7714, 0.0
    %v7731 = vadd.f32 %v7729, %v7730
    %v7732 = vsel %vm1154, %v7715, 0.0
    %v7733 = vadd.f32 %v7731, %v7732
    %v7734 = vrot.slane %v7733, 4
    %v7735 = vadd.f32 %v7733, %v7734
    %v7736 = vrot.slane %v7735, 2
    %v7737 = vadd.f32 %v7735, %v7736
    %v7738 = vrot.slane %v7737, 1
    %v7739 = vadd.f32 %v7737, %v7738
    %v7740 = vmul.f32 %v7739, 0.015625
    %v7741 = vmul.f32 %v7740, %v7718
    %v7742 = vlaneseq
    %v7743 = vshrl.u32 %v7742, 7
    %v7744 = vsub.s32 0, %v7743
    %v7745 = vrot.slane %v7741, %v7744
    %v7746 = vsub.f32 %v7708, %v7745
    %v7747 = vsub.f32 %v7709, %v7745
    %v7748 = vsub.f32 %v7710, %v7745
    %v7749 = vsub.f32 %v7711, %v7745
    %v7750 = vsub.f32 %v7712, %v7745
    %v7751 = vsub.f32 %v7713, %v7745
    %v7752 = vsub.f32 %v7714, %v7745
    %v7753 = vsub.f32 %v7715, %v7745
    %v7754 = vmul.f32 %v7746, %v7746
    %v7755 = vmul.f32 %v7747, %v7747
    %v7756 = vmul.f32 %v7748, %v7748
    %v7757 = vmul.f32 %v7749, %v7749
    %v7758 = vmul.f32 %v7750, %v7750
    %v7759 = vmul.f32 %v7751, %v7751
    %v7760 = vmul.f32 %v7752, %v7752
    %v7761 = vmul.f32 %v7753, %v7753
    %v7762 = vsel %vm1154, %v7754, 0.0
    %v7763 = vsel %vm1154, %v7755, 0.0
    %v7764 = vadd.f32 %v7762, %v7763
    %v7765 = vsel %vm1154, %v7756, 0.0
    %v7766 = vadd.f32 %v7764, %v7765
    %v7767 = vsel %vm1154, %v7757, 0.0
    %v7768 = vadd.f32 %v7766, %v7767
    %v7769 = vsel %vm1154, %v7758, 0.0
    %v7770 = vadd.f32 %v7768, %v7769
    %v7771 = vsel %vm1154, %v7759, 0.0
    %v7772 = vadd.f32 %v7770, %v7771
    %v7773 = vsel %vm1154, %v7760, 0.0
    %v7774 = vadd.f32 %v7772, %v7773
    %v7775 = vsel %vm1154, %v7761, 0.0
    %v7776 = vadd.f32 %v7774, %v7775
    %v7777 = vrot.slane %v7776, 4
    %v7778 = vadd.f32 %v7776, %v7777
    %v7779 = vrot.slane %v7778, 2
    %v7780 = vadd.f32 %v7778, %v7779
    %v7781 = vrot.slane %v7780, 1
    %v7782 = vadd.f32 %v7780, %v7781
    %v7783 = vmul.f32 %v7782, 0.015625
    %v7785 = vlaneseq
    %v7786 = vshrl.u32 %v7785, 7
    %v7787 = vsub.s32 0, %v7786
    %v7788 = vrot.slane %v7716, %v7787
    %v7790 = vmul.f32 %v7788, %v7746
    %v7791 = vmul.f32 %v7788, %v7747
    %v7792 = vmul.f32 %v7788, %v7748
    %v7793 = vmul.f32 %v7788, %v7749
    %v7794 = vmul.f32 %v7788, %v7750
    %v7795 = vmul.f32 %v7788, %v7751
    %v7796 = vmul.f32 %v7788, %v7752
    %v7797 = vmul.f32 %v7788, %v7753
    %v7798 = vadd.f32 %v7783, 1e-05
    %v7799 = vrsqrt.pop %v7798
    %v7800 = vmul.f32 %v7790, %v7799
    %v7801 = vmul.f32 %v7791, %v7799
    %v7802 = vmul.f32 %v7792, %v7799
    %v7803 = vmul.f32 %v7793, %v7799
    %v7804 = vmul.f32 %v7794, %v7799
    %v7805 = vmul.f32 %v7795, %v7799
    %v7806 = vmul.f32 %v7796, %v7799
    %v7807 = vmul.f32 %v7797, %v7799
    %v7809 = vlaneseq
    %v7810 = vshrl.u32 %v7809, 7
    %v7811 = vsub.s32 0, %v7810
    %v7812 = vrot.slane %v7717, %v7811
    %v7814 = vadd.f32 %v7800, %v7812
    %v7815 = vadd.f32 %v7801, %v7812
    %v7816 = vadd.f32 %v7802, %v7812
    %v7817 = vadd.f32 %v7803, %v7812
    %v7818 = vadd.f32 %v7804, %v7812
    %v7819 = vadd.f32 %v7805, %v7812
    %v7820 = vadd.f32 %v7806, %v7812
    %v7821 = vadd.f32 %v7807, %v7812
    %7822 = vxpose.xlu0.b32.start [1/16] %v7814, 128
    %7823 = vxpose.xlu0.b32.cont [2/16] %v7815, 128
    %7824 = vxpose.xlu0.b32.cont [3/16] %v7816, 128
    %7825 = vxpose.xlu0.b32.cont [4/16] %v7817, 128
    %7826 = vxpose.xlu0.b32.cont [5/16] %v7818, 128
    %7827 = vxpose.xlu0.b32.cont [6/16] %v7819, 128
    %7828 = vxpose.xlu0.b32.cont [7/16] %v7820, 128
    %7829 = vxpose.xlu0.b32.cont [8/16] %v7821, 128
    %7830 = vxpose.xlu0.b32.cont [9/16] 0.0, 128
    %7831 = vxpose.xlu0.b32.cont [10/16] 0.0, 128
    %7832 = vxpose.xlu0.b32.cont [11/16] 0.0, 128
    %7833 = vxpose.xlu0.b32.cont [12/16] 0.0, 128
    %7834 = vxpose.xlu0.b32.cont [13/16] 0.0, 128
    %7835 = vxpose.xlu0.b32.cont [14/16] 0.0, 128
    %7836 = vxpose.xlu0.b32.cont [15/16] 0.0, 128
    %7837 = vxpose.xlu0.b32.end [16/16] 0.0, 128
    %v7838 = vpop.trf.xlu0
    %v7839 = vpop.trf.xlu0
    %v7840 = vpop.trf.xlu0
    %v7841 = vpop.trf.xlu0
    %v7842 = vpop.trf.xlu0
    %v7843 = vpop.trf.xlu0
    %v7844 = vpop.trf.xlu0
    %v7845 = vpop.trf.xlu0
    %v7846 = vpop.trf.xlu0
    %v7847 = vpop.trf.xlu0
    %v7848 = vpop.trf.xlu0
    %v7849 = vpop.trf.xlu0
    %v7850 = vpop.trf.xlu0
    %v7851 = vpop.trf.xlu0
    %v7852 = vpop.trf.xlu0
    %v7853 = vpop.trf.xlu0
    %v7854 = vmul.f32 %v7838, %v7838
    %v7855 = vmul.f32 %v7839, %v7839
    %v7856 = vmul.f32 %v7840, %v7840
    %v7857 = vmul.f32 %v7841, %v7841
    %v7858 = vsel %vm3215, %v7854, 0.0
    %7859 = vadd.xlane.f32.xlu0 %v7858
    %v7860 = vpop.xlane.xlu0 %7859
    %v7861 = vsel %vm3215, %v7855, 0.0
    %7862 = vadd.xlane.f32.xlu0 %v7861
    %v7863 = vpop.xlane.xlu0 %7862
    %v7864 = vsel %vm3215, %v7856, 0.0
    %7865 = vadd.xlane.f32.xlu0 %v7864
    %v7866 = vpop.xlane.xlu0 %7865
    %v7867 = vsel %vm3215, %v7857, 0.0
    %7868 = vadd.xlane.f32.xlu0 %v7867
    %v7869 = vpop.xlane.xlu0 %7868
    %v7870 = vadd.f32 %v7860, 1e-24
    %v7871 = vadd.f32 %v7863, 1e-24
    %v7872 = vadd.f32 %v7866, 1e-24
    %v7873 = vadd.f32 %v7869, 1e-24
    %v7874 = vrsqrt.pop %v7870
    %v7875 = vrsqrt.pop %v7871
    %v7876 = vrsqrt.pop %v7872
    %v7877 = vrsqrt.pop %v7873
    %v7878 = vmul.f32 %v7838, %v7874
    %v7879 = vmul.f32 %v7839, %v7875
    %v7880 = vmul.f32 %v7840, %v7876
    %v7881 = vmul.f32 %v7841, %v7877
    %v7883 = vsel %vm3215, %v7878, 0
    %v7886 = vsel %vm3215, %v7879, 0
    %v7889 = vsel %vm3215, %v7880, 0
    %v7892 = vsel %vm3215, %v7881, 0
    %7894 = vmatprep.subr.mxu0 0.0
    %7895 = vmatpush1.xpose.msra.mxu0 %v7883
    %7896 = vmatprep.subr.mxu0 0.0
    %7897 = vmatpush1.xpose.msra.mxu0 %v7886
    %7898 = vmatprep.subr.mxu0 0.0
    %7899 = vmatpush1.xpose.msra.mxu0 %v7889
    %7900 = vmatprep.subr.mxu0 0.0
    %7901 = vmatpush1.xpose.msra.mxu0 %v7892
    %7902 = vmatprep.subr.mxu0 0.0
    %7903 = vmatpush1.xpose.msra.mxu0 0.0
    %7904 = vmatprep.subr.mxu0 0.0
    %7905 = vmatpush1.xpose.msra.mxu0 0.0
    %7906 = vmatprep.subr.mxu0 0.0
    %7907 = vmatpush1.xpose.msra.mxu0 0.0
    %7908 = vmatprep.subr.mxu0 0.0
    %7909 = vmatpush1.xpose.msra.mxu0 0.0
    %7910 = vmatprep.subr.mxu0 0.0
    %7911 = vmatpush1.xpose.msra.mxu0 0.0
    %7912 = vmatprep.subr.mxu0 0.0
    %7913 = vmatpush1.xpose.msra.mxu0 0.0
    %7914 = vmatprep.subr.mxu0 0.0
    %7915 = vmatpush1.xpose.msra.mxu0 0.0
    %7916 = vmatprep.subr.mxu0 0.0
    %7917 = vmatpush1.xpose.msra.mxu0 0.0
    %7918 = vmatprep.subr.mxu0 0.0
    %7919 = vmatpush1.xpose.msra.mxu0 0.0
    %7920 = vmatprep.subr.mxu0 0.0
    %7921 = vmatpush1.xpose.msra.mxu0 0.0
    %7922 = vmatprep.subr.mxu0 0.0
    %7923 = vmatpush1.xpose.msra.mxu0 0.0
    %7924 = vmatprep.subr.mxu0 0.0
    %7925 = vmatpush1.xpose.msra.mxu0 0.0
    %7926 = vmatprep.subr.mxu0 0.0
    %7927 = vmatpush1.xpose.msra.mxu0 0.0
    %7928 = vmatprep.subr.mxu0 0.0
    %7929 = vmatpush1.xpose.msra.mxu0 0.0
    %7930 = vmatprep.subr.mxu0 0.0
    %7931 = vmatpush1.xpose.msra.mxu0 0.0
    %7932 = vmatprep.subr.mxu0 0.0
    %7933 = vmatpush1.xpose.msra.mxu0 0.0
    %7934 = vmatprep.subr.mxu0 0.0
    %7935 = vmatpush1.xpose.msra.mxu0 0.0
    %7936 = vmatprep.subr.mxu0 0.0
    %7937 = vmatpush1.xpose.msra.mxu0 0.0
    %7938 = vmatprep.subr.mxu0 0.0
    %7939 = vmatpush1.xpose.msra.mxu0 0.0
    %7940 = vmatprep.subr.mxu0 0.0
    %7941 = vmatpush1.xpose.msra.mxu0 0.0
    %7942 = vmatprep.subr.mxu0 0.0
    %7943 = vmatpush1.xpose.msra.mxu0 0.0
    %7944 = vmatprep.subr.mxu0 0.0
    %7945 = vmatpush1.xpose.msra.mxu0 0.0
    %7946 = vmatprep.subr.mxu0 0.0
    %7947 = vmatpush1.xpose.msra.mxu0 0.0
    %7948 = vmatprep.subr.mxu0 0.0
    %7949 = vmatpush1.xpose.msra.mxu0 0.0
    %7950 = vmatprep.subr.mxu0 0.0
    %7951 = vmatpush1.xpose.msra.mxu0 0.0
    %7952 = vmatprep.subr.mxu0 0.0
    %7953 = vmatpush1.xpose.msra.mxu0 0.0
    %7954 = vmatprep.subr.mxu0 0.0
    %7955 = vmatpush1.xpose.msra.mxu0 0.0
    %7956 = vmatprep.subr.mxu0 0.0
    %7957 = vmatpush1.xpose.msra.mxu0 0.0
    %7958 = vmatprep.mubr.f32.mxu0 0.0
    %7959 = vmatmul.mubr.f32.gmra.mrb[0].mxu0 %v7883
    %v7960 = vpop.f32.mrb[0].mxu0
    %v7961 = vadd.f32 0.0, %v7960
    %v7962 = vpop.f32.mrb[0].mxu0
    %7963 = vmatprep.mubr.f32.mxu0 0.0
    %7964 = vmatmul.mubr.f32.gmra.mrb[0].mxu0 %v7886
    %v7965 = vpop.f32.mrb[0].mxu0
    %v7966 = vadd.f32 0.0, %v7965
    %v7967 = vpop.f32.mrb[0].mxu0
    %7968 = vmatprep.mubr.f32.mxu0 0.0
    %7969 = vmatmul.mubr.f32.gmra.mrb[0].mxu0 %v7889
    %v7970 = vpop.f32.mrb[0].mxu0
    %v7971 = vadd.f32 0.0, %v7970
    %v7972 = vpop.f32.mrb[0].mxu0
    %7973 = vmatprep.mubr.f32.mxu0 0.0
    %7974 = vmatmul.mubr.f32.gmra.mrb[0].mxu0 %v7892
    %v7975 = vpop.f32.mrb[0].mxu0
    %v7976 = vadd.f32 0.0, %v7975
    %v7977 = vpop.f32.mrb[0].mxu0
    %7978 = vdwg.mxu0
    %v7979 = vmax.f32 %v7961, 0.0
    %v7980 = vmax.f32 %v7966, 0.0
    %v7981 = vmax.f32 %v7971, 0.0
    %v7982 = vmax.f32 %v7976, 0.0
    %7983 = vst.msk [vmem:[#allocation10] sm:$0xff] %vm1154, %v7979
    %7984 = vst.msk [vmem:[#allocation10 + $0x8] sm:$0xff] %vm1154, %v7980
    %7985 = vst.msk [vmem:[#allocation10 + $0x10] sm:$0xff] %vm1154, %v7981
    %7986 = vst.msk [vmem:[#allocation10 + $0x18] sm:$0xff] %vm1154, %v7982
    // Predicated region
    $region34: #{perfect_feature_model.1} parent=1 // pred_check
      _
    $region35: #{perfect_feature_model.1} parent=1 // pred_check_branch
      %7988 = sbr.rel (0) target = $region37
    $region36: #{perfect_feature_model.1} parent=1 // pred_region
      %s7990 = ssub.s32 512, 512
      %7991 = vsyncadd [#allocation4], %s7990
      %s7992 = sshll.u32 [#allocation10], 4
      %s7993 = int_to_ptr.vmem [resolvable:$true] %s7992
      %7998 = dma.vmem_to_hbm [thread:$0]  %s7993, 512, %s4, [#allocation4], 128, 128, 8
    $region37: #{perfect_feature_model.1} parent=1 // pred_fallthru
      _
    // Predicated region
    $region38: #{perfect_feature_model.1} parent=1 // pred_check
      _
    $region39: #{perfect_feature_model.1} parent=1 // pred_check_branch
      %8000 = sbr.rel (0) target = $region41
    $region40: #{perfect_feature_model.1} parent=1 // pred_region
      %s8002 = ssub.s32 256, 256
      %8003 = vsyncadd [#allocation12], %s8002
      %s8004 = sshll.u32 [#allocation11], 4
      %s8005 = int_to_ptr.vmem [resolvable:$true] %s8004
      %8010 = dma.vmem_to_hbm [thread:$0]  %s8005, 256, %s5, [#allocation12], 128, 128, 8
    $region41: #{perfect_feature_model.1} parent=1 // pred_fallthru
      _
    // Predicated region
    $region42: #{perfect_feature_model.1} parent=1 // pred_check
      _
    $region43: #{perfect_feature_model.1} parent=1 // pred_check_branch
      %8012 = sbr.rel (0) target = $region45
    $region44: #{perfect_feature_model.1} parent=1 // pred_region
      %8013 = dma.done [#allocation4], 512
    $region45: #{perfect_feature_model.1} parent=1 // pred_fallthru
      _
    // Predicated region
    $region46: #{perfect_feature_model.1} parent=1 // pred_check
      _
    $region47: #{perfect_feature_model.1} parent=1 // pred_check_branch
      %8015 = sbr.rel (0) target = $region49
    $region48: #{perfect_feature_model.1} parent=1 // pred_region
      %8016 = dma.done [#allocation12], 256
    $region49: #{perfect_feature_model.1} parent=1 // pred_fallthru
      _
    %8017 = vsyncpa [#allocation3], 1
    %8018 = vsyncpa [#allocation6], 1
    %8019 = vsyncpa [#allocation9], 1
    %8020 = vsyncpa [#allocation4], 1
    %8021 = vsyncpa [#allocation12], 1

</llo_original>
